<compile_context>
chip_gen: v6e
topology: v6e:2x2x1
jax: 0.10.0
libtpu: 0.0.40
codegen_flags: <defaults>
</compile_context>

<pallas_src>
import jax
import jax.numpy as jnp
import numpy as np
from jax import lax
from jax.experimental import pallas as pl
from jax.experimental.pallas import tpu as pltpu

BN_EPS = 1e-5
LRELU_SLOPE = 0.2
LANE = 128
# Well under the 64 MiB/TC physical VMEM of v7x (and 128 MiB of v5e/v6e).
VMEM_LIMIT_BYTES = 32 * 1024 * 1024


def _round_up(x, m):
    return ((x + m - 1) // m) * m


# --------------------------------------------------------------------------- kernels
def _conv_bn_lrelu_kernel(inv_m):
    """Fused Conv(as matmul) + BatchNorm(batch stats) + LeakyReLU, one block."""
    def kernel(w_ref, p_ref, g_ref, b_ref, o_ref):
        # w: (Cout, K) f32, p: (K, Mp) f32, g/b: (Cout, 1) f32, o: (Cout, Mp) f32.
        y = jnp.dot(w_ref[...], p_ref[...], preferred_element_type=jnp.float32)
        # No conv bias -> zero-padded patch columns give y == 0 exactly, so the
        # lane sums over Mp equal the sums over the M valid columns.
        s = jnp.sum(y, axis=1, keepdims=True)              # XLU lane reduce
        q = jnp.sum(y * y, axis=1, keepdims=True)
        mean = s * inv_m
        var = jnp.maximum(q * inv_m - mean * mean, 0.0)
        scale = g_ref[...] * lax.rsqrt(var + BN_EPS)        # EUP rsqrt
        shift = b_ref[...] - mean * scale
        o = y * scale + shift
        o_ref[...] = jnp.where(o >= 0, o, LRELU_SLOPE * o)
    return kernel


def _final_conv_kernel(w_ref, p_ref, b_ref, o_ref):
    o_ref[...] = jnp.dot(w_ref[...], p_ref[...],
                         preferred_element_type=jnp.float32) + b_ref[...]


# ------------------------------------------------------------------------ pallas wrappers
def fused_conv_bn_lrelu(w_t, patches_t, gamma, beta, m_valid):
    """w_t: (Cout, K), patches_t: (K, Mp), gamma/beta: (Cout, 1); all f32."""
    Cout = w_t.shape[0]
    Mp = patches_t.shape[1]
    return pl.pallas_call(
        _conv_bn_lrelu_kernel(1.0 / float(m_valid)),
        out_shape=jax.ShapeDtypeStruct((Cout, Mp), jnp.float32),
        compiler_params=pltpu.CompilerParams(vmem_limit_bytes=VMEM_LIMIT_BYTES),
    )(w_t, patches_t, gamma, beta)


def final_conv_call(w_t, patches_t, bias_col):
    Cout = w_t.shape[0]
    Mp = patches_t.shape[1]
    return pl.pallas_call(
        _final_conv_kernel,
        out_shape=jax.ShapeDtypeStruct((Cout, Mp), jnp.float32),
        compiler_params=pltpu.CompilerParams(vmem_limit_bytes=VMEM_LIMIT_BYTES),
    )(w_t, patches_t, bias_col)


# ------------------------------------------------------------------------------- glue
def im2col_t(x_cnhw, ksize, stride, pad):
    """x: (C, N, H, W) f32 -> patch matrix (K, Mp) f32.

    K = ksize*ksize*C with row order (kh*ksize + kw)*C + c; M = N*OH*OW on the
    lane axis, zero-padded up to a multiple of 128 for lane-dense blocks.
    """
    C, N, H, W = x_cnhw.shape
    xp = jnp.pad(x_cnhw, ((0, 0), (0, 0), (pad, pad), (pad, pad)))
    OH = (H + 2 * pad - ksize) // stride + 1
    OW = (W + 2 * pad - ksize) // stride + 1
    slabs = []
    for kh in range(ksize):
        for kw in range(ksize):
            slabs.append(xp[:, :, kh:kh + (OH - 1) * stride + 1:stride,
                               kw:kw + (OW - 1) * stride + 1:stride])
    pt = jnp.stack(slabs, axis=0).reshape(ksize * ksize * C, N * OH * OW)
    M = N * OH * OW
    Mp = _round_up(M, LANE)
    pt = jnp.pad(pt, ((0, 0), (0, Mp - M)))
    return pt, M, OH, OW


def conv_bn_lrelu_layer(x_cnhw, layer_params, stride):
    w_t, gamma, beta = layer_params                 # prepared: (Cout,K),(Cout,1),(Cout,1)
    Cout = w_t.shape[0]
    N = x_cnhw.shape[1]
    patches_t, M, OH, OW = im2col_t(x_cnhw, 4, stride, 1)
    f = fused_conv_bn_lrelu(w_t, patches_t, gamma, beta, M)   # (Cout, Mp) f32
    return f[:, :M].reshape(Cout, N, OH, OW)


def final_conv(x_cnhw, final_params):
    w_t, bias_col = final_params                    # (8, K) with rows 1..7 zero, (8, 1)
    N = x_cnhw.shape[1]
    patches_t, M, OH, OW = im2col_t(x_cnhw, 4, 1, 1)
    y = final_conv_call(w_t, patches_t, bias_col)   # (8, Mp) f32
    return y[:1, :M].reshape(1, N, OH, OW)


def patch_discriminator(x_cnhw, params):
    f1 = conv_bn_lrelu_layer(x_cnhw, params["l1"], 2)
    f2 = conv_bn_lrelu_layer(f1, params["l2"], 2)
    f3 = conv_bn_lrelu_layer(f2, params["l3"], 2)
    f4 = conv_bn_lrelu_layer(f3, params["l4"], 1)
    out = final_conv(f4, params["final"])
    return out, [f1, f2, f3, f4]


def down2_nchw(x):
    # F.interpolate(scale_factor=0.5, bilinear, align_corners=False) == 2x2 avg pool.
    N, C, H, W = x.shape
    return x.reshape(N, C, H // 2, 2, W // 2, 2).mean(axis=(3, 5))


def down4_nchw(x):
    # One-shot bilinear x0.25: src coord = 4*i + 1.5 -> mean of taps 4i+1, 4i+2 per dim.
    xr = 0.5 * (x[:, :, 1::4, :] + x[:, :, 2::4, :])
    return 0.5 * (xr[:, :, :, 1::4] + xr[:, :, :, 2::4])


@jax.jit
def multi_scale_forward(x_nchw, prepared_params):
    x = x_nchw.astype(jnp.float32)
    scales = (x, down2_nchw(x), down4_nchw(x))
    outputs, features = [], []
    for inp, p in zip(scales, prepared_params):
        x_cnhw = jnp.transpose(inp, (1, 0, 2, 3))            # (C, N, H, W) f32
        out, feats = patch_discriminator(x_cnhw, p)
        outputs.append(jnp.transpose(out, (1, 0, 2, 3)))     # NCHW f32
        features.append([jnp.transpose(f, (1, 0, 2, 3)) for f in feats])
    return outputs, features


# ---------------------------------------------------------------------------- parameters
def init_disc_params(key, cin, nf):
    chans = [(cin, nf), (nf, 2 * nf), (2 * nf, 4 * nf), (4 * nf, 8 * nf)]
    keys = jax.random.split(key, 5)
    params = {}
    for i, (ci, co) in enumerate(chans):
        kw, kb, kg, kbt = jax.random.split(keys[i], 4)
        params["l%d" % (i + 1)] = (
            0.05 * jax.random.normal(kw, (16 * ci, co), jnp.float32),   # (K, Cout)
            0.10 * jax.random.normal(kb, (co,), jnp.float32),           # conv bias
            1.0 + 0.1 * jax.random.normal(kg, (co,), jnp.float32),      # BN gamma
            0.10 * jax.random.normal(kbt, (co,), jnp.float32),          # BN beta
        )
    kw, kb = jax.random.split(keys[4], 2)
    ci = 8 * nf
    params["final"] = (
        0.05 * jax.random.normal(kw, (16 * ci, 1), jnp.float32),
        0.10 * jax.random.normal(kb, (1,), jnp.float32),
    )
    return params


def prepare_params(raw):
    """One-time weight packing done OUTSIDE the jitted forward (perf review #9)."""
    prepared = {}
    for i in range(1, 5):
        w_mat, _bias, gamma, beta = raw["l%d" % i]
        co = w_mat.shape[1]
        # Conv bias for layers 1-4 is exactly cancelled by BatchNorm -> dropped.
        prepared["l%d" % i] = (
            jnp.asarray(w_mat.T, jnp.float32),                # (Cout, K)
            gamma.reshape(co, 1).astype(jnp.float32),
            beta.reshape(co, 1).astype(jnp.float32),
        )
    w_mat, bias = raw["final"]
    K = w_mat.shape[0]
    # Pad Cout=1 up to 8 sublanes with zero weights / zero bias; slice after.
    w_t = jnp.zeros((8, K), jnp.float32).at[:1].set(w_mat.T.astype(jnp.float32))
    b = jnp.zeros((8, 1), jnp.float32).at[0, 0].set(bias[0])
    prepared["final"] = (w_t, b)
    return prepared


# ------------------------------------------------------------------------- JAX reference
def ref_forward(x_nchw, all_params):
    # Pure-JAX reference in f32 (includes the conv biases; BatchNorm with
    # batch statistics cancels them, which also validates dropping them in the
    # Pallas path).
    def conv(x, w_mat, b, s):
        cin = w_mat.shape[0] // 16
        cout = w_mat.shape[1]
        w = w_mat.reshape(4, 4, cin, cout).transpose(3, 2, 0, 1)  # OIHW
        y = lax.conv_general_dilated(
            x, w, (s, s), ((1, 1), (1, 1)),
            dimension_numbers=("NCHW", "OIHW", "NCHW"),
            precision=lax.Precision.HIGHEST)
        return y + b[None, :, None, None]

    def bn_lrelu_ref(y, g, be):
        mean = y.mean(axis=(0, 2, 3), keepdims=True)
        var = y.var(axis=(0, 2, 3), keepdims=True)          # biased, as PyTorch BN
        yh = (y - mean) / jnp.sqrt(var + BN_EPS)
        y2 = g[None, :, None, None] * yh + be[None, :, None, None]
        return jnp.where(y2 >= 0, y2, LRELU_SLOPE * y2)

    def disc(x, p):
        h = x
        feats = []
        for i, s in zip(range(4), (2, 2, 2, 1)):
            w_mat, b, g, be = p["l%d" % (i + 1)]
            h = bn_lrelu_ref(conv(h, w_mat, b, s), g, be)
            feats.append(h)
        w_mat, b = p["final"]
        return conv(h, w_mat, b, 1), feats

    xs = [x_nchw, down2_nchw(x_nchw), down4_nchw(x_nchw)]
    outs, feats = [], []
    for xi, p in zip(xs, all_params):
        o, f = disc(xi, p)
        outs.append(o)
        feats.append(f)
    return outs, feats


# -------------------------------------------------------------------------------- main
if __name__ == "__main__":
    # Spatial must be >= 96 so the quarter-scale branch keeps every conv output
    # size positive (same structural constraint as the PyTorch module).
    BATCH, IN_CH, H, W = 2, 3, 96, 96
    NUM_FILTERS = 8

    key = jax.random.PRNGKey(0)
    kx, k1, k2, k3 = jax.random.split(key, 4)
    x = jax.random.normal(kx, (BATCH, IN_CH, H, W), jnp.float32)

    raw_params = [
        init_disc_params(k1, IN_CH, NUM_FILTERS),
        init_disc_params(k2, IN_CH, NUM_FILTERS),
        init_disc_params(k3, IN_CH, NUM_FILTERS),
    ]
    prepared_params = [prepare_params(p) for p in raw_params]

    outputs, features = multi_scale_forward(x, prepared_params)
    outputs = jax.block_until_ready(outputs)
    features = jax.block_until_ready(features)

    # Verify against a pure-JAX (lax.conv, f32) reference.  Tolerances cover a
    # possible default-precision MXU matmul path on hardware; the match is
    # ~1e-5 when both paths run at full f32 precision.
    ref_outs, ref_feats = jax.jit(ref_forward)(x, raw_params)
    ref_outs = jax.block_until_ready(ref_outs)
    for o_p, o_r in zip(outputs, ref_outs):
        np.testing.assert_allclose(np.asarray(o_p), np.asarray(o_r),
                                   rtol=2e-2, atol=2e-2)
    for fs_p, fs_r in zip(features, ref_feats):
        for f_p, f_r in zip(fs_p, fs_r):
            np.testing.assert_allclose(np.asarray(f_p), np.asarray(f_r),
                                       rtol=2e-2, atol=2e-2)

    print("KERNEL_OK")
</pallas_src>

<mosaic_0001>
module attributes {stable_mosaic.version = 11 : i64} {
  func.func @kernel(%arg0: memref<8x48xf32, #tpu.memory_space<vmem>>, %arg1: memref<48x384xf32, #tpu.memory_space<vmem>>, %arg2: memref<8x1xf32, #tpu.memory_space<vmem>>, %arg3: memref<8x1xf32, #tpu.memory_space<vmem>>, %arg4: memref<8x384xf32, #tpu.memory_space<vmem>>) attributes {dimension_semantics = [], scalar_prefetch = 0 : i64, scratch_operands = 0 : i64, tpu.core_type = #tpu.core_type<tc>} {
    %c0 = arith.constant 0 : index
    %c0_0 = arith.constant 0 : index
    %0 = vector.load %arg0[%c0, %c0_0] : memref<8x48xf32, #tpu.memory_space<vmem>>, vector<8x48xf32>
    %c0_1 = arith.constant 0 : index
    %c0_2 = arith.constant 0 : index
    %1 = vector.load %arg1[%c0_1, %c0_2] : memref<48x384xf32, #tpu.memory_space<vmem>>, vector<48x384xf32>
    %cst = arith.constant dense<0.000000e+00> : vector<8x384xf32>
    %2 = tpu.matmul %0, %1, %cst {dimension_numbers = #tpu.dot_dimension_numbers<[1], [0], [0], [1], [0, 0, 1, 1], [], []>} : vector<8x48xf32>, vector<48x384xf32>, vector<8x384xf32> -> vector<8x384xf32>
    %cst_3 = arith.constant dense<0.000000e+00> : vector<8xf32>
    %3 = vector.multi_reduction <add>, %2, %cst_3 [1] : vector<8x384xf32> to vector<8xf32>
    %4 = vector.shape_cast %3 : vector<8xf32> to vector<8x1xf32>
    %5 = arith.mulf %2, %2 : vector<8x384xf32>
    %cst_4 = arith.constant dense<0.000000e+00> : vector<8xf32>
    %6 = vector.multi_reduction <add>, %5, %cst_4 [1] : vector<8x384xf32> to vector<8xf32>
    %7 = vector.shape_cast %6 : vector<8xf32> to vector<8x1xf32>
    %cst_5 = arith.constant 0.00347222225 : f32
    %8 = vector.broadcast %cst_5 : f32 to vector<8x1xf32>
    %9 = arith.mulf %4, %8 : vector<8x1xf32>
    %cst_6 = arith.constant 0.00347222225 : f32
    %10 = vector.broadcast %cst_6 : f32 to vector<8x1xf32>
    %11 = arith.mulf %7, %10 : vector<8x1xf32>
    %12 = arith.mulf %9, %9 : vector<8x1xf32>
    %13 = arith.subf %11, %12 : vector<8x1xf32>
    %cst_7 = arith.constant 0.000000e+00 : f32
    %14 = vector.broadcast %cst_7 : f32 to vector<8x1xf32>
    %15 = arith.maximumf %13, %14 : vector<8x1xf32>
    %c0_8 = arith.constant 0 : index
    %c0_9 = arith.constant 0 : index
    %16 = vector.load %arg2[%c0_8, %c0_9] : memref<8x1xf32, #tpu.memory_space<vmem>>, vector<8x1xf32>
    %cst_10 = arith.constant 9.99999974E-6 : f32
    %17 = vector.broadcast %cst_10 : f32 to vector<8x1xf32>
    %18 = arith.addf %15, %17 : vector<8x1xf32>
    %19 = math.rsqrt %18 : vector<8x1xf32>
    %20 = arith.mulf %16, %19 : vector<8x1xf32>
    %c0_11 = arith.constant 0 : index
    %c0_12 = arith.constant 0 : index
    %21 = vector.load %arg3[%c0_11, %c0_12] : memref<8x1xf32, #tpu.memory_space<vmem>>, vector<8x1xf32>
    %22 = arith.mulf %9, %20 : vector<8x1xf32>
    %23 = arith.subf %21, %22 : vector<8x1xf32>
    %24 = vector.broadcast %20 : vector<8x1xf32> to vector<8x384xf32>
    %25 = arith.mulf %2, %24 : vector<8x384xf32>
    %26 = vector.broadcast %23 : vector<8x1xf32> to vector<8x384xf32>
    %27 = arith.addf %25, %26 : vector<8x384xf32>
    %cst_13 = arith.constant 0.000000e+00 : f32
    %28 = vector.broadcast %cst_13 : f32 to vector<8x384xf32>
    %29 = arith.cmpf oge, %27, %28 : vector<8x384xf32>
    %cst_14 = arith.constant 2.000000e-01 : f32
    %30 = vector.broadcast %cst_14 : f32 to vector<8x384xf32>
    %31 = arith.mulf %30, %27 : vector<8x384xf32>
    %32 = arith.select %29, %27, %31 : vector<8x384xi1>, vector<8x384xf32>
    %c0_15 = arith.constant 0 : index
    %c0_16 = arith.constant 0 : index
    %33 = vector.load %arg4[%c0_15, %c0_16] : memref<8x384xf32, #tpu.memory_space<vmem>>, vector<8x384xf32>
    tpu.vector_store %arg4[%c0_15, %c0_16], %32 {strides = array<i32>} : memref<8x384xf32, #tpu.memory_space<vmem>>, vector<8x384xf32>,
    return
  }
}

module attributes {stable_mosaic.version = 11 : i64} {
  func.func @kernel(%arg0: memref<16x128xf32, #tpu.memory_space<vmem>>, %arg1: memref<128x128xf32, #tpu.memory_space<vmem>>, %arg2: memref<16x1xf32, #tpu.memory_space<vmem>>, %arg3: memref<16x1xf32, #tpu.memory_space<vmem>>, %arg4: memref<16x128xf32, #tpu.memory_space<vmem>>) attributes {dimension_semantics = [], scalar_prefetch = 0 : i64, scratch_operands = 0 : i64, tpu.core_type = #tpu.core_type<tc>} {
    %c0 = arith.constant 0 : index
    %c0_0 = arith.constant 0 : index
    %0 = vector.load %arg0[%c0, %c0_0] : memref<16x128xf32, #tpu.memory_space<vmem>>, vector<16x128xf32>
    %c0_1 = arith.constant 0 : index
    %c0_2 = arith.constant 0 : index
    %1 = vector.load %arg1[%c0_1, %c0_2] : memref<128x128xf32, #tpu.memory_space<vmem>>, vector<128x128xf32>
    %cst = arith.constant dense<0.000000e+00> : vector<16x128xf32>
    %2 = tpu.matmul %0, %1, %cst {dimension_numbers = #tpu.dot_dimension_numbers<[1], [0], [0], [1], [0, 0, 1, 1], [], []>} : vector<16x128xf32>, vector<128x128xf32>, vector<16x128xf32> -> vector<16x128xf32>
    %cst_3 = arith.constant dense<0.000000e+00> : vector<16xf32>
    %3 = vector.multi_reduction <add>, %2, %cst_3 [1] : vector<16x128xf32> to vector<16xf32>
    %4 = vector.shape_cast %3 : vector<16xf32> to vector<16x1xf32>
    %5 = arith.mulf %2, %2 : vector<16x128xf32>
    %cst_4 = arith.constant dense<0.000000e+00> : vector<16xf32>
    %6 = vector.multi_reduction <add>, %5, %cst_4 [1] : vector<16x128xf32> to vector<16xf32>
    %7 = vector.shape_cast %6 : vector<16xf32> to vector<16x1xf32>
    %cst_5 = arith.constant 0.013888889 : f32
    %8 = vector.broadcast %cst_5 : f32 to vector<16x1xf32>
    %9 = arith.mulf %4, %8 : vector<16x1xf32>
    %cst_6 = arith.constant 0.013888889 : f32
    %10 = vector.broadcast %cst_6 : f32 to vector<16x1xf32>
    %11 = arith.mulf %7, %10 : vector<16x1xf32>
    %12 = arith.mulf %9, %9 : vector<16x1xf32>
    %13 = arith.subf %11, %12 : vector<16x1xf32>
    %cst_7 = arith.constant 0.000000e+00 : f32
    %14 = vector.broadcast %cst_7 : f32 to vector<16x1xf32>
    %15 = arith.maximumf %13, %14 : vector<16x1xf32>
    %c0_8 = arith.constant 0 : index
    %c0_9 = arith.constant 0 : index
    %16 = vector.load %arg2[%c0_8, %c0_9] : memref<16x1xf32, #tpu.memory_space<vmem>>, vector<16x1xf32>
    %cst_10 = arith.constant 9.99999974E-6 : f32
    %17 = vector.broadcast %cst_10 : f32 to vector<16x1xf32>
    %18 = arith.addf %15, %17 : vector<16x1xf32>
    %19 = math.rsqrt %18 : vector<16x1xf32>
    %20 = arith.mulf %16, %19 : vector<16x1xf32>
    %c0_11 = arith.constant 0 : index
    %c0_12 = arith.constant 0 : index
    %21 = vector.load %arg3[%c0_11, %c0_12] : memref<16x1xf32, #tpu.memory_space<vmem>>, vector<16x1xf32>
    %22 = arith.mulf %9, %20 : vector<16x1xf32>
    %23 = arith.subf %21, %22 : vector<16x1xf32>
    %24 = vector.broadcast %20 : vector<16x1xf32> to vector<16x128xf32>
    %25 = arith.mulf %2, %24 : vector<16x128xf32>
    %26 = vector.broadcast %23 : vector<16x1xf32> to vector<16x128xf32>
    %27 = arith.addf %25, %26 : vector<16x128xf32>
    %cst_13 = arith.constant 0.000000e+00 : f32
    %28 = vector.broadcast %cst_13 : f32 to vector<16x128xf32>
    %29 = arith.cmpf oge, %27, %28 : vector<16x128xf32>
    %cst_14 = arith.constant 2.000000e-01 : f32
    %30 = vector.broadcast %cst_14 : f32 to vector<16x128xf32>
    %31 = arith.mulf %30, %27 : vector<16x128xf32>
    %32 = arith.select %29, %27, %31 : vector<16x128xi1>, vector<16x128xf32>
    %c0_15 = arith.constant 0 : index
    %c0_16 = arith.constant 0 : index
    %33 = vector.load %arg4[%c0_15, %c0_16] : memref<16x128xf32, #tpu.memory_space<vmem>>, vector<16x128xf32>
    tpu.vector_store %arg4[%c0_15, %c0_16], %32 {strides = array<i32>} : memref<16x128xf32, #tpu.memory_space<vmem>>, vector<16x128xf32>,
    return
  }
}

module attributes {stable_mosaic.version = 11 : i64} {
  func.func @kernel(%arg0: memref<32x256xf32, #tpu.memory_space<vmem>>, %arg1: memref<256x128xf32, #tpu.memory_space<vmem>>, %arg2: memref<32x1xf32, #tpu.memory_space<vmem>>, %arg3: memref<32x1xf32, #tpu.memory_space<vmem>>, %arg4: memref<32x128xf32, #tpu.memory_space<vmem>>) attributes {dimension_semantics = [], scalar_prefetch = 0 : i64, scratch_operands = 0 : i64, tpu.core_type = #tpu.core_type<tc>} {
    %c0 = arith.constant 0 : index
    %c0_0 = arith.constant 0 : index
    %0 = vector.load %arg0[%c0, %c0_0] : memref<32x256xf32, #tpu.memory_space<vmem>>, vector<32x256xf32>
    %c0_1 = arith.constant 0 : index
    %c0_2 = arith.constant 0 : index
    %1 = vector.load %arg1[%c0_1, %c0_2] : memref<256x128xf32, #tpu.memory_space<vmem>>, vector<256x128xf32>
    %cst = arith.constant dense<0.000000e+00> : vector<32x128xf32>
    %2 = tpu.matmul %0, %1, %cst {dimension_numbers = #tpu.dot_dimension_numbers<[1], [0], [0], [1], [0, 0, 1, 1], [], []>} : vector<32x256xf32>, vector<256x128xf32>, vector<32x128xf32> -> vector<32x128xf32>
    %cst_3 = arith.constant dense<0.000000e+00> : vector<32xf32>
    %3 = vector.multi_reduction <add>, %2, %cst_3 [1] : vector<32x128xf32> to vector<32xf32>
    %4 = vector.shape_cast %3 : vector<32xf32> to vector<32x1xf32>
    %5 = arith.mulf %2, %2 : vector<32x128xf32>
    %cst_4 = arith.constant dense<0.000000e+00> : vector<32xf32>
    %6 = vector.multi_reduction <add>, %5, %cst_4 [1] : vector<32x128xf32> to vector<32xf32>
    %7 = vector.shape_cast %6 : vector<32xf32> to vector<32x1xf32>
    %cst_5 = arith.constant 0.055555556 : f32
    %8 = vector.broadcast %cst_5 : f32 to vector<32x1xf32>
    %9 = arith.mulf %4, %8 : vector<32x1xf32>
    %cst_6 = arith.constant 0.055555556 : f32
    %10 = vector.broadcast %cst_6 : f32 to vector<32x1xf32>
    %11 = arith.mulf %7, %10 : vector<32x1xf32>
    %12 = arith.mulf %9, %9 : vector<32x1xf32>
    %13 = arith.subf %11, %12 : vector<32x1xf32>
    %cst_7 = arith.constant 0.000000e+00 : f32
    %14 = vector.broadcast %cst_7 : f32 to vector<32x1xf32>
    %15 = arith.maximumf %13, %14 : vector<32x1xf32>
    %c0_8 = arith.constant 0 : index
    %c0_9 = arith.constant 0 : index
    %16 = vector.load %arg2[%c0_8, %c0_9] : memref<32x1xf32, #tpu.memory_space<vmem>>, vector<32x1xf32>
    %cst_10 = arith.constant 9.99999974E-6 : f32
    %17 = vector.broadcast %cst_10 : f32 to vector<32x1xf32>
    %18 = arith.addf %15, %17 : vector<32x1xf32>
    %19 = math.rsqrt %18 : vector<32x1xf32>
    %20 = arith.mulf %16, %19 : vector<32x1xf32>
    %c0_11 = arith.constant 0 : index
    %c0_12 = arith.constant 0 : index
    %21 = vector.load %arg3[%c0_11, %c0_12] : memref<32x1xf32, #tpu.memory_space<vmem>>, vector<32x1xf32>
    %22 = arith.mulf %9, %20 : vector<32x1xf32>
    %23 = arith.subf %21, %22 : vector<32x1xf32>
    %24 = vector.broadcast %20 : vector<32x1xf32> to vector<32x128xf32>
    %25 = arith.mulf %2, %24 : vector<32x128xf32>
    %26 = vector.broadcast %23 : vector<32x1xf32> to vector<32x128xf32>
    %27 = arith.addf %25, %26 : vector<32x128xf32>
    %cst_13 = arith.constant 0.000000e+00 : f32
    %28 = vector.broadcast %cst_13 : f32 to vector<32x128xf32>
    %29 = arith.cmpf oge, %27, %28 : vector<32x128xf32>
    %cst_14 = arith.constant 2.000000e-01 : f32
    %30 = vector.broadcast %cst_14 : f32 to vector<32x128xf32>
    %31 = arith.mulf %30, %27 : vector<32x128xf32>
    %32 = arith.select %29, %27, %31 : vector<32x128xi1>, vector<32x128xf32>
    %c0_15 = arith.constant 0 : index
    %c0_16 = arith.constant 0 : index
    %33 = vector.load %arg4[%c0_15, %c0_16] : memref<32x128xf32, #tpu.memory_space<vmem>>, vector<32x128xf32>
    tpu.vector_store %arg4[%c0_15, %c0_16], %32 {strides = array<i32>} : memref<32x128xf32, #tpu.memory_space<vmem>>, vector<32x128xf32>,
    return
  }
}

module attributes {stable_mosaic.version = 11 : i64} {
  func.func @kernel(%arg0: memref<64x512xf32, #tpu.memory_space<vmem>>, %arg1: memref<512x128xf32, #tpu.memory_space<vmem>>, %arg2: memref<64x1xf32, #tpu.memory_space<vmem>>, %arg3: memref<64x1xf32, #tpu.memory_space<vmem>>, %arg4: memref<64x128xf32, #tpu.memory_space<vmem>>) attributes {dimension_semantics = [], scalar_prefetch = 0 : i64, scratch_operands = 0 : i64, tpu.core_type = #tpu.core_type<tc>} {
    %c0 = arith.constant 0 : index
    %c0_0 = arith.constant 0 : index
    %0 = vector.load %arg0[%c0, %c0_0] : memref<64x512xf32, #tpu.memory_space<vmem>>, vector<64x512xf32>
    %c0_1 = arith.constant 0 : index
    %c0_2 = arith.constant 0 : index
    %1 = vector.load %arg1[%c0_1, %c0_2] : memref<512x128xf32, #tpu.memory_space<vmem>>, vector<512x128xf32>
    %cst = arith.constant dense<0.000000e+00> : vector<64x128xf32>
    %2 = tpu.matmul %0, %1, %cst {dimension_numbers = #tpu.dot_dimension_numbers<[1], [0], [0], [1], [0, 0, 1, 1], [], []>} : vector<64x512xf32>, vector<512x128xf32>, vector<64x128xf32> -> vector<64x128xf32>
    %cst_3 = arith.constant dense<0.000000e+00> : vector<64xf32>
    %3 = vector.multi_reduction <add>, %2, %cst_3 [1] : vector<64x128xf32> to vector<64xf32>
    %4 = vector.shape_cast %3 : vector<64xf32> to vector<64x1xf32>
    %5 = arith.mulf %2, %2 : vector<64x128xf32>
    %cst_4 = arith.constant dense<0.000000e+00> : vector<64xf32>
    %6 = vector.multi_reduction <add>, %5, %cst_4 [1] : vector<64x128xf32> to vector<64xf32>
    %7 = vector.shape_cast %6 : vector<64xf32> to vector<64x1xf32>
    %cst_5 = arith.constant 1.250000e-01 : f32
    %8 = vector.broadcast %cst_5 : f32 to vector<64x1xf32>
    %9 = arith.mulf %4, %8 : vector<64x1xf32>
    %cst_6 = arith.constant 1.250000e-01 : f32
    %10 = vector.broadcast %cst_6 : f32 to vector<64x1xf32>
    %11 = arith.mulf %7, %10 : vector<64x1xf32>
    %12 = arith.mulf %9, %9 : vector<64x1xf32>
    %13 = arith.subf %11, %12 : vector<64x1xf32>
    %cst_7 = arith.constant 0.000000e+00 : f32
    %14 = vector.broadcast %cst_7 : f32 to vector<64x1xf32>
    %15 = arith.maximumf %13, %14 : vector<64x1xf32>
    %c0_8 = arith.constant 0 : index
    %c0_9 = arith.constant 0 : index
    %16 = vector.load %arg2[%c0_8, %c0_9] : memref<64x1xf32, #tpu.memory_space<vmem>>, vector<64x1xf32>
    %cst_10 = arith.constant 9.99999974E-6 : f32
    %17 = vector.broadcast %cst_10 : f32 to vector<64x1xf32>
    %18 = arith.addf %15, %17 : vector<64x1xf32>
    %19 = math.rsqrt %18 : vector<64x1xf32>
    %20 = arith.mulf %16, %19 : vector<64x1xf32>
    %c0_11 = arith.constant 0 : index
    %c0_12 = arith.constant 0 : index
    %21 = vector.load %arg3[%c0_11, %c0_12] : memref<64x1xf32, #tpu.memory_space<vmem>>, vector<64x1xf32>
    %22 = arith.mulf %9, %20 : vector<64x1xf32>
    %23 = arith.subf %21, %22 : vector<64x1xf32>
    %24 = vector.broadcast %20 : vector<64x1xf32> to vector<64x128xf32>
    %25 = arith.mulf %2, %24 : vector<64x128xf32>
    %26 = vector.broadcast %23 : vector<64x1xf32> to vector<64x128xf32>
    %27 = arith.addf %25, %26 : vector<64x128xf32>
    %cst_13 = arith.constant 0.000000e+00 : f32
    %28 = vector.broadcast %cst_13 : f32 to vector<64x128xf32>
    %29 = arith.cmpf oge, %27, %28 : vector<64x128xf32>
    %cst_14 = arith.constant 2.000000e-01 : f32
    %30 = vector.broadcast %cst_14 : f32 to vector<64x128xf32>
    %31 = arith.mulf %30, %27 : vector<64x128xf32>
    %32 = arith.select %29, %27, %31 : vector<64x128xi1>, vector<64x128xf32>
    %c0_15 = arith.constant 0 : index
    %c0_16 = arith.constant 0 : index
    %33 = vector.load %arg4[%c0_15, %c0_16] : memref<64x128xf32, #tpu.memory_space<vmem>>, vector<64x128xf32>
    tpu.vector_store %arg4[%c0_15, %c0_16], %32 {strides = array<i32>} : memref<64x128xf32, #tpu.memory_space<vmem>>, vector<64x128xf32>,
    return
  }
}

module attributes {stable_mosaic.version = 11 : i64} {
  func.func @_final_conv_kernel(%arg0: memref<8x1024xf32, #tpu.memory_space<vmem>>, %arg1: memref<1024x128xf32, #tpu.memory_space<vmem>>, %arg2: memref<8x1xf32, #tpu.memory_space<vmem>>, %arg3: memref<8x128xf32, #tpu.memory_space<vmem>>) attributes {dimension_semantics = [], scalar_prefetch = 0 : i64, scratch_operands = 0 : i64, tpu.core_type = #tpu.core_type<tc>} {
    %c0 = arith.constant 0 : index
    %c0_0 = arith.constant 0 : index
    %0 = vector.load %arg0[%c0, %c0_0] : memref<8x1024xf32, #tpu.memory_space<vmem>>, vector<8x1024xf32>
    %c0_1 = arith.constant 0 : index
    %c0_2 = arith.constant 0 : index
    %1 = vector.load %arg1[%c0_1, %c0_2] : memref<1024x128xf32, #tpu.memory_space<vmem>>, vector<1024x128xf32>
    %cst = arith.constant dense<0.000000e+00> : vector<8x128xf32>
    %2 = tpu.matmul %0, %1, %cst {dimension_numbers = #tpu.dot_dimension_numbers<[1], [0], [0], [1], [0, 0, 1, 1], [], []>} : vector<8x1024xf32>, vector<1024x128xf32>, vector<8x128xf32> -> vector<8x128xf32>
    %c0_3 = arith.constant 0 : index
    %c0_4 = arith.constant 0 : index
    %3 = vector.load %arg2[%c0_3, %c0_4] : memref<8x1xf32, #tpu.memory_space<vmem>>, vector<8x1xf32>
    %4 = vector.broadcast %3 : vector<8x1xf32> to vector<8x128xf32>
    %5 = arith.addf %2, %4 : vector<8x128xf32>
    %c0_5 = arith.constant 0 : index
    %c0_6 = arith.constant 0 : index
    %6 = vector.load %arg3[%c0_5, %c0_6] : memref<8x128xf32, #tpu.memory_space<vmem>>, vector<8x128xf32>
    tpu.vector_store %arg3[%c0_5, %c0_6], %5 {strides = array<i32>} : memref<8x128xf32, #tpu.memory_space<vmem>>, vector<8x128xf32>,
    return
  }
}

module attributes {stable_mosaic.version = 11 : i64} {
  func.func @kernel(%arg0: memref<8x48xf32, #tpu.memory_space<vmem>>, %arg1: memref<48x1152xf32, #tpu.memory_space<vmem>>, %arg2: memref<8x1xf32, #tpu.memory_space<vmem>>, %arg3: memref<8x1xf32, #tpu.memory_space<vmem>>, %arg4: memref<8x1152xf32, #tpu.memory_space<vmem>>) attributes {dimension_semantics = [], scalar_prefetch = 0 : i64, scratch_operands = 0 : i64, tpu.core_type = #tpu.core_type<tc>} {
    %c0 = arith.constant 0 : index
    %c0_0 = arith.constant 0 : index
    %0 = vector.load %arg0[%c0, %c0_0] : memref<8x48xf32, #tpu.memory_space<vmem>>, vector<8x48xf32>
    %c0_1 = arith.constant 0 : index
    %c0_2 = arith.constant 0 : index
    %1 = vector.load %arg1[%c0_1, %c0_2] : memref<48x1152xf32, #tpu.memory_space<vmem>>, vector<48x1152xf32>
    %cst = arith.constant dense<0.000000e+00> : vector<8x1152xf32>
    %2 = tpu.matmul %0, %1, %cst {dimension_numbers = #tpu.dot_dimension_numbers<[1], [0], [0], [1], [0, 0, 1, 1], [], []>} : vector<8x48xf32>, vector<48x1152xf32>, vector<8x1152xf32> -> vector<8x1152xf32>
    %cst_3 = arith.constant dense<0.000000e+00> : vector<8xf32>
    %3 = vector.multi_reduction <add>, %2, %cst_3 [1] : vector<8x1152xf32> to vector<8xf32>
    %4 = vector.shape_cast %3 : vector<8xf32> to vector<8x1xf32>
    %5 = arith.mulf %2, %2 : vector<8x1152xf32>
    %cst_4 = arith.constant dense<0.000000e+00> : vector<8xf32>
    %6 = vector.multi_reduction <add>, %5, %cst_4 [1] : vector<8x1152xf32> to vector<8xf32>
    %7 = vector.shape_cast %6 : vector<8xf32> to vector<8x1xf32>
    %cst_5 = arith.constant 8.68055562E-4 : f32
    %8 = vector.broadcast %cst_5 : f32 to vector<8x1xf32>
    %9 = arith.mulf %4, %8 : vector<8x1xf32>
    %cst_6 = arith.constant 8.68055562E-4 : f32
    %10 = vector.broadcast %cst_6 : f32 to vector<8x1xf32>
    %11 = arith.mulf %7, %10 : vector<8x1xf32>
    %12 = arith.mulf %9, %9 : vector<8x1xf32>
    %13 = arith.subf %11, %12 : vector<8x1xf32>
    %cst_7 = arith.constant 0.000000e+00 : f32
    %14 = vector.broadcast %cst_7 : f32 to vector<8x1xf32>
    %15 = arith.maximumf %13, %14 : vector<8x1xf32>
    %c0_8 = arith.constant 0 : index
    %c0_9 = arith.constant 0 : index
    %16 = vector.load %arg2[%c0_8, %c0_9] : memref<8x1xf32, #tpu.memory_space<vmem>>, vector<8x1xf32>
    %cst_10 = arith.constant 9.99999974E-6 : f32
    %17 = vector.broadcast %cst_10 : f32 to vector<8x1xf32>
    %18 = arith.addf %15, %17 : vector<8x1xf32>
    %19 = math.rsqrt %18 : vector<8x1xf32>
    %20 = arith.mulf %16, %19 : vector<8x1xf32>
    %c0_11 = arith.constant 0 : index
    %c0_12 = arith.constant 0 : index
    %21 = vector.load %arg3[%c0_11, %c0_12] : memref<8x1xf32, #tpu.memory_space<vmem>>, vector<8x1xf32>
    %22 = arith.mulf %9, %20 : vector<8x1xf32>
    %23 = arith.subf %21, %22 : vector<8x1xf32>
    %24 = vector.broadcast %20 : vector<8x1xf32> to vector<8x1152xf32>
    %25 = arith.mulf %2, %24 : vector<8x1152xf32>
    %26 = vector.broadcast %23 : vector<8x1xf32> to vector<8x1152xf32>
    %27 = arith.addf %25, %26 : vector<8x1152xf32>
    %cst_13 = arith.constant 0.000000e+00 : f32
    %28 = vector.broadcast %cst_13 : f32 to vector<8x1152xf32>
    %29 = arith.cmpf oge, %27, %28 : vector<8x1152xf32>
    %cst_14 = arith.constant 2.000000e-01 : f32
    %30 = vector.broadcast %cst_14 : f32 to vector<8x1152xf32>
    %31 = arith.mulf %30, %27 : vector<8x1152xf32>
    %32 = arith.select %29, %27, %31 : vector<8x1152xi1>, vector<8x1152xf32>
    %c0_15 = arith.constant 0 : index
    %c0_16 = arith.constant 0 : index
    %33 = vector.load %arg4[%c0_15, %c0_16] : memref<8x1152xf32, #tpu.memory_space<vmem>>, vector<8x1152xf32>
    tpu.vector_store %arg4[%c0_15, %c0_16], %32 {strides = array<i32>} : memref<8x1152xf32, #tpu.memory_space<vmem>>, vector<8x1152xf32>,
    return
  }
}

module attributes {stable_mosaic.version = 11 : i64} {
  func.func @kernel(%arg0: memref<16x128xf32, #tpu.memory_space<vmem>>, %arg1: memref<128x384xf32, #tpu.memory_space<vmem>>, %arg2: memref<16x1xf32, #tpu.memory_space<vmem>>, %arg3: memref<16x1xf32, #tpu.memory_space<vmem>>, %arg4: memref<16x384xf32, #tpu.memory_space<vmem>>) attributes {dimension_semantics = [], scalar_prefetch = 0 : i64, scratch_operands = 0 : i64, tpu.core_type = #tpu.core_type<tc>} {
    %c0 = arith.constant 0 : index
    %c0_0 = arith.constant 0 : index
    %0 = vector.load %arg0[%c0, %c0_0] : memref<16x128xf32, #tpu.memory_space<vmem>>, vector<16x128xf32>
    %c0_1 = arith.constant 0 : index
    %c0_2 = arith.constant 0 : index
    %1 = vector.load %arg1[%c0_1, %c0_2] : memref<128x384xf32, #tpu.memory_space<vmem>>, vector<128x384xf32>
    %cst = arith.constant dense<0.000000e+00> : vector<16x384xf32>
    %2 = tpu.matmul %0, %1, %cst {dimension_numbers = #tpu.dot_dimension_numbers<[1], [0], [0], [1], [0, 0, 1, 1], [], []>} : vector<16x128xf32>, vector<128x384xf32>, vector<16x384xf32> -> vector<16x384xf32>
    %cst_3 = arith.constant dense<0.000000e+00> : vector<16xf32>
    %3 = vector.multi_reduction <add>, %2, %cst_3 [1] : vector<16x384xf32> to vector<16xf32>
    %4 = vector.shape_cast %3 : vector<16xf32> to vector<16x1xf32>
    %5 = arith.mulf %2, %2 : vector<16x384xf32>
    %cst_4 = arith.constant dense<0.000000e+00> : vector<16xf32>
    %6 = vector.multi_reduction <add>, %5, %cst_4 [1] : vector<16x384xf32> to vector<16xf32>
    %7 = vector.shape_cast %6 : vector<16xf32> to vector<16x1xf32>
    %cst_5 = arith.constant 0.00347222225 : f32
    %8 = vector.broadcast %cst_5 : f32 to vector<16x1xf32>
    %9 = arith.mulf %4, %8 : vector<16x1xf32>
    %cst_6 = arith.constant 0.00347222225 : f32
    %10 = vector.broadcast %cst_6 : f32 to vector<16x1xf32>
    %11 = arith.mulf %7, %10 : vector<16x1xf32>
    %12 = arith.mulf %9, %9 : vector<16x1xf32>
    %13 = arith.subf %11, %12 : vector<16x1xf32>
    %cst_7 = arith.constant 0.000000e+00 : f32
    %14 = vector.broadcast %cst_7 : f32 to vector<16x1xf32>
    %15 = arith.maximumf %13, %14 : vector<16x1xf32>
    %c0_8 = arith.constant 0 : index
    %c0_9 = arith.constant 0 : index
    %16 = vector.load %arg2[%c0_8, %c0_9] : memref<16x1xf32, #tpu.memory_space<vmem>>, vector<16x1xf32>
    %cst_10 = arith.constant 9.99999974E-6 : f32
    %17 = vector.broadcast %cst_10 : f32 to vector<16x1xf32>
    %18 = arith.addf %15, %17 : vector<16x1xf32>
    %19 = math.rsqrt %18 : vector<16x1xf32>
    %20 = arith.mulf %16, %19 : vector<16x1xf32>
    %c0_11 = arith.constant 0 : index
    %c0_12 = arith.constant 0 : index
    %21 = vector.load %arg3[%c0_11, %c0_12] : memref<16x1xf32, #tpu.memory_space<vmem>>, vector<16x1xf32>
    %22 = arith.mulf %9, %20 : vector<16x1xf32>
    %23 = arith.subf %21, %22 : vector<16x1xf32>
    %24 = vector.broadcast %20 : vector<16x1xf32> to vector<16x384xf32>
    %25 = arith.mulf %2, %24 : vector<16x384xf32>
    %26 = vector.broadcast %23 : vector<16x1xf32> to vector<16x384xf32>
    %27 = arith.addf %25, %26 : vector<16x384xf32>
    %cst_13 = arith.constant 0.000000e+00 : f32
    %28 = vector.broadcast %cst_13 : f32 to vector<16x384xf32>
    %29 = arith.cmpf oge, %27, %28 : vector<16x384xf32>
    %cst_14 = arith.constant 2.000000e-01 : f32
    %30 = vector.broadcast %cst_14 : f32 to vector<16x384xf32>
    %31 = arith.mulf %30, %27 : vector<16x384xf32>
    %32 = arith.select %29, %27, %31 : vector<16x384xi1>, vector<16x384xf32>
    %c0_15 = arith.constant 0 : index
    %c0_16 = arith.constant 0 : index
    %33 = vector.load %arg4[%c0_15, %c0_16] : memref<16x384xf32, #tpu.memory_space<vmem>>, vector<16x384xf32>
    tpu.vector_store %arg4[%c0_15, %c0_16], %32 {strides = array<i32>} : memref<16x384xf32, #tpu.memory_space<vmem>>, vector<16x384xf32>,
    return
  }
}

module attributes {stable_mosaic.version = 11 : i64} {
  func.func @kernel(%arg0: memref<32x256xf32, #tpu.memory_space<vmem>>, %arg1: memref<256x128xf32, #tpu.memory_space<vmem>>, %arg2: memref<32x1xf32, #tpu.memory_space<vmem>>, %arg3: memref<32x1xf32, #tpu.memory_space<vmem>>, %arg4: memref<32x128xf32, #tpu.memory_space<vmem>>) attributes {dimension_semantics = [], scalar_prefetch = 0 : i64, scratch_operands = 0 : i64, tpu.core_type = #tpu.core_type<tc>} {
    %c0 = arith.constant 0 : index
    %c0_0 = arith.constant 0 : index
    %0 = vector.load %arg0[%c0, %c0_0] : memref<32x256xf32, #tpu.memory_space<vmem>>, vector<32x256xf32>
    %c0_1 = arith.constant 0 : index
    %c0_2 = arith.constant 0 : index
    %1 = vector.load %arg1[%c0_1, %c0_2] : memref<256x128xf32, #tpu.memory_space<vmem>>, vector<256x128xf32>
    %cst = arith.constant dense<0.000000e+00> : vector<32x128xf32>
    %2 = tpu.matmul %0, %1, %cst {dimension_numbers = #tpu.dot_dimension_numbers<[1], [0], [0], [1], [0, 0, 1, 1], [], []>} : vector<32x256xf32>, vector<256x128xf32>, vector<32x128xf32> -> vector<32x128xf32>
    %cst_3 = arith.constant dense<0.000000e+00> : vector<32xf32>
    %3 = vector.multi_reduction <add>, %2, %cst_3 [1] : vector<32x128xf32> to vector<32xf32>
    %4 = vector.shape_cast %3 : vector<32xf32> to vector<32x1xf32>
    %5 = arith.mulf %2, %2 : vector<32x128xf32>
    %cst_4 = arith.constant dense<0.000000e+00> : vector<32xf32>
    %6 = vector.multi_reduction <add>, %5, %cst_4 [1] : vector<32x128xf32> to vector<32xf32>
    %7 = vector.shape_cast %6 : vector<32xf32> to vector<32x1xf32>
    %cst_5 = arith.constant 0.013888889 : f32
    %8 = vector.broadcast %cst_5 : f32 to vector<32x1xf32>
    %9 = arith.mulf %4, %8 : vector<32x1xf32>
    %cst_6 = arith.constant 0.013888889 : f32
    %10 = vector.broadcast %cst_6 : f32 to vector<32x1xf32>
    %11 = arith.mulf %7, %10 : vector<32x1xf32>
    %12 = arith.mulf %9, %9 : vector<32x1xf32>
    %13 = arith.subf %11, %12 : vector<32x1xf32>
    %cst_7 = arith.constant 0.000000e+00 : f32
    %14 = vector.broadcast %cst_7 : f32 to vector<32x1xf32>
    %15 = arith.maximumf %13, %14 : vector<32x1xf32>
    %c0_8 = arith.constant 0 : index
    %c0_9 = arith.constant 0 : index
    %16 = vector.load %arg2[%c0_8, %c0_9] : memref<32x1xf32, #tpu.memory_space<vmem>>, vector<32x1xf32>
    %cst_10 = arith.constant 9.99999974E-6 : f32
    %17 = vector.broadcast %cst_10 : f32 to vector<32x1xf32>
    %18 = arith.addf %15, %17 : vector<32x1xf32>
    %19 = math.rsqrt %18 : vector<32x1xf32>
    %20 = arith.mulf %16, %19 : vector<32x1xf32>
    %c0_11 = arith.constant 0 : index
    %c0_12 = arith.constant 0 : index
    %21 = vector.load %arg3[%c0_11, %c0_12] : memref<32x1xf32, #tpu.memory_space<vmem>>, vector<32x1xf32>
    %22 = arith.mulf %9, %20 : vector<32x1xf32>
    %23 = arith.subf %21, %22 : vector<32x1xf32>
    %24 = vector.broadcast %20 : vector<32x1xf32> to vector<32x128xf32>
    %25 = arith.mulf %2, %24 : vector<32x128xf32>
    %26 = vector.broadcast %23 : vector<32x1xf32> to vector<32x128xf32>
    %27 = arith.addf %25, %26 : vector<32x128xf32>
    %cst_13 = arith.constant 0.000000e+00 : f32
    %28 = vector.broadcast %cst_13 : f32 to vector<32x128xf32>
    %29 = arith.cmpf oge, %27, %28 : vector<32x128xf32>
    %cst_14 = arith.constant 2.000000e-01 : f32
    %30 = vector.broadcast %cst_14 : f32 to vector<32x128xf32>
    %31 = arith.mulf %30, %27 : vector<32x128xf32>
    %32 = arith.select %29, %27, %31 : vector<32x128xi1>, vector<32x128xf32>
    %c0_15 = arith.constant 0 : index
    %c0_16 = arith.constant 0 : index
    %33 = vector.load %arg4[%c0_15, %c0_16] : memref<32x128xf32, #tpu.memory_space<vmem>>, vector<32x128xf32>
    tpu.vector_store %arg4[%c0_15, %c0_16], %32 {strides = array<i32>} : memref<32x128xf32, #tpu.memory_space<vmem>>, vector<32x128xf32>,
    return
  }
}

module attributes {stable_mosaic.version = 11 : i64} {
  func.func @kernel(%arg0: memref<64x512xf32, #tpu.memory_space<vmem>>, %arg1: memref<512x128xf32, #tpu.memory_space<vmem>>, %arg2: memref<64x1xf32, #tpu.memory_space<vmem>>, %arg3: memref<64x1xf32, #tpu.memory_space<vmem>>, %arg4: memref<64x128xf32, #tpu.memory_space<vmem>>) attributes {dimension_semantics = [], scalar_prefetch = 0 : i64, scratch_operands = 0 : i64, tpu.core_type = #tpu.core_type<tc>} {
    %c0 = arith.constant 0 : index
    %c0_0 = arith.constant 0 : index
    %0 = vector.load %arg0[%c0, %c0_0] : memref<64x512xf32, #tpu.memory_space<vmem>>, vector<64x512xf32>
    %c0_1 = arith.constant 0 : index
    %c0_2 = arith.constant 0 : index
    %1 = vector.load %arg1[%c0_1, %c0_2] : memref<512x128xf32, #tpu.memory_space<vmem>>, vector<512x128xf32>
    %cst = arith.constant dense<0.000000e+00> : vector<64x128xf32>
    %2 = tpu.matmul %0, %1, %cst {dimension_numbers = #tpu.dot_dimension_numbers<[1], [0], [0], [1], [0, 0, 1, 1], [], []>} : vector<64x512xf32>, vector<512x128xf32>, vector<64x128xf32> -> vector<64x128xf32>
    %cst_3 = arith.constant dense<0.000000e+00> : vector<64xf32>
    %3 = vector.multi_reduction <add>, %2, %cst_3 [1] : vector<64x128xf32> to vector<64xf32>
    %4 = vector.shape_cast %3 : vector<64xf32> to vector<64x1xf32>
    %5 = arith.mulf %2, %2 : vector<64x128xf32>
    %cst_4 = arith.constant dense<0.000000e+00> : vector<64xf32>
    %6 = vector.multi_reduction <add>, %5, %cst_4 [1] : vector<64x128xf32> to vector<64xf32>
    %7 = vector.shape_cast %6 : vector<64xf32> to vector<64x1xf32>
    %cst_5 = arith.constant 2.000000e-02 : f32
    %8 = vector.broadcast %cst_5 : f32 to vector<64x1xf32>
    %9 = arith.mulf %4, %8 : vector<64x1xf32>
    %cst_6 = arith.constant 2.000000e-02 : f32
    %10 = vector.broadcast %cst_6 : f32 to vector<64x1xf32>
    %11 = arith.mulf %7, %10 : vector<64x1xf32>
    %12 = arith.mulf %9, %9 : vector<64x1xf32>
    %13 = arith.subf %11, %12 : vector<64x1xf32>
    %cst_7 = arith.constant 0.000000e+00 : f32
    %14 = vector.broadcast %cst_7 : f32 to vector<64x1xf32>
    %15 = arith.maximumf %13, %14 : vector<64x1xf32>
    %c0_8 = arith.constant 0 : index
    %c0_9 = arith.constant 0 : index
    %16 = vector.load %arg2[%c0_8, %c0_9] : memref<64x1xf32, #tpu.memory_space<vmem>>, vector<64x1xf32>
    %cst_10 = arith.constant 9.99999974E-6 : f32
    %17 = vector.broadcast %cst_10 : f32 to vector<64x1xf32>
    %18 = arith.addf %15, %17 : vector<64x1xf32>
    %19 = math.rsqrt %18 : vector<64x1xf32>
    %20 = arith.mulf %16, %19 : vector<64x1xf32>
    %c0_11 = arith.constant 0 : index
    %c0_12 = arith.constant 0 : index
    %21 = vector.load %arg3[%c0_11, %c0_12] : memref<64x1xf32, #tpu.memory_space<vmem>>, vector<64x1xf32>
    %22 = arith.mulf %9, %20 : vector<64x1xf32>
    %23 = arith.subf %21, %22 : vector<64x1xf32>
    %24 = vector.broadcast %20 : vector<64x1xf32> to vector<64x128xf32>
    %25 = arith.mulf %2, %24 : vector<64x128xf32>
    %26 = vector.broadcast %23 : vector<64x1xf32> to vector<64x128xf32>
    %27 = arith.addf %25, %26 : vector<64x128xf32>
    %cst_13 = arith.constant 0.000000e+00 : f32
    %28 = vector.broadcast %cst_13 : f32 to vector<64x128xf32>
    %29 = arith.cmpf oge, %27, %28 : vector<64x128xf32>
    %cst_14 = arith.constant 2.000000e-01 : f32
    %30 = vector.broadcast %cst_14 : f32 to vector<64x128xf32>
    %31 = arith.mulf %30, %27 : vector<64x128xf32>
    %32 = arith.select %29, %27, %31 : vector<64x128xi1>, vector<64x128xf32>
    %c0_15 = arith.constant 0 : index
    %c0_16 = arith.constant 0 : index
    %33 = vector.load %arg4[%c0_15, %c0_16] : memref<64x128xf32, #tpu.memory_space<vmem>>, vector<64x128xf32>
    tpu.vector_store %arg4[%c0_15, %c0_16], %32 {strides = array<i32>} : memref<64x128xf32, #tpu.memory_space<vmem>>, vector<64x128xf32>,
    return
  }
}

module attributes {stable_mosaic.version = 11 : i64} {
  func.func @kernel(%arg0: memref<8x48xf32, #tpu.memory_space<vmem>>, %arg1: memref<48x4608xf32, #tpu.memory_space<vmem>>, %arg2: memref<8x1xf32, #tpu.memory_space<vmem>>, %arg3: memref<8x1xf32, #tpu.memory_space<vmem>>, %arg4: memref<8x4608xf32, #tpu.memory_space<vmem>>) attributes {dimension_semantics = [], scalar_prefetch = 0 : i64, scratch_operands = 0 : i64, tpu.core_type = #tpu.core_type<tc>} {
    %c0 = arith.constant 0 : index
    %c0_0 = arith.constant 0 : index
    %0 = vector.load %arg0[%c0, %c0_0] : memref<8x48xf32, #tpu.memory_space<vmem>>, vector<8x48xf32>
    %c0_1 = arith.constant 0 : index
    %c0_2 = arith.constant 0 : index
    %1 = vector.load %arg1[%c0_1, %c0_2] : memref<48x4608xf32, #tpu.memory_space<vmem>>, vector<48x4608xf32>
    %cst = arith.constant dense<0.000000e+00> : vector<8x4608xf32>
    %2 = tpu.matmul %0, %1, %cst {dimension_numbers = #tpu.dot_dimension_numbers<[1], [0], [0], [1], [0, 0, 1, 1], [], []>} : vector<8x48xf32>, vector<48x4608xf32>, vector<8x4608xf32> -> vector<8x4608xf32>
    %cst_3 = arith.constant dense<0.000000e+00> : vector<8xf32>
    %3 = vector.multi_reduction <add>, %2, %cst_3 [1] : vector<8x4608xf32> to vector<8xf32>
    %4 = vector.shape_cast %3 : vector<8xf32> to vector<8x1xf32>
    %5 = arith.mulf %2, %2 : vector<8x4608xf32>
    %cst_4 = arith.constant dense<0.000000e+00> : vector<8xf32>
    %6 = vector.multi_reduction <add>, %5, %cst_4 [1] : vector<8x4608xf32> to vector<8xf32>
    %7 = vector.shape_cast %6 : vector<8xf32> to vector<8x1xf32>
    %cst_5 = arith.constant 2.17013891E-4 : f32
    %8 = vector.broadcast %cst_5 : f32 to vector<8x1xf32>
    %9 = arith.mulf %4, %8 : vector<8x1xf32>
    %cst_6 = arith.constant 2.17013891E-4 : f32
    %10 = vector.broadcast %cst_6 : f32 to vector<8x1xf32>
    %11 = arith.mulf %7, %10 : vector<8x1xf32>
    %12 = arith.mulf %9, %9 : vector<8x1xf32>
    %13 = arith.subf %11, %12 : vector<8x1xf32>
    %cst_7 = arith.constant 0.000000e+00 : f32
    %14 = vector.broadcast %cst_7 : f32 to vector<8x1xf32>
    %15 = arith.maximumf %13, %14 : vector<8x1xf32>
    %c0_8 = arith.constant 0 : index
    %c0_9 = arith.constant 0 : index
    %16 = vector.load %arg2[%c0_8, %c0_9] : memref<8x1xf32, #tpu.memory_space<vmem>>, vector<8x1xf32>
    %cst_10 = arith.constant 9.99999974E-6 : f32
    %17 = vector.broadcast %cst_10 : f32 to vector<8x1xf32>
    %18 = arith.addf %15, %17 : vector<8x1xf32>
    %19 = math.rsqrt %18 : vector<8x1xf32>
    %20 = arith.mulf %16, %19 : vector<8x1xf32>
    %c0_11 = arith.constant 0 : index
    %c0_12 = arith.constant 0 : index
    %21 = vector.load %arg3[%c0_11, %c0_12] : memref<8x1xf32, #tpu.memory_space<vmem>>, vector<8x1xf32>
    %22 = arith.mulf %9, %20 : vector<8x1xf32>
    %23 = arith.subf %21, %22 : vector<8x1xf32>
    %24 = vector.broadcast %20 : vector<8x1xf32> to vector<8x4608xf32>
    %25 = arith.mulf %2, %24 : vector<8x4608xf32>
    %26 = vector.broadcast %23 : vector<8x1xf32> to vector<8x4608xf32>
    %27 = arith.addf %25, %26 : vector<8x4608xf32>
    %cst_13 = arith.constant 0.000000e+00 : f32
    %28 = vector.broadcast %cst_13 : f32 to vector<8x4608xf32>
    %29 = arith.cmpf oge, %27, %28 : vector<8x4608xf32>
    %cst_14 = arith.constant 2.000000e-01 : f32
    %30 = vector.broadcast %cst_14 : f32 to vector<8x4608xf32>
    %31 = arith.mulf %30, %27 : vector<8x4608xf32>
    %32 = arith.select %29, %27, %31 : vector<8x4608xi1>, vector<8x4608xf32>
    %c0_15 = arith.constant 0 : index
    %c0_16 = arith.constant 0 : index
    %33 = vector.load %arg4[%c0_15, %c0_16] : memref<8x4608xf32, #tpu.memory_space<vmem>>, vector<8x4608xf32>
    tpu.vector_store %arg4[%c0_15, %c0_16], %32 {strides = array<i32>} : memref<8x4608xf32, #tpu.memory_space<vmem>>, vector<8x4608xf32>,
    return
  }
}

module attributes {stable_mosaic.version = 11 : i64} {
  func.func @kernel(%arg0: memref<16x128xf32, #tpu.memory_space<vmem>>, %arg1: memref<128x1152xf32, #tpu.memory_space<vmem>>, %arg2: memref<16x1xf32, #tpu.memory_space<vmem>>, %arg3: memref<16x1xf32, #tpu.memory_space<vmem>>, %arg4: memref<16x1152xf32, #tpu.memory_space<vmem>>) attributes {dimension_semantics = [], scalar_prefetch = 0 : i64, scratch_operands = 0 : i64, tpu.core_type = #tpu.core_type<tc>} {
    %c0 = arith.constant 0 : index
    %c0_0 = arith.constant 0 : index
    %0 = vector.load %arg0[%c0, %c0_0] : memref<16x128xf32, #tpu.memory_space<vmem>>, vector<16x128xf32>
    %c0_1 = arith.constant 0 : index
    %c0_2 = arith.constant 0 : index
    %1 = vector.load %arg1[%c0_1, %c0_2] : memref<128x1152xf32, #tpu.memory_space<vmem>>, vector<128x1152xf32>
    %cst = arith.constant dense<0.000000e+00> : vector<16x1152xf32>
    %2 = tpu.matmul %0, %1, %cst {dimension_numbers = #tpu.dot_dimension_numbers<[1], [0], [0], [1], [0, 0, 1, 1], [], []>} : vector<16x128xf32>, vector<128x1152xf32>, vector<16x1152xf32> -> vector<16x1152xf32>
    %cst_3 = arith.constant dense<0.000000e+00> : vector<16xf32>
    %3 = vector.multi_reduction <add>, %2, %cst_3 [1] : vector<16x1152xf32> to vector<16xf32>
    %4 = vector.shape_cast %3 : vector<16xf32> to vector<16x1xf32>
    %5 = arith.mulf %2, %2 : vector<16x1152xf32>
    %cst_4 = arith.constant dense<0.000000e+00> : vector<16xf32>
    %6 = vector.multi_reduction <add>, %5, %cst_4 [1] : vector<16x1152xf32> to vector<16xf32>
    %7 = vector.shape_cast %6 : vector<16xf32> to vector<16x1xf32>
    %cst_5 = arith.constant 8.68055562E-4 : f32
    %8 = vector.broadcast %cst_5 : f32 to vector<16x1xf32>
    %9 = arith.mulf %4, %8 : vector<16x1xf32>
    %cst_6 = arith.constant 8.68055562E-4 : f32
    %10 = vector.broadcast %cst_6 : f32 to vector<16x1xf32>
    %11 = arith.mulf %7, %10 : vector<16x1xf32>
    %12 = arith.mulf %9, %9 : vector<16x1xf32>
    %13 = arith.subf %11, %12 : vector<16x1xf32>
    %cst_7 = arith.constant 0.000000e+00 : f32
    %14 = vector.broadcast %cst_7 : f32 to vector<16x1xf32>
    %15 = arith.maximumf %13, %14 : vector<16x1xf32>
    %c0_8 = arith.constant 0 : index
    %c0_9 = arith.constant 0 : index
    %16 = vector.load %arg2[%c0_8, %c0_9] : memref<16x1xf32, #tpu.memory_space<vmem>>, vector<16x1xf32>
    %cst_10 = arith.constant 9.99999974E-6 : f32
    %17 = vector.broadcast %cst_10 : f32 to vector<16x1xf32>
    %18 = arith.addf %15, %17 : vector<16x1xf32>
    %19 = math.rsqrt %18 : vector<16x1xf32>
    %20 = arith.mulf %16, %19 : vector<16x1xf32>
    %c0_11 = arith.constant 0 : index
    %c0_12 = arith.constant 0 : index
    %21 = vector.load %arg3[%c0_11, %c0_12] : memref<16x1xf32, #tpu.memory_space<vmem>>, vector<16x1xf32>
    %22 = arith.mulf %9, %20 : vector<16x1xf32>
    %23 = arith.subf %21, %22 : vector<16x1xf32>
    %24 = vector.broadcast %20 : vector<16x1xf32> to vector<16x1152xf32>
    %25 = arith.mulf %2, %24 : vector<16x1152xf32>
    %26 = vector.broadcast %23 : vector<16x1xf32> to vector<16x1152xf32>
    %27 = arith.addf %25, %26 : vector<16x1152xf32>
    %cst_13 = arith.constant 0.000000e+00 : f32
    %28 = vector.broadcast %cst_13 : f32 to vector<16x1152xf32>
    %29 = arith.cmpf oge, %27, %28 : vector<16x1152xf32>
    %cst_14 = arith.constant 2.000000e-01 : f32
    %30 = vector.broadcast %cst_14 : f32 to vector<16x1152xf32>
    %31 = arith.mulf %30, %27 : vector<16x1152xf32>
    %32 = arith.select %29, %27, %31 : vector<16x1152xi1>, vector<16x1152xf32>
    %c0_15 = arith.constant 0 : index
    %c0_16 = arith.constant 0 : index
    %33 = vector.load %arg4[%c0_15, %c0_16] : memref<16x1152xf32, #tpu.memory_space<vmem>>, vector<16x1152xf32>
    tpu.vector_store %arg4[%c0_15, %c0_16], %32 {strides = array<i32>} : memref<16x1152xf32, #tpu.memory_space<vmem>>, vector<16x1152xf32>,
    return
  }
}

module attributes {stable_mosaic.version = 11 : i64} {
  func.func @kernel(%arg0: memref<32x256xf32, #tpu.memory_space<vmem>>, %arg1: memref<256x384xf32, #tpu.memory_space<vmem>>, %arg2: memref<32x1xf32, #tpu.memory_space<vmem>>, %arg3: memref<32x1xf32, #tpu.memory_space<vmem>>, %arg4: memref<32x384xf32, #tpu.memory_space<vmem>>) attributes {dimension_semantics = [], scalar_prefetch = 0 : i64, scratch_operands = 0 : i64, tpu.core_type = #tpu.core_type<tc>} {
    %c0 = arith.constant 0 : index
    %c0_0 = arith.constant 0 : index
    %0 = vector.load %arg0[%c0, %c0_0] : memref<32x256xf32, #tpu.memory_space<vmem>>, vector<32x256xf32>
    %c0_1 = arith.constant 0 : index
    %c0_2 = arith.constant 0 : index
    %1 = vector.load %arg1[%c0_1, %c0_2] : memref<256x384xf32, #tpu.memory_space<vmem>>, vector<256x384xf32>
    %cst = arith.constant dense<0.000000e+00> : vector<32x384xf32>
    %2 = tpu.matmul %0, %1, %cst {dimension_numbers = #tpu.dot_dimension_numbers<[1], [0], [0], [1], [0, 0, 1, 1], [], []>} : vector<32x256xf32>, vector<256x384xf32>, vector<32x384xf32> -> vector<32x384xf32>
    %cst_3 = arith.constant dense<0.000000e+00> : vector<32xf32>
    %3 = vector.multi_reduction <add>, %2, %cst_3 [1] : vector<32x384xf32> to vector<32xf32>
    %4 = vector.shape_cast %3 : vector<32xf32> to vector<32x1xf32>
    %5 = arith.mulf %2, %2 : vector<32x384xf32>
    %cst_4 = arith.constant dense<0.000000e+00> : vector<32xf32>
    %6 = vector.multi_reduction <add>, %5, %cst_4 [1] : vector<32x384xf32> to vector<32xf32>
    %7 = vector.shape_cast %6 : vector<32xf32> to vector<32x1xf32>
    %cst_5 = arith.constant 0.00347222225 : f32
    %8 = vector.broadcast %cst_5 : f32 to vector<32x1xf32>
    %9 = arith.mulf %4, %8 : vector<32x1xf32>
    %cst_6 = arith.constant 0.00347222225 : f32
    %10 = vector.broadcast %cst_6 : f32 to vector<32x1xf32>
    %11 = arith.mulf %7, %10 : vector<32x1xf32>
    %12 = arith.mulf %9, %9 : vector<32x1xf32>
    %13 = arith.subf %11, %12 : vector<32x1xf32>
    %cst_7 = arith.constant 0.000000e+00 : f32
    %14 = vector.broadcast %cst_7 : f32 to vector<32x1xf32>
    %15 = arith.maximumf %13, %14 : vector<32x1xf32>
    %c0_8 = arith.constant 0 : index
    %c0_9 = arith.constant 0 : index
    %16 = vector.load %arg2[%c0_8, %c0_9] : memref<32x1xf32, #tpu.memory_space<vmem>>, vector<32x1xf32>
    %cst_10 = arith.constant 9.99999974E-6 : f32
    %17 = vector.broadcast %cst_10 : f32 to vector<32x1xf32>
    %18 = arith.addf %15, %17 : vector<32x1xf32>
    %19 = math.rsqrt %18 : vector<32x1xf32>
    %20 = arith.mulf %16, %19 : vector<32x1xf32>
    %c0_11 = arith.constant 0 : index
    %c0_12 = arith.constant 0 : index
    %21 = vector.load %arg3[%c0_11, %c0_12] : memref<32x1xf32, #tpu.memory_space<vmem>>, vector<32x1xf32>
    %22 = arith.mulf %9, %20 : vector<32x1xf32>
    %23 = arith.subf %21, %22 : vector<32x1xf32>
    %24 = vector.broadcast %20 : vector<32x1xf32> to vector<32x384xf32>
    %25 = arith.mulf %2, %24 : vector<32x384xf32>
    %26 = vector.broadcast %23 : vector<32x1xf32> to vector<32x384xf32>
    %27 = arith.addf %25, %26 : vector<32x384xf32>
    %cst_13 = arith.constant 0.000000e+00 : f32
    %28 = vector.broadcast %cst_13 : f32 to vector<32x384xf32>
    %29 = arith.cmpf oge, %27, %28 : vector<32x384xf32>
    %cst_14 = arith.constant 2.000000e-01 : f32
    %30 = vector.broadcast %cst_14 : f32 to vector<32x384xf32>
    %31 = arith.mulf %30, %27 : vector<32x384xf32>
    %32 = arith.select %29, %27, %31 : vector<32x384xi1>, vector<32x384xf32>
    %c0_15 = arith.constant 0 : index
    %c0_16 = arith.constant 0 : index
    %33 = vector.load %arg4[%c0_15, %c0_16] : memref<32x384xf32, #tpu.memory_space<vmem>>, vector<32x384xf32>
    tpu.vector_store %arg4[%c0_15, %c0_16], %32 {strides = array<i32>} : memref<32x384xf32, #tpu.memory_space<vmem>>, vector<32x384xf32>,
    return
  }
}

module attributes {stable_mosaic.version = 11 : i64} {
  func.func @kernel(%arg0: memref<64x512xf32, #tpu.memory_space<vmem>>, %arg1: memref<512x256xf32, #tpu.memory_space<vmem>>, %arg2: memref<64x1xf32, #tpu.memory_space<vmem>>, %arg3: memref<64x1xf32, #tpu.memory_space<vmem>>, %arg4: memref<64x256xf32, #tpu.memory_space<vmem>>) attributes {dimension_semantics = [], scalar_prefetch = 0 : i64, scratch_operands = 0 : i64, tpu.core_type = #tpu.core_type<tc>} {
    %c0 = arith.constant 0 : index
    %c0_0 = arith.constant 0 : index
    %0 = vector.load %arg0[%c0, %c0_0] : memref<64x512xf32, #tpu.memory_space<vmem>>, vector<64x512xf32>
    %c0_1 = arith.constant 0 : index
    %c0_2 = arith.constant 0 : index
    %1 = vector.load %arg1[%c0_1, %c0_2] : memref<512x256xf32, #tpu.memory_space<vmem>>, vector<512x256xf32>
    %cst = arith.constant dense<0.000000e+00> : vector<64x256xf32>
    %2 = tpu.matmul %0, %1, %cst {dimension_numbers = #tpu.dot_dimension_numbers<[1], [0], [0], [1], [0, 0, 1, 1], [], []>} : vector<64x512xf32>, vector<512x256xf32>, vector<64x256xf32> -> vector<64x256xf32>
    %cst_3 = arith.constant dense<0.000000e+00> : vector<64xf32>
    %3 = vector.multi_reduction <add>, %2, %cst_3 [1] : vector<64x256xf32> to vector<64xf32>
    %4 = vector.shape_cast %3 : vector<64xf32> to vector<64x1xf32>
    %5 = arith.mulf %2, %2 : vector<64x256xf32>
    %cst_4 = arith.constant dense<0.000000e+00> : vector<64xf32>
    %6 = vector.multi_reduction <add>, %5, %cst_4 [1] : vector<64x256xf32> to vector<64xf32>
    %7 = vector.shape_cast %6 : vector<64xf32> to vector<64x1xf32>
    %cst_5 = arith.constant 0.00413223123 : f32
    %8 = vector.broadcast %cst_5 : f32 to vector<64x1xf32>
    %9 = arith.mulf %4, %8 : vector<64x1xf32>
    %cst_6 = arith.constant 0.00413223123 : f32
    %10 = vector.broadcast %cst_6 : f32 to vector<64x1xf32>
    %11 = arith.mulf %7, %10 : vector<64x1xf32>
    %12 = arith.mulf %9, %9 : vector<64x1xf32>
    %13 = arith.subf %11, %12 : vector<64x1xf32>
    %cst_7 = arith.constant 0.000000e+00 : f32
    %14 = vector.broadcast %cst_7 : f32 to vector<64x1xf32>
    %15 = arith.maximumf %13, %14 : vector<64x1xf32>
    %c0_8 = arith.constant 0 : index
    %c0_9 = arith.constant 0 : index
    %16 = vector.load %arg2[%c0_8, %c0_9] : memref<64x1xf32, #tpu.memory_space<vmem>>, vector<64x1xf32>
    %cst_10 = arith.constant 9.99999974E-6 : f32
    %17 = vector.broadcast %cst_10 : f32 to vector<64x1xf32>
    %18 = arith.addf %15, %17 : vector<64x1xf32>
    %19 = math.rsqrt %18 : vector<64x1xf32>
    %20 = arith.mulf %16, %19 : vector<64x1xf32>
    %c0_11 = arith.constant 0 : index
    %c0_12 = arith.constant 0 : index
    %21 = vector.load %arg3[%c0_11, %c0_12] : memref<64x1xf32, #tpu.memory_space<vmem>>, vector<64x1xf32>
    %22 = arith.mulf %9, %20 : vector<64x1xf32>
    %23 = arith.subf %21, %22 : vector<64x1xf32>
    %24 = vector.broadcast %20 : vector<64x1xf32> to vector<64x256xf32>
    %25 = arith.mulf %2, %24 : vector<64x256xf32>
    %26 = vector.broadcast %23 : vector<64x1xf32> to vector<64x256xf32>
    %27 = arith.addf %25, %26 : vector<64x256xf32>
    %cst_13 = arith.constant 0.000000e+00 : f32
    %28 = vector.broadcast %cst_13 : f32 to vector<64x256xf32>
    %29 = arith.cmpf oge, %27, %28 : vector<64x256xf32>
    %cst_14 = arith.constant 2.000000e-01 : f32
    %30 = vector.broadcast %cst_14 : f32 to vector<64x256xf32>
    %31 = arith.mulf %30, %27 : vector<64x256xf32>
    %32 = arith.select %29, %27, %31 : vector<64x256xi1>, vector<64x256xf32>
    %c0_15 = arith.constant 0 : index
    %c0_16 = arith.constant 0 : index
    %33 = vector.load %arg4[%c0_15, %c0_16] : memref<64x256xf32, #tpu.memory_space<vmem>>, vector<64x256xf32>
    tpu.vector_store %arg4[%c0_15, %c0_16], %32 {strides = array<i32>} : memref<64x256xf32, #tpu.memory_space<vmem>>, vector<64x256xf32>,
    return
  }
}

module attributes {stable_mosaic.version = 11 : i64} {
  func.func @_final_conv_kernel(%arg0: memref<8x1024xf32, #tpu.memory_space<vmem>>, %arg1: memref<1024x256xf32, #tpu.memory_space<vmem>>, %arg2: memref<8x1xf32, #tpu.memory_space<vmem>>, %arg3: memref<8x256xf32, #tpu.memory_space<vmem>>) attributes {dimension_semantics = [], scalar_prefetch = 0 : i64, scratch_operands = 0 : i64, tpu.core_type = #tpu.core_type<tc>} {
    %c0 = arith.constant 0 : index
    %c0_0 = arith.constant 0 : index
    %0 = vector.load %arg0[%c0, %c0_0] : memref<8x1024xf32, #tpu.memory_space<vmem>>, vector<8x1024xf32>
    %c0_1 = arith.constant 0 : index
    %c0_2 = arith.constant 0 : index
    %1 = vector.load %arg1[%c0_1, %c0_2] : memref<1024x256xf32, #tpu.memory_space<vmem>>, vector<1024x256xf32>
    %cst = arith.constant dense<0.000000e+00> : vector<8x256xf32>
    %2 = tpu.matmul %0, %1, %cst {dimension_numbers = #tpu.dot_dimension_numbers<[1], [0], [0], [1], [0, 0, 1, 1], [], []>} : vector<8x1024xf32>, vector<1024x256xf32>, vector<8x256xf32> -> vector<8x256xf32>
    %c0_3 = arith.constant 0 : index
    %c0_4 = arith.constant 0 : index
    %3 = vector.load %arg2[%c0_3, %c0_4] : memref<8x1xf32, #tpu.memory_space<vmem>>, vector<8x1xf32>
    %4 = vector.broadcast %3 : vector<8x1xf32> to vector<8x256xf32>
    %5 = arith.addf %2, %4 : vector<8x256xf32>
    %c0_5 = arith.constant 0 : index
    %c0_6 = arith.constant 0 : index
    %6 = vector.load %arg3[%c0_5, %c0_6] : memref<8x256xf32, #tpu.memory_space<vmem>>, vector<8x256xf32>
    tpu.vector_store %arg3[%c0_5, %c0_6], %5 {strides = array<i32>} : memref<8x256xf32, #tpu.memory_space<vmem>>, vector<8x256xf32>,
    return
  }
}

</mosaic_0001>

<llo_original>
// kernel: multi_scale_forward.25
$region0: #{multi_scale_forward.25}
  #allocation0 [shape = 'u32[]', space=smem, size = 0x4, offset = 0x4, fixed_abs, tag = 'smem constant byte address 0x4 - core index']
  #allocation1 [shape = 'u32[144,128]{1,0:T(1,128)}', space=vmem, size = 0x12000, scoped, tag = 'internal scratch']
  %s0 = inlined_call_operand.vmem [shape: f32[8,48], index: 0, kind: input, shape index: {}]
  %s1 = inlined_call_operand.vmem [shape: f32[48,384], index: 1, kind: input, shape index: {}]
  %s2 = inlined_call_operand.vmem [shape: f32[8,1], index: 2, kind: input, shape index: {}]
  %s3 = inlined_call_operand.vmem [shape: f32[8,1], index: 3, kind: input, shape index: {}]
  %s4 = inlined_call_operand.vmem [shape: f32[8,384], index: 4, kind: output, shape index: {}]
  %s5 = sld [smem:[#allocation0]]
  $region26: #{multi_scale_forward.25} parent=0
    _
  %s7 = ssub.s32 1, %s5
  %s8 = scalar_select 0, %s7, %s5
  // Predicated region
  $region2: #{multi_scale_forward.25} parent=0 // pred_check
    _
  $region3: #{multi_scale_forward.25} parent=0 // pred_check_branch
    %10 = sbr.rel (0) target = $region5
  $region4: #{multi_scale_forward.25} parent=0 // pred_region
    _
  $region5: #{multi_scale_forward.25} parent=0 // pred_fallthru
    _
  // Predicated region
  $region6: #{multi_scale_forward.25} parent=0 // pred_check
    _
  $region7: #{multi_scale_forward.25} parent=0 // pred_check_branch
    %12 = sbr.rel (0) target = $region9
  $region8: #{multi_scale_forward.25} parent=0 // pred_region
    _
  $region9: #{multi_scale_forward.25} parent=0 // pred_fallthru
    _
  // Predicated region
  $region10: #{multi_scale_forward.25} parent=0 // pred_check
    _
  $region11: #{multi_scale_forward.25} parent=0 // pred_check_branch
    %14 = sbr.rel (0) target = $region13
  $region12: #{multi_scale_forward.25} parent=0 // pred_region
    _
  $region13: #{multi_scale_forward.25} parent=0 // pred_fallthru
    _
  // Predicated region
  $region14: #{multi_scale_forward.25} parent=0 // pred_check
    _
  $region15: #{multi_scale_forward.25} parent=0 // pred_check_branch
    %16 = sbr.rel (0) target = $region17
  $region16: #{multi_scale_forward.25} parent=0 // pred_region
    _
  $region17: #{multi_scale_forward.25} parent=0 // pred_fallthru
    _
  %v17 = vld [vmem:[%s0] sm:$0xff]
  %v18 = vld [vmem:[%s1] sm:$0xff]
  %v19 = vld [vmem:[%s1 + $0x8] sm:$0xff]
  %v20 = vld [vmem:[%s1 + $0x10] sm:$0xff]
  %v21 = vld [vmem:[%s1 + $0x18] sm:$0xff]
  %v22 = vld [vmem:[%s1 + $0x20] sm:$0xff]
  %v23 = vld [vmem:[%s1 + $0x28] sm:$0xff]
  %v24 = vld [vmem:[%s1 + $0x30] sm:$0xff]
  %v25 = vld [vmem:[%s1 + $0x38] sm:$0xff]
  %v26 = vld [vmem:[%s1 + $0x40] sm:$0xff]
  %v27 = vld [vmem:[%s1 + $0x48] sm:$0xff]
  %v28 = vld [vmem:[%s1 + $0x50] sm:$0xff]
  %v29 = vld [vmem:[%s1 + $0x58] sm:$0xff]
  %v30 = vld [vmem:[%s1 + $0x60] sm:$0xff]
  %v31 = vld [vmem:[%s1 + $0x68] sm:$0xff]
  %v32 = vld [vmem:[%s1 + $0x70] sm:$0xff]
  %v33 = vld [vmem:[%s1 + $0x78] sm:$0xff]
  %v34 = vld [vmem:[%s1 + $0x80] sm:$0xff]
  %v35 = vld [vmem:[%s1 + $0x88] sm:$0xff]
  %vm36 = vcmask 392192
  %v38 = vsel %vm36, %v17, 0
  %40 = vmatprep.subr.mxu0 0.0
  %41 = vmatpush1.msra.mxu0 0.0
  %42 = vmatprep.subr.mxu0 0.0
  %43 = vmatpush1.msra.mxu0 0.0
  %44 = vmatprep.subr.mxu0 0.0
  %45 = vmatpush1.msra.mxu0 0.0
  %46 = vmatprep.subr.mxu0 0.0
  %47 = vmatpush1.msra.mxu0 0.0
  %48 = vmatprep.subr.mxu0 0.0
  %49 = vmatpush1.msra.mxu0 0.0
  %50 = vmatprep.subr.mxu0 0.0
  %51 = vmatpush1.msra.mxu0 0.0
  %52 = vmatprep.subr.mxu0 0.0
  %53 = vmatpush1.msra.mxu0 0.0
  %54 = vmatprep.subr.mxu0 0.0
  %55 = vmatpush1.msra.mxu0 0.0
  %56 = vmatprep.subr.mxu0 0.0
  %57 = vmatpush1.msra.mxu0 0.0
  %58 = vmatprep.subr.mxu0 0.0
  %59 = vmatpush1.msra.mxu0 0.0
  %60 = vmatprep.subr.mxu0 %v34
  %61 = vmatpush1.msra.mxu0 %v33
  %62 = vmatprep.subr.mxu0 %v31
  %63 = vmatpush1.msra.mxu0 %v30
  %64 = vmatprep.subr.mxu0 %v28
  %65 = vmatpush1.msra.mxu0 %v27
  %66 = vmatprep.subr.mxu0 %v25
  %67 = vmatpush1.msra.mxu0 %v24
  %68 = vmatprep.subr.mxu0 %v22
  %69 = vmatpush1.msra.mxu0 %v21
  %70 = vmatprep.subr.mxu0 %v19
  %71 = vmatpush1.msra.mxu0 %v18
  %72 = vmatprep.subr.mxu0 0.0
  %73 = vmatpush2.msra.mxu0 0.0
  %74 = vmatprep.subr.mxu0 0.0
  %75 = vmatpush2.msra.mxu0 0.0
  %76 = vmatprep.subr.mxu0 0.0
  %77 = vmatpush2.msra.mxu0 0.0
  %78 = vmatprep.subr.mxu0 0.0
  %79 = vmatpush2.msra.mxu0 0.0
  %80 = vmatprep.subr.mxu0 0.0
  %81 = vmatpush2.msra.mxu0 0.0
  %82 = vmatprep.subr.mxu0 0.0
  %83 = vmatpush2.msra.mxu0 0.0
  %84 = vmatprep.subr.mxu0 0.0
  %85 = vmatpush2.msra.mxu0 0.0
  %86 = vmatprep.subr.mxu0 0.0
  %87 = vmatpush2.msra.mxu0 0.0
  %88 = vmatprep.subr.mxu0 0.0
  %89 = vmatpush2.msra.mxu0 0.0
  %90 = vmatprep.subr.mxu0 0.0
  %91 = vmatpush2.msra.mxu0 0.0
  %92 = vmatprep.subr.mxu0 0.0
  %93 = vmatpush2.msra.mxu0 0.0
  %94 = vmatprep.subr.mxu0 0.0
  %95 = vmatpush2.msra.mxu0 0.0
  %96 = vmatprep.subr.mxu0 0.0
  %97 = vmatpush2.msra.mxu0 0.0
  %98 = vmatprep.subr.mxu0 0.0
  %99 = vmatpush2.msra.mxu0 0.0
  %100 = vmatprep.subr.mxu0 0.0
  %101 = vmatpush2.msra.mxu0 0.0
  %102 = vmatprep.subr.mxu0 0.0
  %103 = vmatpush2.msra.mxu0 0.0
  %104 = vmatprep.mubr.f32.mxu0 0.0
  %105 = vmatmul.mubr.f32.gmra.mxu0 %v38
  %v106 = vpop.f32.mrf.mxu0
  %v107 = vadd.f32 0.0, %v106
  %v108 = vpop.f32.mrf.mxu0
  %v109 = vadd.f32 0.0, %v108
  %110 = vdwg.mxu0
  %111 = vmatprep.subr.mxu0 0.0
  %112 = vmatpush1.msra.mxu0 0.0
  %113 = vmatprep.subr.mxu0 0.0
  %114 = vmatpush1.msra.mxu0 0.0
  %115 = vmatprep.subr.mxu0 0.0
  %116 = vmatpush1.msra.mxu0 0.0
  %117 = vmatprep.subr.mxu0 0.0
  %118 = vmatpush1.msra.mxu0 0.0
  %119 = vmatprep.subr.mxu0 0.0
  %120 = vmatpush1.msra.mxu0 0.0
  %121 = vmatprep.subr.mxu0 0.0
  %122 = vmatpush1.msra.mxu0 0.0
  %123 = vmatprep.subr.mxu0 0.0
  %124 = vmatpush1.msra.mxu0 0.0
  %125 = vmatprep.subr.mxu0 0.0
  %126 = vmatpush1.msra.mxu0 0.0
  %127 = vmatprep.subr.mxu0 0.0
  %128 = vmatpush1.msra.mxu0 0.0
  %129 = vmatprep.subr.mxu0 0.0
  %130 = vmatpush1.msra.mxu0 0.0
  %131 = vmatprep.subr.mxu0 0.0
  %132 = vmatpush1.msra.mxu0 %v35
  %133 = vmatprep.subr.mxu0 0.0
  %134 = vmatpush1.msra.mxu0 %v32
  %135 = vmatprep.subr.mxu0 0.0
  %136 = vmatpush1.msra.mxu0 %v29
  %137 = vmatprep.subr.mxu0 0.0
  %138 = vmatpush1.msra.mxu0 %v26
  %139 = vmatprep.subr.mxu0 0.0
  %140 = vmatpush1.msra.mxu0 %v23
  %141 = vmatprep.subr.mxu0 0.0
  %142 = vmatpush1.msra.mxu0 %v20
  %143 = vmatprep.subr.mxu0 0.0
  %144 = vmatpush2.msra.mxu0 0.0
  %145 = vmatprep.subr.mxu0 0.0
  %146 = vmatpush2.msra.mxu0 0.0
  %147 = vmatprep.subr.mxu0 0.0
  %148 = vmatpush2.msra.mxu0 0.0
  %149 = vmatprep.subr.mxu0 0.0
  %150 = vmatpush2.msra.mxu0 0.0
  %151 = vmatprep.subr.mxu0 0.0
  %152 = vmatpush2.msra.mxu0 0.0
  %153 = vmatprep.subr.mxu0 0.0
  %154 = vmatpush2.msra.mxu0 0.0
  %155 = vmatprep.subr.mxu0 0.0
  %156 = vmatpush2.msra.mxu0 0.0
  %157 = vmatprep.subr.mxu0 0.0
  %158 = vmatpush2.msra.mxu0 0.0
  %159 = vmatprep.subr.mxu0 0.0
  %160 = vmatpush2.msra.mxu0 0.0
  %161 = vmatprep.subr.mxu0 0.0
  %162 = vmatpush2.msra.mxu0 0.0
  %163 = vmatprep.subr.mxu0 0.0
  %164 = vmatpush2.msra.mxu0 0.0
  %165 = vmatprep.subr.mxu0 0.0
  %166 = vmatpush2.msra.mxu0 0.0
  %167 = vmatprep.subr.mxu0 0.0
  %168 = vmatpush2.msra.mxu0 0.0
  %169 = vmatprep.subr.mxu0 0.0
  %170 = vmatpush2.msra.mxu0 0.0
  %171 = vmatprep.subr.mxu0 0.0
  %172 = vmatpush2.msra.mxu0 0.0
  %173 = vmatprep.subr.mxu0 0.0
  %174 = vmatpush2.msra.mxu0 0.0
  %175 = vmatprep.mubr.f32.mxu0 0.0
  %176 = vmatmul.mubr.f32.gmra.mxu0 %v38
  %v177 = vpop.f32.mrf.mxu0
  %v178 = vadd.f32 0.0, %v177
  %v179 = vpop.f32.mrf.mxu0
  %180 = vdwg.mxu0
  %v181 = vadd.f32 %v107, %v109
  %v182 = vadd.f32 %v181, %v178
  %183 = vadd.xlane.f32.xlu0 %v182
  %v184 = vpop.xlane.xlu0 %183
  %v185 = vmul.f32 %v107, %v107
  %v186 = vmul.f32 %v109, %v109
  %v187 = vmul.f32 %v178, %v178
  %v188 = vadd.f32 %v185, %v186
  %v189 = vadd.f32 %v188, %v187
  %190 = vadd.xlane.f32.xlu0 %v189
  %v191 = vpop.xlane.xlu0 %190
  %v192 = vmul.f32 %v184, 0.0034722222
  %v193 = vmul.f32 %v191, 0.0034722222
  %v194 = vmul.f32 %v192, %v192
  %v195 = vsub.f32 %v193, %v194
  %v196 = vmax.f32 %v195, 0.0
  %v197 = vld [vmem:[%s2] sm:$0xff]
  %v198 = vadd.f32 %v196, 1e-05
  %v199 = vrsqrt.pop %v198
  %v200 = vmul.f32 %v197, %v199
  %v201 = vld [vmem:[%s3] sm:$0xff]
  %v202 = vmul.f32 %v192, %v200
  %v203 = vsub.f32 %v201, %v202
  %205 = vset.pattern.permute.xlu0 0
  %206 = vperm.xlu0 %205, %v200
  %v207 = vpop.permute.xlu0 %206
  %v209 = vmul.f32 %v107, %v207
  %v210 = vmul.f32 %v109, %v207
  %v211 = vmul.f32 %v178, %v207
  %213 = vset.pattern.permute.xlu0 0
  %214 = vperm.xlu0 %213, %v203
  %v215 = vpop.permute.xlu0 %214
  %v217 = vadd.f32 %v209, %v215
  %v218 = vadd.f32 %v210, %v215
  %v219 = vadd.f32 %v211, %v215
  %vm220 = vcmp.ge.f32.partialorder %v217, 0.0
  %vm221 = vcmp.ge.f32.partialorder %v218, 0.0
  %vm222 = vcmp.ge.f32.partialorder %v219, 0.0
  %v223 = vmul.f32 %v217, 0.2
  %v224 = vmul.f32 %v218, 0.2
  %v225 = vmul.f32 %v219, 0.2
  %v226 = vsel %vm220, %v217, %v223
  %v227 = vsel %vm221, %v218, %v224
  %v228 = vsel %vm222, %v219, %v225
  %229 = vst [vmem:[%s4] sm:$0xff] %v226
  %230 = vst [vmem:[%s4 + $0x8] sm:$0xff] %v227
  %231 = vst [vmem:[%s4 + $0x10] sm:$0xff] %v228
  // Predicated region
  $region18: #{multi_scale_forward.25} parent=0 // pred_check
    _
  $region19: #{multi_scale_forward.25} parent=0 // pred_check_branch
    %233 = sbr.rel (0) target = $region21
  $region20: #{multi_scale_forward.25} parent=0 // pred_region
    _
  $region21: #{multi_scale_forward.25} parent=0 // pred_fallthru
    _
  // Predicated region
  $region22: #{multi_scale_forward.25} parent=0 // pred_check
    _
  $region23: #{multi_scale_forward.25} parent=0 // pred_check_branch
    %235 = sbr.rel (0) target = $region25
  $region24: #{multi_scale_forward.25} parent=0 // pred_region
    _
  $region25: #{multi_scale_forward.25} parent=0 // pred_fallthru
    _

// kernel: multi_scale_forward.26
$region0: #{multi_scale_forward.26}
  #allocation0 [shape = 'u32[]', space=smem, size = 0x4, offset = 0x4, fixed_abs, tag = 'smem constant byte address 0x4 - core index']
  #allocation1 [shape = 'u32[144,128]{1,0:T(1,128)}', space=vmem, size = 0x12000, scoped, tag = 'internal scratch']
  %s0 = inlined_call_operand.vmem [shape: f32[16,128], index: 0, kind: input, shape index: {}]
  %s1 = inlined_call_operand.vmem [shape: f32[128,128], index: 1, kind: input, shape index: {}]
  %s2 = inlined_call_operand.vmem [shape: f32[16,1], index: 2, kind: input, shape index: {}]
  %s3 = inlined_call_operand.vmem [shape: f32[16,1], index: 3, kind: input, shape index: {}]
  %s4 = inlined_call_operand.vmem [shape: f32[16,128], index: 4, kind: output, shape index: {}]
  %s5 = sld [smem:[#allocation0]]
  $region26: #{multi_scale_forward.26} parent=0
    _
  %s7 = ssub.s32 1, %s5
  %s8 = scalar_select 0, %s7, %s5
  // Predicated region
  $region2: #{multi_scale_forward.26} parent=0 // pred_check
    _
  $region3: #{multi_scale_forward.26} parent=0 // pred_check_branch
    %10 = sbr.rel (0) target = $region5
  $region4: #{multi_scale_forward.26} parent=0 // pred_region
    _
  $region5: #{multi_scale_forward.26} parent=0 // pred_fallthru
    _
  // Predicated region
  $region6: #{multi_scale_forward.26} parent=0 // pred_check
    _
  $region7: #{multi_scale_forward.26} parent=0 // pred_check_branch
    %12 = sbr.rel (0) target = $region9
  $region8: #{multi_scale_forward.26} parent=0 // pred_region
    _
  $region9: #{multi_scale_forward.26} parent=0 // pred_fallthru
    _
  // Predicated region
  $region10: #{multi_scale_forward.26} parent=0 // pred_check
    _
  $region11: #{multi_scale_forward.26} parent=0 // pred_check_branch
    %14 = sbr.rel (0) target = $region13
  $region12: #{multi_scale_forward.26} parent=0 // pred_region
    _
  $region13: #{multi_scale_forward.26} parent=0 // pred_fallthru
    _
  // Predicated region
  $region14: #{multi_scale_forward.26} parent=0 // pred_check
    _
  $region15: #{multi_scale_forward.26} parent=0 // pred_check_branch
    %16 = sbr.rel (0) target = $region17
  $region16: #{multi_scale_forward.26} parent=0 // pred_region
    _
  $region17: #{multi_scale_forward.26} parent=0 // pred_fallthru
    _
  %v17 = vld [vmem:[%s0] sm:$0xff]
  %v18 = vld [vmem:[%s0 + $0x8] sm:$0xff]
  %v19 = vld [vmem:[%s1] sm:$0xff]
  %v20 = vld [vmem:[%s1 + $0x8] sm:$0xff]
  %v21 = vld [vmem:[%s1 + $0x10] sm:$0xff]
  %v22 = vld [vmem:[%s1 + $0x18] sm:$0xff]
  %v23 = vld [vmem:[%s1 + $0x20] sm:$0xff]
  %v24 = vld [vmem:[%s1 + $0x28] sm:$0xff]
  %v25 = vld [vmem:[%s1 + $0x30] sm:$0xff]
  %v26 = vld [vmem:[%s1 + $0x38] sm:$0xff]
  %v27 = vld [vmem:[%s1 + $0x40] sm:$0xff]
  %v28 = vld [vmem:[%s1 + $0x48] sm:$0xff]
  %v29 = vld [vmem:[%s1 + $0x50] sm:$0xff]
  %v30 = vld [vmem:[%s1 + $0x58] sm:$0xff]
  %v31 = vld [vmem:[%s1 + $0x60] sm:$0xff]
  %v32 = vld [vmem:[%s1 + $0x68] sm:$0xff]
  %v33 = vld [vmem:[%s1 + $0x70] sm:$0xff]
  %v34 = vld [vmem:[%s1 + $0x78] sm:$0xff]
  %35 = vmatprep.subr.mxu0 0.0
  %36 = vmatpush1.msra.mxu0 %v34
  %37 = vmatprep.subr.mxu0 0.0
  %38 = vmatpush1.msra.mxu0 %v33
  %39 = vmatprep.subr.mxu0 0.0
  %40 = vmatpush1.msra.mxu0 %v32
  %41 = vmatprep.subr.mxu0 0.0
  %42 = vmatpush1.msra.mxu0 %v31
  %43 = vmatprep.subr.mxu0 0.0
  %44 = vmatpush1.msra.mxu0 %v30
  %45 = vmatprep.subr.mxu0 0.0
  %46 = vmatpush1.msra.mxu0 %v29
  %47 = vmatprep.subr.mxu0 0.0
  %48 = vmatpush1.msra.mxu0 %v28
  %49 = vmatprep.subr.mxu0 0.0
  %50 = vmatpush1.msra.mxu0 %v27
  %51 = vmatprep.subr.mxu0 0.0
  %52 = vmatpush1.msra.mxu0 %v26
  %53 = vmatprep.subr.mxu0 0.0
  %54 = vmatpush1.msra.mxu0 %v25
  %55 = vmatprep.subr.mxu0 0.0
  %56 = vmatpush1.msra.mxu0 %v24
  %57 = vmatprep.subr.mxu0 0.0
  %58 = vmatpush1.msra.mxu0 %v23
  %59 = vmatprep.subr.mxu0 0.0
  %60 = vmatpush1.msra.mxu0 %v22
  %61 = vmatprep.subr.mxu0 0.0
  %62 = vmatpush1.msra.mxu0 %v21
  %63 = vmatprep.subr.mxu0 0.0
  %64 = vmatpush1.msra.mxu0 %v20
  %65 = vmatprep.subr.mxu0 0.0
  %66 = vmatpush1.msra.mxu0 %v19
  %67 = vmatprep.subr.mxu0 0.0
  %68 = vmatpush2.msra.mxu0 0.0
  %69 = vmatprep.subr.mxu0 0.0
  %70 = vmatpush2.msra.mxu0 0.0
  %71 = vmatprep.subr.mxu0 0.0
  %72 = vmatpush2.msra.mxu0 0.0
  %73 = vmatprep.subr.mxu0 0.0
  %74 = vmatpush2.msra.mxu0 0.0
  %75 = vmatprep.subr.mxu0 0.0
  %76 = vmatpush2.msra.mxu0 0.0
  %77 = vmatprep.subr.mxu0 0.0
  %78 = vmatpush2.msra.mxu0 0.0
  %79 = vmatprep.subr.mxu0 0.0
  %80 = vmatpush2.msra.mxu0 0.0
  %81 = vmatprep.subr.mxu0 0.0
  %82 = vmatpush2.msra.mxu0 0.0
  %83 = vmatprep.subr.mxu0 0.0
  %84 = vmatpush2.msra.mxu0 0.0
  %85 = vmatprep.subr.mxu0 0.0
  %86 = vmatpush2.msra.mxu0 0.0
  %87 = vmatprep.subr.mxu0 0.0
  %88 = vmatpush2.msra.mxu0 0.0
  %89 = vmatprep.subr.mxu0 0.0
  %90 = vmatpush2.msra.mxu0 0.0
  %91 = vmatprep.subr.mxu0 0.0
  %92 = vmatpush2.msra.mxu0 0.0
  %93 = vmatprep.subr.mxu0 0.0
  %94 = vmatpush2.msra.mxu0 0.0
  %95 = vmatprep.subr.mxu0 0.0
  %96 = vmatpush2.msra.mxu0 0.0
  %97 = vmatprep.subr.mxu0 0.0
  %98 = vmatpush2.msra.mxu0 0.0
  %99 = vmatprep.mubr.f32.mxu0 0.0
  %100 = vmatmul.mubr.f32.gmra.mxu0 %v17
  %v101 = vpop.f32.mrf.mxu0
  %v102 = vadd.f32 0.0, %v101
  %v103 = vpop.f32.mrf.mxu0
  %104 = vmatprep.mubr.f32.mxu0 0.0
  %105 = vmatmul.mubr.f32.gmra.mxu0 %v18
  %v106 = vpop.f32.mrf.mxu0
  %v107 = vadd.f32 0.0, %v106
  %v108 = vpop.f32.mrf.mxu0
  %109 = vdwg.mxu0
  %110 = vadd.xlane.f32.xlu0 %v102
  %v111 = vpop.xlane.xlu0 %110
  %112 = vadd.xlane.f32.xlu0 %v107
  %v113 = vpop.xlane.xlu0 %112
  %v114 = vmul.f32 %v102, %v102
  %v115 = vmul.f32 %v107, %v107
  %116 = vadd.xlane.f32.xlu0 %v114
  %v117 = vpop.xlane.xlu0 %116
  %118 = vadd.xlane.f32.xlu0 %v115
  %v119 = vpop.xlane.xlu0 %118
  %v120 = vmul.f32 %v111, 0.013888889
  %v121 = vmul.f32 %v113, 0.013888889
  %v122 = vmul.f32 %v117, 0.013888889
  %v123 = vmul.f32 %v119, 0.013888889
  %v124 = vmul.f32 %v120, %v120
  %v125 = vmul.f32 %v121, %v121
  %v126 = vsub.f32 %v122, %v124
  %v127 = vsub.f32 %v123, %v125
  %v128 = vmax.f32 %v126, 0.0
  %v129 = vmax.f32 %v127, 0.0
  %v130 = vld [vmem:[%s2] sm:$0xff]
  %v131 = vld [vmem:[%s2 + $0x8] sm:$0xff]
  %v132 = vadd.f32 %v128, 1e-05
  %v133 = vadd.f32 %v129, 1e-05
  %v134 = vrsqrt.pop %v132
  %v135 = vrsqrt.pop %v133
  %v136 = vmul.f32 %v130, %v134
  %v137 = vmul.f32 %v131, %v135
  %v138 = vld [vmem:[%s3] sm:$0xff]
  %v139 = vld [vmem:[%s3 + $0x8] sm:$0xff]
  %v140 = vmul.f32 %v120, %v136
  %v141 = vmul.f32 %v121, %v137
  %v142 = vsub.f32 %v138, %v140
  %v143 = vsub.f32 %v139, %v141
  %145 = vset.pattern.permute.xlu0 0
  %146 = vperm.xlu0 %145, %v136
  %v147 = vpop.permute.xlu0 %146
  %150 = vset.pattern.permute.xlu0 0
  %151 = vperm.xlu0 %150, %v137
  %v152 = vpop.permute.xlu0 %151
  %v154 = vmul.f32 %v102, %v147
  %v155 = vmul.f32 %v107, %v152
  %157 = vset.pattern.permute.xlu0 0
  %158 = vperm.xlu0 %157, %v142
  %v159 = vpop.permute.xlu0 %158
  %162 = vset.pattern.permute.xlu0 0
  %163 = vperm.xlu0 %162, %v143
  %v164 = vpop.permute.xlu0 %163
  %v166 = vadd.f32 %v154, %v159
  %v167 = vadd.f32 %v155, %v164
  %vm168 = vcmp.ge.f32.partialorder %v166, 0.0
  %vm169 = vcmp.ge.f32.partialorder %v167, 0.0
  %v170 = vmul.f32 %v166, 0.2
  %v171 = vmul.f32 %v167, 0.2
  %v172 = vsel %vm168, %v166, %v170
  %v173 = vsel %vm169, %v167, %v171
  %174 = vst [vmem:[%s4] sm:$0xff] %v172
  %175 = vst [vmem:[%s4 + $0x8] sm:$0xff] %v173
  // Predicated region
  $region18: #{multi_scale_forward.26} parent=0 // pred_check
    _
  $region19: #{multi_scale_forward.26} parent=0 // pred_check_branch
    %177 = sbr.rel (0) target = $region21
  $region20: #{multi_scale_forward.26} parent=0 // pred_region
    _
  $region21: #{multi_scale_forward.26} parent=0 // pred_fallthru
    _
  // Predicated region
  $region22: #{multi_scale_forward.26} parent=0 // pred_check
    _
  $region23: #{multi_scale_forward.26} parent=0 // pred_check_branch
    %179 = sbr.rel (0) target = $region25
  $region24: #{multi_scale_forward.26} parent=0 // pred_region
    _
  $region25: #{multi_scale_forward.26} parent=0 // pred_fallthru
    _

// kernel: multi_scale_forward.27
$region0: #{multi_scale_forward.27}
  #allocation0 [shape = 'u32[]', space=smem, size = 0x4, offset = 0x4, fixed_abs, tag = 'smem constant byte address 0x4 - core index']
  #allocation1 [shape = 'u32[144,128]{1,0:T(1,128)}', space=vmem, size = 0x12000, scoped, tag = 'internal scratch']
  %s0 = inlined_call_operand.vmem [shape: f32[32,256], index: 0, kind: input, shape index: {}]
  %s1 = inlined_call_operand.vmem [shape: f32[256,128], index: 1, kind: input, shape index: {}]
  %s2 = inlined_call_operand.vmem [shape: f32[32,1], index: 2, kind: input, shape index: {}]
  %s3 = inlined_call_operand.vmem [shape: f32[32,1], index: 3, kind: input, shape index: {}]
  %s4 = inlined_call_operand.vmem [shape: f32[32,128], index: 4, kind: output, shape index: {}]
  %s5 = sld [smem:[#allocation0]]
  $region26: #{multi_scale_forward.27} parent=0
    _
  %s7 = ssub.s32 1, %s5
  %s8 = scalar_select 0, %s7, %s5
  // Predicated region
  $region2: #{multi_scale_forward.27} parent=0 // pred_check
    _
  $region3: #{multi_scale_forward.27} parent=0 // pred_check_branch
    %10 = sbr.rel (0) target = $region5
  $region4: #{multi_scale_forward.27} parent=0 // pred_region
    _
  $region5: #{multi_scale_forward.27} parent=0 // pred_fallthru
    _
  // Predicated region
  $region6: #{multi_scale_forward.27} parent=0 // pred_check
    _
  $region7: #{multi_scale_forward.27} parent=0 // pred_check_branch
    %12 = sbr.rel (0) target = $region9
  $region8: #{multi_scale_forward.27} parent=0 // pred_region
    _
  $region9: #{multi_scale_forward.27} parent=0 // pred_fallthru
    _
  // Predicated region
  $region10: #{multi_scale_forward.27} parent=0 // pred_check
    _
  $region11: #{multi_scale_forward.27} parent=0 // pred_check_branch
    %14 = sbr.rel (0) target = $region13
  $region12: #{multi_scale_forward.27} parent=0 // pred_region
    _
  $region13: #{multi_scale_forward.27} parent=0 // pred_fallthru
    _
  // Predicated region
  $region14: #{multi_scale_forward.27} parent=0 // pred_check
    _
  $region15: #{multi_scale_forward.27} parent=0 // pred_check_branch
    %16 = sbr.rel (0) target = $region17
  $region16: #{multi_scale_forward.27} parent=0 // pred_region
    _
  $region17: #{multi_scale_forward.27} parent=0 // pred_fallthru
    _
  %v17 = vld [vmem:[%s0] sm:$0xff]
  %v18 = vld [vmem:[%s0 + $0x8] sm:$0xff]
  %v19 = vld [vmem:[%s0 + $0x10] sm:$0xff]
  %v20 = vld [vmem:[%s0 + $0x18] sm:$0xff]
  %v21 = vld [vmem:[%s0 + $0x20] sm:$0xff]
  %v22 = vld [vmem:[%s0 + $0x28] sm:$0xff]
  %v23 = vld [vmem:[%s0 + $0x30] sm:$0xff]
  %v24 = vld [vmem:[%s0 + $0x38] sm:$0xff]
  %v25 = vld [vmem:[%s1] sm:$0xff]
  %v26 = vld [vmem:[%s1 + $0x8] sm:$0xff]
  %v27 = vld [vmem:[%s1 + $0x10] sm:$0xff]
  %v28 = vld [vmem:[%s1 + $0x18] sm:$0xff]
  %v29 = vld [vmem:[%s1 + $0x20] sm:$0xff]
  %v30 = vld [vmem:[%s1 + $0x28] sm:$0xff]
  %v31 = vld [vmem:[%s1 + $0x30] sm:$0xff]
  %v32 = vld [vmem:[%s1 + $0x38] sm:$0xff]
  %v33 = vld [vmem:[%s1 + $0x40] sm:$0xff]
  %v34 = vld [vmem:[%s1 + $0x48] sm:$0xff]
  %v35 = vld [vmem:[%s1 + $0x50] sm:$0xff]
  %v36 = vld [vmem:[%s1 + $0x58] sm:$0xff]
  %v37 = vld [vmem:[%s1 + $0x60] sm:$0xff]
  %v38 = vld [vmem:[%s1 + $0x68] sm:$0xff]
  %v39 = vld [vmem:[%s1 + $0x70] sm:$0xff]
  %v40 = vld [vmem:[%s1 + $0x78] sm:$0xff]
  %v41 = vld [vmem:[%s1 + $0x80] sm:$0xff]
  %v42 = vld [vmem:[%s1 + $0x88] sm:$0xff]
  %v43 = vld [vmem:[%s1 + $0x90] sm:$0xff]
  %v44 = vld [vmem:[%s1 + $0x98] sm:$0xff]
  %v45 = vld [vmem:[%s1 + $0xa0] sm:$0xff]
  %v46 = vld [vmem:[%s1 + $0xa8] sm:$0xff]
  %v47 = vld [vmem:[%s1 + $0xb0] sm:$0xff]
  %v48 = vld [vmem:[%s1 + $0xb8] sm:$0xff]
  %v49 = vld [vmem:[%s1 + $0xc0] sm:$0xff]
  %v50 = vld [vmem:[%s1 + $0xc8] sm:$0xff]
  %v51 = vld [vmem:[%s1 + $0xd0] sm:$0xff]
  %v52 = vld [vmem:[%s1 + $0xd8] sm:$0xff]
  %v53 = vld [vmem:[%s1 + $0xe0] sm:$0xff]
  %v54 = vld [vmem:[%s1 + $0xe8] sm:$0xff]
  %v55 = vld [vmem:[%s1 + $0xf0] sm:$0xff]
  %v56 = vld [vmem:[%s1 + $0xf8] sm:$0xff]
  %57 = vmatprep.subr.mxu0 0.0
  %58 = vmatpush1.msra.mxu0 %v40
  %59 = vmatprep.subr.mxu0 0.0
  %60 = vmatpush1.msra.mxu0 %v39
  %61 = vmatprep.subr.mxu0 0.0
  %62 = vmatpush1.msra.mxu0 %v38
  %63 = vmatprep.subr.mxu0 0.0
  %64 = vmatpush1.msra.mxu0 %v37
  %65 = vmatprep.subr.mxu0 0.0
  %66 = vmatpush1.msra.mxu0 %v36
  %67 = vmatprep.subr.mxu0 0.0
  %68 = vmatpush1.msra.mxu0 %v35
  %69 = vmatprep.subr.mxu0 0.0
  %70 = vmatpush1.msra.mxu0 %v34
  %71 = vmatprep.subr.mxu0 0.0
  %72 = vmatpush1.msra.mxu0 %v33
  %73 = vmatprep.subr.mxu0 0.0
  %74 = vmatpush1.msra.mxu0 %v32
  %75 = vmatprep.subr.mxu0 0.0
  %76 = vmatpush1.msra.mxu0 %v31
  %77 = vmatprep.subr.mxu0 0.0
  %78 = vmatpush1.msra.mxu0 %v30
  %79 = vmatprep.subr.mxu0 0.0
  %80 = vmatpush1.msra.mxu0 %v29
  %81 = vmatprep.subr.mxu0 0.0
  %82 = vmatpush1.msra.mxu0 %v28
  %83 = vmatprep.subr.mxu0 0.0
  %84 = vmatpush1.msra.mxu0 %v27
  %85 = vmatprep.subr.mxu0 0.0
  %86 = vmatpush1.msra.mxu0 %v26
  %87 = vmatprep.subr.mxu0 0.0
  %88 = vmatpush1.msra.mxu0 %v25
  %89 = vmatprep.subr.mxu0 0.0
  %90 = vmatpush2.msra.mxu0 %v56
  %91 = vmatprep.subr.mxu0 0.0
  %92 = vmatpush2.msra.mxu0 %v55
  %93 = vmatprep.subr.mxu0 0.0
  %94 = vmatpush2.msra.mxu0 %v54
  %95 = vmatprep.subr.mxu0 0.0
  %96 = vmatpush2.msra.mxu0 %v53
  %97 = vmatprep.subr.mxu0 0.0
  %98 = vmatpush2.msra.mxu0 %v52
  %99 = vmatprep.subr.mxu0 0.0
  %100 = vmatpush2.msra.mxu0 %v51
  %101 = vmatprep.subr.mxu0 0.0
  %102 = vmatpush2.msra.mxu0 %v50
  %103 = vmatprep.subr.mxu0 0.0
  %104 = vmatpush2.msra.mxu0 %v49
  %105 = vmatprep.subr.mxu0 0.0
  %106 = vmatpush2.msra.mxu0 %v48
  %107 = vmatprep.subr.mxu0 0.0
  %108 = vmatpush2.msra.mxu0 %v47
  %109 = vmatprep.subr.mxu0 0.0
  %110 = vmatpush2.msra.mxu0 %v46
  %111 = vmatprep.subr.mxu0 0.0
  %112 = vmatpush2.msra.mxu0 %v45
  %113 = vmatprep.subr.mxu0 0.0
  %114 = vmatpush2.msra.mxu0 %v44
  %115 = vmatprep.subr.mxu0 0.0
  %116 = vmatpush2.msra.mxu0 %v43
  %117 = vmatprep.subr.mxu0 0.0
  %118 = vmatpush2.msra.mxu0 %v42
  %119 = vmatprep.subr.mxu0 0.0
  %120 = vmatpush2.msra.mxu0 %v41
  %121 = vmatprep.mubr.f32.mxu0 %v18
  %122 = vmatmul.mubr.f32.gmra.mxu0 %v17
  %v123 = vpop.f32.mrf.mxu0
  %v124 = vadd.f32 0.0, %v123
  %v125 = vpop.f32.mrf.mxu0
  %126 = vmatprep.mubr.f32.mxu0 %v20
  %127 = vmatmul.mubr.f32.gmra.mxu0 %v19
  %v128 = vpop.f32.mrf.mxu0
  %v129 = vadd.f32 0.0, %v128
  %v130 = vpop.f32.mrf.mxu0
  %131 = vmatprep.mubr.f32.mxu0 %v22
  %132 = vmatmul.mubr.f32.gmra.mxu0 %v21
  %v133 = vpop.f32.mrf.mxu0
  %v134 = vadd.f32 0.0, %v133
  %v135 = vpop.f32.mrf.mxu0
  %136 = vmatprep.mubr.f32.mxu0 %v24
  %137 = vmatmul.mubr.f32.gmra.mxu0 %v23
  %v138 = vpop.f32.mrf.mxu0
  %v139 = vadd.f32 0.0, %v138
  %v140 = vpop.f32.mrf.mxu0
  %141 = vdwg.mxu0
  %142 = vadd.xlane.f32.xlu0 %v124
  %v143 = vpop.xlane.xlu0 %142
  %144 = vadd.xlane.f32.xlu0 %v129
  %v145 = vpop.xlane.xlu0 %144
  %146 = vadd.xlane.f32.xlu0 %v134
  %v147 = vpop.xlane.xlu0 %146
  %148 = vadd.xlane.f32.xlu0 %v139
  %v149 = vpop.xlane.xlu0 %148
  %v150 = vmul.f32 %v124, %v124
  %v151 = vmul.f32 %v129, %v129
  %v152 = vmul.f32 %v134, %v134
  %v153 = vmul.f32 %v139, %v139
  %154 = vadd.xlane.f32.xlu0 %v150
  %v155 = vpop.xlane.xlu0 %154
  %156 = vadd.xlane.f32.xlu0 %v151
  %v157 = vpop.xlane.xlu0 %156
  %158 = vadd.xlane.f32.xlu0 %v152
  %v159 = vpop.xlane.xlu0 %158
  %160 = vadd.xlane.f32.xlu0 %v153
  %v161 = vpop.xlane.xlu0 %160
  %v162 = vmul.f32 %v143, 0.055555556
  %v163 = vmul.f32 %v145, 0.055555556
  %v164 = vmul.f32 %v147, 0.055555556
  %v165 = vmul.f32 %v149, 0.055555556
  %v166 = vmul.f32 %v155, 0.055555556
  %v167 = vmul.f32 %v157, 0.055555556
  %v168 = vmul.f32 %v159, 0.055555556
  %v169 = vmul.f32 %v161, 0.055555556
  %v170 = vmul.f32 %v162, %v162
  %v171 = vmul.f32 %v163, %v163
  %v172 = vmul.f32 %v164, %v164
  %v173 = vmul.f32 %v165, %v165
  %v174 = vsub.f32 %v166, %v170
  %v175 = vsub.f32 %v167, %v171
  %v176 = vsub.f32 %v168, %v172
  %v177 = vsub.f32 %v169, %v173
  %v178 = vmax.f32 %v174, 0.0
  %v179 = vmax.f32 %v175, 0.0
  %v180 = vmax.f32 %v176, 0.0
  %v181 = vmax.f32 %v177, 0.0
  %v182 = vld [vmem:[%s2] sm:$0xff]
  %v183 = vld [vmem:[%s2 + $0x8] sm:$0xff]
  %v184 = vld [vmem:[%s2 + $0x10] sm:$0xff]
  %v185 = vld [vmem:[%s2 + $0x18] sm:$0xff]
  %v186 = vadd.f32 %v178, 1e-05
  %v187 = vadd.f32 %v179, 1e-05
  %v188 = vadd.f32 %v180, 1e-05
  %v189 = vadd.f32 %v181, 1e-05
  %v190 = vrsqrt.pop %v186
  %v191 = vrsqrt.pop %v187
  %v192 = vrsqrt.pop %v188
  %v193 = vrsqrt.pop %v189
  %v194 = vmul.f32 %v182, %v190
  %v195 = vmul.f32 %v183, %v191
  %v196 = vmul.f32 %v184, %v192
  %v197 = vmul.f32 %v185, %v193
  %v198 = vld [vmem:[%s3] sm:$0xff]
  %v199 = vld [vmem:[%s3 + $0x8] sm:$0xff]
  %v200 = vld [vmem:[%s3 + $0x10] sm:$0xff]
  %v201 = vld [vmem:[%s3 + $0x18] sm:$0xff]
  %v202 = vmul.f32 %v162, %v194
  %v203 = vmul.f32 %v163, %v195
  %v204 = vmul.f32 %v164, %v196
  %v205 = vmul.f32 %v165, %v197
  %v206 = vsub.f32 %v198, %v202
  %v207 = vsub.f32 %v199, %v203
  %v208 = vsub.f32 %v200, %v204
  %v209 = vsub.f32 %v201, %v205
  %211 = vset.pattern.permute.xlu0 0
  %212 = vperm.xlu0 %211, %v194
  %v213 = vpop.permute.xlu0 %212
  %216 = vset.pattern.permute.xlu0 0
  %217 = vperm.xlu0 %216, %v195
  %v218 = vpop.permute.xlu0 %217
  %221 = vset.pattern.permute.xlu0 0
  %222 = vperm.xlu0 %221, %v196
  %v223 = vpop.permute.xlu0 %222
  %226 = vset.pattern.permute.xlu0 0
  %227 = vperm.xlu0 %226, %v197
  %v228 = vpop.permute.xlu0 %227
  %v230 = vmul.f32 %v124, %v213
  %v231 = vmul.f32 %v129, %v218
  %v232 = vmul.f32 %v134, %v223
  %v233 = vmul.f32 %v139, %v228
  %235 = vset.pattern.permute.xlu0 0
  %236 = vperm.xlu0 %235, %v206
  %v237 = vpop.permute.xlu0 %236
  %240 = vset.pattern.permute.xlu0 0
  %241 = vperm.xlu0 %240, %v207
  %v242 = vpop.permute.xlu0 %241
  %245 = vset.pattern.permute.xlu0 0
  %246 = vperm.xlu0 %245, %v208
  %v247 = vpop.permute.xlu0 %246
  %250 = vset.pattern.permute.xlu0 0
  %251 = vperm.xlu0 %250, %v209
  %v252 = vpop.permute.xlu0 %251
  %v254 = vadd.f32 %v230, %v237
  %v255 = vadd.f32 %v231, %v242
  %v256 = vadd.f32 %v232, %v247
  %v257 = vadd.f32 %v233, %v252
  %vm258 = vcmp.ge.f32.partialorder %v254, 0.0
  %vm259 = vcmp.ge.f32.partialorder %v255, 0.0
  %vm260 = vcmp.ge.f32.partialorder %v256, 0.0
  %vm261 = vcmp.ge.f32.partialorder %v257, 0.0
  %v262 = vmul.f32 %v254, 0.2
  %v263 = vmul.f32 %v255, 0.2
  %v264 = vmul.f32 %v256, 0.2
  %v265 = vmul.f32 %v257, 0.2
  %v266 = vsel %vm258, %v254, %v262
  %v267 = vsel %vm259, %v255, %v263
  %v268 = vsel %vm260, %v256, %v264
  %v269 = vsel %vm261, %v257, %v265
  %270 = vst [vmem:[%s4] sm:$0xff] %v266
  %271 = vst [vmem:[%s4 + $0x8] sm:$0xff] %v267
  %272 = vst [vmem:[%s4 + $0x10] sm:$0xff] %v268
  %273 = vst [vmem:[%s4 + $0x18] sm:$0xff] %v269
  // Predicated region
  $region18: #{multi_scale_forward.27} parent=0 // pred_check
    _
  $region19: #{multi_scale_forward.27} parent=0 // pred_check_branch
    %275 = sbr.rel (0) target = $region21
  $region20: #{multi_scale_forward.27} parent=0 // pred_region
    _
  $region21: #{multi_scale_forward.27} parent=0 // pred_fallthru
    _
  // Predicated region
  $region22: #{multi_scale_forward.27} parent=0 // pred_check
    _
  $region23: #{multi_scale_forward.27} parent=0 // pred_check_branch
    %277 = sbr.rel (0) target = $region25
  $region24: #{multi_scale_forward.27} parent=0 // pred_region
    _
  $region25: #{multi_scale_forward.27} parent=0 // pred_fallthru
    _

// kernel: multi_scale_forward.28
$region0: #{multi_scale_forward.28}
  #allocation0 [shape = 'u32[]', space=smem, size = 0x4, offset = 0x4, fixed_abs, tag = 'smem constant byte address 0x4 - core index']
  #allocation1 [shape = 'u32[144,128]{1,0:T(1,128)}', space=vmem, size = 0x12000, scoped, tag = 'internal scratch']
  %s0 = inlined_call_operand.vmem [shape: f32[64,512], index: 0, kind: input, shape index: {}]
  %s1 = inlined_call_operand.vmem [shape: f32[512,128], index: 1, kind: input, shape index: {}]
  %s2 = inlined_call_operand.vmem [shape: f32[64,1], index: 2, kind: input, shape index: {}]
  %s3 = inlined_call_operand.vmem [shape: f32[64,1], index: 3, kind: input, shape index: {}]
  %s4 = inlined_call_operand.vmem [shape: f32[64,128], index: 4, kind: output, shape index: {}]
  %s5 = sld [smem:[#allocation0]]
  $region26: #{multi_scale_forward.28} parent=0
    _
  %s7 = ssub.s32 1, %s5
  %s8 = scalar_select 0, %s7, %s5
  // Predicated region
  $region2: #{multi_scale_forward.28} parent=0 // pred_check
    _
  $region3: #{multi_scale_forward.28} parent=0 // pred_check_branch
    %10 = sbr.rel (0) target = $region5
  $region4: #{multi_scale_forward.28} parent=0 // pred_region
    _
  $region5: #{multi_scale_forward.28} parent=0 // pred_fallthru
    _
  // Predicated region
  $region6: #{multi_scale_forward.28} parent=0 // pred_check
    _
  $region7: #{multi_scale_forward.28} parent=0 // pred_check_branch
    %12 = sbr.rel (0) target = $region9
  $region8: #{multi_scale_forward.28} parent=0 // pred_region
    _
  $region9: #{multi_scale_forward.28} parent=0 // pred_fallthru
    _
  // Predicated region
  $region10: #{multi_scale_forward.28} parent=0 // pred_check
    _
  $region11: #{multi_scale_forward.28} parent=0 // pred_check_branch
    %14 = sbr.rel (0) target = $region13
  $region12: #{multi_scale_forward.28} parent=0 // pred_region
    _
  $region13: #{multi_scale_forward.28} parent=0 // pred_fallthru
    _
  // Predicated region
  $region14: #{multi_scale_forward.28} parent=0 // pred_check
    _
  $region15: #{multi_scale_forward.28} parent=0 // pred_check_branch
    %16 = sbr.rel (0) target = $region17
  $region16: #{multi_scale_forward.28} parent=0 // pred_region
    _
  $region17: #{multi_scale_forward.28} parent=0 // pred_fallthru
    _
  %v17 = vld [vmem:[%s0] sm:$0xff]
  %v18 = vld [vmem:[%s0 + $0x8] sm:$0xff]
  %v19 = vld [vmem:[%s0 + $0x10] sm:$0xff]
  %v20 = vld [vmem:[%s0 + $0x18] sm:$0xff]
  %v21 = vld [vmem:[%s0 + $0x20] sm:$0xff]
  %v22 = vld [vmem:[%s0 + $0x28] sm:$0xff]
  %v23 = vld [vmem:[%s0 + $0x30] sm:$0xff]
  %v24 = vld [vmem:[%s0 + $0x38] sm:$0xff]
  %v25 = vld [vmem:[%s0 + $0x40] sm:$0xff]
  %v26 = vld [vmem:[%s0 + $0x48] sm:$0xff]
  %v27 = vld [vmem:[%s0 + $0x50] sm:$0xff]
  %v28 = vld [vmem:[%s0 + $0x58] sm:$0xff]
  %v29 = vld [vmem:[%s0 + $0x60] sm:$0xff]
  %v30 = vld [vmem:[%s0 + $0x68] sm:$0xff]
  %v31 = vld [vmem:[%s0 + $0x70] sm:$0xff]
  %v32 = vld [vmem:[%s0 + $0x78] sm:$0xff]
  %v33 = vld [vmem:[%s0 + $0x80] sm:$0xff]
  %v34 = vld [vmem:[%s0 + $0x88] sm:$0xff]
  %v35 = vld [vmem:[%s0 + $0x90] sm:$0xff]
  %v36 = vld [vmem:[%s0 + $0x98] sm:$0xff]
  %v37 = vld [vmem:[%s0 + $0xa0] sm:$0xff]
  %v38 = vld [vmem:[%s0 + $0xa8] sm:$0xff]
  %v39 = vld [vmem:[%s0 + $0xb0] sm:$0xff]
  %v40 = vld [vmem:[%s0 + $0xb8] sm:$0xff]
  %v41 = vld [vmem:[%s0 + $0xc0] sm:$0xff]
  %v42 = vld [vmem:[%s0 + $0xc8] sm:$0xff]
  %v43 = vld [vmem:[%s0 + $0xd0] sm:$0xff]
  %v44 = vld [vmem:[%s0 + $0xd8] sm:$0xff]
  %v45 = vld [vmem:[%s0 + $0xe0] sm:$0xff]
  %v46 = vld [vmem:[%s0 + $0xe8] sm:$0xff]
  %v47 = vld [vmem:[%s0 + $0xf0] sm:$0xff]
  %v48 = vld [vmem:[%s0 + $0xf8] sm:$0xff]
  %v49 = vld [vmem:[%s1] sm:$0xff]
  %v50 = vld [vmem:[%s1 + $0x8] sm:$0xff]
  %v51 = vld [vmem:[%s1 + $0x10] sm:$0xff]
  %v52 = vld [vmem:[%s1 + $0x18] sm:$0xff]
  %v53 = vld [vmem:[%s1 + $0x20] sm:$0xff]
  %v54 = vld [vmem:[%s1 + $0x28] sm:$0xff]
  %v55 = vld [vmem:[%s1 + $0x30] sm:$0xff]
  %v56 = vld [vmem:[%s1 + $0x38] sm:$0xff]
  %v57 = vld [vmem:[%s1 + $0x40] sm:$0xff]
  %v58 = vld [vmem:[%s1 + $0x48] sm:$0xff]
  %v59 = vld [vmem:[%s1 + $0x50] sm:$0xff]
  %v60 = vld [vmem:[%s1 + $0x58] sm:$0xff]
  %v61 = vld [vmem:[%s1 + $0x60] sm:$0xff]
  %v62 = vld [vmem:[%s1 + $0x68] sm:$0xff]
  %v63 = vld [vmem:[%s1 + $0x70] sm:$0xff]
  %v64 = vld [vmem:[%s1 + $0x78] sm:$0xff]
  %v65 = vld [vmem:[%s1 + $0x80] sm:$0xff]
  %v66 = vld [vmem:[%s1 + $0x88] sm:$0xff]
  %v67 = vld [vmem:[%s1 + $0x90] sm:$0xff]
  %v68 = vld [vmem:[%s1 + $0x98] sm:$0xff]
  %v69 = vld [vmem:[%s1 + $0xa0] sm:$0xff]
  %v70 = vld [vmem:[%s1 + $0xa8] sm:$0xff]
  %v71 = vld [vmem:[%s1 + $0xb0] sm:$0xff]
  %v72 = vld [vmem:[%s1 + $0xb8] sm:$0xff]
  %v73 = vld [vmem:[%s1 + $0xc0] sm:$0xff]
  %v74 = vld [vmem:[%s1 + $0xc8] sm:$0xff]
  %v75 = vld [vmem:[%s1 + $0xd0] sm:$0xff]
  %v76 = vld [vmem:[%s1 + $0xd8] sm:$0xff]
  %v77 = vld [vmem:[%s1 + $0xe0] sm:$0xff]
  %v78 = vld [vmem:[%s1 + $0xe8] sm:$0xff]
  %v79 = vld [vmem:[%s1 + $0xf0] sm:$0xff]
  %v80 = vld [vmem:[%s1 + $0xf8] sm:$0xff]
  %v81 = vld [vmem:[%s1 + $0x100] sm:$0xff]
  %v82 = vld [vmem:[%s1 + $0x108] sm:$0xff]
  %v83 = vld [vmem:[%s1 + $0x110] sm:$0xff]
  %v84 = vld [vmem:[%s1 + $0x118] sm:$0xff]
  %v85 = vld [vmem:[%s1 + $0x120] sm:$0xff]
  %v86 = vld [vmem:[%s1 + $0x128] sm:$0xff]
  %v87 = vld [vmem:[%s1 + $0x130] sm:$0xff]
  %v88 = vld [vmem:[%s1 + $0x138] sm:$0xff]
  %v89 = vld [vmem:[%s1 + $0x140] sm:$0xff]
  %v90 = vld [vmem:[%s1 + $0x148] sm:$0xff]
  %v91 = vld [vmem:[%s1 + $0x150] sm:$0xff]
  %v92 = vld [vmem:[%s1 + $0x158] sm:$0xff]
  %v93 = vld [vmem:[%s1 + $0x160] sm:$0xff]
  %v94 = vld [vmem:[%s1 + $0x168] sm:$0xff]
  %v95 = vld [vmem:[%s1 + $0x170] sm:$0xff]
  %v96 = vld [vmem:[%s1 + $0x178] sm:$0xff]
  %v97 = vld [vmem:[%s1 + $0x180] sm:$0xff]
  %v98 = vld [vmem:[%s1 + $0x188] sm:$0xff]
  %v99 = vld [vmem:[%s1 + $0x190] sm:$0xff]
  %v100 = vld [vmem:[%s1 + $0x198] sm:$0xff]
  %v101 = vld [vmem:[%s1 + $0x1a0] sm:$0xff]
  %v102 = vld [vmem:[%s1 + $0x1a8] sm:$0xff]
  %v103 = vld [vmem:[%s1 + $0x1b0] sm:$0xff]
  %v104 = vld [vmem:[%s1 + $0x1b8] sm:$0xff]
  %v105 = vld [vmem:[%s1 + $0x1c0] sm:$0xff]
  %v106 = vld [vmem:[%s1 + $0x1c8] sm:$0xff]
  %v107 = vld [vmem:[%s1 + $0x1d0] sm:$0xff]
  %v108 = vld [vmem:[%s1 + $0x1d8] sm:$0xff]
  %v109 = vld [vmem:[%s1 + $0x1e0] sm:$0xff]
  %v110 = vld [vmem:[%s1 + $0x1e8] sm:$0xff]
  %v111 = vld [vmem:[%s1 + $0x1f0] sm:$0xff]
  %v112 = vld [vmem:[%s1 + $0x1f8] sm:$0xff]
  %113 = vmatprep.subr.mxu0 0.0
  %114 = vmatpush1.msra.mxu0 %v64
  %115 = vmatprep.subr.mxu0 0.0
  %116 = vmatpush1.msra.mxu0 %v63
  %117 = vmatprep.subr.mxu0 0.0
  %118 = vmatpush1.msra.mxu0 %v62
  %119 = vmatprep.subr.mxu0 0.0
  %120 = vmatpush1.msra.mxu0 %v61
  %121 = vmatprep.subr.mxu0 0.0
  %122 = vmatpush1.msra.mxu0 %v60
  %123 = vmatprep.subr.mxu0 0.0
  %124 = vmatpush1.msra.mxu0 %v59
  %125 = vmatprep.subr.mxu0 0.0
  %126 = vmatpush1.msra.mxu0 %v58
  %127 = vmatprep.subr.mxu0 0.0
  %128 = vmatpush1.msra.mxu0 %v57
  %129 = vmatprep.subr.mxu0 0.0
  %130 = vmatpush1.msra.mxu0 %v56
  %131 = vmatprep.subr.mxu0 0.0
  %132 = vmatpush1.msra.mxu0 %v55
  %133 = vmatprep.subr.mxu0 0.0
  %134 = vmatpush1.msra.mxu0 %v54
  %135 = vmatprep.subr.mxu0 0.0
  %136 = vmatpush1.msra.mxu0 %v53
  %137 = vmatprep.subr.mxu0 0.0
  %138 = vmatpush1.msra.mxu0 %v52
  %139 = vmatprep.subr.mxu0 0.0
  %140 = vmatpush1.msra.mxu0 %v51
  %141 = vmatprep.subr.mxu0 0.0
  %142 = vmatpush1.msra.mxu0 %v50
  %143 = vmatprep.subr.mxu0 0.0
  %144 = vmatpush1.msra.mxu0 %v49
  %145 = vmatprep.subr.mxu0 0.0
  %146 = vmatpush2.msra.mxu0 %v80
  %147 = vmatprep.subr.mxu0 0.0
  %148 = vmatpush2.msra.mxu0 %v79
  %149 = vmatprep.subr.mxu0 0.0
  %150 = vmatpush2.msra.mxu0 %v78
  %151 = vmatprep.subr.mxu0 0.0
  %152 = vmatpush2.msra.mxu0 %v77
  %153 = vmatprep.subr.mxu0 0.0
  %154 = vmatpush2.msra.mxu0 %v76
  %155 = vmatprep.subr.mxu0 0.0
  %156 = vmatpush2.msra.mxu0 %v75
  %157 = vmatprep.subr.mxu0 0.0
  %158 = vmatpush2.msra.mxu0 %v74
  %159 = vmatprep.subr.mxu0 0.0
  %160 = vmatpush2.msra.mxu0 %v73
  %161 = vmatprep.subr.mxu0 0.0
  %162 = vmatpush2.msra.mxu0 %v72
  %163 = vmatprep.subr.mxu0 0.0
  %164 = vmatpush2.msra.mxu0 %v71
  %165 = vmatprep.subr.mxu0 0.0
  %166 = vmatpush2.msra.mxu0 %v70
  %167 = vmatprep.subr.mxu0 0.0
  %168 = vmatpush2.msra.mxu0 %v69
  %169 = vmatprep.subr.mxu0 0.0
  %170 = vmatpush2.msra.mxu0 %v68
  %171 = vmatprep.subr.mxu0 0.0
  %172 = vmatpush2.msra.mxu0 %v67
  %173 = vmatprep.subr.mxu0 0.0
  %174 = vmatpush2.msra.mxu0 %v66
  %175 = vmatprep.subr.mxu0 0.0
  %176 = vmatpush2.msra.mxu0 %v65
  %177 = vmatprep.mubr.f32.mxu0 %v18
  %178 = vmatmul.mubr.f32.gmra.mxu0 %v17
  %v179 = vpop.f32.mrf.mxu0
  %v180 = vadd.f32 0.0, %v179
  %v181 = vpop.f32.mrf.mxu0
  %182 = vmatprep.mubr.f32.mxu0 %v22
  %183 = vmatmul.mubr.f32.gmra.mxu0 %v21
  %v184 = vpop.f32.mrf.mxu0
  %v185 = vadd.f32 0.0, %v184
  %v186 = vpop.f32.mrf.mxu0
  %187 = vmatprep.mubr.f32.mxu0 %v26
  %188 = vmatmul.mubr.f32.gmra.mxu0 %v25
  %v189 = vpop.f32.mrf.mxu0
  %v190 = vadd.f32 0.0, %v189
  %v191 = vpop.f32.mrf.mxu0
  %192 = vmatprep.mubr.f32.mxu0 %v30
  %193 = vmatmul.mubr.f32.gmra.mxu0 %v29
  %v194 = vpop.f32.mrf.mxu0
  %v195 = vadd.f32 0.0, %v194
  %v196 = vpop.f32.mrf.mxu0
  %197 = vmatprep.mubr.f32.mxu0 %v34
  %198 = vmatmul.mubr.f32.gmra.mxu0 %v33
  %v199 = vpop.f32.mrf.mxu0
  %v200 = vadd.f32 0.0, %v199
  %v201 = vpop.f32.mrf.mxu0
  %202 = vmatprep.mubr.f32.mxu0 %v38
  %203 = vmatmul.mubr.f32.gmra.mxu0 %v37
  %v204 = vpop.f32.mrf.mxu0
  %v205 = vadd.f32 0.0, %v204
  %v206 = vpop.f32.mrf.mxu0
  %207 = vmatprep.mubr.f32.mxu0 %v42
  %208 = vmatmul.mubr.f32.gmra.mxu0 %v41
  %v209 = vpop.f32.mrf.mxu0
  %v210 = vadd.f32 0.0, %v209
  %v211 = vpop.f32.mrf.mxu0
  %212 = vmatprep.mubr.f32.mxu0 %v46
  %213 = vmatmul.mubr.f32.gmra.mxu0 %v45
  %v214 = vpop.f32.mrf.mxu0
  %v215 = vadd.f32 0.0, %v214
  %v216 = vpop.f32.mrf.mxu0
  %217 = vdwg.mxu0
  %218 = vmatprep.subr.mxu0 0.0
  %219 = vmatpush1.msra.mxu0 %v96
  %220 = vmatprep.subr.mxu0 0.0
  %221 = vmatpush1.msra.mxu0 %v95
  %222 = vmatprep.subr.mxu0 0.0
  %223 = vmatpush1.msra.mxu0 %v94
  %224 = vmatprep.subr.mxu0 0.0
  %225 = vmatpush1.msra.mxu0 %v93
  %226 = vmatprep.subr.mxu0 0.0
  %227 = vmatpush1.msra.mxu0 %v92
  %228 = vmatprep.subr.mxu0 0.0
  %229 = vmatpush1.msra.mxu0 %v91
  %230 = vmatprep.subr.mxu0 0.0
  %231 = vmatpush1.msra.mxu0 %v90
  %232 = vmatprep.subr.mxu0 0.0
  %233 = vmatpush1.msra.mxu0 %v89
  %234 = vmatprep.subr.mxu0 0.0
  %235 = vmatpush1.msra.mxu0 %v88
  %236 = vmatprep.subr.mxu0 0.0
  %237 = vmatpush1.msra.mxu0 %v87
  %238 = vmatprep.subr.mxu0 0.0
  %239 = vmatpush1.msra.mxu0 %v86
  %240 = vmatprep.subr.mxu0 0.0
  %241 = vmatpush1.msra.mxu0 %v85
  %242 = vmatprep.subr.mxu0 0.0
  %243 = vmatpush1.msra.mxu0 %v84
  %244 = vmatprep.subr.mxu0 0.0
  %245 = vmatpush1.msra.mxu0 %v83
  %246 = vmatprep.subr.mxu0 0.0
  %247 = vmatpush1.msra.mxu0 %v82
  %248 = vmatprep.subr.mxu0 0.0
  %249 = vmatpush1.msra.mxu0 %v81
  %250 = vmatprep.subr.mxu0 0.0
  %251 = vmatpush2.msra.mxu0 %v112
  %252 = vmatprep.subr.mxu0 0.0
  %253 = vmatpush2.msra.mxu0 %v111
  %254 = vmatprep.subr.mxu0 0.0
  %255 = vmatpush2.msra.mxu0 %v110
  %256 = vmatprep.subr.mxu0 0.0
  %257 = vmatpush2.msra.mxu0 %v109
  %258 = vmatprep.subr.mxu0 0.0
  %259 = vmatpush2.msra.mxu0 %v108
  %260 = vmatprep.subr.mxu0 0.0
  %261 = vmatpush2.msra.mxu0 %v107
  %262 = vmatprep.subr.mxu0 0.0
  %263 = vmatpush2.msra.mxu0 %v106
  %264 = vmatprep.subr.mxu0 0.0
  %265 = vmatpush2.msra.mxu0 %v105
  %266 = vmatprep.subr.mxu0 0.0
  %267 = vmatpush2.msra.mxu0 %v104
  %268 = vmatprep.subr.mxu0 0.0
  %269 = vmatpush2.msra.mxu0 %v103
  %270 = vmatprep.subr.mxu0 0.0
  %271 = vmatpush2.msra.mxu0 %v102
  %272 = vmatprep.subr.mxu0 0.0
  %273 = vmatpush2.msra.mxu0 %v101
  %274 = vmatprep.subr.mxu0 0.0
  %275 = vmatpush2.msra.mxu0 %v100
  %276 = vmatprep.subr.mxu0 0.0
  %277 = vmatpush2.msra.mxu0 %v99
  %278 = vmatprep.subr.mxu0 0.0
  %279 = vmatpush2.msra.mxu0 %v98
  %280 = vmatprep.subr.mxu0 0.0
  %281 = vmatpush2.msra.mxu0 %v97
  %282 = vmatprep.mubr.f32.mxu0 %v20
  %283 = vmatmul.mubr.f32.gmra.mxu0 %v19
  %v284 = vpop.f32.mrf.mxu0
  %v285 = vadd.f32 %v180, %v284
  %v286 = vpop.f32.mrf.mxu0
  %287 = vmatprep.mubr.f32.mxu0 %v24
  %288 = vmatmul.mubr.f32.gmra.mxu0 %v23
  %v289 = vpop.f32.mrf.mxu0
  %v290 = vadd.f32 %v185, %v289
  %v291 = vpop.f32.mrf.mxu0
  %292 = vmatprep.mubr.f32.mxu0 %v28
  %293 = vmatmul.mubr.f32.gmra.mxu0 %v27
  %v294 = vpop.f32.mrf.mxu0
  %v295 = vadd.f32 %v190, %v294
  %v296 = vpop.f32.mrf.mxu0
  %297 = vmatprep.mubr.f32.mxu0 %v32
  %298 = vmatmul.mubr.f32.gmra.mxu0 %v31
  %v299 = vpop.f32.mrf.mxu0
  %v300 = vadd.f32 %v195, %v299
  %v301 = vpop.f32.mrf.mxu0
  %302 = vmatprep.mubr.f32.mxu0 %v36
  %303 = vmatmul.mubr.f32.gmra.mxu0 %v35
  %v304 = vpop.f32.mrf.mxu0
  %v305 = vadd.f32 %v200, %v304
  %v306 = vpop.f32.mrf.mxu0
  %307 = vmatprep.mubr.f32.mxu0 %v40
  %308 = vmatmul.mubr.f32.gmra.mxu0 %v39
  %v309 = vpop.f32.mrf.mxu0
  %v310 = vadd.f32 %v205, %v309
  %v311 = vpop.f32.mrf.mxu0
  %312 = vmatprep.mubr.f32.mxu0 %v44
  %313 = vmatmul.mubr.f32.gmra.mxu0 %v43
  %v314 = vpop.f32.mrf.mxu0
  %v315 = vadd.f32 %v210, %v314
  %v316 = vpop.f32.mrf.mxu0
  %317 = vmatprep.mubr.f32.mxu0 %v48
  %318 = vmatmul.mubr.f32.gmra.mxu0 %v47
  %v319 = vpop.f32.mrf.mxu0
  %v320 = vadd.f32 %v215, %v319
  %v321 = vpop.f32.mrf.mxu0
  %322 = vdwg.mxu0
  %323 = vadd.xlane.f32.xlu0 %v285
  %v324 = vpop.xlane.xlu0 %323
  %325 = vadd.xlane.f32.xlu0 %v290
  %v326 = vpop.xlane.xlu0 %325
  %327 = vadd.xlane.f32.xlu0 %v295
  %v328 = vpop.xlane.xlu0 %327
  %329 = vadd.xlane.f32.xlu0 %v300
  %v330 = vpop.xlane.xlu0 %329
  %331 = vadd.xlane.f32.xlu0 %v305
  %v332 = vpop.xlane.xlu0 %331
  %333 = vadd.xlane.f32.xlu0 %v310
  %v334 = vpop.xlane.xlu0 %333
  %335 = vadd.xlane.f32.xlu0 %v315
  %v336 = vpop.xlane.xlu0 %335
  %337 = vadd.xlane.f32.xlu0 %v320
  %v338 = vpop.xlane.xlu0 %337
  %v339 = vmul.f32 %v285, %v285
  %v340 = vmul.f32 %v290, %v290
  %v341 = vmul.f32 %v295, %v295
  %v342 = vmul.f32 %v300, %v300
  %v343 = vmul.f32 %v305, %v305
  %v344 = vmul.f32 %v310, %v310
  %v345 = vmul.f32 %v315, %v315
  %v346 = vmul.f32 %v320, %v320
  %347 = vadd.xlane.f32.xlu0 %v339
  %v348 = vpop.xlane.xlu0 %347
  %349 = vadd.xlane.f32.xlu0 %v340
  %v350 = vpop.xlane.xlu0 %349
  %351 = vadd.xlane.f32.xlu0 %v341
  %v352 = vpop.xlane.xlu0 %351
  %353 = vadd.xlane.f32.xlu0 %v342
  %v354 = vpop.xlane.xlu0 %353
  %355 = vadd.xlane.f32.xlu0 %v343
  %v356 = vpop.xlane.xlu0 %355
  %357 = vadd.xlane.f32.xlu0 %v344
  %v358 = vpop.xlane.xlu0 %357
  %359 = vadd.xlane.f32.xlu0 %v345
  %v360 = vpop.xlane.xlu0 %359
  %361 = vadd.xlane.f32.xlu0 %v346
  %v362 = vpop.xlane.xlu0 %361
  %v363 = vmul.f32 %v324, 0.125
  %v364 = vmul.f32 %v326, 0.125
  %v365 = vmul.f32 %v328, 0.125
  %v366 = vmul.f32 %v330, 0.125
  %v367 = vmul.f32 %v332, 0.125
  %v368 = vmul.f32 %v334, 0.125
  %v369 = vmul.f32 %v336, 0.125
  %v370 = vmul.f32 %v338, 0.125
  %v371 = vmul.f32 %v348, 0.125
  %v372 = vmul.f32 %v350, 0.125
  %v373 = vmul.f32 %v352, 0.125
  %v374 = vmul.f32 %v354, 0.125
  %v375 = vmul.f32 %v356, 0.125
  %v376 = vmul.f32 %v358, 0.125
  %v377 = vmul.f32 %v360, 0.125
  %v378 = vmul.f32 %v362, 0.125
  %v379 = vmul.f32 %v363, %v363
  %v380 = vmul.f32 %v364, %v364
  %v381 = vmul.f32 %v365, %v365
  %v382 = vmul.f32 %v366, %v366
  %v383 = vmul.f32 %v367, %v367
  %v384 = vmul.f32 %v368, %v368
  %v385 = vmul.f32 %v369, %v369
  %v386 = vmul.f32 %v370, %v370
  %v387 = vsub.f32 %v371, %v379
  %v388 = vsub.f32 %v372, %v380
  %v389 = vsub.f32 %v373, %v381
  %v390 = vsub.f32 %v374, %v382
  %v391 = vsub.f32 %v375, %v383
  %v392 = vsub.f32 %v376, %v384
  %v393 = vsub.f32 %v377, %v385
  %v394 = vsub.f32 %v378, %v386
  %v395 = vmax.f32 %v387, 0.0
  %v396 = vmax.f32 %v388, 0.0
  %v397 = vmax.f32 %v389, 0.0
  %v398 = vmax.f32 %v390, 0.0
  %v399 = vmax.f32 %v391, 0.0
  %v400 = vmax.f32 %v392, 0.0
  %v401 = vmax.f32 %v393, 0.0
  %v402 = vmax.f32 %v394, 0.0
  %v403 = vld [vmem:[%s2] sm:$0xff]
  %v404 = vld [vmem:[%s2 + $0x8] sm:$0xff]
  %v405 = vld [vmem:[%s2 + $0x10] sm:$0xff]
  %v406 = vld [vmem:[%s2 + $0x18] sm:$0xff]
  %v407 = vld [vmem:[%s2 + $0x20] sm:$0xff]
  %v408 = vld [vmem:[%s2 + $0x28] sm:$0xff]
  %v409 = vld [vmem:[%s2 + $0x30] sm:$0xff]
  %v410 = vld [vmem:[%s2 + $0x38] sm:$0xff]
  %v411 = vadd.f32 %v395, 1e-05
  %v412 = vadd.f32 %v396, 1e-05
  %v413 = vadd.f32 %v397, 1e-05
  %v414 = vadd.f32 %v398, 1e-05
  %v415 = vadd.f32 %v399, 1e-05
  %v416 = vadd.f32 %v400, 1e-05
  %v417 = vadd.f32 %v401, 1e-05
  %v418 = vadd.f32 %v402, 1e-05
  %v419 = vrsqrt.pop %v411
  %v420 = vrsqrt.pop %v412
  %v421 = vrsqrt.pop %v413
  %v422 = vrsqrt.pop %v414
  %v423 = vrsqrt.pop %v415
  %v424 = vrsqrt.pop %v416
  %v425 = vrsqrt.pop %v417
  %v426 = vrsqrt.pop %v418
  %v427 = vmul.f32 %v403, %v419
  %v428 = vmul.f32 %v404, %v420
  %v429 = vmul.f32 %v405, %v421
  %v430 = vmul.f32 %v406, %v422
  %v431 = vmul.f32 %v407, %v423
  %v432 = vmul.f32 %v408, %v424
  %v433 = vmul.f32 %v409, %v425
  %v434 = vmul.f32 %v410, %v426
  %v435 = vld [vmem:[%s3] sm:$0xff]
  %v436 = vld [vmem:[%s3 + $0x8] sm:$0xff]
  %v437 = vld [vmem:[%s3 + $0x10] sm:$0xff]
  %v438 = vld [vmem:[%s3 + $0x18] sm:$0xff]
  %v439 = vld [vmem:[%s3 + $0x20] sm:$0xff]
  %v440 = vld [vmem:[%s3 + $0x28] sm:$0xff]
  %v441 = vld [vmem:[%s3 + $0x30] sm:$0xff]
  %v442 = vld [vmem:[%s3 + $0x38] sm:$0xff]
  %v443 = vmul.f32 %v363, %v427
  %v444 = vmul.f32 %v364, %v428
  %v445 = vmul.f32 %v365, %v429
  %v446 = vmul.f32 %v366, %v430
  %v447 = vmul.f32 %v367, %v431
  %v448 = vmul.f32 %v368, %v432
  %v449 = vmul.f32 %v369, %v433
  %v450 = vmul.f32 %v370, %v434
  %v451 = vsub.f32 %v435, %v443
  %v452 = vsub.f32 %v436, %v444
  %v453 = vsub.f32 %v437, %v445
  %v454 = vsub.f32 %v438, %v446
  %v455 = vsub.f32 %v439, %v447
  %v456 = vsub.f32 %v440, %v448
  %v457 = vsub.f32 %v441, %v449
  %v458 = vsub.f32 %v442, %v450
  %460 = vset.pattern.permute.xlu0 0
  %461 = vperm.xlu0 %460, %v427
  %v462 = vpop.permute.xlu0 %461
  %465 = vset.pattern.permute.xlu0 0
  %466 = vperm.xlu0 %465, %v428
  %v467 = vpop.permute.xlu0 %466
  %470 = vset.pattern.permute.xlu0 0
  %471 = vperm.xlu0 %470, %v429
  %v472 = vpop.permute.xlu0 %471
  %475 = vset.pattern.permute.xlu0 0
  %476 = vperm.xlu0 %475, %v430
  %v477 = vpop.permute.xlu0 %476
  %480 = vset.pattern.permute.xlu0 0
  %481 = vperm.xlu0 %480, %v431
  %v482 = vpop.permute.xlu0 %481
  %485 = vset.pattern.permute.xlu0 0
  %486 = vperm.xlu0 %485, %v432
  %v487 = vpop.permute.xlu0 %486
  %490 = vset.pattern.permute.xlu0 0
  %491 = vperm.xlu0 %490, %v433
  %v492 = vpop.permute.xlu0 %491
  %495 = vset.pattern.permute.xlu0 0
  %496 = vperm.xlu0 %495, %v434
  %v497 = vpop.permute.xlu0 %496
  %v499 = vmul.f32 %v285, %v462
  %v500 = vmul.f32 %v290, %v467
  %v501 = vmul.f32 %v295, %v472
  %v502 = vmul.f32 %v300, %v477
  %v503 = vmul.f32 %v305, %v482
  %v504 = vmul.f32 %v310, %v487
  %v505 = vmul.f32 %v315, %v492
  %v506 = vmul.f32 %v320, %v497
  %508 = vset.pattern.permute.xlu0 0
  %509 = vperm.xlu0 %508, %v451
  %v510 = vpop.permute.xlu0 %509
  %513 = vset.pattern.permute.xlu0 0
  %514 = vperm.xlu0 %513, %v452
  %v515 = vpop.permute.xlu0 %514
  %518 = vset.pattern.permute.xlu0 0
  %519 = vperm.xlu0 %518, %v453
  %v520 = vpop.permute.xlu0 %519
  %523 = vset.pattern.permute.xlu0 0
  %524 = vperm.xlu0 %523, %v454
  %v525 = vpop.permute.xlu0 %524
  %528 = vset.pattern.permute.xlu0 0
  %529 = vperm.xlu0 %528, %v455
  %v530 = vpop.permute.xlu0 %529
  %533 = vset.pattern.permute.xlu0 0
  %534 = vperm.xlu0 %533, %v456
  %v535 = vpop.permute.xlu0 %534
  %538 = vset.pattern.permute.xlu0 0
  %539 = vperm.xlu0 %538, %v457
  %v540 = vpop.permute.xlu0 %539
  %543 = vset.pattern.permute.xlu0 0
  %544 = vperm.xlu0 %543, %v458
  %v545 = vpop.permute.xlu0 %544
  %v547 = vadd.f32 %v499, %v510
  %v548 = vadd.f32 %v500, %v515
  %v549 = vadd.f32 %v501, %v520
  %v550 = vadd.f32 %v502, %v525
  %v551 = vadd.f32 %v503, %v530
  %v552 = vadd.f32 %v504, %v535
  %v553 = vadd.f32 %v505, %v540
  %v554 = vadd.f32 %v506, %v545
  %vm555 = vcmp.ge.f32.partialorder %v547, 0.0
  %vm556 = vcmp.ge.f32.partialorder %v548, 0.0
  %vm557 = vcmp.ge.f32.partialorder %v549, 0.0
  %vm558 = vcmp.ge.f32.partialorder %v550, 0.0
  %vm559 = vcmp.ge.f32.partialorder %v551, 0.0
  %vm560 = vcmp.ge.f32.partialorder %v552, 0.0
  %vm561 = vcmp.ge.f32.partialorder %v553, 0.0
  %vm562 = vcmp.ge.f32.partialorder %v554, 0.0
  %v563 = vmul.f32 %v547, 0.2
  %v564 = vmul.f32 %v548, 0.2
  %v565 = vmul.f32 %v549, 0.2
  %v566 = vmul.f32 %v550, 0.2
  %v567 = vmul.f32 %v551, 0.2
  %v568 = vmul.f32 %v552, 0.2
  %v569 = vmul.f32 %v553, 0.2
  %v570 = vmul.f32 %v554, 0.2
  %v571 = vsel %vm555, %v547, %v563
  %v572 = vsel %vm556, %v548, %v564
  %v573 = vsel %vm557, %v549, %v565
  %v574 = vsel %vm558, %v550, %v566
  %v575 = vsel %vm559, %v551, %v567
  %v576 = vsel %vm560, %v552, %v568
  %v577 = vsel %vm561, %v553, %v569
  %v578 = vsel %vm562, %v554, %v570
  %579 = vst [vmem:[%s4] sm:$0xff] %v571
  %580 = vst [vmem:[%s4 + $0x8] sm:$0xff] %v572
  %581 = vst [vmem:[%s4 + $0x10] sm:$0xff] %v573
  %582 = vst [vmem:[%s4 + $0x18] sm:$0xff] %v574
  %583 = vst [vmem:[%s4 + $0x20] sm:$0xff] %v575
  %584 = vst [vmem:[%s4 + $0x28] sm:$0xff] %v576
  %585 = vst [vmem:[%s4 + $0x30] sm:$0xff] %v577
  %586 = vst [vmem:[%s4 + $0x38] sm:$0xff] %v578
  // Predicated region
  $region18: #{multi_scale_forward.28} parent=0 // pred_check
    _
  $region19: #{multi_scale_forward.28} parent=0 // pred_check_branch
    %588 = sbr.rel (0) target = $region21
  $region20: #{multi_scale_forward.28} parent=0 // pred_region
    _
  $region21: #{multi_scale_forward.28} parent=0 // pred_fallthru
    _
  // Predicated region
  $region22: #{multi_scale_forward.28} parent=0 // pred_check
    _
  $region23: #{multi_scale_forward.28} parent=0 // pred_check_branch
    %590 = sbr.rel (0) target = $region25
  $region24: #{multi_scale_forward.28} parent=0 // pred_region
    _
  $region25: #{multi_scale_forward.28} parent=0 // pred_fallthru
    _

// kernel: multi_scale_forward.29
$region0: #{multi_scale_forward.29}
  #allocation0 [shape = 'u32[]', space=smem, size = 0x4, offset = 0x4, fixed_abs, tag = 'smem constant byte address 0x4 - core index']
  #allocation1 [shape = 'u32[144,128]{1,0:T(1,128)}', space=vmem, size = 0x12000, scoped, tag = 'internal scratch']
  %s0 = inlined_call_operand.vmem [shape: f32[8,1024], index: 0, kind: input, shape index: {}]
  %s1 = inlined_call_operand.vmem [shape: f32[1024,128], index: 1, kind: input, shape index: {}]
  %s2 = inlined_call_operand.vmem [shape: f32[8,1], index: 2, kind: input, shape index: {}]
  %s3 = inlined_call_operand.vmem [shape: f32[8,128], index: 3, kind: output, shape index: {}]
  %s4 = sld [smem:[#allocation0]]
  $region22: #{multi_scale_forward.29} parent=0
    _
  %s6 = ssub.s32 1, %s4
  %s7 = scalar_select 0, %s6, %s4
  // Predicated region
  $region2: #{multi_scale_forward.29} parent=0 // pred_check
    _
  $region3: #{multi_scale_forward.29} parent=0 // pred_check_branch
    %9 = sbr.rel (0) target = $region5
  $region4: #{multi_scale_forward.29} parent=0 // pred_region
    _
  $region5: #{multi_scale_forward.29} parent=0 // pred_fallthru
    _
  // Predicated region
  $region6: #{multi_scale_forward.29} parent=0 // pred_check
    _
  $region7: #{multi_scale_forward.29} parent=0 // pred_check_branch
    %11 = sbr.rel (0) target = $region9
  $region8: #{multi_scale_forward.29} parent=0 // pred_region
    _
  $region9: #{multi_scale_forward.29} parent=0 // pred_fallthru
    _
  // Predicated region
  $region10: #{multi_scale_forward.29} parent=0 // pred_check
    _
  $region11: #{multi_scale_forward.29} parent=0 // pred_check_branch
    %13 = sbr.rel (0) target = $region13
  $region12: #{multi_scale_forward.29} parent=0 // pred_region
    _
  $region13: #{multi_scale_forward.29} parent=0 // pred_fallthru
    _
  %v14 = vld [vmem:[%s0] sm:$0xff]
  %v15 = vld [vmem:[%s0 + $0x8] sm:$0xff]
  %v16 = vld [vmem:[%s0 + $0x10] sm:$0xff]
  %v17 = vld [vmem:[%s0 + $0x18] sm:$0xff]
  %v18 = vld [vmem:[%s0 + $0x20] sm:$0xff]
  %v19 = vld [vmem:[%s0 + $0x28] sm:$0xff]
  %v20 = vld [vmem:[%s0 + $0x30] sm:$0xff]
  %v21 = vld [vmem:[%s0 + $0x38] sm:$0xff]
  %v22 = vld [vmem:[%s1] sm:$0xff]
  %v23 = vld [vmem:[%s1 + $0x8] sm:$0xff]
  %v24 = vld [vmem:[%s1 + $0x10] sm:$0xff]
  %v25 = vld [vmem:[%s1 + $0x18] sm:$0xff]
  %v26 = vld [vmem:[%s1 + $0x20] sm:$0xff]
  %v27 = vld [vmem:[%s1 + $0x28] sm:$0xff]
  %v28 = vld [vmem:[%s1 + $0x30] sm:$0xff]
  %v29 = vld [vmem:[%s1 + $0x38] sm:$0xff]
  %v30 = vld [vmem:[%s1 + $0x40] sm:$0xff]
  %v31 = vld [vmem:[%s1 + $0x48] sm:$0xff]
  %v32 = vld [vmem:[%s1 + $0x50] sm:$0xff]
  %v33 = vld [vmem:[%s1 + $0x58] sm:$0xff]
  %v34 = vld [vmem:[%s1 + $0x60] sm:$0xff]
  %v35 = vld [vmem:[%s1 + $0x68] sm:$0xff]
  %v36 = vld [vmem:[%s1 + $0x70] sm:$0xff]
  %v37 = vld [vmem:[%s1 + $0x78] sm:$0xff]
  %v38 = vld [vmem:[%s1 + $0x80] sm:$0xff]
  %v39 = vld [vmem:[%s1 + $0x88] sm:$0xff]
  %v40 = vld [vmem:[%s1 + $0x90] sm:$0xff]
  %v41 = vld [vmem:[%s1 + $0x98] sm:$0xff]
  %v42 = vld [vmem:[%s1 + $0xa0] sm:$0xff]
  %v43 = vld [vmem:[%s1 + $0xa8] sm:$0xff]
  %v44 = vld [vmem:[%s1 + $0xb0] sm:$0xff]
  %v45 = vld [vmem:[%s1 + $0xb8] sm:$0xff]
  %v46 = vld [vmem:[%s1 + $0xc0] sm:$0xff]
  %v47 = vld [vmem:[%s1 + $0xc8] sm:$0xff]
  %v48 = vld [vmem:[%s1 + $0xd0] sm:$0xff]
  %v49 = vld [vmem:[%s1 + $0xd8] sm:$0xff]
  %v50 = vld [vmem:[%s1 + $0xe0] sm:$0xff]
  %v51 = vld [vmem:[%s1 + $0xe8] sm:$0xff]
  %v52 = vld [vmem:[%s1 + $0xf0] sm:$0xff]
  %v53 = vld [vmem:[%s1 + $0xf8] sm:$0xff]
  %v54 = vld [vmem:[%s1 + $0x100] sm:$0xff]
  %v55 = vld [vmem:[%s1 + $0x108] sm:$0xff]
  %v56 = vld [vmem:[%s1 + $0x110] sm:$0xff]
  %v57 = vld [vmem:[%s1 + $0x118] sm:$0xff]
  %v58 = vld [vmem:[%s1 + $0x120] sm:$0xff]
  %v59 = vld [vmem:[%s1 + $0x128] sm:$0xff]
  %v60 = vld [vmem:[%s1 + $0x130] sm:$0xff]
  %v61 = vld [vmem:[%s1 + $0x138] sm:$0xff]
  %v62 = vld [vmem:[%s1 + $0x140] sm:$0xff]
  %v63 = vld [vmem:[%s1 + $0x148] sm:$0xff]
  %v64 = vld [vmem:[%s1 + $0x150] sm:$0xff]
  %v65 = vld [vmem:[%s1 + $0x158] sm:$0xff]
  %v66 = vld [vmem:[%s1 + $0x160] sm:$0xff]
  %v67 = vld [vmem:[%s1 + $0x168] sm:$0xff]
  %v68 = vld [vmem:[%s1 + $0x170] sm:$0xff]
  %v69 = vld [vmem:[%s1 + $0x178] sm:$0xff]
  %v70 = vld [vmem:[%s1 + $0x180] sm:$0xff]
  %v71 = vld [vmem:[%s1 + $0x188] sm:$0xff]
  %v72 = vld [vmem:[%s1 + $0x190] sm:$0xff]
  %v73 = vld [vmem:[%s1 + $0x198] sm:$0xff]
  %v74 = vld [vmem:[%s1 + $0x1a0] sm:$0xff]
  %v75 = vld [vmem:[%s1 + $0x1a8] sm:$0xff]
  %v76 = vld [vmem:[%s1 + $0x1b0] sm:$0xff]
  %v77 = vld [vmem:[%s1 + $0x1b8] sm:$0xff]
  %v78 = vld [vmem:[%s1 + $0x1c0] sm:$0xff]
  %v79 = vld [vmem:[%s1 + $0x1c8] sm:$0xff]
  %v80 = vld [vmem:[%s1 + $0x1d0] sm:$0xff]
  %v81 = vld [vmem:[%s1 + $0x1d8] sm:$0xff]
  %v82 = vld [vmem:[%s1 + $0x1e0] sm:$0xff]
  %v83 = vld [vmem:[%s1 + $0x1e8] sm:$0xff]
  %v84 = vld [vmem:[%s1 + $0x1f0] sm:$0xff]
  %v85 = vld [vmem:[%s1 + $0x1f8] sm:$0xff]
  %v86 = vld [vmem:[%s1 + $0x200] sm:$0xff]
  %v87 = vld [vmem:[%s1 + $0x208] sm:$0xff]
  %v88 = vld [vmem:[%s1 + $0x210] sm:$0xff]
  %v89 = vld [vmem:[%s1 + $0x218] sm:$0xff]
  %v90 = vld [vmem:[%s1 + $0x220] sm:$0xff]
  %v91 = vld [vmem:[%s1 + $0x228] sm:$0xff]
  %v92 = vld [vmem:[%s1 + $0x230] sm:$0xff]
  %v93 = vld [vmem:[%s1 + $0x238] sm:$0xff]
  %v94 = vld [vmem:[%s1 + $0x240] sm:$0xff]
  %v95 = vld [vmem:[%s1 + $0x248] sm:$0xff]
  %v96 = vld [vmem:[%s1 + $0x250] sm:$0xff]
  %v97 = vld [vmem:[%s1 + $0x258] sm:$0xff]
  %v98 = vld [vmem:[%s1 + $0x260] sm:$0xff]
  %v99 = vld [vmem:[%s1 + $0x268] sm:$0xff]
  %v100 = vld [vmem:[%s1 + $0x270] sm:$0xff]
  %v101 = vld [vmem:[%s1 + $0x278] sm:$0xff]
  %v102 = vld [vmem:[%s1 + $0x280] sm:$0xff]
  %v103 = vld [vmem:[%s1 + $0x288] sm:$0xff]
  %v104 = vld [vmem:[%s1 + $0x290] sm:$0xff]
  %v105 = vld [vmem:[%s1 + $0x298] sm:$0xff]
  %v106 = vld [vmem:[%s1 + $0x2a0] sm:$0xff]
  %v107 = vld [vmem:[%s1 + $0x2a8] sm:$0xff]
  %v108 = vld [vmem:[%s1 + $0x2b0] sm:$0xff]
  %v109 = vld [vmem:[%s1 + $0x2b8] sm:$0xff]
  %v110 = vld [vmem:[%s1 + $0x2c0] sm:$0xff]
  %v111 = vld [vmem:[%s1 + $0x2c8] sm:$0xff]
  %v112 = vld [vmem:[%s1 + $0x2d0] sm:$0xff]
  %v113 = vld [vmem:[%s1 + $0x2d8] sm:$0xff]
  %v114 = vld [vmem:[%s1 + $0x2e0] sm:$0xff]
  %v115 = vld [vmem:[%s1 + $0x2e8] sm:$0xff]
  %v116 = vld [vmem:[%s1 + $0x2f0] sm:$0xff]
  %v117 = vld [vmem:[%s1 + $0x2f8] sm:$0xff]
  %v118 = vld [vmem:[%s1 + $0x300] sm:$0xff]
  %v119 = vld [vmem:[%s1 + $0x308] sm:$0xff]
  %v120 = vld [vmem:[%s1 + $0x310] sm:$0xff]
  %v121 = vld [vmem:[%s1 + $0x318] sm:$0xff]
  %v122 = vld [vmem:[%s1 + $0x320] sm:$0xff]
  %v123 = vld [vmem:[%s1 + $0x328] sm:$0xff]
  %v124 = vld [vmem:[%s1 + $0x330] sm:$0xff]
  %v125 = vld [vmem:[%s1 + $0x338] sm:$0xff]
  %v126 = vld [vmem:[%s1 + $0x340] sm:$0xff]
  %v127 = vld [vmem:[%s1 + $0x348] sm:$0xff]
  %v128 = vld [vmem:[%s1 + $0x350] sm:$0xff]
  %v129 = vld [vmem:[%s1 + $0x358] sm:$0xff]
  %v130 = vld [vmem:[%s1 + $0x360] sm:$0xff]
  %v131 = vld [vmem:[%s1 + $0x368] sm:$0xff]
  %v132 = vld [vmem:[%s1 + $0x370] sm:$0xff]
  %v133 = vld [vmem:[%s1 + $0x378] sm:$0xff]
  %v134 = vld [vmem:[%s1 + $0x380] sm:$0xff]
  %v135 = vld [vmem:[%s1 + $0x388] sm:$0xff]
  %v136 = vld [vmem:[%s1 + $0x390] sm:$0xff]
  %v137 = vld [vmem:[%s1 + $0x398] sm:$0xff]
  %v138 = vld [vmem:[%s1 + $0x3a0] sm:$0xff]
  %v139 = vld [vmem:[%s1 + $0x3a8] sm:$0xff]
  %v140 = vld [vmem:[%s1 + $0x3b0] sm:$0xff]
  %v141 = vld [vmem:[%s1 + $0x3b8] sm:$0xff]
  %v142 = vld [vmem:[%s1 + $0x3c0] sm:$0xff]
  %v143 = vld [vmem:[%s1 + $0x3c8] sm:$0xff]
  %v144 = vld [vmem:[%s1 + $0x3d0] sm:$0xff]
  %v145 = vld [vmem:[%s1 + $0x3d8] sm:$0xff]
  %v146 = vld [vmem:[%s1 + $0x3e0] sm:$0xff]
  %v147 = vld [vmem:[%s1 + $0x3e8] sm:$0xff]
  %v148 = vld [vmem:[%s1 + $0x3f0] sm:$0xff]
  %v149 = vld [vmem:[%s1 + $0x3f8] sm:$0xff]
  %v150 = vld [vmem:[%s2] sm:$0xff]
  %152 = vset.pattern.permute.xlu0 0
  %153 = vperm.xlu0 %152, %v150
  %v154 = vpop.permute.xlu0 %153
  %156 = vmatprep.subr.mxu0 0.0
  %157 = vmatpush1.msra.mxu0 %v37
  %158 = vmatprep.subr.mxu0 0.0
  %159 = vmatpush1.msra.mxu0 %v36
  %160 = vmatprep.subr.mxu0 0.0
  %161 = vmatpush1.msra.mxu0 %v35
  %162 = vmatprep.subr.mxu0 0.0
  %163 = vmatpush1.msra.mxu0 %v34
  %164 = vmatprep.subr.mxu0 0.0
  %165 = vmatpush1.msra.mxu0 %v33
  %166 = vmatprep.subr.mxu0 0.0
  %167 = vmatpush1.msra.mxu0 %v32
  %168 = vmatprep.subr.mxu0 0.0
  %169 = vmatpush1.msra.mxu0 %v31
  %170 = vmatprep.subr.mxu0 0.0
  %171 = vmatpush1.msra.mxu0 %v30
  %172 = vmatprep.subr.mxu0 0.0
  %173 = vmatpush1.msra.mxu0 %v29
  %174 = vmatprep.subr.mxu0 0.0
  %175 = vmatpush1.msra.mxu0 %v28
  %176 = vmatprep.subr.mxu0 0.0
  %177 = vmatpush1.msra.mxu0 %v27
  %178 = vmatprep.subr.mxu0 0.0
  %179 = vmatpush1.msra.mxu0 %v26
  %180 = vmatprep.subr.mxu0 0.0
  %181 = vmatpush1.msra.mxu0 %v25
  %182 = vmatprep.subr.mxu0 0.0
  %183 = vmatpush1.msra.mxu0 %v24
  %184 = vmatprep.subr.mxu0 0.0
  %185 = vmatpush1.msra.mxu0 %v23
  %186 = vmatprep.subr.mxu0 0.0
  %187 = vmatpush1.msra.mxu0 %v22
  %188 = vmatprep.subr.mxu0 0.0
  %189 = vmatpush2.msra.mxu0 %v53
  %190 = vmatprep.subr.mxu0 0.0
  %191 = vmatpush2.msra.mxu0 %v52
  %192 = vmatprep.subr.mxu0 0.0
  %193 = vmatpush2.msra.mxu0 %v51
  %194 = vmatprep.subr.mxu0 0.0
  %195 = vmatpush2.msra.mxu0 %v50
  %196 = vmatprep.subr.mxu0 0.0
  %197 = vmatpush2.msra.mxu0 %v49
  %198 = vmatprep.subr.mxu0 0.0
  %199 = vmatpush2.msra.mxu0 %v48
  %200 = vmatprep.subr.mxu0 0.0
  %201 = vmatpush2.msra.mxu0 %v47
  %202 = vmatprep.subr.mxu0 0.0
  %203 = vmatpush2.msra.mxu0 %v46
  %204 = vmatprep.subr.mxu0 0.0
  %205 = vmatpush2.msra.mxu0 %v45
  %206 = vmatprep.subr.mxu0 0.0
  %207 = vmatpush2.msra.mxu0 %v44
  %208 = vmatprep.subr.mxu0 0.0
  %209 = vmatpush2.msra.mxu0 %v43
  %210 = vmatprep.subr.mxu0 0.0
  %211 = vmatpush2.msra.mxu0 %v42
  %212 = vmatprep.subr.mxu0 0.0
  %213 = vmatpush2.msra.mxu0 %v41
  %214 = vmatprep.subr.mxu0 0.0
  %215 = vmatpush2.msra.mxu0 %v40
  %216 = vmatprep.subr.mxu0 0.0
  %217 = vmatpush2.msra.mxu0 %v39
  %218 = vmatprep.subr.mxu0 0.0
  %219 = vmatpush2.msra.mxu0 %v38
  %220 = vmatprep.mubr.f32.mxu0 %v15
  %221 = vmatmul.mubr.f32.gmra.mxu0 %v14
  %v222 = vpop.f32.mrf.mxu0
  %v223 = vadd.f32 %v154, %v222
  %v224 = vpop.f32.mrf.mxu0
  %225 = vdwg.mxu0
  %226 = vmatprep.subr.mxu0 0.0
  %227 = vmatpush1.msra.mxu0 %v69
  %228 = vmatprep.subr.mxu0 0.0
  %229 = vmatpush1.msra.mxu0 %v68
  %230 = vmatprep.subr.mxu0 0.0
  %231 = vmatpush1.msra.mxu0 %v67
  %232 = vmatprep.subr.mxu0 0.0
  %233 = vmatpush1.msra.mxu0 %v66
  %234 = vmatprep.subr.mxu0 0.0
  %235 = vmatpush1.msra.mxu0 %v65
  %236 = vmatprep.subr.mxu0 0.0
  %237 = vmatpush1.msra.mxu0 %v64
  %238 = vmatprep.subr.mxu0 0.0
  %239 = vmatpush1.msra.mxu0 %v63
  %240 = vmatprep.subr.mxu0 0.0
  %241 = vmatpush1.msra.mxu0 %v62
  %242 = vmatprep.subr.mxu0 0.0
  %243 = vmatpush1.msra.mxu0 %v61
  %244 = vmatprep.subr.mxu0 0.0
  %245 = vmatpush1.msra.mxu0 %v60
  %246 = vmatprep.subr.mxu0 0.0
  %247 = vmatpush1.msra.mxu0 %v59
  %248 = vmatprep.subr.mxu0 0.0
  %249 = vmatpush1.msra.mxu0 %v58
  %250 = vmatprep.subr.mxu0 0.0
  %251 = vmatpush1.msra.mxu0 %v57
  %252 = vmatprep.subr.mxu0 0.0
  %253 = vmatpush1.msra.mxu0 %v56
  %254 = vmatprep.subr.mxu0 0.0
  %255 = vmatpush1.msra.mxu0 %v55
  %256 = vmatprep.subr.mxu0 0.0
  %257 = vmatpush1.msra.mxu0 %v54
  %258 = vmatprep.subr.mxu0 0.0
  %259 = vmatpush2.msra.mxu0 %v85
  %260 = vmatprep.subr.mxu0 0.0
  %261 = vmatpush2.msra.mxu0 %v84
  %262 = vmatprep.subr.mxu0 0.0
  %263 = vmatpush2.msra.mxu0 %v83
  %264 = vmatprep.subr.mxu0 0.0
  %265 = vmatpush2.msra.mxu0 %v82
  %266 = vmatprep.subr.mxu0 0.0
  %267 = vmatpush2.msra.mxu0 %v81
  %268 = vmatprep.subr.mxu0 0.0
  %269 = vmatpush2.msra.mxu0 %v80
  %270 = vmatprep.subr.mxu0 0.0
  %271 = vmatpush2.msra.mxu0 %v79
  %272 = vmatprep.subr.mxu0 0.0
  %273 = vmatpush2.msra.mxu0 %v78
  %274 = vmatprep.subr.mxu0 0.0
  %275 = vmatpush2.msra.mxu0 %v77
  %276 = vmatprep.subr.mxu0 0.0
  %277 = vmatpush2.msra.mxu0 %v76
  %278 = vmatprep.subr.mxu0 0.0
  %279 = vmatpush2.msra.mxu0 %v75
  %280 = vmatprep.subr.mxu0 0.0
  %281 = vmatpush2.msra.mxu0 %v74
  %282 = vmatprep.subr.mxu0 0.0
  %283 = vmatpush2.msra.mxu0 %v73
  %284 = vmatprep.subr.mxu0 0.0
  %285 = vmatpush2.msra.mxu0 %v72
  %286 = vmatprep.subr.mxu0 0.0
  %287 = vmatpush2.msra.mxu0 %v71
  %288 = vmatprep.subr.mxu0 0.0
  %289 = vmatpush2.msra.mxu0 %v70
  %290 = vmatprep.mubr.f32.mxu0 %v17
  %291 = vmatmul.mubr.f32.gmra.mxu0 %v16
  %v292 = vpop.f32.mrf.mxu0
  %v293 = vadd.f32 %v223, %v292
  %v294 = vpop.f32.mrf.mxu0
  %295 = vdwg.mxu0
  %296 = vmatprep.subr.mxu0 0.0
  %297 = vmatpush1.msra.mxu0 %v101
  %298 = vmatprep.subr.mxu0 0.0
  %299 = vmatpush1.msra.mxu0 %v100
  %300 = vmatprep.subr.mxu0 0.0
  %301 = vmatpush1.msra.mxu0 %v99
  %302 = vmatprep.subr.mxu0 0.0
  %303 = vmatpush1.msra.mxu0 %v98
  %304 = vmatprep.subr.mxu0 0.0
  %305 = vmatpush1.msra.mxu0 %v97
  %306 = vmatprep.subr.mxu0 0.0
  %307 = vmatpush1.msra.mxu0 %v96
  %308 = vmatprep.subr.mxu0 0.0
  %309 = vmatpush1.msra.mxu0 %v95
  %310 = vmatprep.subr.mxu0 0.0
  %311 = vmatpush1.msra.mxu0 %v94
  %312 = vmatprep.subr.mxu0 0.0
  %313 = vmatpush1.msra.mxu0 %v93
  %314 = vmatprep.subr.mxu0 0.0
  %315 = vmatpush1.msra.mxu0 %v92
  %316 = vmatprep.subr.mxu0 0.0
  %317 = vmatpush1.msra.mxu0 %v91
  %318 = vmatprep.subr.mxu0 0.0
  %319 = vmatpush1.msra.mxu0 %v90
  %320 = vmatprep.subr.mxu0 0.0
  %321 = vmatpush1.msra.mxu0 %v89
  %322 = vmatprep.subr.mxu0 0.0
  %323 = vmatpush1.msra.mxu0 %v88
  %324 = vmatprep.subr.mxu0 0.0
  %325 = vmatpush1.msra.mxu0 %v87
  %326 = vmatprep.subr.mxu0 0.0
  %327 = vmatpush1.msra.mxu0 %v86
  %328 = vmatprep.subr.mxu0 0.0
  %329 = vmatpush2.msra.mxu0 %v117
  %330 = vmatprep.subr.mxu0 0.0
  %331 = vmatpush2.msra.mxu0 %v116
  %332 = vmatprep.subr.mxu0 0.0
  %333 = vmatpush2.msra.mxu0 %v115
  %334 = vmatprep.subr.mxu0 0.0
  %335 = vmatpush2.msra.mxu0 %v114
  %336 = vmatprep.subr.mxu0 0.0
  %337 = vmatpush2.msra.mxu0 %v113
  %338 = vmatprep.subr.mxu0 0.0
  %339 = vmatpush2.msra.mxu0 %v112
  %340 = vmatprep.subr.mxu0 0.0
  %341 = vmatpush2.msra.mxu0 %v111
  %342 = vmatprep.subr.mxu0 0.0
  %343 = vmatpush2.msra.mxu0 %v110
  %344 = vmatprep.subr.mxu0 0.0
  %345 = vmatpush2.msra.mxu0 %v109
  %346 = vmatprep.subr.mxu0 0.0
  %347 = vmatpush2.msra.mxu0 %v108
  %348 = vmatprep.subr.mxu0 0.0
  %349 = vmatpush2.msra.mxu0 %v107
  %350 = vmatprep.subr.mxu0 0.0
  %351 = vmatpush2.msra.mxu0 %v106
  %352 = vmatprep.subr.mxu0 0.0
  %353 = vmatpush2.msra.mxu0 %v105
  %354 = vmatprep.subr.mxu0 0.0
  %355 = vmatpush2.msra.mxu0 %v104
  %356 = vmatprep.subr.mxu0 0.0
  %357 = vmatpush2.msra.mxu0 %v103
  %358 = vmatprep.subr.mxu0 0.0
  %359 = vmatpush2.msra.mxu0 %v102
  %360 = vmatprep.mubr.f32.mxu0 %v19
  %361 = vmatmul.mubr.f32.gmra.mxu0 %v18
  %v362 = vpop.f32.mrf.mxu0
  %v363 = vadd.f32 %v293, %v362
  %v364 = vpop.f32.mrf.mxu0
  %365 = vdwg.mxu0
  %366 = vmatprep.subr.mxu0 0.0
  %367 = vmatpush1.msra.mxu0 %v133
  %368 = vmatprep.subr.mxu0 0.0
  %369 = vmatpush1.msra.mxu0 %v132
  %370 = vmatprep.subr.mxu0 0.0
  %371 = vmatpush1.msra.mxu0 %v131
  %372 = vmatprep.subr.mxu0 0.0
  %373 = vmatpush1.msra.mxu0 %v130
  %374 = vmatprep.subr.mxu0 0.0
  %375 = vmatpush1.msra.mxu0 %v129
  %376 = vmatprep.subr.mxu0 0.0
  %377 = vmatpush1.msra.mxu0 %v128
  %378 = vmatprep.subr.mxu0 0.0
  %379 = vmatpush1.msra.mxu0 %v127
  %380 = vmatprep.subr.mxu0 0.0
  %381 = vmatpush1.msra.mxu0 %v126
  %382 = vmatprep.subr.mxu0 0.0
  %383 = vmatpush1.msra.mxu0 %v125
  %384 = vmatprep.subr.mxu0 0.0
  %385 = vmatpush1.msra.mxu0 %v124
  %386 = vmatprep.subr.mxu0 0.0
  %387 = vmatpush1.msra.mxu0 %v123
  %388 = vmatprep.subr.mxu0 0.0
  %389 = vmatpush1.msra.mxu0 %v122
  %390 = vmatprep.subr.mxu0 0.0
  %391 = vmatpush1.msra.mxu0 %v121
  %392 = vmatprep.subr.mxu0 0.0
  %393 = vmatpush1.msra.mxu0 %v120
  %394 = vmatprep.subr.mxu0 0.0
  %395 = vmatpush1.msra.mxu0 %v119
  %396 = vmatprep.subr.mxu0 0.0
  %397 = vmatpush1.msra.mxu0 %v118
  %398 = vmatprep.subr.mxu0 0.0
  %399 = vmatpush2.msra.mxu0 %v149
  %400 = vmatprep.subr.mxu0 0.0
  %401 = vmatpush2.msra.mxu0 %v148
  %402 = vmatprep.subr.mxu0 0.0
  %403 = vmatpush2.msra.mxu0 %v147
  %404 = vmatprep.subr.mxu0 0.0
  %405 = vmatpush2.msra.mxu0 %v146
  %406 = vmatprep.subr.mxu0 0.0
  %407 = vmatpush2.msra.mxu0 %v145
  %408 = vmatprep.subr.mxu0 0.0
  %409 = vmatpush2.msra.mxu0 %v144
  %410 = vmatprep.subr.mxu0 0.0
  %411 = vmatpush2.msra.mxu0 %v143
  %412 = vmatprep.subr.mxu0 0.0
  %413 = vmatpush2.msra.mxu0 %v142
  %414 = vmatprep.subr.mxu0 0.0
  %415 = vmatpush2.msra.mxu0 %v141
  %416 = vmatprep.subr.mxu0 0.0
  %417 = vmatpush2.msra.mxu0 %v140
  %418 = vmatprep.subr.mxu0 0.0
  %419 = vmatpush2.msra.mxu0 %v139
  %420 = vmatprep.subr.mxu0 0.0
  %421 = vmatpush2.msra.mxu0 %v138
  %422 = vmatprep.subr.mxu0 0.0
  %423 = vmatpush2.msra.mxu0 %v137
  %424 = vmatprep.subr.mxu0 0.0
  %425 = vmatpush2.msra.mxu0 %v136
  %426 = vmatprep.subr.mxu0 0.0
  %427 = vmatpush2.msra.mxu0 %v135
  %428 = vmatprep.subr.mxu0 0.0
  %429 = vmatpush2.msra.mxu0 %v134
  %430 = vmatprep.mubr.f32.mxu0 %v21
  %431 = vmatmul.mubr.f32.gmra.mxu0 %v20
  %v432 = vpop.f32.mrf.mxu0
  %v433 = vadd.f32 %v363, %v432
  %v434 = vpop.f32.mrf.mxu0
  %435 = vdwg.mxu0
  %436 = vst [vmem:[%s3] sm:$0xff] %v433
  // Predicated region
  $region14: #{multi_scale_forward.29} parent=0 // pred_check
    _
  $region15: #{multi_scale_forward.29} parent=0 // pred_check_branch
    %438 = sbr.rel (0) target = $region17
  $region16: #{multi_scale_forward.29} parent=0 // pred_region
    _
  $region17: #{multi_scale_forward.29} parent=0 // pred_fallthru
    _
  // Predicated region
  $region18: #{multi_scale_forward.29} parent=0 // pred_check
    _
  $region19: #{multi_scale_forward.29} parent=0 // pred_check_branch
    %440 = sbr.rel (0) target = $region21
  $region20: #{multi_scale_forward.29} parent=0 // pred_region
    _
  $region21: #{multi_scale_forward.29} parent=0 // pred_fallthru
    _

// kernel: multi_scale_forward.20
$region0: #{multi_scale_forward.20}
  #allocation0 [shape = 'u32[]', space=smem, size = 0x4, offset = 0x4, fixed_abs, tag = 'smem constant byte address 0x4 - core index']
  #allocation1 [shape = 'u32[144,128]{1,0:T(1,128)}', space=vmem, size = 0x12000, scoped, tag = 'internal scratch']
  %s0 = inlined_call_operand.vmem [shape: f32[8,48], index: 0, kind: input, shape index: {}]
  %s1 = inlined_call_operand.vmem [shape: f32[48,1152], index: 1, kind: input, shape index: {}]
  %s2 = inlined_call_operand.vmem [shape: f32[8,1], index: 2, kind: input, shape index: {}]
  %s3 = inlined_call_operand.vmem [shape: f32[8,1], index: 3, kind: input, shape index: {}]
  %s4 = inlined_call_operand.vmem [shape: f32[8,1152], index: 4, kind: output, shape index: {}]
  %s5 = sld [smem:[#allocation0]]
  $region26: #{multi_scale_forward.20} parent=0
    _
  %s7 = ssub.s32 1, %s5
  %s8 = scalar_select 0, %s7, %s5
  // Predicated region
  $region2: #{multi_scale_forward.20} parent=0 // pred_check
    _
  $region3: #{multi_scale_forward.20} parent=0 // pred_check_branch
    %10 = sbr.rel (0) target = $region5
  $region4: #{multi_scale_forward.20} parent=0 // pred_region
    _
  $region5: #{multi_scale_forward.20} parent=0 // pred_fallthru
    _
  // Predicated region
  $region6: #{multi_scale_forward.20} parent=0 // pred_check
    _
  $region7: #{multi_scale_forward.20} parent=0 // pred_check_branch
    %12 = sbr.rel (0) target = $region9
  $region8: #{multi_scale_forward.20} parent=0 // pred_region
    _
  $region9: #{multi_scale_forward.20} parent=0 // pred_fallthru
    _
  // Predicated region
  $region10: #{multi_scale_forward.20} parent=0 // pred_check
    _
  $region11: #{multi_scale_forward.20} parent=0 // pred_check_branch
    %14 = sbr.rel (0) target = $region13
  $region12: #{multi_scale_forward.20} parent=0 // pred_region
    _
  $region13: #{multi_scale_forward.20} parent=0 // pred_fallthru
    _
  // Predicated region
  $region14: #{multi_scale_forward.20} parent=0 // pred_check
    _
  $region15: #{multi_scale_forward.20} parent=0 // pred_check_branch
    %16 = sbr.rel (0) target = $region17
  $region16: #{multi_scale_forward.20} parent=0 // pred_region
    _
  $region17: #{multi_scale_forward.20} parent=0 // pred_fallthru
    _
  %v17 = vld [vmem:[%s0] sm:$0xff]
  %v18 = vld [vmem:[%s1] sm:$0xff]
  %v19 = vld [vmem:[%s1 + $0x8] sm:$0xff]
  %v20 = vld [vmem:[%s1 + $0x10] sm:$0xff]
  %v21 = vld [vmem:[%s1 + $0x18] sm:$0xff]
  %v22 = vld [vmem:[%s1 + $0x20] sm:$0xff]
  %v23 = vld [vmem:[%s1 + $0x28] sm:$0xff]
  %v24 = vld [vmem:[%s1 + $0x30] sm:$0xff]
  %v25 = vld [vmem:[%s1 + $0x38] sm:$0xff]
  %v26 = vld [vmem:[%s1 + $0x40] sm:$0xff]
  %v27 = vld [vmem:[%s1 + $0x48] sm:$0xff]
  %v28 = vld [vmem:[%s1 + $0x50] sm:$0xff]
  %v29 = vld [vmem:[%s1 + $0x58] sm:$0xff]
  %v30 = vld [vmem:[%s1 + $0x60] sm:$0xff]
  %v31 = vld [vmem:[%s1 + $0x68] sm:$0xff]
  %v32 = vld [vmem:[%s1 + $0x70] sm:$0xff]
  %v33 = vld [vmem:[%s1 + $0x78] sm:$0xff]
  %v34 = vld [vmem:[%s1 + $0x80] sm:$0xff]
  %v35 = vld [vmem:[%s1 + $0x88] sm:$0xff]
  %v36 = vld [vmem:[%s1 + $0x90] sm:$0xff]
  %v37 = vld [vmem:[%s1 + $0x98] sm:$0xff]
  %v38 = vld [vmem:[%s1 + $0xa0] sm:$0xff]
  %v39 = vld [vmem:[%s1 + $0xa8] sm:$0xff]
  %v40 = vld [vmem:[%s1 + $0xb0] sm:$0xff]
  %v41 = vld [vmem:[%s1 + $0xb8] sm:$0xff]
  %v42 = vld [vmem:[%s1 + $0xc0] sm:$0xff]
  %v43 = vld [vmem:[%s1 + $0xc8] sm:$0xff]
  %v44 = vld [vmem:[%s1 + $0xd0] sm:$0xff]
  %v45 = vld [vmem:[%s1 + $0xd8] sm:$0xff]
  %v46 = vld [vmem:[%s1 + $0xe0] sm:$0xff]
  %v47 = vld [vmem:[%s1 + $0xe8] sm:$0xff]
  %v48 = vld [vmem:[%s1 + $0xf0] sm:$0xff]
  %v49 = vld [vmem:[%s1 + $0xf8] sm:$0xff]
  %v50 = vld [vmem:[%s1 + $0x100] sm:$0xff]
  %v51 = vld [vmem:[%s1 + $0x108] sm:$0xff]
  %v52 = vld [vmem:[%s1 + $0x110] sm:$0xff]
  %v53 = vld [vmem:[%s1 + $0x118] sm:$0xff]
  %v54 = vld [vmem:[%s1 + $0x120] sm:$0xff]
  %v55 = vld [vmem:[%s1 + $0x128] sm:$0xff]
  %v56 = vld [vmem:[%s1 + $0x130] sm:$0xff]
  %v57 = vld [vmem:[%s1 + $0x138] sm:$0xff]
  %v58 = vld [vmem:[%s1 + $0x140] sm:$0xff]
  %v59 = vld [vmem:[%s1 + $0x148] sm:$0xff]
  %v60 = vld [vmem:[%s1 + $0x150] sm:$0xff]
  %v61 = vld [vmem:[%s1 + $0x158] sm:$0xff]
  %v62 = vld [vmem:[%s1 + $0x160] sm:$0xff]
  %v63 = vld [vmem:[%s1 + $0x168] sm:$0xff]
  %v64 = vld [vmem:[%s1 + $0x170] sm:$0xff]
  %v65 = vld [vmem:[%s1 + $0x178] sm:$0xff]
  %v66 = vld [vmem:[%s1 + $0x180] sm:$0xff]
  %v67 = vld [vmem:[%s1 + $0x188] sm:$0xff]
  %v68 = vld [vmem:[%s1 + $0x190] sm:$0xff]
  %v69 = vld [vmem:[%s1 + $0x198] sm:$0xff]
  %v70 = vld [vmem:[%s1 + $0x1a0] sm:$0xff]
  %v71 = vld [vmem:[%s1 + $0x1a8] sm:$0xff]
  %vm72 = vcmask 392192
  %v74 = vsel %vm72, %v17, 0
  %76 = vmatprep.subr.mxu0 0.0
  %77 = vmatpush1.msra.mxu0 0.0
  %78 = vmatprep.subr.mxu0 0.0
  %79 = vmatpush1.msra.mxu0 0.0
  %80 = vmatprep.subr.mxu0 0.0
  %81 = vmatpush1.msra.mxu0 0.0
  %82 = vmatprep.subr.mxu0 0.0
  %83 = vmatpush1.msra.mxu0 0.0
  %84 = vmatprep.subr.mxu0 0.0
  %85 = vmatpush1.msra.mxu0 0.0
  %86 = vmatprep.subr.mxu0 0.0
  %87 = vmatpush1.msra.mxu0 0.0
  %88 = vmatprep.subr.mxu0 0.0
  %89 = vmatpush1.msra.mxu0 0.0
  %90 = vmatprep.subr.mxu0 0.0
  %91 = vmatpush1.msra.mxu0 0.0
  %92 = vmatprep.subr.mxu0 0.0
  %93 = vmatpush1.msra.mxu0 0.0
  %94 = vmatprep.subr.mxu0 0.0
  %95 = vmatpush1.msra.mxu0 0.0
  %96 = vmatprep.subr.mxu0 %v64
  %97 = vmatpush1.msra.mxu0 %v63
  %98 = vmatprep.subr.mxu0 %v55
  %99 = vmatpush1.msra.mxu0 %v54
  %100 = vmatprep.subr.mxu0 %v46
  %101 = vmatpush1.msra.mxu0 %v45
  %102 = vmatprep.subr.mxu0 %v37
  %103 = vmatpush1.msra.mxu0 %v36
  %104 = vmatprep.subr.mxu0 %v28
  %105 = vmatpush1.msra.mxu0 %v27
  %106 = vmatprep.subr.mxu0 %v19
  %107 = vmatpush1.msra.mxu0 %v18
  %108 = vmatprep.subr.mxu0 0.0
  %109 = vmatpush2.msra.mxu0 0.0
  %110 = vmatprep.subr.mxu0 0.0
  %111 = vmatpush2.msra.mxu0 0.0
  %112 = vmatprep.subr.mxu0 0.0
  %113 = vmatpush2.msra.mxu0 0.0
  %114 = vmatprep.subr.mxu0 0.0
  %115 = vmatpush2.msra.mxu0 0.0
  %116 = vmatprep.subr.mxu0 0.0
  %117 = vmatpush2.msra.mxu0 0.0
  %118 = vmatprep.subr.mxu0 0.0
  %119 = vmatpush2.msra.mxu0 0.0
  %120 = vmatprep.subr.mxu0 0.0
  %121 = vmatpush2.msra.mxu0 0.0
  %122 = vmatprep.subr.mxu0 0.0
  %123 = vmatpush2.msra.mxu0 0.0
  %124 = vmatprep.subr.mxu0 0.0
  %125 = vmatpush2.msra.mxu0 0.0
  %126 = vmatprep.subr.mxu0 0.0
  %127 = vmatpush2.msra.mxu0 0.0
  %128 = vmatprep.subr.mxu0 0.0
  %129 = vmatpush2.msra.mxu0 0.0
  %130 = vmatprep.subr.mxu0 0.0
  %131 = vmatpush2.msra.mxu0 0.0
  %132 = vmatprep.subr.mxu0 0.0
  %133 = vmatpush2.msra.mxu0 0.0
  %134 = vmatprep.subr.mxu0 0.0
  %135 = vmatpush2.msra.mxu0 0.0
  %136 = vmatprep.subr.mxu0 0.0
  %137 = vmatpush2.msra.mxu0 0.0
  %138 = vmatprep.subr.mxu0 0.0
  %139 = vmatpush2.msra.mxu0 0.0
  %140 = vmatprep.mubr.f32.mxu0 0.0
  %141 = vmatmul.mubr.f32.gmra.mxu0 %v74
  %v142 = vpop.f32.mrf.mxu0
  %v143 = vadd.f32 0.0, %v142
  %v144 = vpop.f32.mrf.mxu0
  %v145 = vadd.f32 0.0, %v144
  %146 = vdwg.mxu0
  %147 = vmatprep.subr.mxu0 0.0
  %148 = vmatpush1.msra.mxu0 0.0
  %149 = vmatprep.subr.mxu0 0.0
  %150 = vmatpush1.msra.mxu0 0.0
  %151 = vmatprep.subr.mxu0 0.0
  %152 = vmatpush1.msra.mxu0 0.0
  %153 = vmatprep.subr.mxu0 0.0
  %154 = vmatpush1.msra.mxu0 0.0
  %155 = vmatprep.subr.mxu0 0.0
  %156 = vmatpush1.msra.mxu0 0.0
  %157 = vmatprep.subr.mxu0 0.0
  %158 = vmatpush1.msra.mxu0 0.0
  %159 = vmatprep.subr.mxu0 0.0
  %160 = vmatpush1.msra.mxu0 0.0
  %161 = vmatprep.subr.mxu0 0.0
  %162 = vmatpush1.msra.mxu0 0.0
  %163 = vmatprep.subr.mxu0 0.0
  %164 = vmatpush1.msra.mxu0 0.0
  %165 = vmatprep.subr.mxu0 0.0
  %166 = vmatpush1.msra.mxu0 0.0
  %167 = vmatprep.subr.mxu0 %v66
  %168 = vmatpush1.msra.mxu0 %v65
  %169 = vmatprep.subr.mxu0 %v57
  %170 = vmatpush1.msra.mxu0 %v56
  %171 = vmatprep.subr.mxu0 %v48
  %172 = vmatpush1.msra.mxu0 %v47
  %173 = vmatprep.subr.mxu0 %v39
  %174 = vmatpush1.msra.mxu0 %v38
  %175 = vmatprep.subr.mxu0 %v30
  %176 = vmatpush1.msra.mxu0 %v29
  %177 = vmatprep.subr.mxu0 %v21
  %178 = vmatpush1.msra.mxu0 %v20
  %179 = vmatprep.subr.mxu0 0.0
  %180 = vmatpush2.msra.mxu0 0.0
  %181 = vmatprep.subr.mxu0 0.0
  %182 = vmatpush2.msra.mxu0 0.0
  %183 = vmatprep.subr.mxu0 0.0
  %184 = vmatpush2.msra.mxu0 0.0
  %185 = vmatprep.subr.mxu0 0.0
  %186 = vmatpush2.msra.mxu0 0.0
  %187 = vmatprep.subr.mxu0 0.0
  %188 = vmatpush2.msra.mxu0 0.0
  %189 = vmatprep.subr.mxu0 0.0
  %190 = vmatpush2.msra.mxu0 0.0
  %191 = vmatprep.subr.mxu0 0.0
  %192 = vmatpush2.msra.mxu0 0.0
  %193 = vmatprep.subr.mxu0 0.0
  %194 = vmatpush2.msra.mxu0 0.0
  %195 = vmatprep.subr.mxu0 0.0
  %196 = vmatpush2.msra.mxu0 0.0
  %197 = vmatprep.subr.mxu0 0.0
  %198 = vmatpush2.msra.mxu0 0.0
  %199 = vmatprep.subr.mxu0 0.0
  %200 = vmatpush2.msra.mxu0 0.0
  %201 = vmatprep.subr.mxu0 0.0
  %202 = vmatpush2.msra.mxu0 0.0
  %203 = vmatprep.subr.mxu0 0.0
  %204 = vmatpush2.msra.mxu0 0.0
  %205 = vmatprep.subr.mxu0 0.0
  %206 = vmatpush2.msra.mxu0 0.0
  %207 = vmatprep.subr.mxu0 0.0
  %208 = vmatpush2.msra.mxu0 0.0
  %209 = vmatprep.subr.mxu0 0.0
  %210 = vmatpush2.msra.mxu0 0.0
  %211 = vmatprep.mubr.f32.mxu0 0.0
  %212 = vmatmul.mubr.f32.gmra.mxu0 %v74
  %v213 = vpop.f32.mrf.mxu0
  %v214 = vadd.f32 0.0, %v213
  %v215 = vpop.f32.mrf.mxu0
  %v216 = vadd.f32 0.0, %v215
  %217 = vdwg.mxu0
  %218 = vmatprep.subr.mxu0 0.0
  %219 = vmatpush1.msra.mxu0 0.0
  %220 = vmatprep.subr.mxu0 0.0
  %221 = vmatpush1.msra.mxu0 0.0
  %222 = vmatprep.subr.mxu0 0.0
  %223 = vmatpush1.msra.mxu0 0.0
  %224 = vmatprep.subr.mxu0 0.0
  %225 = vmatpush1.msra.mxu0 0.0
  %226 = vmatprep.subr.mxu0 0.0
  %227 = vmatpush1.msra.mxu0 0.0
  %228 = vmatprep.subr.mxu0 0.0
  %229 = vmatpush1.msra.mxu0 0.0
  %230 = vmatprep.subr.mxu0 0.0
  %231 = vmatpush1.msra.mxu0 0.0
  %232 = vmatprep.subr.mxu0 0.0
  %233 = vmatpush1.msra.mxu0 0.0
  %234 = vmatprep.subr.mxu0 0.0
  %235 = vmatpush1.msra.mxu0 0.0
  %236 = vmatprep.subr.mxu0 0.0
  %237 = vmatpush1.msra.mxu0 0.0
  %238 = vmatprep.subr.mxu0 %v68
  %239 = vmatpush1.msra.mxu0 %v67
  %240 = vmatprep.subr.mxu0 %v59
  %241 = vmatpush1.msra.mxu0 %v58
  %242 = vmatprep.subr.mxu0 %v50
  %243 = vmatpush1.msra.mxu0 %v49
  %244 = vmatprep.subr.mxu0 %v41
  %245 = vmatpush1.msra.mxu0 %v40
  %246 = vmatprep.subr.mxu0 %v32
  %247 = vmatpush1.msra.mxu0 %v31
  %248 = vmatprep.subr.mxu0 %v23
  %249 = vmatpush1.msra.mxu0 %v22
  %250 = vmatprep.subr.mxu0 0.0
  %251 = vmatpush2.msra.mxu0 0.0
  %252 = vmatprep.subr.mxu0 0.0
  %253 = vmatpush2.msra.mxu0 0.0
  %254 = vmatprep.subr.mxu0 0.0
  %255 = vmatpush2.msra.mxu0 0.0
  %256 = vmatprep.subr.mxu0 0.0
  %257 = vmatpush2.msra.mxu0 0.0
  %258 = vmatprep.subr.mxu0 0.0
  %259 = vmatpush2.msra.mxu0 0.0
  %260 = vmatprep.subr.mxu0 0.0
  %261 = vmatpush2.msra.mxu0 0.0
  %262 = vmatprep.subr.mxu0 0.0
  %263 = vmatpush2.msra.mxu0 0.0
  %264 = vmatprep.subr.mxu0 0.0
  %265 = vmatpush2.msra.mxu0 0.0
  %266 = vmatprep.subr.mxu0 0.0
  %267 = vmatpush2.msra.mxu0 0.0
  %268 = vmatprep.subr.mxu0 0.0
  %269 = vmatpush2.msra.mxu0 0.0
  %270 = vmatprep.subr.mxu0 0.0
  %271 = vmatpush2.msra.mxu0 0.0
  %272 = vmatprep.subr.mxu0 0.0
  %273 = vmatpush2.msra.mxu0 0.0
  %274 = vmatprep.subr.mxu0 0.0
  %275 = vmatpush2.msra.mxu0 0.0
  %276 = vmatprep.subr.mxu0 0.0
  %277 = vmatpush2.msra.mxu0 0.0
  %278 = vmatprep.subr.mxu0 0.0
  %279 = vmatpush2.msra.mxu0 0.0
  %280 = vmatprep.subr.mxu0 0.0
  %281 = vmatpush2.msra.mxu0 0.0
  %282 = vmatprep.mubr.f32.mxu0 0.0
  %283 = vmatmul.mubr.f32.gmra.mxu0 %v74
  %v284 = vpop.f32.mrf.mxu0
  %v285 = vadd.f32 0.0, %v284
  %v286 = vpop.f32.mrf.mxu0
  %v287 = vadd.f32 0.0, %v286
  %288 = vdwg.mxu0
  %289 = vmatprep.subr.mxu0 0.0
  %290 = vmatpush1.msra.mxu0 0.0
  %291 = vmatprep.subr.mxu0 0.0
  %292 = vmatpush1.msra.mxu0 0.0
  %293 = vmatprep.subr.mxu0 0.0
  %294 = vmatpush1.msra.mxu0 0.0
  %295 = vmatprep.subr.mxu0 0.0
  %296 = vmatpush1.msra.mxu0 0.0
  %297 = vmatprep.subr.mxu0 0.0
  %298 = vmatpush1.msra.mxu0 0.0
  %299 = vmatprep.subr.mxu0 0.0
  %300 = vmatpush1.msra.mxu0 0.0
  %301 = vmatprep.subr.mxu0 0.0
  %302 = vmatpush1.msra.mxu0 0.0
  %303 = vmatprep.subr.mxu0 0.0
  %304 = vmatpush1.msra.mxu0 0.0
  %305 = vmatprep.subr.mxu0 0.0
  %306 = vmatpush1.msra.mxu0 0.0
  %307 = vmatprep.subr.mxu0 0.0
  %308 = vmatpush1.msra.mxu0 0.0
  %309 = vmatprep.subr.mxu0 %v70
  %310 = vmatpush1.msra.mxu0 %v69
  %311 = vmatprep.subr.mxu0 %v61
  %312 = vmatpush1.msra.mxu0 %v60
  %313 = vmatprep.subr.mxu0 %v52
  %314 = vmatpush1.msra.mxu0 %v51
  %315 = vmatprep.subr.mxu0 %v43
  %316 = vmatpush1.msra.mxu0 %v42
  %317 = vmatprep.subr.mxu0 %v34
  %318 = vmatpush1.msra.mxu0 %v33
  %319 = vmatprep.subr.mxu0 %v25
  %320 = vmatpush1.msra.mxu0 %v24
  %321 = vmatprep.subr.mxu0 0.0
  %322 = vmatpush2.msra.mxu0 0.0
  %323 = vmatprep.subr.mxu0 0.0
  %324 = vmatpush2.msra.mxu0 0.0
  %325 = vmatprep.subr.mxu0 0.0
  %326 = vmatpush2.msra.mxu0 0.0
  %327 = vmatprep.subr.mxu0 0.0
  %328 = vmatpush2.msra.mxu0 0.0
  %329 = vmatprep.subr.mxu0 0.0
  %330 = vmatpush2.msra.mxu0 0.0
  %331 = vmatprep.subr.mxu0 0.0
  %332 = vmatpush2.msra.mxu0 0.0
  %333 = vmatprep.subr.mxu0 0.0
  %334 = vmatpush2.msra.mxu0 0.0
  %335 = vmatprep.subr.mxu0 0.0
  %336 = vmatpush2.msra.mxu0 0.0
  %337 = vmatprep.subr.mxu0 0.0
  %338 = vmatpush2.msra.mxu0 0.0
  %339 = vmatprep.subr.mxu0 0.0
  %340 = vmatpush2.msra.mxu0 0.0
  %341 = vmatprep.subr.mxu0 0.0
  %342 = vmatpush2.msra.mxu0 0.0
  %343 = vmatprep.subr.mxu0 0.0
  %344 = vmatpush2.msra.mxu0 0.0
  %345 = vmatprep.subr.mxu0 0.0
  %346 = vmatpush2.msra.mxu0 0.0
  %347 = vmatprep.subr.mxu0 0.0
  %348 = vmatpush2.msra.mxu0 0.0
  %349 = vmatprep.subr.mxu0 0.0
  %350 = vmatpush2.msra.mxu0 0.0
  %351 = vmatprep.subr.mxu0 0.0
  %352 = vmatpush2.msra.mxu0 0.0
  %353 = vmatprep.mubr.f32.mxu0 0.0
  %354 = vmatmul.mubr.f32.gmra.mxu0 %v74
  %v355 = vpop.f32.mrf.mxu0
  %v356 = vadd.f32 0.0, %v355
  %v357 = vpop.f32.mrf.mxu0
  %v358 = vadd.f32 0.0, %v357
  %359 = vdwg.mxu0
  %360 = vmatprep.subr.mxu0 0.0
  %361 = vmatpush1.msra.mxu0 0.0
  %362 = vmatprep.subr.mxu0 0.0
  %363 = vmatpush1.msra.mxu0 0.0
  %364 = vmatprep.subr.mxu0 0.0
  %365 = vmatpush1.msra.mxu0 0.0
  %366 = vmatprep.subr.mxu0 0.0
  %367 = vmatpush1.msra.mxu0 0.0
  %368 = vmatprep.subr.mxu0 0.0
  %369 = vmatpush1.msra.mxu0 0.0
  %370 = vmatprep.subr.mxu0 0.0
  %371 = vmatpush1.msra.mxu0 0.0
  %372 = vmatprep.subr.mxu0 0.0
  %373 = vmatpush1.msra.mxu0 0.0
  %374 = vmatprep.subr.mxu0 0.0
  %375 = vmatpush1.msra.mxu0 0.0
  %376 = vmatprep.subr.mxu0 0.0
  %377 = vmatpush1.msra.mxu0 0.0
  %378 = vmatprep.subr.mxu0 0.0
  %379 = vmatpush1.msra.mxu0 0.0
  %380 = vmatprep.subr.mxu0 0.0
  %381 = vmatpush1.msra.mxu0 %v71
  %382 = vmatprep.subr.mxu0 0.0
  %383 = vmatpush1.msra.mxu0 %v62
  %384 = vmatprep.subr.mxu0 0.0
  %385 = vmatpush1.msra.mxu0 %v53
  %386 = vmatprep.subr.mxu0 0.0
  %387 = vmatpush1.msra.mxu0 %v44
  %388 = vmatprep.subr.mxu0 0.0
  %389 = vmatpush1.msra.mxu0 %v35
  %390 = vmatprep.subr.mxu0 0.0
  %391 = vmatpush1.msra.mxu0 %v26
  %392 = vmatprep.subr.mxu0 0.0
  %393 = vmatpush2.msra.mxu0 0.0
  %394 = vmatprep.subr.mxu0 0.0
  %395 = vmatpush2.msra.mxu0 0.0
  %396 = vmatprep.subr.mxu0 0.0
  %397 = vmatpush2.msra.mxu0 0.0
  %398 = vmatprep.subr.mxu0 0.0
  %399 = vmatpush2.msra.mxu0 0.0
  %400 = vmatprep.subr.mxu0 0.0
  %401 = vmatpush2.msra.mxu0 0.0
  %402 = vmatprep.subr.mxu0 0.0
  %403 = vmatpush2.msra.mxu0 0.0
  %404 = vmatprep.subr.mxu0 0.0
  %405 = vmatpush2.msra.mxu0 0.0
  %406 = vmatprep.subr.mxu0 0.0
  %407 = vmatpush2.msra.mxu0 0.0
  %408 = vmatprep.subr.mxu0 0.0
  %409 = vmatpush2.msra.mxu0 0.0
  %410 = vmatprep.subr.mxu0 0.0
  %411 = vmatpush2.msra.mxu0 0.0
  %412 = vmatprep.subr.mxu0 0.0
  %413 = vmatpush2.msra.mxu0 0.0
  %414 = vmatprep.subr.mxu0 0.0
  %415 = vmatpush2.msra.mxu0 0.0
  %416 = vmatprep.subr.mxu0 0.0
  %417 = vmatpush2.msra.mxu0 0.0
  %418 = vmatprep.subr.mxu0 0.0
  %419 = vmatpush2.msra.mxu0 0.0
  %420 = vmatprep.subr.mxu0 0.0
  %421 = vmatpush2.msra.mxu0 0.0
  %422 = vmatprep.subr.mxu0 0.0
  %423 = vmatpush2.msra.mxu0 0.0
  %424 = vmatprep.mubr.f32.mxu0 0.0
  %425 = vmatmul.mubr.f32.gmra.mxu0 %v74
  %v426 = vpop.f32.mrf.mxu0
  %v427 = vadd.f32 0.0, %v426
  %v428 = vpop.f32.mrf.mxu0
  %429 = vdwg.mxu0
  %v430 = vadd.f32 %v143, %v145
  %v431 = vadd.f32 %v430, %v214
  %v432 = vadd.f32 %v431, %v216
  %v433 = vadd.f32 %v432, %v285
  %v434 = vadd.f32 %v433, %v287
  %v435 = vadd.f32 %v434, %v356
  %v436 = vadd.f32 %v435, %v358
  %v437 = vadd.f32 %v436, %v427
  %438 = vadd.xlane.f32.xlu0 %v437
  %v439 = vpop.xlane.xlu0 %438
  %v440 = vmul.f32 %v143, %v143
  %v441 = vmul.f32 %v145, %v145
  %v442 = vmul.f32 %v214, %v214
  %v443 = vmul.f32 %v216, %v216
  %v444 = vmul.f32 %v285, %v285
  %v445 = vmul.f32 %v287, %v287
  %v446 = vmul.f32 %v356, %v356
  %v447 = vmul.f32 %v358, %v358
  %v448 = vmul.f32 %v427, %v427
  %v449 = vadd.f32 %v440, %v441
  %v450 = vadd.f32 %v449, %v442
  %v451 = vadd.f32 %v450, %v443
  %v452 = vadd.f32 %v451, %v444
  %v453 = vadd.f32 %v452, %v445
  %v454 = vadd.f32 %v453, %v446
  %v455 = vadd.f32 %v454, %v447
  %v456 = vadd.f32 %v455, %v448
  %457 = vadd.xlane.f32.xlu0 %v456
  %v458 = vpop.xlane.xlu0 %457
  %v459 = vmul.f32 %v439, 0.00086805556
  %v460 = vmul.f32 %v458, 0.00086805556
  %v461 = vmul.f32 %v459, %v459
  %v462 = vsub.f32 %v460, %v461
  %v463 = vmax.f32 %v462, 0.0
  %v464 = vld [vmem:[%s2] sm:$0xff]
  %v465 = vadd.f32 %v463, 1e-05
  %v466 = vrsqrt.pop %v465
  %v467 = vmul.f32 %v464, %v466
  %v468 = vld [vmem:[%s3] sm:$0xff]
  %v469 = vmul.f32 %v459, %v467
  %v470 = vsub.f32 %v468, %v469
  %472 = vset.pattern.permute.xlu0 0
  %473 = vperm.xlu0 %472, %v467
  %v474 = vpop.permute.xlu0 %473
  %v476 = vmul.f32 %v143, %v474
  %v477 = vmul.f32 %v145, %v474
  %v478 = vmul.f32 %v214, %v474
  %v479 = vmul.f32 %v216, %v474
  %v480 = vmul.f32 %v285, %v474
  %v481 = vmul.f32 %v287, %v474
  %v482 = vmul.f32 %v356, %v474
  %v483 = vmul.f32 %v358, %v474
  %v484 = vmul.f32 %v427, %v474
  %486 = vset.pattern.permute.xlu0 0
  %487 = vperm.xlu0 %486, %v470
  %v488 = vpop.permute.xlu0 %487
  %v490 = vadd.f32 %v476, %v488
  %v491 = vadd.f32 %v477, %v488
  %v492 = vadd.f32 %v478, %v488
  %v493 = vadd.f32 %v479, %v488
  %v494 = vadd.f32 %v480, %v488
  %v495 = vadd.f32 %v481, %v488
  %v496 = vadd.f32 %v482, %v488
  %v497 = vadd.f32 %v483, %v488
  %v498 = vadd.f32 %v484, %v488
  %vm499 = vcmp.ge.f32.partialorder %v490, 0.0
  %vm500 = vcmp.ge.f32.partialorder %v491, 0.0
  %vm501 = vcmp.ge.f32.partialorder %v492, 0.0
  %vm502 = vcmp.ge.f32.partialorder %v493, 0.0
  %vm503 = vcmp.ge.f32.partialorder %v494, 0.0
  %vm504 = vcmp.ge.f32.partialorder %v495, 0.0
  %vm505 = vcmp.ge.f32.partialorder %v496, 0.0
  %vm506 = vcmp.ge.f32.partialorder %v497, 0.0
  %vm507 = vcmp.ge.f32.partialorder %v498, 0.0
  %v508 = vmul.f32 %v490, 0.2
  %v509 = vmul.f32 %v491, 0.2
  %v510 = vmul.f32 %v492, 0.2
  %v511 = vmul.f32 %v493, 0.2
  %v512 = vmul.f32 %v494, 0.2
  %v513 = vmul.f32 %v495, 0.2
  %v514 = vmul.f32 %v496, 0.2
  %v515 = vmul.f32 %v497, 0.2
  %v516 = vmul.f32 %v498, 0.2
  %v517 = vsel %vm499, %v490, %v508
  %v518 = vsel %vm500, %v491, %v509
  %v519 = vsel %vm501, %v492, %v510
  %v520 = vsel %vm502, %v493, %v511
  %v521 = vsel %vm503, %v494, %v512
  %v522 = vsel %vm504, %v495, %v513
  %v523 = vsel %vm505, %v496, %v514
  %v524 = vsel %vm506, %v497, %v515
  %v525 = vsel %vm507, %v498, %v516
  %526 = vst [vmem:[%s4] sm:$0xff] %v517
  %527 = vst [vmem:[%s4 + $0x8] sm:$0xff] %v518
  %528 = vst [vmem:[%s4 + $0x10] sm:$0xff] %v519
  %529 = vst [vmem:[%s4 + $0x18] sm:$0xff] %v520
  %530 = vst [vmem:[%s4 + $0x20] sm:$0xff] %v521
  %531 = vst [vmem:[%s4 + $0x28] sm:$0xff] %v522
  %532 = vst [vmem:[%s4 + $0x30] sm:$0xff] %v523
  %533 = vst [vmem:[%s4 + $0x38] sm:$0xff] %v524
  %534 = vst [vmem:[%s4 + $0x40] sm:$0xff] %v525
  // Predicated region
  $region18: #{multi_scale_forward.20} parent=0 // pred_check
    _
  $region19: #{multi_scale_forward.20} parent=0 // pred_check_branch
    %536 = sbr.rel (0) target = $region21
  $region20: #{multi_scale_forward.20} parent=0 // pred_region
    _
  $region21: #{multi_scale_forward.20} parent=0 // pred_fallthru
    _
  // Predicated region
  $region22: #{multi_scale_forward.20} parent=0 // pred_check
    _
  $region23: #{multi_scale_forward.20} parent=0 // pred_check_branch
    %538 = sbr.rel (0) target = $region25
  $region24: #{multi_scale_forward.20} parent=0 // pred_region
    _
  $region25: #{multi_scale_forward.20} parent=0 // pred_fallthru
    _

// kernel: multi_scale_forward.21
$region0: #{multi_scale_forward.21}
  #allocation0 [shape = 'u32[]', space=smem, size = 0x4, offset = 0x4, fixed_abs, tag = 'smem constant byte address 0x4 - core index']
  #allocation1 [shape = 'u32[144,128]{1,0:T(1,128)}', space=vmem, size = 0x12000, scoped, tag = 'internal scratch']
  %s0 = inlined_call_operand.vmem [shape: f32[16,128], index: 0, kind: input, shape index: {}]
  %s1 = inlined_call_operand.vmem [shape: f32[128,384], index: 1, kind: input, shape index: {}]
  %s2 = inlined_call_operand.vmem [shape: f32[16,1], index: 2, kind: input, shape index: {}]
  %s3 = inlined_call_operand.vmem [shape: f32[16,1], index: 3, kind: input, shape index: {}]
  %s4 = inlined_call_operand.vmem [shape: f32[16,384], index: 4, kind: output, shape index: {}]
  %s5 = sld [smem:[#allocation0]]
  $region26: #{multi_scale_forward.21} parent=0
    _
  %s7 = ssub.s32 1, %s5
  %s8 = scalar_select 0, %s7, %s5
  // Predicated region
  $region2: #{multi_scale_forward.21} parent=0 // pred_check
    _
  $region3: #{multi_scale_forward.21} parent=0 // pred_check_branch
    %10 = sbr.rel (0) target = $region5
  $region4: #{multi_scale_forward.21} parent=0 // pred_region
    _
  $region5: #{multi_scale_forward.21} parent=0 // pred_fallthru
    _
  // Predicated region
  $region6: #{multi_scale_forward.21} parent=0 // pred_check
    _
  $region7: #{multi_scale_forward.21} parent=0 // pred_check_branch
    %12 = sbr.rel (0) target = $region9
  $region8: #{multi_scale_forward.21} parent=0 // pred_region
    _
  $region9: #{multi_scale_forward.21} parent=0 // pred_fallthru
    _
  // Predicated region
  $region10: #{multi_scale_forward.21} parent=0 // pred_check
    _
  $region11: #{multi_scale_forward.21} parent=0 // pred_check_branch
    %14 = sbr.rel (0) target = $region13
  $region12: #{multi_scale_forward.21} parent=0 // pred_region
    _
  $region13: #{multi_scale_forward.21} parent=0 // pred_fallthru
    _
  // Predicated region
  $region14: #{multi_scale_forward.21} parent=0 // pred_check
    _
  $region15: #{multi_scale_forward.21} parent=0 // pred_check_branch
    %16 = sbr.rel (0) target = $region17
  $region16: #{multi_scale_forward.21} parent=0 // pred_region
    _
  $region17: #{multi_scale_forward.21} parent=0 // pred_fallthru
    _
  %v17 = vld [vmem:[%s0] sm:$0xff]
  %v18 = vld [vmem:[%s0 + $0x8] sm:$0xff]
  %v19 = vld [vmem:[%s1] sm:$0xff]
  %v20 = vld [vmem:[%s1 + $0x8] sm:$0xff]
  %v21 = vld [vmem:[%s1 + $0x10] sm:$0xff]
  %v22 = vld [vmem:[%s1 + $0x18] sm:$0xff]
  %v23 = vld [vmem:[%s1 + $0x20] sm:$0xff]
  %v24 = vld [vmem:[%s1 + $0x28] sm:$0xff]
  %v25 = vld [vmem:[%s1 + $0x30] sm:$0xff]
  %v26 = vld [vmem:[%s1 + $0x38] sm:$0xff]
  %v27 = vld [vmem:[%s1 + $0x40] sm:$0xff]
  %v28 = vld [vmem:[%s1 + $0x48] sm:$0xff]
  %v29 = vld [vmem:[%s1 + $0x50] sm:$0xff]
  %v30 = vld [vmem:[%s1 + $0x58] sm:$0xff]
  %v31 = vld [vmem:[%s1 + $0x60] sm:$0xff]
  %v32 = vld [vmem:[%s1 + $0x68] sm:$0xff]
  %v33 = vld [vmem:[%s1 + $0x70] sm:$0xff]
  %v34 = vld [vmem:[%s1 + $0x78] sm:$0xff]
  %v35 = vld [vmem:[%s1 + $0x80] sm:$0xff]
  %v36 = vld [vmem:[%s1 + $0x88] sm:$0xff]
  %v37 = vld [vmem:[%s1 + $0x90] sm:$0xff]
  %v38 = vld [vmem:[%s1 + $0x98] sm:$0xff]
  %v39 = vld [vmem:[%s1 + $0xa0] sm:$0xff]
  %v40 = vld [vmem:[%s1 + $0xa8] sm:$0xff]
  %v41 = vld [vmem:[%s1 + $0xb0] sm:$0xff]
  %v42 = vld [vmem:[%s1 + $0xb8] sm:$0xff]
  %v43 = vld [vmem:[%s1 + $0xc0] sm:$0xff]
  %v44 = vld [vmem:[%s1 + $0xc8] sm:$0xff]
  %v45 = vld [vmem:[%s1 + $0xd0] sm:$0xff]
  %v46 = vld [vmem:[%s1 + $0xd8] sm:$0xff]
  %v47 = vld [vmem:[%s1 + $0xe0] sm:$0xff]
  %v48 = vld [vmem:[%s1 + $0xe8] sm:$0xff]
  %v49 = vld [vmem:[%s1 + $0xf0] sm:$0xff]
  %v50 = vld [vmem:[%s1 + $0xf8] sm:$0xff]
  %v51 = vld [vmem:[%s1 + $0x100] sm:$0xff]
  %v52 = vld [vmem:[%s1 + $0x108] sm:$0xff]
  %v53 = vld [vmem:[%s1 + $0x110] sm:$0xff]
  %v54 = vld [vmem:[%s1 + $0x118] sm:$0xff]
  %v55 = vld [vmem:[%s1 + $0x120] sm:$0xff]
  %v56 = vld [vmem:[%s1 + $0x128] sm:$0xff]
  %v57 = vld [vmem:[%s1 + $0x130] sm:$0xff]
  %v58 = vld [vmem:[%s1 + $0x138] sm:$0xff]
  %v59 = vld [vmem:[%s1 + $0x140] sm:$0xff]
  %v60 = vld [vmem:[%s1 + $0x148] sm:$0xff]
  %v61 = vld [vmem:[%s1 + $0x150] sm:$0xff]
  %v62 = vld [vmem:[%s1 + $0x158] sm:$0xff]
  %v63 = vld [vmem:[%s1 + $0x160] sm:$0xff]
  %v64 = vld [vmem:[%s1 + $0x168] sm:$0xff]
  %v65 = vld [vmem:[%s1 + $0x170] sm:$0xff]
  %v66 = vld [vmem:[%s1 + $0x178] sm:$0xff]
  %67 = vmatprep.subr.mxu0 %v65
  %68 = vmatpush1.msra.mxu0 %v64
  %69 = vmatprep.subr.mxu0 %v62
  %70 = vmatpush1.msra.mxu0 %v61
  %71 = vmatprep.subr.mxu0 %v59
  %72 = vmatpush1.msra.mxu0 %v58
  %73 = vmatprep.subr.mxu0 %v56
  %74 = vmatpush1.msra.mxu0 %v55
  %75 = vmatprep.subr.mxu0 %v53
  %76 = vmatpush1.msra.mxu0 %v52
  %77 = vmatprep.subr.mxu0 %v50
  %78 = vmatpush1.msra.mxu0 %v49
  %79 = vmatprep.subr.mxu0 %v47
  %80 = vmatpush1.msra.mxu0 %v46
  %81 = vmatprep.subr.mxu0 %v44
  %82 = vmatpush1.msra.mxu0 %v43
  %83 = vmatprep.subr.mxu0 %v41
  %84 = vmatpush1.msra.mxu0 %v40
  %85 = vmatprep.subr.mxu0 %v38
  %86 = vmatpush1.msra.mxu0 %v37
  %87 = vmatprep.subr.mxu0 %v35
  %88 = vmatpush1.msra.mxu0 %v34
  %89 = vmatprep.subr.mxu0 %v32
  %90 = vmatpush1.msra.mxu0 %v31
  %91 = vmatprep.subr.mxu0 %v29
  %92 = vmatpush1.msra.mxu0 %v28
  %93 = vmatprep.subr.mxu0 %v26
  %94 = vmatpush1.msra.mxu0 %v25
  %95 = vmatprep.subr.mxu0 %v23
  %96 = vmatpush1.msra.mxu0 %v22
  %97 = vmatprep.subr.mxu0 %v20
  %98 = vmatpush1.msra.mxu0 %v19
  %99 = vmatprep.subr.mxu0 0.0
  %100 = vmatpush2.msra.mxu0 0.0
  %101 = vmatprep.subr.mxu0 0.0
  %102 = vmatpush2.msra.mxu0 0.0
  %103 = vmatprep.subr.mxu0 0.0
  %104 = vmatpush2.msra.mxu0 0.0
  %105 = vmatprep.subr.mxu0 0.0
  %106 = vmatpush2.msra.mxu0 0.0
  %107 = vmatprep.subr.mxu0 0.0
  %108 = vmatpush2.msra.mxu0 0.0
  %109 = vmatprep.subr.mxu0 0.0
  %110 = vmatpush2.msra.mxu0 0.0
  %111 = vmatprep.subr.mxu0 0.0
  %112 = vmatpush2.msra.mxu0 0.0
  %113 = vmatprep.subr.mxu0 0.0
  %114 = vmatpush2.msra.mxu0 0.0
  %115 = vmatprep.subr.mxu0 0.0
  %116 = vmatpush2.msra.mxu0 0.0
  %117 = vmatprep.subr.mxu0 0.0
  %118 = vmatpush2.msra.mxu0 0.0
  %119 = vmatprep.subr.mxu0 0.0
  %120 = vmatpush2.msra.mxu0 0.0
  %121 = vmatprep.subr.mxu0 0.0
  %122 = vmatpush2.msra.mxu0 0.0
  %123 = vmatprep.subr.mxu0 0.0
  %124 = vmatpush2.msra.mxu0 0.0
  %125 = vmatprep.subr.mxu0 0.0
  %126 = vmatpush2.msra.mxu0 0.0
  %127 = vmatprep.subr.mxu0 0.0
  %128 = vmatpush2.msra.mxu0 0.0
  %129 = vmatprep.subr.mxu0 0.0
  %130 = vmatpush2.msra.mxu0 0.0
  %131 = vmatprep.mubr.f32.mxu0 0.0
  %132 = vmatmul.mubr.f32.gmra.mxu0 %v17
  %v133 = vpop.f32.mrf.mxu0
  %v134 = vadd.f32 0.0, %v133
  %v135 = vpop.f32.mrf.mxu0
  %v136 = vadd.f32 0.0, %v135
  %137 = vmatprep.mubr.f32.mxu0 0.0
  %138 = vmatmul.mubr.f32.gmra.mxu0 %v18
  %v139 = vpop.f32.mrf.mxu0
  %v140 = vadd.f32 0.0, %v139
  %v141 = vpop.f32.mrf.mxu0
  %v142 = vadd.f32 0.0, %v141
  %143 = vdwg.mxu0
  %144 = vmatprep.subr.mxu0 0.0
  %145 = vmatpush1.msra.mxu0 %v66
  %146 = vmatprep.subr.mxu0 0.0
  %147 = vmatpush1.msra.mxu0 %v63
  %148 = vmatprep.subr.mxu0 0.0
  %149 = vmatpush1.msra.mxu0 %v60
  %150 = vmatprep.subr.mxu0 0.0
  %151 = vmatpush1.msra.mxu0 %v57
  %152 = vmatprep.subr.mxu0 0.0
  %153 = vmatpush1.msra.mxu0 %v54
  %154 = vmatprep.subr.mxu0 0.0
  %155 = vmatpush1.msra.mxu0 %v51
  %156 = vmatprep.subr.mxu0 0.0
  %157 = vmatpush1.msra.mxu0 %v48
  %158 = vmatprep.subr.mxu0 0.0
  %159 = vmatpush1.msra.mxu0 %v45
  %160 = vmatprep.subr.mxu0 0.0
  %161 = vmatpush1.msra.mxu0 %v42
  %162 = vmatprep.subr.mxu0 0.0
  %163 = vmatpush1.msra.mxu0 %v39
  %164 = vmatprep.subr.mxu0 0.0
  %165 = vmatpush1.msra.mxu0 %v36
  %166 = vmatprep.subr.mxu0 0.0
  %167 = vmatpush1.msra.mxu0 %v33
  %168 = vmatprep.subr.mxu0 0.0
  %169 = vmatpush1.msra.mxu0 %v30
  %170 = vmatprep.subr.mxu0 0.0
  %171 = vmatpush1.msra.mxu0 %v27
  %172 = vmatprep.subr.mxu0 0.0
  %173 = vmatpush1.msra.mxu0 %v24
  %174 = vmatprep.subr.mxu0 0.0
  %175 = vmatpush1.msra.mxu0 %v21
  %176 = vmatprep.subr.mxu0 0.0
  %177 = vmatpush2.msra.mxu0 0.0
  %178 = vmatprep.subr.mxu0 0.0
  %179 = vmatpush2.msra.mxu0 0.0
  %180 = vmatprep.subr.mxu0 0.0
  %181 = vmatpush2.msra.mxu0 0.0
  %182 = vmatprep.subr.mxu0 0.0
  %183 = vmatpush2.msra.mxu0 0.0
  %184 = vmatprep.subr.mxu0 0.0
  %185 = vmatpush2.msra.mxu0 0.0
  %186 = vmatprep.subr.mxu0 0.0
  %187 = vmatpush2.msra.mxu0 0.0
  %188 = vmatprep.subr.mxu0 0.0
  %189 = vmatpush2.msra.mxu0 0.0
  %190 = vmatprep.subr.mxu0 0.0
  %191 = vmatpush2.msra.mxu0 0.0
  %192 = vmatprep.subr.mxu0 0.0
  %193 = vmatpush2.msra.mxu0 0.0
  %194 = vmatprep.subr.mxu0 0.0
  %195 = vmatpush2.msra.mxu0 0.0
  %196 = vmatprep.subr.mxu0 0.0
  %197 = vmatpush2.msra.mxu0 0.0
  %198 = vmatprep.subr.mxu0 0.0
  %199 = vmatpush2.msra.mxu0 0.0
  %200 = vmatprep.subr.mxu0 0.0
  %201 = vmatpush2.msra.mxu0 0.0
  %202 = vmatprep.subr.mxu0 0.0
  %203 = vmatpush2.msra.mxu0 0.0
  %204 = vmatprep.subr.mxu0 0.0
  %205 = vmatpush2.msra.mxu0 0.0
  %206 = vmatprep.subr.mxu0 0.0
  %207 = vmatpush2.msra.mxu0 0.0
  %208 = vmatprep.mubr.f32.mxu0 0.0
  %209 = vmatmul.mubr.f32.gmra.mxu0 %v17
  %v210 = vpop.f32.mrf.mxu0
  %v211 = vadd.f32 0.0, %v210
  %v212 = vpop.f32.mrf.mxu0
  %213 = vmatprep.mubr.f32.mxu0 0.0
  %214 = vmatmul.mubr.f32.gmra.mxu0 %v18
  %v215 = vpop.f32.mrf.mxu0
  %v216 = vadd.f32 0.0, %v215
  %v217 = vpop.f32.mrf.mxu0
  %218 = vdwg.mxu0
  %v219 = vadd.f32 %v134, %v136
  %v220 = vadd.f32 %v219, %v211
  %221 = vadd.xlane.f32.xlu0 %v220
  %v222 = vpop.xlane.xlu0 %221
  %v223 = vadd.f32 %v140, %v142
  %v224 = vadd.f32 %v223, %v216
  %225 = vadd.xlane.f32.xlu0 %v224
  %v226 = vpop.xlane.xlu0 %225
  %v227 = vmul.f32 %v134, %v134
  %v228 = vmul.f32 %v136, %v136
  %v229 = vmul.f32 %v211, %v211
  %v230 = vmul.f32 %v140, %v140
  %v231 = vmul.f32 %v142, %v142
  %v232 = vmul.f32 %v216, %v216
  %v233 = vadd.f32 %v227, %v228
  %v234 = vadd.f32 %v233, %v229
  %235 = vadd.xlane.f32.xlu0 %v234
  %v236 = vpop.xlane.xlu0 %235
  %v237 = vadd.f32 %v230, %v231
  %v238 = vadd.f32 %v237, %v232
  %239 = vadd.xlane.f32.xlu0 %v238
  %v240 = vpop.xlane.xlu0 %239
  %v241 = vmul.f32 %v222, 0.0034722222
  %v242 = vmul.f32 %v226, 0.0034722222
  %v243 = vmul.f32 %v236, 0.0034722222
  %v244 = vmul.f32 %v240, 0.0034722222
  %v245 = vmul.f32 %v241, %v241
  %v246 = vmul.f32 %v242, %v242
  %v247 = vsub.f32 %v243, %v245
  %v248 = vsub.f32 %v244, %v246
  %v249 = vmax.f32 %v247, 0.0
  %v250 = vmax.f32 %v248, 0.0
  %v251 = vld [vmem:[%s2] sm:$0xff]
  %v252 = vld [vmem:[%s2 + $0x8] sm:$0xff]
  %v253 = vadd.f32 %v249, 1e-05
  %v254 = vadd.f32 %v250, 1e-05
  %v255 = vrsqrt.pop %v253
  %v256 = vrsqrt.pop %v254
  %v257 = vmul.f32 %v251, %v255
  %v258 = vmul.f32 %v252, %v256
  %v259 = vld [vmem:[%s3] sm:$0xff]
  %v260 = vld [vmem:[%s3 + $0x8] sm:$0xff]
  %v261 = vmul.f32 %v241, %v257
  %v262 = vmul.f32 %v242, %v258
  %v263 = vsub.f32 %v259, %v261
  %v264 = vsub.f32 %v260, %v262
  %266 = vset.pattern.permute.xlu0 0
  %267 = vperm.xlu0 %266, %v257
  %v268 = vpop.permute.xlu0 %267
  %271 = vset.pattern.permute.xlu0 0
  %272 = vperm.xlu0 %271, %v258
  %v273 = vpop.permute.xlu0 %272
  %v275 = vmul.f32 %v134, %v268
  %v276 = vmul.f32 %v136, %v268
  %v277 = vmul.f32 %v211, %v268
  %v278 = vmul.f32 %v140, %v273
  %v279 = vmul.f32 %v142, %v273
  %v280 = vmul.f32 %v216, %v273
  %282 = vset.pattern.permute.xlu0 0
  %283 = vperm.xlu0 %282, %v263
  %v284 = vpop.permute.xlu0 %283
  %287 = vset.pattern.permute.xlu0 0
  %288 = vperm.xlu0 %287, %v264
  %v289 = vpop.permute.xlu0 %288
  %v291 = vadd.f32 %v275, %v284
  %v292 = vadd.f32 %v276, %v284
  %v293 = vadd.f32 %v277, %v284
  %v294 = vadd.f32 %v278, %v289
  %v295 = vadd.f32 %v279, %v289
  %v296 = vadd.f32 %v280, %v289
  %vm297 = vcmp.ge.f32.partialorder %v291, 0.0
  %vm298 = vcmp.ge.f32.partialorder %v292, 0.0
  %vm299 = vcmp.ge.f32.partialorder %v293, 0.0
  %vm300 = vcmp.ge.f32.partialorder %v294, 0.0
  %vm301 = vcmp.ge.f32.partialorder %v295, 0.0
  %vm302 = vcmp.ge.f32.partialorder %v296, 0.0
  %v303 = vmul.f32 %v291, 0.2
  %v304 = vmul.f32 %v292, 0.2
  %v305 = vmul.f32 %v293, 0.2
  %v306 = vmul.f32 %v294, 0.2
  %v307 = vmul.f32 %v295, 0.2
  %v308 = vmul.f32 %v296, 0.2
  %v309 = vsel %vm297, %v291, %v303
  %v310 = vsel %vm298, %v292, %v304
  %v311 = vsel %vm299, %v293, %v305
  %v312 = vsel %vm300, %v294, %v306
  %v313 = vsel %vm301, %v295, %v307
  %v314 = vsel %vm302, %v296, %v308
  %315 = vst [vmem:[%s4] sm:$0xff] %v309
  %316 = vst [vmem:[%s4 + $0x8] sm:$0xff] %v310
  %317 = vst [vmem:[%s4 + $0x10] sm:$0xff] %v311
  %318 = vst [vmem:[%s4 + $0x18] sm:$0xff] %v312
  %319 = vst [vmem:[%s4 + $0x20] sm:$0xff] %v313
  %320 = vst [vmem:[%s4 + $0x28] sm:$0xff] %v314
  // Predicated region
  $region18: #{multi_scale_forward.21} parent=0 // pred_check
    _
  $region19: #{multi_scale_forward.21} parent=0 // pred_check_branch
    %322 = sbr.rel (0) target = $region21
  $region20: #{multi_scale_forward.21} parent=0 // pred_region
    _
  $region21: #{multi_scale_forward.21} parent=0 // pred_fallthru
    _
  // Predicated region
  $region22: #{multi_scale_forward.21} parent=0 // pred_check
    _
  $region23: #{multi_scale_forward.21} parent=0 // pred_check_branch
    %324 = sbr.rel (0) target = $region25
  $region24: #{multi_scale_forward.21} parent=0 // pred_region
    _
  $region25: #{multi_scale_forward.21} parent=0 // pred_fallthru
    _

// kernel: multi_scale_forward.22
$region0: #{multi_scale_forward.22}
  #allocation0 [shape = 'u32[]', space=smem, size = 0x4, offset = 0x4, fixed_abs, tag = 'smem constant byte address 0x4 - core index']
  #allocation1 [shape = 'u32[144,128]{1,0:T(1,128)}', space=vmem, size = 0x12000, scoped, tag = 'internal scratch']
  %s0 = inlined_call_operand.vmem [shape: f32[32,256], index: 0, kind: input, shape index: {}]
  %s1 = inlined_call_operand.vmem [shape: f32[256,128], index: 1, kind: input, shape index: {}]
  %s2 = inlined_call_operand.vmem [shape: f32[32,1], index: 2, kind: input, shape index: {}]
  %s3 = inlined_call_operand.vmem [shape: f32[32,1], index: 3, kind: input, shape index: {}]
  %s4 = inlined_call_operand.vmem [shape: f32[32,128], index: 4, kind: output, shape index: {}]
  %s5 = sld [smem:[#allocation0]]
  $region26: #{multi_scale_forward.22} parent=0
    _
  %s7 = ssub.s32 1, %s5
  %s8 = scalar_select 0, %s7, %s5
  // Predicated region
  $region2: #{multi_scale_forward.22} parent=0 // pred_check
    _
  $region3: #{multi_scale_forward.22} parent=0 // pred_check_branch
    %10 = sbr.rel (0) target = $region5
  $region4: #{multi_scale_forward.22} parent=0 // pred_region
    _
  $region5: #{multi_scale_forward.22} parent=0 // pred_fallthru
    _
  // Predicated region
  $region6: #{multi_scale_forward.22} parent=0 // pred_check
    _
  $region7: #{multi_scale_forward.22} parent=0 // pred_check_branch
    %12 = sbr.rel (0) target = $region9
  $region8: #{multi_scale_forward.22} parent=0 // pred_region
    _
  $region9: #{multi_scale_forward.22} parent=0 // pred_fallthru
    _
  // Predicated region
  $region10: #{multi_scale_forward.22} parent=0 // pred_check
    _
  $region11: #{multi_scale_forward.22} parent=0 // pred_check_branch
    %14 = sbr.rel (0) target = $region13
  $region12: #{multi_scale_forward.22} parent=0 // pred_region
    _
  $region13: #{multi_scale_forward.22} parent=0 // pred_fallthru
    _
  // Predicated region
  $region14: #{multi_scale_forward.22} parent=0 // pred_check
    _
  $region15: #{multi_scale_forward.22} parent=0 // pred_check_branch
    %16 = sbr.rel (0) target = $region17
  $region16: #{multi_scale_forward.22} parent=0 // pred_region
    _
  $region17: #{multi_scale_forward.22} parent=0 // pred_fallthru
    _
  %v17 = vld [vmem:[%s0] sm:$0xff]
  %v18 = vld [vmem:[%s0 + $0x8] sm:$0xff]
  %v19 = vld [vmem:[%s0 + $0x10] sm:$0xff]
  %v20 = vld [vmem:[%s0 + $0x18] sm:$0xff]
  %v21 = vld [vmem:[%s0 + $0x20] sm:$0xff]
  %v22 = vld [vmem:[%s0 + $0x28] sm:$0xff]
  %v23 = vld [vmem:[%s0 + $0x30] sm:$0xff]
  %v24 = vld [vmem:[%s0 + $0x38] sm:$0xff]
  %v25 = vld [vmem:[%s1] sm:$0xff]
  %v26 = vld [vmem:[%s1 + $0x8] sm:$0xff]
  %v27 = vld [vmem:[%s1 + $0x10] sm:$0xff]
  %v28 = vld [vmem:[%s1 + $0x18] sm:$0xff]
  %v29 = vld [vmem:[%s1 + $0x20] sm:$0xff]
  %v30 = vld [vmem:[%s1 + $0x28] sm:$0xff]
  %v31 = vld [vmem:[%s1 + $0x30] sm:$0xff]
  %v32 = vld [vmem:[%s1 + $0x38] sm:$0xff]
  %v33 = vld [vmem:[%s1 + $0x40] sm:$0xff]
  %v34 = vld [vmem:[%s1 + $0x48] sm:$0xff]
  %v35 = vld [vmem:[%s1 + $0x50] sm:$0xff]
  %v36 = vld [vmem:[%s1 + $0x58] sm:$0xff]
  %v37 = vld [vmem:[%s1 + $0x60] sm:$0xff]
  %v38 = vld [vmem:[%s1 + $0x68] sm:$0xff]
  %v39 = vld [vmem:[%s1 + $0x70] sm:$0xff]
  %v40 = vld [vmem:[%s1 + $0x78] sm:$0xff]
  %v41 = vld [vmem:[%s1 + $0x80] sm:$0xff]
  %v42 = vld [vmem:[%s1 + $0x88] sm:$0xff]
  %v43 = vld [vmem:[%s1 + $0x90] sm:$0xff]
  %v44 = vld [vmem:[%s1 + $0x98] sm:$0xff]
  %v45 = vld [vmem:[%s1 + $0xa0] sm:$0xff]
  %v46 = vld [vmem:[%s1 + $0xa8] sm:$0xff]
  %v47 = vld [vmem:[%s1 + $0xb0] sm:$0xff]
  %v48 = vld [vmem:[%s1 + $0xb8] sm:$0xff]
  %v49 = vld [vmem:[%s1 + $0xc0] sm:$0xff]
  %v50 = vld [vmem:[%s1 + $0xc8] sm:$0xff]
  %v51 = vld [vmem:[%s1 + $0xd0] sm:$0xff]
  %v52 = vld [vmem:[%s1 + $0xd8] sm:$0xff]
  %v53 = vld [vmem:[%s1 + $0xe0] sm:$0xff]
  %v54 = vld [vmem:[%s1 + $0xe8] sm:$0xff]
  %v55 = vld [vmem:[%s1 + $0xf0] sm:$0xff]
  %v56 = vld [vmem:[%s1 + $0xf8] sm:$0xff]
  %57 = vmatprep.subr.mxu0 0.0
  %58 = vmatpush1.msra.mxu0 %v40
  %59 = vmatprep.subr.mxu0 0.0
  %60 = vmatpush1.msra.mxu0 %v39
  %61 = vmatprep.subr.mxu0 0.0
  %62 = vmatpush1.msra.mxu0 %v38
  %63 = vmatprep.subr.mxu0 0.0
  %64 = vmatpush1.msra.mxu0 %v37
  %65 = vmatprep.subr.mxu0 0.0
  %66 = vmatpush1.msra.mxu0 %v36
  %67 = vmatprep.subr.mxu0 0.0
  %68 = vmatpush1.msra.mxu0 %v35
  %69 = vmatprep.subr.mxu0 0.0
  %70 = vmatpush1.msra.mxu0 %v34
  %71 = vmatprep.subr.mxu0 0.0
  %72 = vmatpush1.msra.mxu0 %v33
  %73 = vmatprep.subr.mxu0 0.0
  %74 = vmatpush1.msra.mxu0 %v32
  %75 = vmatprep.subr.mxu0 0.0
  %76 = vmatpush1.msra.mxu0 %v31
  %77 = vmatprep.subr.mxu0 0.0
  %78 = vmatpush1.msra.mxu0 %v30
  %79 = vmatprep.subr.mxu0 0.0
  %80 = vmatpush1.msra.mxu0 %v29
  %81 = vmatprep.subr.mxu0 0.0
  %82 = vmatpush1.msra.mxu0 %v28
  %83 = vmatprep.subr.mxu0 0.0
  %84 = vmatpush1.msra.mxu0 %v27
  %85 = vmatprep.subr.mxu0 0.0
  %86 = vmatpush1.msra.mxu0 %v26
  %87 = vmatprep.subr.mxu0 0.0
  %88 = vmatpush1.msra.mxu0 %v25
  %89 = vmatprep.subr.mxu0 0.0
  %90 = vmatpush2.msra.mxu0 %v56
  %91 = vmatprep.subr.mxu0 0.0
  %92 = vmatpush2.msra.mxu0 %v55
  %93 = vmatprep.subr.mxu0 0.0
  %94 = vmatpush2.msra.mxu0 %v54
  %95 = vmatprep.subr.mxu0 0.0
  %96 = vmatpush2.msra.mxu0 %v53
  %97 = vmatprep.subr.mxu0 0.0
  %98 = vmatpush2.msra.mxu0 %v52
  %99 = vmatprep.subr.mxu0 0.0
  %100 = vmatpush2.msra.mxu0 %v51
  %101 = vmatprep.subr.mxu0 0.0
  %102 = vmatpush2.msra.mxu0 %v50
  %103 = vmatprep.subr.mxu0 0.0
  %104 = vmatpush2.msra.mxu0 %v49
  %105 = vmatprep.subr.mxu0 0.0
  %106 = vmatpush2.msra.mxu0 %v48
  %107 = vmatprep.subr.mxu0 0.0
  %108 = vmatpush2.msra.mxu0 %v47
  %109 = vmatprep.subr.mxu0 0.0
  %110 = vmatpush2.msra.mxu0 %v46
  %111 = vmatprep.subr.mxu0 0.0
  %112 = vmatpush2.msra.mxu0 %v45
  %113 = vmatprep.subr.mxu0 0.0
  %114 = vmatpush2.msra.mxu0 %v44
  %115 = vmatprep.subr.mxu0 0.0
  %116 = vmatpush2.msra.mxu0 %v43
  %117 = vmatprep.subr.mxu0 0.0
  %118 = vmatpush2.msra.mxu0 %v42
  %119 = vmatprep.subr.mxu0 0.0
  %120 = vmatpush2.msra.mxu0 %v41
  %121 = vmatprep.mubr.f32.mxu0 %v18
  %122 = vmatmul.mubr.f32.gmra.mxu0 %v17
  %v123 = vpop.f32.mrf.mxu0
  %v124 = vadd.f32 0.0, %v123
  %v125 = vpop.f32.mrf.mxu0
  %126 = vmatprep.mubr.f32.mxu0 %v20
  %127 = vmatmul.mubr.f32.gmra.mxu0 %v19
  %v128 = vpop.f32.mrf.mxu0
  %v129 = vadd.f32 0.0, %v128
  %v130 = vpop.f32.mrf.mxu0
  %131 = vmatprep.mubr.f32.mxu0 %v22
  %132 = vmatmul.mubr.f32.gmra.mxu0 %v21
  %v133 = vpop.f32.mrf.mxu0
  %v134 = vadd.f32 0.0, %v133
  %v135 = vpop.f32.mrf.mxu0
  %136 = vmatprep.mubr.f32.mxu0 %v24
  %137 = vmatmul.mubr.f32.gmra.mxu0 %v23
  %v138 = vpop.f32.mrf.mxu0
  %v139 = vadd.f32 0.0, %v138
  %v140 = vpop.f32.mrf.mxu0
  %141 = vdwg.mxu0
  %142 = vadd.xlane.f32.xlu0 %v124
  %v143 = vpop.xlane.xlu0 %142
  %144 = vadd.xlane.f32.xlu0 %v129
  %v145 = vpop.xlane.xlu0 %144
  %146 = vadd.xlane.f32.xlu0 %v134
  %v147 = vpop.xlane.xlu0 %146
  %148 = vadd.xlane.f32.xlu0 %v139
  %v149 = vpop.xlane.xlu0 %148
  %v150 = vmul.f32 %v124, %v124
  %v151 = vmul.f32 %v129, %v129
  %v152 = vmul.f32 %v134, %v134
  %v153 = vmul.f32 %v139, %v139
  %154 = vadd.xlane.f32.xlu0 %v150
  %v155 = vpop.xlane.xlu0 %154
  %156 = vadd.xlane.f32.xlu0 %v151
  %v157 = vpop.xlane.xlu0 %156
  %158 = vadd.xlane.f32.xlu0 %v152
  %v159 = vpop.xlane.xlu0 %158
  %160 = vadd.xlane.f32.xlu0 %v153
  %v161 = vpop.xlane.xlu0 %160
  %v162 = vmul.f32 %v143, 0.013888889
  %v163 = vmul.f32 %v145, 0.013888889
  %v164 = vmul.f32 %v147, 0.013888889
  %v165 = vmul.f32 %v149, 0.013888889
  %v166 = vmul.f32 %v155, 0.013888889
  %v167 = vmul.f32 %v157, 0.013888889
  %v168 = vmul.f32 %v159, 0.013888889
  %v169 = vmul.f32 %v161, 0.013888889
  %v170 = vmul.f32 %v162, %v162
  %v171 = vmul.f32 %v163, %v163
  %v172 = vmul.f32 %v164, %v164
  %v173 = vmul.f32 %v165, %v165
  %v174 = vsub.f32 %v166, %v170
  %v175 = vsub.f32 %v167, %v171
  %v176 = vsub.f32 %v168, %v172
  %v177 = vsub.f32 %v169, %v173
  %v178 = vmax.f32 %v174, 0.0
  %v179 = vmax.f32 %v175, 0.0
  %v180 = vmax.f32 %v176, 0.0
  %v181 = vmax.f32 %v177, 0.0
  %v182 = vld [vmem:[%s2] sm:$0xff]
  %v183 = vld [vmem:[%s2 + $0x8] sm:$0xff]
  %v184 = vld [vmem:[%s2 + $0x10] sm:$0xff]
  %v185 = vld [vmem:[%s2 + $0x18] sm:$0xff]
  %v186 = vadd.f32 %v178, 1e-05
  %v187 = vadd.f32 %v179, 1e-05
  %v188 = vadd.f32 %v180, 1e-05
  %v189 = vadd.f32 %v181, 1e-05
  %v190 = vrsqrt.pop %v186
  %v191 = vrsqrt.pop %v187
  %v192 = vrsqrt.pop %v188
  %v193 = vrsqrt.pop %v189
  %v194 = vmul.f32 %v182, %v190
  %v195 = vmul.f32 %v183, %v191
  %v196 = vmul.f32 %v184, %v192
  %v197 = vmul.f32 %v185, %v193
  %v198 = vld [vmem:[%s3] sm:$0xff]
  %v199 = vld [vmem:[%s3 + $0x8] sm:$0xff]
  %v200 = vld [vmem:[%s3 + $0x10] sm:$0xff]
  %v201 = vld [vmem:[%s3 + $0x18] sm:$0xff]
  %v202 = vmul.f32 %v162, %v194
  %v203 = vmul.f32 %v163, %v195
  %v204 = vmul.f32 %v164, %v196
  %v205 = vmul.f32 %v165, %v197
  %v206 = vsub.f32 %v198, %v202
  %v207 = vsub.f32 %v199, %v203
  %v208 = vsub.f32 %v200, %v204
  %v209 = vsub.f32 %v201, %v205
  %211 = vset.pattern.permute.xlu0 0
  %212 = vperm.xlu0 %211, %v194
  %v213 = vpop.permute.xlu0 %212
  %216 = vset.pattern.permute.xlu0 0
  %217 = vperm.xlu0 %216, %v195
  %v218 = vpop.permute.xlu0 %217
  %221 = vset.pattern.permute.xlu0 0
  %222 = vperm.xlu0 %221, %v196
  %v223 = vpop.permute.xlu0 %222
  %226 = vset.pattern.permute.xlu0 0
  %227 = vperm.xlu0 %226, %v197
  %v228 = vpop.permute.xlu0 %227
  %v230 = vmul.f32 %v124, %v213
  %v231 = vmul.f32 %v129, %v218
  %v232 = vmul.f32 %v134, %v223
  %v233 = vmul.f32 %v139, %v228
  %235 = vset.pattern.permute.xlu0 0
  %236 = vperm.xlu0 %235, %v206
  %v237 = vpop.permute.xlu0 %236
  %240 = vset.pattern.permute.xlu0 0
  %241 = vperm.xlu0 %240, %v207
  %v242 = vpop.permute.xlu0 %241
  %245 = vset.pattern.permute.xlu0 0
  %246 = vperm.xlu0 %245, %v208
  %v247 = vpop.permute.xlu0 %246
  %250 = vset.pattern.permute.xlu0 0
  %251 = vperm.xlu0 %250, %v209
  %v252 = vpop.permute.xlu0 %251
  %v254 = vadd.f32 %v230, %v237
  %v255 = vadd.f32 %v231, %v242
  %v256 = vadd.f32 %v232, %v247
  %v257 = vadd.f32 %v233, %v252
  %vm258 = vcmp.ge.f32.partialorder %v254, 0.0
  %vm259 = vcmp.ge.f32.partialorder %v255, 0.0
  %vm260 = vcmp.ge.f32.partialorder %v256, 0.0
  %vm261 = vcmp.ge.f32.partialorder %v257, 0.0
  %v262 = vmul.f32 %v254, 0.2
  %v263 = vmul.f32 %v255, 0.2
  %v264 = vmul.f32 %v256, 0.2
  %v265 = vmul.f32 %v257, 0.2
  %v266 = vsel %vm258, %v254, %v262
  %v267 = vsel %vm259, %v255, %v263
  %v268 = vsel %vm260, %v256, %v264
  %v269 = vsel %vm261, %v257, %v265
  %270 = vst [vmem:[%s4] sm:$0xff] %v266
  %271 = vst [vmem:[%s4 + $0x8] sm:$0xff] %v267
  %272 = vst [vmem:[%s4 + $0x10] sm:$0xff] %v268
  %273 = vst [vmem:[%s4 + $0x18] sm:$0xff] %v269
  // Predicated region
  $region18: #{multi_scale_forward.22} parent=0 // pred_check
    _
  $region19: #{multi_scale_forward.22} parent=0 // pred_check_branch
    %275 = sbr.rel (0) target = $region21
  $region20: #{multi_scale_forward.22} parent=0 // pred_region
    _
  $region21: #{multi_scale_forward.22} parent=0 // pred_fallthru
    _
  // Predicated region
  $region22: #{multi_scale_forward.22} parent=0 // pred_check
    _
  $region23: #{multi_scale_forward.22} parent=0 // pred_check_branch
    %277 = sbr.rel (0) target = $region25
  $region24: #{multi_scale_forward.22} parent=0 // pred_region
    _
  $region25: #{multi_scale_forward.22} parent=0 // pred_fallthru
    _

// kernel: multi_scale_forward.23
$region0: #{multi_scale_forward.23}
  #allocation0 [shape = 'u32[]', space=smem, size = 0x4, offset = 0x4, fixed_abs, tag = 'smem constant byte address 0x4 - core index']
  #allocation1 [shape = 'u32[144,128]{1,0:T(1,128)}', space=vmem, size = 0x12000, scoped, tag = 'internal scratch']
  %s0 = inlined_call_operand.vmem [shape: f32[64,512], index: 0, kind: input, shape index: {}]
  %s1 = inlined_call_operand.vmem [shape: f32[512,128], index: 1, kind: input, shape index: {}]
  %s2 = inlined_call_operand.vmem [shape: f32[64,1], index: 2, kind: input, shape index: {}]
  %s3 = inlined_call_operand.vmem [shape: f32[64,1], index: 3, kind: input, shape index: {}]
  %s4 = inlined_call_operand.vmem [shape: f32[64,128], index: 4, kind: output, shape index: {}]
  %s5 = sld [smem:[#allocation0]]
  $region26: #{multi_scale_forward.23} parent=0
    _
  %s7 = ssub.s32 1, %s5
  %s8 = scalar_select 0, %s7, %s5
  // Predicated region
  $region2: #{multi_scale_forward.23} parent=0 // pred_check
    _
  $region3: #{multi_scale_forward.23} parent=0 // pred_check_branch
    %10 = sbr.rel (0) target = $region5
  $region4: #{multi_scale_forward.23} parent=0 // pred_region
    _
  $region5: #{multi_scale_forward.23} parent=0 // pred_fallthru
    _
  // Predicated region
  $region6: #{multi_scale_forward.23} parent=0 // pred_check
    _
  $region7: #{multi_scale_forward.23} parent=0 // pred_check_branch
    %12 = sbr.rel (0) target = $region9
  $region8: #{multi_scale_forward.23} parent=0 // pred_region
    _
  $region9: #{multi_scale_forward.23} parent=0 // pred_fallthru
    _
  // Predicated region
  $region10: #{multi_scale_forward.23} parent=0 // pred_check
    _
  $region11: #{multi_scale_forward.23} parent=0 // pred_check_branch
    %14 = sbr.rel (0) target = $region13
  $region12: #{multi_scale_forward.23} parent=0 // pred_region
    _
  $region13: #{multi_scale_forward.23} parent=0 // pred_fallthru
    _
  // Predicated region
  $region14: #{multi_scale_forward.23} parent=0 // pred_check
    _
  $region15: #{multi_scale_forward.23} parent=0 // pred_check_branch
    %16 = sbr.rel (0) target = $region17
  $region16: #{multi_scale_forward.23} parent=0 // pred_region
    _
  $region17: #{multi_scale_forward.23} parent=0 // pred_fallthru
    _
  %v17 = vld [vmem:[%s0] sm:$0xff]
  %v18 = vld [vmem:[%s0 + $0x8] sm:$0xff]
  %v19 = vld [vmem:[%s0 + $0x10] sm:$0xff]
  %v20 = vld [vmem:[%s0 + $0x18] sm:$0xff]
  %v21 = vld [vmem:[%s0 + $0x20] sm:$0xff]
  %v22 = vld [vmem:[%s0 + $0x28] sm:$0xff]
  %v23 = vld [vmem:[%s0 + $0x30] sm:$0xff]
  %v24 = vld [vmem:[%s0 + $0x38] sm:$0xff]
  %v25 = vld [vmem:[%s0 + $0x40] sm:$0xff]
  %v26 = vld [vmem:[%s0 + $0x48] sm:$0xff]
  %v27 = vld [vmem:[%s0 + $0x50] sm:$0xff]
  %v28 = vld [vmem:[%s0 + $0x58] sm:$0xff]
  %v29 = vld [vmem:[%s0 + $0x60] sm:$0xff]
  %v30 = vld [vmem:[%s0 + $0x68] sm:$0xff]
  %v31 = vld [vmem:[%s0 + $0x70] sm:$0xff]
  %v32 = vld [vmem:[%s0 + $0x78] sm:$0xff]
  %v33 = vld [vmem:[%s0 + $0x80] sm:$0xff]
  %v34 = vld [vmem:[%s0 + $0x88] sm:$0xff]
  %v35 = vld [vmem:[%s0 + $0x90] sm:$0xff]
  %v36 = vld [vmem:[%s0 + $0x98] sm:$0xff]
  %v37 = vld [vmem:[%s0 + $0xa0] sm:$0xff]
  %v38 = vld [vmem:[%s0 + $0xa8] sm:$0xff]
  %v39 = vld [vmem:[%s0 + $0xb0] sm:$0xff]
  %v40 = vld [vmem:[%s0 + $0xb8] sm:$0xff]
  %v41 = vld [vmem:[%s0 + $0xc0] sm:$0xff]
  %v42 = vld [vmem:[%s0 + $0xc8] sm:$0xff]
  %v43 = vld [vmem:[%s0 + $0xd0] sm:$0xff]
  %v44 = vld [vmem:[%s0 + $0xd8] sm:$0xff]
  %v45 = vld [vmem:[%s0 + $0xe0] sm:$0xff]
  %v46 = vld [vmem:[%s0 + $0xe8] sm:$0xff]
  %v47 = vld [vmem:[%s0 + $0xf0] sm:$0xff]
  %v48 = vld [vmem:[%s0 + $0xf8] sm:$0xff]
  %v49 = vld [vmem:[%s1] sm:$0xff]
  %v50 = vld [vmem:[%s1 + $0x8] sm:$0xff]
  %v51 = vld [vmem:[%s1 + $0x10] sm:$0xff]
  %v52 = vld [vmem:[%s1 + $0x18] sm:$0xff]
  %v53 = vld [vmem:[%s1 + $0x20] sm:$0xff]
  %v54 = vld [vmem:[%s1 + $0x28] sm:$0xff]
  %v55 = vld [vmem:[%s1 + $0x30] sm:$0xff]
  %v56 = vld [vmem:[%s1 + $0x38] sm:$0xff]
  %v57 = vld [vmem:[%s1 + $0x40] sm:$0xff]
  %v58 = vld [vmem:[%s1 + $0x48] sm:$0xff]
  %v59 = vld [vmem:[%s1 + $0x50] sm:$0xff]
  %v60 = vld [vmem:[%s1 + $0x58] sm:$0xff]
  %v61 = vld [vmem:[%s1 + $0x60] sm:$0xff]
  %v62 = vld [vmem:[%s1 + $0x68] sm:$0xff]
  %v63 = vld [vmem:[%s1 + $0x70] sm:$0xff]
  %v64 = vld [vmem:[%s1 + $0x78] sm:$0xff]
  %v65 = vld [vmem:[%s1 + $0x80] sm:$0xff]
  %v66 = vld [vmem:[%s1 + $0x88] sm:$0xff]
  %v67 = vld [vmem:[%s1 + $0x90] sm:$0xff]
  %v68 = vld [vmem:[%s1 + $0x98] sm:$0xff]
  %v69 = vld [vmem:[%s1 + $0xa0] sm:$0xff]
  %v70 = vld [vmem:[%s1 + $0xa8] sm:$0xff]
  %v71 = vld [vmem:[%s1 + $0xb0] sm:$0xff]
  %v72 = vld [vmem:[%s1 + $0xb8] sm:$0xff]
  %v73 = vld [vmem:[%s1 + $0xc0] sm:$0xff]
  %v74 = vld [vmem:[%s1 + $0xc8] sm:$0xff]
  %v75 = vld [vmem:[%s1 + $0xd0] sm:$0xff]
  %v76 = vld [vmem:[%s1 + $0xd8] sm:$0xff]
  %v77 = vld [vmem:[%s1 + $0xe0] sm:$0xff]
  %v78 = vld [vmem:[%s1 + $0xe8] sm:$0xff]
  %v79 = vld [vmem:[%s1 + $0xf0] sm:$0xff]
  %v80 = vld [vmem:[%s1 + $0xf8] sm:$0xff]
  %v81 = vld [vmem:[%s1 + $0x100] sm:$0xff]
  %v82 = vld [vmem:[%s1 + $0x108] sm:$0xff]
  %v83 = vld [vmem:[%s1 + $0x110] sm:$0xff]
  %v84 = vld [vmem:[%s1 + $0x118] sm:$0xff]
  %v85 = vld [vmem:[%s1 + $0x120] sm:$0xff]
  %v86 = vld [vmem:[%s1 + $0x128] sm:$0xff]
  %v87 = vld [vmem:[%s1 + $0x130] sm:$0xff]
  %v88 = vld [vmem:[%s1 + $0x138] sm:$0xff]
  %v89 = vld [vmem:[%s1 + $0x140] sm:$0xff]
  %v90 = vld [vmem:[%s1 + $0x148] sm:$0xff]
  %v91 = vld [vmem:[%s1 + $0x150] sm:$0xff]
  %v92 = vld [vmem:[%s1 + $0x158] sm:$0xff]
  %v93 = vld [vmem:[%s1 + $0x160] sm:$0xff]
  %v94 = vld [vmem:[%s1 + $0x168] sm:$0xff]
  %v95 = vld [vmem:[%s1 + $0x170] sm:$0xff]
  %v96 = vld [vmem:[%s1 + $0x178] sm:$0xff]
  %v97 = vld [vmem:[%s1 + $0x180] sm:$0xff]
  %v98 = vld [vmem:[%s1 + $0x188] sm:$0xff]
  %v99 = vld [vmem:[%s1 + $0x190] sm:$0xff]
  %v100 = vld [vmem:[%s1 + $0x198] sm:$0xff]
  %v101 = vld [vmem:[%s1 + $0x1a0] sm:$0xff]
  %v102 = vld [vmem:[%s1 + $0x1a8] sm:$0xff]
  %v103 = vld [vmem:[%s1 + $0x1b0] sm:$0xff]
  %v104 = vld [vmem:[%s1 + $0x1b8] sm:$0xff]
  %v105 = vld [vmem:[%s1 + $0x1c0] sm:$0xff]
  %v106 = vld [vmem:[%s1 + $0x1c8] sm:$0xff]
  %v107 = vld [vmem:[%s1 + $0x1d0] sm:$0xff]
  %v108 = vld [vmem:[%s1 + $0x1d8] sm:$0xff]
  %v109 = vld [vmem:[%s1 + $0x1e0] sm:$0xff]
  %v110 = vld [vmem:[%s1 + $0x1e8] sm:$0xff]
  %v111 = vld [vmem:[%s1 + $0x1f0] sm:$0xff]
  %v112 = vld [vmem:[%s1 + $0x1f8] sm:$0xff]
  %113 = vmatprep.subr.mxu0 0.0
  %114 = vmatpush1.msra.mxu0 %v64
  %115 = vmatprep.subr.mxu0 0.0
  %116 = vmatpush1.msra.mxu0 %v63
  %117 = vmatprep.subr.mxu0 0.0
  %118 = vmatpush1.msra.mxu0 %v62
  %119 = vmatprep.subr.mxu0 0.0
  %120 = vmatpush1.msra.mxu0 %v61
  %121 = vmatprep.subr.mxu0 0.0
  %122 = vmatpush1.msra.mxu0 %v60
  %123 = vmatprep.subr.mxu0 0.0
  %124 = vmatpush1.msra.mxu0 %v59
  %125 = vmatprep.subr.mxu0 0.0
  %126 = vmatpush1.msra.mxu0 %v58
  %127 = vmatprep.subr.mxu0 0.0
  %128 = vmatpush1.msra.mxu0 %v57
  %129 = vmatprep.subr.mxu0 0.0
  %130 = vmatpush1.msra.mxu0 %v56
  %131 = vmatprep.subr.mxu0 0.0
  %132 = vmatpush1.msra.mxu0 %v55
  %133 = vmatprep.subr.mxu0 0.0
  %134 = vmatpush1.msra.mxu0 %v54
  %135 = vmatprep.subr.mxu0 0.0
  %136 = vmatpush1.msra.mxu0 %v53
  %137 = vmatprep.subr.mxu0 0.0
  %138 = vmatpush1.msra.mxu0 %v52
  %139 = vmatprep.subr.mxu0 0.0
  %140 = vmatpush1.msra.mxu0 %v51
  %141 = vmatprep.subr.mxu0 0.0
  %142 = vmatpush1.msra.mxu0 %v50
  %143 = vmatprep.subr.mxu0 0.0
  %144 = vmatpush1.msra.mxu0 %v49
  %145 = vmatprep.subr.mxu0 0.0
  %146 = vmatpush2.msra.mxu0 %v80
  %147 = vmatprep.subr.mxu0 0.0
  %148 = vmatpush2.msra.mxu0 %v79
  %149 = vmatprep.subr.mxu0 0.0
  %150 = vmatpush2.msra.mxu0 %v78
  %151 = vmatprep.subr.mxu0 0.0
  %152 = vmatpush2.msra.mxu0 %v77
  %153 = vmatprep.subr.mxu0 0.0
  %154 = vmatpush2.msra.mxu0 %v76
  %155 = vmatprep.subr.mxu0 0.0
  %156 = vmatpush2.msra.mxu0 %v75
  %157 = vmatprep.subr.mxu0 0.0
  %158 = vmatpush2.msra.mxu0 %v74
  %159 = vmatprep.subr.mxu0 0.0
  %160 = vmatpush2.msra.mxu0 %v73
  %161 = vmatprep.subr.mxu0 0.0
  %162 = vmatpush2.msra.mxu0 %v72
  %163 = vmatprep.subr.mxu0 0.0
  %164 = vmatpush2.msra.mxu0 %v71
  %165 = vmatprep.subr.mxu0 0.0
  %166 = vmatpush2.msra.mxu0 %v70
  %167 = vmatprep.subr.mxu0 0.0
  %168 = vmatpush2.msra.mxu0 %v69
  %169 = vmatprep.subr.mxu0 0.0
  %170 = vmatpush2.msra.mxu0 %v68
  %171 = vmatprep.subr.mxu0 0.0
  %172 = vmatpush2.msra.mxu0 %v67
  %173 = vmatprep.subr.mxu0 0.0
  %174 = vmatpush2.msra.mxu0 %v66
  %175 = vmatprep.subr.mxu0 0.0
  %176 = vmatpush2.msra.mxu0 %v65
  %177 = vmatprep.mubr.f32.mxu0 %v18
  %178 = vmatmul.mubr.f32.gmra.mxu0 %v17
  %v179 = vpop.f32.mrf.mxu0
  %v180 = vadd.f32 0.0, %v179
  %v181 = vpop.f32.mrf.mxu0
  %182 = vmatprep.mubr.f32.mxu0 %v22
  %183 = vmatmul.mubr.f32.gmra.mxu0 %v21
  %v184 = vpop.f32.mrf.mxu0
  %v185 = vadd.f32 0.0, %v184
  %v186 = vpop.f32.mrf.mxu0
  %187 = vmatprep.mubr.f32.mxu0 %v26
  %188 = vmatmul.mubr.f32.gmra.mxu0 %v25
  %v189 = vpop.f32.mrf.mxu0
  %v190 = vadd.f32 0.0, %v189
  %v191 = vpop.f32.mrf.mxu0
  %192 = vmatprep.mubr.f32.mxu0 %v30
  %193 = vmatmul.mubr.f32.gmra.mxu0 %v29
  %v194 = vpop.f32.mrf.mxu0
  %v195 = vadd.f32 0.0, %v194
  %v196 = vpop.f32.mrf.mxu0
  %197 = vmatprep.mubr.f32.mxu0 %v34
  %198 = vmatmul.mubr.f32.gmra.mxu0 %v33
  %v199 = vpop.f32.mrf.mxu0
  %v200 = vadd.f32 0.0, %v199
  %v201 = vpop.f32.mrf.mxu0
  %202 = vmatprep.mubr.f32.mxu0 %v38
  %203 = vmatmul.mubr.f32.gmra.mxu0 %v37
  %v204 = vpop.f32.mrf.mxu0
  %v205 = vadd.f32 0.0, %v204
  %v206 = vpop.f32.mrf.mxu0
  %207 = vmatprep.mubr.f32.mxu0 %v42
  %208 = vmatmul.mubr.f32.gmra.mxu0 %v41
  %v209 = vpop.f32.mrf.mxu0
  %v210 = vadd.f32 0.0, %v209
  %v211 = vpop.f32.mrf.mxu0
  %212 = vmatprep.mubr.f32.mxu0 %v46
  %213 = vmatmul.mubr.f32.gmra.mxu0 %v45
  %v214 = vpop.f32.mrf.mxu0
  %v215 = vadd.f32 0.0, %v214
  %v216 = vpop.f32.mrf.mxu0
  %217 = vdwg.mxu0
  %218 = vmatprep.subr.mxu0 0.0
  %219 = vmatpush1.msra.mxu0 %v96
  %220 = vmatprep.subr.mxu0 0.0
  %221 = vmatpush1.msra.mxu0 %v95
  %222 = vmatprep.subr.mxu0 0.0
  %223 = vmatpush1.msra.mxu0 %v94
  %224 = vmatprep.subr.mxu0 0.0
  %225 = vmatpush1.msra.mxu0 %v93
  %226 = vmatprep.subr.mxu0 0.0
  %227 = vmatpush1.msra.mxu0 %v92
  %228 = vmatprep.subr.mxu0 0.0
  %229 = vmatpush1.msra.mxu0 %v91
  %230 = vmatprep.subr.mxu0 0.0
  %231 = vmatpush1.msra.mxu0 %v90
  %232 = vmatprep.subr.mxu0 0.0
  %233 = vmatpush1.msra.mxu0 %v89
  %234 = vmatprep.subr.mxu0 0.0
  %235 = vmatpush1.msra.mxu0 %v88
  %236 = vmatprep.subr.mxu0 0.0
  %237 = vmatpush1.msra.mxu0 %v87
  %238 = vmatprep.subr.mxu0 0.0
  %239 = vmatpush1.msra.mxu0 %v86
  %240 = vmatprep.subr.mxu0 0.0
  %241 = vmatpush1.msra.mxu0 %v85
  %242 = vmatprep.subr.mxu0 0.0
  %243 = vmatpush1.msra.mxu0 %v84
  %244 = vmatprep.subr.mxu0 0.0
  %245 = vmatpush1.msra.mxu0 %v83
  %246 = vmatprep.subr.mxu0 0.0
  %247 = vmatpush1.msra.mxu0 %v82
  %248 = vmatprep.subr.mxu0 0.0
  %249 = vmatpush1.msra.mxu0 %v81
  %250 = vmatprep.subr.mxu0 0.0
  %251 = vmatpush2.msra.mxu0 %v112
  %252 = vmatprep.subr.mxu0 0.0
  %253 = vmatpush2.msra.mxu0 %v111
  %254 = vmatprep.subr.mxu0 0.0
  %255 = vmatpush2.msra.mxu0 %v110
  %256 = vmatprep.subr.mxu0 0.0
  %257 = vmatpush2.msra.mxu0 %v109
  %258 = vmatprep.subr.mxu0 0.0
  %259 = vmatpush2.msra.mxu0 %v108
  %260 = vmatprep.subr.mxu0 0.0
  %261 = vmatpush2.msra.mxu0 %v107
  %262 = vmatprep.subr.mxu0 0.0
  %263 = vmatpush2.msra.mxu0 %v106
  %264 = vmatprep.subr.mxu0 0.0
  %265 = vmatpush2.msra.mxu0 %v105
  %266 = vmatprep.subr.mxu0 0.0
  %267 = vmatpush2.msra.mxu0 %v104
  %268 = vmatprep.subr.mxu0 0.0
  %269 = vmatpush2.msra.mxu0 %v103
  %270 = vmatprep.subr.mxu0 0.0
  %271 = vmatpush2.msra.mxu0 %v102
  %272 = vmatprep.subr.mxu0 0.0
  %273 = vmatpush2.msra.mxu0 %v101
  %274 = vmatprep.subr.mxu0 0.0
  %275 = vmatpush2.msra.mxu0 %v100
  %276 = vmatprep.subr.mxu0 0.0
  %277 = vmatpush2.msra.mxu0 %v99
  %278 = vmatprep.subr.mxu0 0.0
  %279 = vmatpush2.msra.mxu0 %v98
  %280 = vmatprep.subr.mxu0 0.0
  %281 = vmatpush2.msra.mxu0 %v97
  %282 = vmatprep.mubr.f32.mxu0 %v20
  %283 = vmatmul.mubr.f32.gmra.mxu0 %v19
  %v284 = vpop.f32.mrf.mxu0
  %v285 = vadd.f32 %v180, %v284
  %v286 = vpop.f32.mrf.mxu0
  %287 = vmatprep.mubr.f32.mxu0 %v24
  %288 = vmatmul.mubr.f32.gmra.mxu0 %v23
  %v289 = vpop.f32.mrf.mxu0
  %v290 = vadd.f32 %v185, %v289
  %v291 = vpop.f32.mrf.mxu0
  %292 = vmatprep.mubr.f32.mxu0 %v28
  %293 = vmatmul.mubr.f32.gmra.mxu0 %v27
  %v294 = vpop.f32.mrf.mxu0
  %v295 = vadd.f32 %v190, %v294
  %v296 = vpop.f32.mrf.mxu0
  %297 = vmatprep.mubr.f32.mxu0 %v32
  %298 = vmatmul.mubr.f32.gmra.mxu0 %v31
  %v299 = vpop.f32.mrf.mxu0
  %v300 = vadd.f32 %v195, %v299
  %v301 = vpop.f32.mrf.mxu0
  %302 = vmatprep.mubr.f32.mxu0 %v36
  %303 = vmatmul.mubr.f32.gmra.mxu0 %v35
  %v304 = vpop.f32.mrf.mxu0
  %v305 = vadd.f32 %v200, %v304
  %v306 = vpop.f32.mrf.mxu0
  %307 = vmatprep.mubr.f32.mxu0 %v40
  %308 = vmatmul.mubr.f32.gmra.mxu0 %v39
  %v309 = vpop.f32.mrf.mxu0
  %v310 = vadd.f32 %v205, %v309
  %v311 = vpop.f32.mrf.mxu0
  %312 = vmatprep.mubr.f32.mxu0 %v44
  %313 = vmatmul.mubr.f32.gmra.mxu0 %v43
  %v314 = vpop.f32.mrf.mxu0
  %v315 = vadd.f32 %v210, %v314
  %v316 = vpop.f32.mrf.mxu0
  %317 = vmatprep.mubr.f32.mxu0 %v48
  %318 = vmatmul.mubr.f32.gmra.mxu0 %v47
  %v319 = vpop.f32.mrf.mxu0
  %v320 = vadd.f32 %v215, %v319
  %v321 = vpop.f32.mrf.mxu0
  %322 = vdwg.mxu0
  %323 = vadd.xlane.f32.xlu0 %v285
  %v324 = vpop.xlane.xlu0 %323
  %325 = vadd.xlane.f32.xlu0 %v290
  %v326 = vpop.xlane.xlu0 %325
  %327 = vadd.xlane.f32.xlu0 %v295
  %v328 = vpop.xlane.xlu0 %327
  %329 = vadd.xlane.f32.xlu0 %v300
  %v330 = vpop.xlane.xlu0 %329
  %331 = vadd.xlane.f32.xlu0 %v305
  %v332 = vpop.xlane.xlu0 %331
  %333 = vadd.xlane.f32.xlu0 %v310
  %v334 = vpop.xlane.xlu0 %333
  %335 = vadd.xlane.f32.xlu0 %v315
  %v336 = vpop.xlane.xlu0 %335
  %337 = vadd.xlane.f32.xlu0 %v320
  %v338 = vpop.xlane.xlu0 %337
  %v339 = vmul.f32 %v285, %v285
  %v340 = vmul.f32 %v290, %v290
  %v341 = vmul.f32 %v295, %v295
  %v342 = vmul.f32 %v300, %v300
  %v343 = vmul.f32 %v305, %v305
  %v344 = vmul.f32 %v310, %v310
  %v345 = vmul.f32 %v315, %v315
  %v346 = vmul.f32 %v320, %v320
  %347 = vadd.xlane.f32.xlu0 %v339
  %v348 = vpop.xlane.xlu0 %347
  %349 = vadd.xlane.f32.xlu0 %v340
  %v350 = vpop.xlane.xlu0 %349
  %351 = vadd.xlane.f32.xlu0 %v341
  %v352 = vpop.xlane.xlu0 %351
  %353 = vadd.xlane.f32.xlu0 %v342
  %v354 = vpop.xlane.xlu0 %353
  %355 = vadd.xlane.f32.xlu0 %v343
  %v356 = vpop.xlane.xlu0 %355
  %357 = vadd.xlane.f32.xlu0 %v344
  %v358 = vpop.xlane.xlu0 %357
  %359 = vadd.xlane.f32.xlu0 %v345
  %v360 = vpop.xlane.xlu0 %359
  %361 = vadd.xlane.f32.xlu0 %v346
  %v362 = vpop.xlane.xlu0 %361
  %v363 = vmul.f32 %v324, 0.02
  %v364 = vmul.f32 %v326, 0.02
  %v365 = vmul.f32 %v328, 0.02
  %v366 = vmul.f32 %v330, 0.02
  %v367 = vmul.f32 %v332, 0.02
  %v368 = vmul.f32 %v334, 0.02
  %v369 = vmul.f32 %v336, 0.02
  %v370 = vmul.f32 %v338, 0.02
  %v371 = vmul.f32 %v348, 0.02
  %v372 = vmul.f32 %v350, 0.02
  %v373 = vmul.f32 %v352, 0.02
  %v374 = vmul.f32 %v354, 0.02
  %v375 = vmul.f32 %v356, 0.02
  %v376 = vmul.f32 %v358, 0.02
  %v377 = vmul.f32 %v360, 0.02
  %v378 = vmul.f32 %v362, 0.02
  %v379 = vmul.f32 %v363, %v363
  %v380 = vmul.f32 %v364, %v364
  %v381 = vmul.f32 %v365, %v365
  %v382 = vmul.f32 %v366, %v366
  %v383 = vmul.f32 %v367, %v367
  %v384 = vmul.f32 %v368, %v368
  %v385 = vmul.f32 %v369, %v369
  %v386 = vmul.f32 %v370, %v370
  %v387 = vsub.f32 %v371, %v379
  %v388 = vsub.f32 %v372, %v380
  %v389 = vsub.f32 %v373, %v381
  %v390 = vsub.f32 %v374, %v382
  %v391 = vsub.f32 %v375, %v383
  %v392 = vsub.f32 %v376, %v384
  %v393 = vsub.f32 %v377, %v385
  %v394 = vsub.f32 %v378, %v386
  %v395 = vmax.f32 %v387, 0.0
  %v396 = vmax.f32 %v388, 0.0
  %v397 = vmax.f32 %v389, 0.0
  %v398 = vmax.f32 %v390, 0.0
  %v399 = vmax.f32 %v391, 0.0
  %v400 = vmax.f32 %v392, 0.0
  %v401 = vmax.f32 %v393, 0.0
  %v402 = vmax.f32 %v394, 0.0
  %v403 = vld [vmem:[%s2] sm:$0xff]
  %v404 = vld [vmem:[%s2 + $0x8] sm:$0xff]
  %v405 = vld [vmem:[%s2 + $0x10] sm:$0xff]
  %v406 = vld [vmem:[%s2 + $0x18] sm:$0xff]
  %v407 = vld [vmem:[%s2 + $0x20] sm:$0xff]
  %v408 = vld [vmem:[%s2 + $0x28] sm:$0xff]
  %v409 = vld [vmem:[%s2 + $0x30] sm:$0xff]
  %v410 = vld [vmem:[%s2 + $0x38] sm:$0xff]
  %v411 = vadd.f32 %v395, 1e-05
  %v412 = vadd.f32 %v396, 1e-05
  %v413 = vadd.f32 %v397, 1e-05
  %v414 = vadd.f32 %v398, 1e-05
  %v415 = vadd.f32 %v399, 1e-05
  %v416 = vadd.f32 %v400, 1e-05
  %v417 = vadd.f32 %v401, 1e-05
  %v418 = vadd.f32 %v402, 1e-05
  %v419 = vrsqrt.pop %v411
  %v420 = vrsqrt.pop %v412
  %v421 = vrsqrt.pop %v413
  %v422 = vrsqrt.pop %v414
  %v423 = vrsqrt.pop %v415
  %v424 = vrsqrt.pop %v416
  %v425 = vrsqrt.pop %v417
  %v426 = vrsqrt.pop %v418
  %v427 = vmul.f32 %v403, %v419
  %v428 = vmul.f32 %v404, %v420
  %v429 = vmul.f32 %v405, %v421
  %v430 = vmul.f32 %v406, %v422
  %v431 = vmul.f32 %v407, %v423
  %v432 = vmul.f32 %v408, %v424
  %v433 = vmul.f32 %v409, %v425
  %v434 = vmul.f32 %v410, %v426
  %v435 = vld [vmem:[%s3] sm:$0xff]
  %v436 = vld [vmem:[%s3 + $0x8] sm:$0xff]
  %v437 = vld [vmem:[%s3 + $0x10] sm:$0xff]
  %v438 = vld [vmem:[%s3 + $0x18] sm:$0xff]
  %v439 = vld [vmem:[%s3 + $0x20] sm:$0xff]
  %v440 = vld [vmem:[%s3 + $0x28] sm:$0xff]
  %v441 = vld [vmem:[%s3 + $0x30] sm:$0xff]
  %v442 = vld [vmem:[%s3 + $0x38] sm:$0xff]
  %v443 = vmul.f32 %v363, %v427
  %v444 = vmul.f32 %v364, %v428
  %v445 = vmul.f32 %v365, %v429
  %v446 = vmul.f32 %v366, %v430
  %v447 = vmul.f32 %v367, %v431
  %v448 = vmul.f32 %v368, %v432
  %v449 = vmul.f32 %v369, %v433
  %v450 = vmul.f32 %v370, %v434
  %v451 = vsub.f32 %v435, %v443
  %v452 = vsub.f32 %v436, %v444
  %v453 = vsub.f32 %v437, %v445
  %v454 = vsub.f32 %v438, %v446
  %v455 = vsub.f32 %v439, %v447
  %v456 = vsub.f32 %v440, %v448
  %v457 = vsub.f32 %v441, %v449
  %v458 = vsub.f32 %v442, %v450
  %460 = vset.pattern.permute.xlu0 0
  %461 = vperm.xlu0 %460, %v427
  %v462 = vpop.permute.xlu0 %461
  %465 = vset.pattern.permute.xlu0 0
  %466 = vperm.xlu0 %465, %v428
  %v467 = vpop.permute.xlu0 %466
  %470 = vset.pattern.permute.xlu0 0
  %471 = vperm.xlu0 %470, %v429
  %v472 = vpop.permute.xlu0 %471
  %475 = vset.pattern.permute.xlu0 0
  %476 = vperm.xlu0 %475, %v430
  %v477 = vpop.permute.xlu0 %476
  %480 = vset.pattern.permute.xlu0 0
  %481 = vperm.xlu0 %480, %v431
  %v482 = vpop.permute.xlu0 %481
  %485 = vset.pattern.permute.xlu0 0
  %486 = vperm.xlu0 %485, %v432
  %v487 = vpop.permute.xlu0 %486
  %490 = vset.pattern.permute.xlu0 0
  %491 = vperm.xlu0 %490, %v433
  %v492 = vpop.permute.xlu0 %491
  %495 = vset.pattern.permute.xlu0 0
  %496 = vperm.xlu0 %495, %v434
  %v497 = vpop.permute.xlu0 %496
  %v499 = vmul.f32 %v285, %v462
  %v500 = vmul.f32 %v290, %v467
  %v501 = vmul.f32 %v295, %v472
  %v502 = vmul.f32 %v300, %v477
  %v503 = vmul.f32 %v305, %v482
  %v504 = vmul.f32 %v310, %v487
  %v505 = vmul.f32 %v315, %v492
  %v506 = vmul.f32 %v320, %v497
  %508 = vset.pattern.permute.xlu0 0
  %509 = vperm.xlu0 %508, %v451
  %v510 = vpop.permute.xlu0 %509
  %513 = vset.pattern.permute.xlu0 0
  %514 = vperm.xlu0 %513, %v452
  %v515 = vpop.permute.xlu0 %514
  %518 = vset.pattern.permute.xlu0 0
  %519 = vperm.xlu0 %518, %v453
  %v520 = vpop.permute.xlu0 %519
  %523 = vset.pattern.permute.xlu0 0
  %524 = vperm.xlu0 %523, %v454
  %v525 = vpop.permute.xlu0 %524
  %528 = vset.pattern.permute.xlu0 0
  %529 = vperm.xlu0 %528, %v455
  %v530 = vpop.permute.xlu0 %529
  %533 = vset.pattern.permute.xlu0 0
  %534 = vperm.xlu0 %533, %v456
  %v535 = vpop.permute.xlu0 %534
  %538 = vset.pattern.permute.xlu0 0
  %539 = vperm.xlu0 %538, %v457
  %v540 = vpop.permute.xlu0 %539
  %543 = vset.pattern.permute.xlu0 0
  %544 = vperm.xlu0 %543, %v458
  %v545 = vpop.permute.xlu0 %544
  %v547 = vadd.f32 %v499, %v510
  %v548 = vadd.f32 %v500, %v515
  %v549 = vadd.f32 %v501, %v520
  %v550 = vadd.f32 %v502, %v525
  %v551 = vadd.f32 %v503, %v530
  %v552 = vadd.f32 %v504, %v535
  %v553 = vadd.f32 %v505, %v540
  %v554 = vadd.f32 %v506, %v545
  %vm555 = vcmp.ge.f32.partialorder %v547, 0.0
  %vm556 = vcmp.ge.f32.partialorder %v548, 0.0
  %vm557 = vcmp.ge.f32.partialorder %v549, 0.0
  %vm558 = vcmp.ge.f32.partialorder %v550, 0.0
  %vm559 = vcmp.ge.f32.partialorder %v551, 0.0
  %vm560 = vcmp.ge.f32.partialorder %v552, 0.0
  %vm561 = vcmp.ge.f32.partialorder %v553, 0.0
  %vm562 = vcmp.ge.f32.partialorder %v554, 0.0
  %v563 = vmul.f32 %v547, 0.2
  %v564 = vmul.f32 %v548, 0.2
  %v565 = vmul.f32 %v549, 0.2
  %v566 = vmul.f32 %v550, 0.2
  %v567 = vmul.f32 %v551, 0.2
  %v568 = vmul.f32 %v552, 0.2
  %v569 = vmul.f32 %v553, 0.2
  %v570 = vmul.f32 %v554, 0.2
  %v571 = vsel %vm555, %v547, %v563
  %v572 = vsel %vm556, %v548, %v564
  %v573 = vsel %vm557, %v549, %v565
  %v574 = vsel %vm558, %v550, %v566
  %v575 = vsel %vm559, %v551, %v567
  %v576 = vsel %vm560, %v552, %v568
  %v577 = vsel %vm561, %v553, %v569
  %v578 = vsel %vm562, %v554, %v570
  %579 = vst [vmem:[%s4] sm:$0xff] %v571
  %580 = vst [vmem:[%s4 + $0x8] sm:$0xff] %v572
  %581 = vst [vmem:[%s4 + $0x10] sm:$0xff] %v573
  %582 = vst [vmem:[%s4 + $0x18] sm:$0xff] %v574
  %583 = vst [vmem:[%s4 + $0x20] sm:$0xff] %v575
  %584 = vst [vmem:[%s4 + $0x28] sm:$0xff] %v576
  %585 = vst [vmem:[%s4 + $0x30] sm:$0xff] %v577
  %586 = vst [vmem:[%s4 + $0x38] sm:$0xff] %v578
  // Predicated region
  $region18: #{multi_scale_forward.23} parent=0 // pred_check
    _
  $region19: #{multi_scale_forward.23} parent=0 // pred_check_branch
    %588 = sbr.rel (0) target = $region21
  $region20: #{multi_scale_forward.23} parent=0 // pred_region
    _
  $region21: #{multi_scale_forward.23} parent=0 // pred_fallthru
    _
  // Predicated region
  $region22: #{multi_scale_forward.23} parent=0 // pred_check
    _
  $region23: #{multi_scale_forward.23} parent=0 // pred_check_branch
    %590 = sbr.rel (0) target = $region25
  $region24: #{multi_scale_forward.23} parent=0 // pred_region
    _
  $region25: #{multi_scale_forward.23} parent=0 // pred_fallthru
    _

// kernel: multi_scale_forward.15
$region0: #{multi_scale_forward.15}
  #allocation0 [shape = 'u32[]', space=smem, size = 0x4, offset = 0x4, fixed_abs, tag = 'smem constant byte address 0x4 - core index']
  #allocation1 [shape = 'u32[144,128]{1,0:T(1,128)}', space=vmem, size = 0x12000, scoped, tag = 'internal scratch']
  %s0 = inlined_call_operand.vmem [shape: f32[8,48], index: 0, kind: input, shape index: {}]
  %s1 = inlined_call_operand.vmem [shape: f32[48,4608], index: 1, kind: input, shape index: {}]
  %s2 = inlined_call_operand.vmem [shape: f32[8,1], index: 2, kind: input, shape index: {}]
  %s3 = inlined_call_operand.vmem [shape: f32[8,1], index: 3, kind: input, shape index: {}]
  %s4 = inlined_call_operand.vmem [shape: f32[8,4608], index: 4, kind: output, shape index: {}]
  %s5 = sld [smem:[#allocation0]]
  $region26: #{multi_scale_forward.15} parent=0
    _
  %s7 = ssub.s32 1, %s5
  %s8 = scalar_select 0, %s7, %s5
  // Predicated region
  $region2: #{multi_scale_forward.15} parent=0 // pred_check
    _
  $region3: #{multi_scale_forward.15} parent=0 // pred_check_branch
    %10 = sbr.rel (0) target = $region5
  $region4: #{multi_scale_forward.15} parent=0 // pred_region
    _
  $region5: #{multi_scale_forward.15} parent=0 // pred_fallthru
    _
  // Predicated region
  $region6: #{multi_scale_forward.15} parent=0 // pred_check
    _
  $region7: #{multi_scale_forward.15} parent=0 // pred_check_branch
    %12 = sbr.rel (0) target = $region9
  $region8: #{multi_scale_forward.15} parent=0 // pred_region
    _
  $region9: #{multi_scale_forward.15} parent=0 // pred_fallthru
    _
  // Predicated region
  $region10: #{multi_scale_forward.15} parent=0 // pred_check
    _
  $region11: #{multi_scale_forward.15} parent=0 // pred_check_branch
    %14 = sbr.rel (0) target = $region13
  $region12: #{multi_scale_forward.15} parent=0 // pred_region
    _
  $region13: #{multi_scale_forward.15} parent=0 // pred_fallthru
    _
  // Predicated region
  $region14: #{multi_scale_forward.15} parent=0 // pred_check
    _
  $region15: #{multi_scale_forward.15} parent=0 // pred_check_branch
    %16 = sbr.rel (0) target = $region17
  $region16: #{multi_scale_forward.15} parent=0 // pred_region
    _
  $region17: #{multi_scale_forward.15} parent=0 // pred_fallthru
    _
  %v17 = vld [vmem:[%s0] sm:$0xff]
  %v18 = vld [vmem:[%s1] sm:$0xff]
  %v19 = vld [vmem:[%s1 + $0x8] sm:$0xff]
  %v20 = vld [vmem:[%s1 + $0x10] sm:$0xff]
  %v21 = vld [vmem:[%s1 + $0x18] sm:$0xff]
  %v22 = vld [vmem:[%s1 + $0x20] sm:$0xff]
  %v23 = vld [vmem:[%s1 + $0x28] sm:$0xff]
  %v24 = vld [vmem:[%s1 + $0x30] sm:$0xff]
  %v25 = vld [vmem:[%s1 + $0x38] sm:$0xff]
  %v26 = vld [vmem:[%s1 + $0x40] sm:$0xff]
  %v27 = vld [vmem:[%s1 + $0x48] sm:$0xff]
  %v28 = vld [vmem:[%s1 + $0x50] sm:$0xff]
  %v29 = vld [vmem:[%s1 + $0x58] sm:$0xff]
  %v30 = vld [vmem:[%s1 + $0x60] sm:$0xff]
  %v31 = vld [vmem:[%s1 + $0x68] sm:$0xff]
  %v32 = vld [vmem:[%s1 + $0x70] sm:$0xff]
  %v33 = vld [vmem:[%s1 + $0x78] sm:$0xff]
  %v34 = vld [vmem:[%s1 + $0x80] sm:$0xff]
  %v35 = vld [vmem:[%s1 + $0x88] sm:$0xff]
  %v36 = vld [vmem:[%s1 + $0x90] sm:$0xff]
  %v37 = vld [vmem:[%s1 + $0x98] sm:$0xff]
  %v38 = vld [vmem:[%s1 + $0xa0] sm:$0xff]
  %v39 = vld [vmem:[%s1 + $0xa8] sm:$0xff]
  %v40 = vld [vmem:[%s1 + $0xb0] sm:$0xff]
  %v41 = vld [vmem:[%s1 + $0xb8] sm:$0xff]
  %v42 = vld [vmem:[%s1 + $0xc0] sm:$0xff]
  %v43 = vld [vmem:[%s1 + $0xc8] sm:$0xff]
  %v44 = vld [vmem:[%s1 + $0xd0] sm:$0xff]
  %v45 = vld [vmem:[%s1 + $0xd8] sm:$0xff]
  %v46 = vld [vmem:[%s1 + $0xe0] sm:$0xff]
  %v47 = vld [vmem:[%s1 + $0xe8] sm:$0xff]
  %v48 = vld [vmem:[%s1 + $0xf0] sm:$0xff]
  %v49 = vld [vmem:[%s1 + $0xf8] sm:$0xff]
  %v50 = vld [vmem:[%s1 + $0x100] sm:$0xff]
  %v51 = vld [vmem:[%s1 + $0x108] sm:$0xff]
  %v52 = vld [vmem:[%s1 + $0x110] sm:$0xff]
  %v53 = vld [vmem:[%s1 + $0x118] sm:$0xff]
  %v54 = vld [vmem:[%s1 + $0x120] sm:$0xff]
  %v55 = vld [vmem:[%s1 + $0x128] sm:$0xff]
  %v56 = vld [vmem:[%s1 + $0x130] sm:$0xff]
  %v57 = vld [vmem:[%s1 + $0x138] sm:$0xff]
  %v58 = vld [vmem:[%s1 + $0x140] sm:$0xff]
  %v59 = vld [vmem:[%s1 + $0x148] sm:$0xff]
  %v60 = vld [vmem:[%s1 + $0x150] sm:$0xff]
  %v61 = vld [vmem:[%s1 + $0x158] sm:$0xff]
  %v62 = vld [vmem:[%s1 + $0x160] sm:$0xff]
  %v63 = vld [vmem:[%s1 + $0x168] sm:$0xff]
  %v64 = vld [vmem:[%s1 + $0x170] sm:$0xff]
  %v65 = vld [vmem:[%s1 + $0x178] sm:$0xff]
  %v66 = vld [vmem:[%s1 + $0x180] sm:$0xff]
  %v67 = vld [vmem:[%s1 + $0x188] sm:$0xff]
  %v68 = vld [vmem:[%s1 + $0x190] sm:$0xff]
  %v69 = vld [vmem:[%s1 + $0x198] sm:$0xff]
  %v70 = vld [vmem:[%s1 + $0x1a0] sm:$0xff]
  %v71 = vld [vmem:[%s1 + $0x1a8] sm:$0xff]
  %v72 = vld [vmem:[%s1 + $0x1b0] sm:$0xff]
  %v73 = vld [vmem:[%s1 + $0x1b8] sm:$0xff]
  %v74 = vld [vmem:[%s1 + $0x1c0] sm:$0xff]
  %v75 = vld [vmem:[%s1 + $0x1c8] sm:$0xff]
  %v76 = vld [vmem:[%s1 + $0x1d0] sm:$0xff]
  %v77 = vld [vmem:[%s1 + $0x1d8] sm:$0xff]
  %v78 = vld [vmem:[%s1 + $0x1e0] sm:$0xff]
  %v79 = vld [vmem:[%s1 + $0x1e8] sm:$0xff]
  %v80 = vld [vmem:[%s1 + $0x1f0] sm:$0xff]
  %v81 = vld [vmem:[%s1 + $0x1f8] sm:$0xff]
  %v82 = vld [vmem:[%s1 + $0x200] sm:$0xff]
  %v83 = vld [vmem:[%s1 + $0x208] sm:$0xff]
  %v84 = vld [vmem:[%s1 + $0x210] sm:$0xff]
  %v85 = vld [vmem:[%s1 + $0x218] sm:$0xff]
  %v86 = vld [vmem:[%s1 + $0x220] sm:$0xff]
  %v87 = vld [vmem:[%s1 + $0x228] sm:$0xff]
  %v88 = vld [vmem:[%s1 + $0x230] sm:$0xff]
  %v89 = vld [vmem:[%s1 + $0x238] sm:$0xff]
  %v90 = vld [vmem:[%s1 + $0x240] sm:$0xff]
  %v91 = vld [vmem:[%s1 + $0x248] sm:$0xff]
  %v92 = vld [vmem:[%s1 + $0x250] sm:$0xff]
  %v93 = vld [vmem:[%s1 + $0x258] sm:$0xff]
  %v94 = vld [vmem:[%s1 + $0x260] sm:$0xff]
  %v95 = vld [vmem:[%s1 + $0x268] sm:$0xff]
  %v96 = vld [vmem:[%s1 + $0x270] sm:$0xff]
  %v97 = vld [vmem:[%s1 + $0x278] sm:$0xff]
  %v98 = vld [vmem:[%s1 + $0x280] sm:$0xff]
  %v99 = vld [vmem:[%s1 + $0x288] sm:$0xff]
  %v100 = vld [vmem:[%s1 + $0x290] sm:$0xff]
  %v101 = vld [vmem:[%s1 + $0x298] sm:$0xff]
  %v102 = vld [vmem:[%s1 + $0x2a0] sm:$0xff]
  %v103 = vld [vmem:[%s1 + $0x2a8] sm:$0xff]
  %v104 = vld [vmem:[%s1 + $0x2b0] sm:$0xff]
  %v105 = vld [vmem:[%s1 + $0x2b8] sm:$0xff]
  %v106 = vld [vmem:[%s1 + $0x2c0] sm:$0xff]
  %v107 = vld [vmem:[%s1 + $0x2c8] sm:$0xff]
  %v108 = vld [vmem:[%s1 + $0x2d0] sm:$0xff]
  %v109 = vld [vmem:[%s1 + $0x2d8] sm:$0xff]
  %v110 = vld [vmem:[%s1 + $0x2e0] sm:$0xff]
  %v111 = vld [vmem:[%s1 + $0x2e8] sm:$0xff]
  %v112 = vld [vmem:[%s1 + $0x2f0] sm:$0xff]
  %v113 = vld [vmem:[%s1 + $0x2f8] sm:$0xff]
  %v114 = vld [vmem:[%s1 + $0x300] sm:$0xff]
  %v115 = vld [vmem:[%s1 + $0x308] sm:$0xff]
  %v116 = vld [vmem:[%s1 + $0x310] sm:$0xff]
  %v117 = vld [vmem:[%s1 + $0x318] sm:$0xff]
  %v118 = vld [vmem:[%s1 + $0x320] sm:$0xff]
  %v119 = vld [vmem:[%s1 + $0x328] sm:$0xff]
  %v120 = vld [vmem:[%s1 + $0x330] sm:$0xff]
  %v121 = vld [vmem:[%s1 + $0x338] sm:$0xff]
  %v122 = vld [vmem:[%s1 + $0x340] sm:$0xff]
  %v123 = vld [vmem:[%s1 + $0x348] sm:$0xff]
  %v124 = vld [vmem:[%s1 + $0x350] sm:$0xff]
  %v125 = vld [vmem:[%s1 + $0x358] sm:$0xff]
  %v126 = vld [vmem:[%s1 + $0x360] sm:$0xff]
  %v127 = vld [vmem:[%s1 + $0x368] sm:$0xff]
  %v128 = vld [vmem:[%s1 + $0x370] sm:$0xff]
  %v129 = vld [vmem:[%s1 + $0x378] sm:$0xff]
  %v130 = vld [vmem:[%s1 + $0x380] sm:$0xff]
  %v131 = vld [vmem:[%s1 + $0x388] sm:$0xff]
  %v132 = vld [vmem:[%s1 + $0x390] sm:$0xff]
  %v133 = vld [vmem:[%s1 + $0x398] sm:$0xff]
  %v134 = vld [vmem:[%s1 + $0x3a0] sm:$0xff]
  %v135 = vld [vmem:[%s1 + $0x3a8] sm:$0xff]
  %v136 = vld [vmem:[%s1 + $0x3b0] sm:$0xff]
  %v137 = vld [vmem:[%s1 + $0x3b8] sm:$0xff]
  %v138 = vld [vmem:[%s1 + $0x3c0] sm:$0xff]
  %v139 = vld [vmem:[%s1 + $0x3c8] sm:$0xff]
  %v140 = vld [vmem:[%s1 + $0x3d0] sm:$0xff]
  %v141 = vld [vmem:[%s1 + $0x3d8] sm:$0xff]
  %v142 = vld [vmem:[%s1 + $0x3e0] sm:$0xff]
  %v143 = vld [vmem:[%s1 + $0x3e8] sm:$0xff]
  %v144 = vld [vmem:[%s1 + $0x3f0] sm:$0xff]
  %v145 = vld [vmem:[%s1 + $0x3f8] sm:$0xff]
  %v146 = vld [vmem:[%s1 + $0x400] sm:$0xff]
  %v147 = vld [vmem:[%s1 + $0x408] sm:$0xff]
  %v148 = vld [vmem:[%s1 + $0x410] sm:$0xff]
  %v149 = vld [vmem:[%s1 + $0x418] sm:$0xff]
  %v150 = vld [vmem:[%s1 + $0x420] sm:$0xff]
  %v151 = vld [vmem:[%s1 + $0x428] sm:$0xff]
  %v152 = vld [vmem:[%s1 + $0x430] sm:$0xff]
  %v153 = vld [vmem:[%s1 + $0x438] sm:$0xff]
  %v154 = vld [vmem:[%s1 + $0x440] sm:$0xff]
  %v155 = vld [vmem:[%s1 + $0x448] sm:$0xff]
  %v156 = vld [vmem:[%s1 + $0x450] sm:$0xff]
  %v157 = vld [vmem:[%s1 + $0x458] sm:$0xff]
  %v158 = vld [vmem:[%s1 + $0x460] sm:$0xff]
  %v159 = vld [vmem:[%s1 + $0x468] sm:$0xff]
  %v160 = vld [vmem:[%s1 + $0x470] sm:$0xff]
  %v161 = vld [vmem:[%s1 + $0x478] sm:$0xff]
  %v162 = vld [vmem:[%s1 + $0x480] sm:$0xff]
  %v163 = vld [vmem:[%s1 + $0x488] sm:$0xff]
  %v164 = vld [vmem:[%s1 + $0x490] sm:$0xff]
  %v165 = vld [vmem:[%s1 + $0x498] sm:$0xff]
  %v166 = vld [vmem:[%s1 + $0x4a0] sm:$0xff]
  %v167 = vld [vmem:[%s1 + $0x4a8] sm:$0xff]
  %v168 = vld [vmem:[%s1 + $0x4b0] sm:$0xff]
  %v169 = vld [vmem:[%s1 + $0x4b8] sm:$0xff]
  %v170 = vld [vmem:[%s1 + $0x4c0] sm:$0xff]
  %v171 = vld [vmem:[%s1 + $0x4c8] sm:$0xff]
  %v172 = vld [vmem:[%s1 + $0x4d0] sm:$0xff]
  %v173 = vld [vmem:[%s1 + $0x4d8] sm:$0xff]
  %v174 = vld [vmem:[%s1 + $0x4e0] sm:$0xff]
  %v175 = vld [vmem:[%s1 + $0x4e8] sm:$0xff]
  %v176 = vld [vmem:[%s1 + $0x4f0] sm:$0xff]
  %v177 = vld [vmem:[%s1 + $0x4f8] sm:$0xff]
  %v178 = vld [vmem:[%s1 + $0x500] sm:$0xff]
  %v179 = vld [vmem:[%s1 + $0x508] sm:$0xff]
  %v180 = vld [vmem:[%s1 + $0x510] sm:$0xff]
  %v181 = vld [vmem:[%s1 + $0x518] sm:$0xff]
  %v182 = vld [vmem:[%s1 + $0x520] sm:$0xff]
  %v183 = vld [vmem:[%s1 + $0x528] sm:$0xff]
  %v184 = vld [vmem:[%s1 + $0x530] sm:$0xff]
  %v185 = vld [vmem:[%s1 + $0x538] sm:$0xff]
  %v186 = vld [vmem:[%s1 + $0x540] sm:$0xff]
  %v187 = vld [vmem:[%s1 + $0x548] sm:$0xff]
  %v188 = vld [vmem:[%s1 + $0x550] sm:$0xff]
  %v189 = vld [vmem:[%s1 + $0x558] sm:$0xff]
  %v190 = vld [vmem:[%s1 + $0x560] sm:$0xff]
  %v191 = vld [vmem:[%s1 + $0x568] sm:$0xff]
  %v192 = vld [vmem:[%s1 + $0x570] sm:$0xff]
  %v193 = vld [vmem:[%s1 + $0x578] sm:$0xff]
  %v194 = vld [vmem:[%s1 + $0x580] sm:$0xff]
  %v195 = vld [vmem:[%s1 + $0x588] sm:$0xff]
  %v196 = vld [vmem:[%s1 + $0x590] sm:$0xff]
  %v197 = vld [vmem:[%s1 + $0x598] sm:$0xff]
  %v198 = vld [vmem:[%s1 + $0x5a0] sm:$0xff]
  %v199 = vld [vmem:[%s1 + $0x5a8] sm:$0xff]
  %v200 = vld [vmem:[%s1 + $0x5b0] sm:$0xff]
  %v201 = vld [vmem:[%s1 + $0x5b8] sm:$0xff]
  %v202 = vld [vmem:[%s1 + $0x5c0] sm:$0xff]
  %v203 = vld [vmem:[%s1 + $0x5c8] sm:$0xff]
  %v204 = vld [vmem:[%s1 + $0x5d0] sm:$0xff]
  %v205 = vld [vmem:[%s1 + $0x5d8] sm:$0xff]
  %v206 = vld [vmem:[%s1 + $0x5e0] sm:$0xff]
  %v207 = vld [vmem:[%s1 + $0x5e8] sm:$0xff]
  %v208 = vld [vmem:[%s1 + $0x5f0] sm:$0xff]
  %v209 = vld [vmem:[%s1 + $0x5f8] sm:$0xff]
  %v210 = vld [vmem:[%s1 + $0x600] sm:$0xff]
  %v211 = vld [vmem:[%s1 + $0x608] sm:$0xff]
  %v212 = vld [vmem:[%s1 + $0x610] sm:$0xff]
  %v213 = vld [vmem:[%s1 + $0x618] sm:$0xff]
  %v214 = vld [vmem:[%s1 + $0x620] sm:$0xff]
  %v215 = vld [vmem:[%s1 + $0x628] sm:$0xff]
  %v216 = vld [vmem:[%s1 + $0x630] sm:$0xff]
  %v217 = vld [vmem:[%s1 + $0x638] sm:$0xff]
  %v218 = vld [vmem:[%s1 + $0x640] sm:$0xff]
  %v219 = vld [vmem:[%s1 + $0x648] sm:$0xff]
  %v220 = vld [vmem:[%s1 + $0x650] sm:$0xff]
  %v221 = vld [vmem:[%s1 + $0x658] sm:$0xff]
  %v222 = vld [vmem:[%s1 + $0x660] sm:$0xff]
  %v223 = vld [vmem:[%s1 + $0x668] sm:$0xff]
  %v224 = vld [vmem:[%s1 + $0x670] sm:$0xff]
  %v225 = vld [vmem:[%s1 + $0x678] sm:$0xff]
  %v226 = vld [vmem:[%s1 + $0x680] sm:$0xff]
  %v227 = vld [vmem:[%s1 + $0x688] sm:$0xff]
  %v228 = vld [vmem:[%s1 + $0x690] sm:$0xff]
  %v229 = vld [vmem:[%s1 + $0x698] sm:$0xff]
  %v230 = vld [vmem:[%s1 + $0x6a0] sm:$0xff]
  %v231 = vld [vmem:[%s1 + $0x6a8] sm:$0xff]
  %v232 = vld [vmem:[%s1 + $0x6b0] sm:$0xff]
  %v233 = vld [vmem:[%s1 + $0x6b8] sm:$0xff]
  %vm234 = vcmask 392192
  %v236 = vsel %vm234, %v17, 0
  %238 = vmatprep.subr.mxu0 0.0
  %239 = vmatpush1.msra.mxu0 0.0
  %240 = vmatprep.subr.mxu0 0.0
  %241 = vmatpush1.msra.mxu0 0.0
  %242 = vmatprep.subr.mxu0 0.0
  %243 = vmatpush1.msra.mxu0 0.0
  %244 = vmatprep.subr.mxu0 0.0
  %245 = vmatpush1.msra.mxu0 0.0
  %246 = vmatprep.subr.mxu0 0.0
  %247 = vmatpush1.msra.mxu0 0.0
  %248 = vmatprep.subr.mxu0 0.0
  %249 = vmatpush1.msra.mxu0 0.0
  %250 = vmatprep.subr.mxu0 0.0
  %251 = vmatpush1.msra.mxu0 0.0
  %252 = vmatprep.subr.mxu0 0.0
  %253 = vmatpush1.msra.mxu0 0.0
  %254 = vmatprep.subr.mxu0 0.0
  %255 = vmatpush1.msra.mxu0 0.0
  %256 = vmatprep.subr.mxu0 0.0
  %257 = vmatpush1.msra.mxu0 0.0
  %258 = vmatprep.subr.mxu0 %v199
  %259 = vmatpush1.msra.mxu0 %v198
  %260 = vmatprep.subr.mxu0 %v163
  %261 = vmatpush1.msra.mxu0 %v162
  %262 = vmatprep.subr.mxu0 %v127
  %263 = vmatpush1.msra.mxu0 %v126
  %264 = vmatprep.subr.mxu0 %v91
  %265 = vmatpush1.msra.mxu0 %v90
  %266 = vmatprep.subr.mxu0 %v55
  %267 = vmatpush1.msra.mxu0 %v54
  %268 = vmatprep.subr.mxu0 %v19
  %269 = vmatpush1.msra.mxu0 %v18
  %270 = vmatprep.subr.mxu0 0.0
  %271 = vmatpush2.msra.mxu0 0.0
  %272 = vmatprep.subr.mxu0 0.0
  %273 = vmatpush2.msra.mxu0 0.0
  %274 = vmatprep.subr.mxu0 0.0
  %275 = vmatpush2.msra.mxu0 0.0
  %276 = vmatprep.subr.mxu0 0.0
  %277 = vmatpush2.msra.mxu0 0.0
  %278 = vmatprep.subr.mxu0 0.0
  %279 = vmatpush2.msra.mxu0 0.0
  %280 = vmatprep.subr.mxu0 0.0
  %281 = vmatpush2.msra.mxu0 0.0
  %282 = vmatprep.subr.mxu0 0.0
  %283 = vmatpush2.msra.mxu0 0.0
  %284 = vmatprep.subr.mxu0 0.0
  %285 = vmatpush2.msra.mxu0 0.0
  %286 = vmatprep.subr.mxu0 0.0
  %287 = vmatpush2.msra.mxu0 0.0
  %288 = vmatprep.subr.mxu0 0.0
  %289 = vmatpush2.msra.mxu0 0.0
  %290 = vmatprep.subr.mxu0 0.0
  %291 = vmatpush2.msra.mxu0 0.0
  %292 = vmatprep.subr.mxu0 0.0
  %293 = vmatpush2.msra.mxu0 0.0
  %294 = vmatprep.subr.mxu0 0.0
  %295 = vmatpush2.msra.mxu0 0.0
  %296 = vmatprep.subr.mxu0 0.0
  %297 = vmatpush2.msra.mxu0 0.0
  %298 = vmatprep.subr.mxu0 0.0
  %299 = vmatpush2.msra.mxu0 0.0
  %300 = vmatprep.subr.mxu0 0.0
  %301 = vmatpush2.msra.mxu0 0.0
  %302 = vmatprep.mubr.f32.mxu0 0.0
  %303 = vmatmul.mubr.f32.gmra.mxu0 %v236
  %v304 = vpop.f32.mrf.mxu0
  %v305 = vadd.f32 0.0, %v304
  %v306 = vpop.f32.mrf.mxu0
  %v307 = vadd.f32 0.0, %v306
  %308 = vdwg.mxu0
  %309 = vmatprep.subr.mxu0 0.0
  %310 = vmatpush1.msra.mxu0 0.0
  %311 = vmatprep.subr.mxu0 0.0
  %312 = vmatpush1.msra.mxu0 0.0
  %313 = vmatprep.subr.mxu0 0.0
  %314 = vmatpush1.msra.mxu0 0.0
  %315 = vmatprep.subr.mxu0 0.0
  %316 = vmatpush1.msra.mxu0 0.0
  %317 = vmatprep.subr.mxu0 0.0
  %318 = vmatpush1.msra.mxu0 0.0
  %319 = vmatprep.subr.mxu0 0.0
  %320 = vmatpush1.msra.mxu0 0.0
  %321 = vmatprep.subr.mxu0 0.0
  %322 = vmatpush1.msra.mxu0 0.0
  %323 = vmatprep.subr.mxu0 0.0
  %324 = vmatpush1.msra.mxu0 0.0
  %325 = vmatprep.subr.mxu0 0.0
  %326 = vmatpush1.msra.mxu0 0.0
  %327 = vmatprep.subr.mxu0 0.0
  %328 = vmatpush1.msra.mxu0 0.0
  %329 = vmatprep.subr.mxu0 %v201
  %330 = vmatpush1.msra.mxu0 %v200
  %331 = vmatprep.subr.mxu0 %v165
  %332 = vmatpush1.msra.mxu0 %v164
  %333 = vmatprep.subr.mxu0 %v129
  %334 = vmatpush1.msra.mxu0 %v128
  %335 = vmatprep.subr.mxu0 %v93
  %336 = vmatpush1.msra.mxu0 %v92
  %337 = vmatprep.subr.mxu0 %v57
  %338 = vmatpush1.msra.mxu0 %v56
  %339 = vmatprep.subr.mxu0 %v21
  %340 = vmatpush1.msra.mxu0 %v20
  %341 = vmatprep.subr.mxu0 0.0
  %342 = vmatpush2.msra.mxu0 0.0
  %343 = vmatprep.subr.mxu0 0.0
  %344 = vmatpush2.msra.mxu0 0.0
  %345 = vmatprep.subr.mxu0 0.0
  %346 = vmatpush2.msra.mxu0 0.0
  %347 = vmatprep.subr.mxu0 0.0
  %348 = vmatpush2.msra.mxu0 0.0
  %349 = vmatprep.subr.mxu0 0.0
  %350 = vmatpush2.msra.mxu0 0.0
  %351 = vmatprep.subr.mxu0 0.0
  %352 = vmatpush2.msra.mxu0 0.0
  %353 = vmatprep.subr.mxu0 0.0
  %354 = vmatpush2.msra.mxu0 0.0
  %355 = vmatprep.subr.mxu0 0.0
  %356 = vmatpush2.msra.mxu0 0.0
  %357 = vmatprep.subr.mxu0 0.0
  %358 = vmatpush2.msra.mxu0 0.0
  %359 = vmatprep.subr.mxu0 0.0
  %360 = vmatpush2.msra.mxu0 0.0
  %361 = vmatprep.subr.mxu0 0.0
  %362 = vmatpush2.msra.mxu0 0.0
  %363 = vmatprep.subr.mxu0 0.0
  %364 = vmatpush2.msra.mxu0 0.0
  %365 = vmatprep.subr.mxu0 0.0
  %366 = vmatpush2.msra.mxu0 0.0
  %367 = vmatprep.subr.mxu0 0.0
  %368 = vmatpush2.msra.mxu0 0.0
  %369 = vmatprep.subr.mxu0 0.0
  %370 = vmatpush2.msra.mxu0 0.0
  %371 = vmatprep.subr.mxu0 0.0
  %372 = vmatpush2.msra.mxu0 0.0
  %373 = vmatprep.mubr.f32.mxu0 0.0
  %374 = vmatmul.mubr.f32.gmra.mxu0 %v236
  %v375 = vpop.f32.mrf.mxu0
  %v376 = vadd.f32 0.0, %v375
  %v377 = vpop.f32.mrf.mxu0
  %v378 = vadd.f32 0.0, %v377
  %379 = vdwg.mxu0
  %380 = vmatprep.subr.mxu0 0.0
  %381 = vmatpush1.msra.mxu0 0.0
  %382 = vmatprep.subr.mxu0 0.0
  %383 = vmatpush1.msra.mxu0 0.0
  %384 = vmatprep.subr.mxu0 0.0
  %385 = vmatpush1.msra.mxu0 0.0
  %386 = vmatprep.subr.mxu0 0.0
  %387 = vmatpush1.msra.mxu0 0.0
  %388 = vmatprep.subr.mxu0 0.0
  %389 = vmatpush1.msra.mxu0 0.0
  %390 = vmatprep.subr.mxu0 0.0
  %391 = vmatpush1.msra.mxu0 0.0
  %392 = vmatprep.subr.mxu0 0.0
  %393 = vmatpush1.msra.mxu0 0.0
  %394 = vmatprep.subr.mxu0 0.0
  %395 = vmatpush1.msra.mxu0 0.0
  %396 = vmatprep.subr.mxu0 0.0
  %397 = vmatpush1.msra.mxu0 0.0
  %398 = vmatprep.subr.mxu0 0.0
  %399 = vmatpush1.msra.mxu0 0.0
  %400 = vmatprep.subr.mxu0 %v203
  %401 = vmatpush1.msra.mxu0 %v202
  %402 = vmatprep.subr.mxu0 %v167
  %403 = vmatpush1.msra.mxu0 %v166
  %404 = vmatprep.subr.mxu0 %v131
  %405 = vmatpush1.msra.mxu0 %v130
  %406 = vmatprep.subr.mxu0 %v95
  %407 = vmatpush1.msra.mxu0 %v94
  %408 = vmatprep.subr.mxu0 %v59
  %409 = vmatpush1.msra.mxu0 %v58
  %410 = vmatprep.subr.mxu0 %v23
  %411 = vmatpush1.msra.mxu0 %v22
  %412 = vmatprep.subr.mxu0 0.0
  %413 = vmatpush2.msra.mxu0 0.0
  %414 = vmatprep.subr.mxu0 0.0
  %415 = vmatpush2.msra.mxu0 0.0
  %416 = vmatprep.subr.mxu0 0.0
  %417 = vmatpush2.msra.mxu0 0.0
  %418 = vmatprep.subr.mxu0 0.0
  %419 = vmatpush2.msra.mxu0 0.0
  %420 = vmatprep.subr.mxu0 0.0
  %421 = vmatpush2.msra.mxu0 0.0
  %422 = vmatprep.subr.mxu0 0.0
  %423 = vmatpush2.msra.mxu0 0.0
  %424 = vmatprep.subr.mxu0 0.0
  %425 = vmatpush2.msra.mxu0 0.0
  %426 = vmatprep.subr.mxu0 0.0
  %427 = vmatpush2.msra.mxu0 0.0
  %428 = vmatprep.subr.mxu0 0.0
  %429 = vmatpush2.msra.mxu0 0.0
  %430 = vmatprep.subr.mxu0 0.0
  %431 = vmatpush2.msra.mxu0 0.0
  %432 = vmatprep.subr.mxu0 0.0
  %433 = vmatpush2.msra.mxu0 0.0
  %434 = vmatprep.subr.mxu0 0.0
  %435 = vmatpush2.msra.mxu0 0.0
  %436 = vmatprep.subr.mxu0 0.0
  %437 = vmatpush2.msra.mxu0 0.0
  %438 = vmatprep.subr.mxu0 0.0
  %439 = vmatpush2.msra.mxu0 0.0
  %440 = vmatprep.subr.mxu0 0.0
  %441 = vmatpush2.msra.mxu0 0.0
  %442 = vmatprep.subr.mxu0 0.0
  %443 = vmatpush2.msra.mxu0 0.0
  %444 = vmatprep.mubr.f32.mxu0 0.0
  %445 = vmatmul.mubr.f32.gmra.mxu0 %v236
  %v446 = vpop.f32.mrf.mxu0
  %v447 = vadd.f32 0.0, %v446
  %v448 = vpop.f32.mrf.mxu0
  %v449 = vadd.f32 0.0, %v448
  %450 = vdwg.mxu0
  %451 = vmatprep.subr.mxu0 0.0
  %452 = vmatpush1.msra.mxu0 0.0
  %453 = vmatprep.subr.mxu0 0.0
  %454 = vmatpush1.msra.mxu0 0.0
  %455 = vmatprep.subr.mxu0 0.0
  %456 = vmatpush1.msra.mxu0 0.0
  %457 = vmatprep.subr.mxu0 0.0
  %458 = vmatpush1.msra.mxu0 0.0
  %459 = vmatprep.subr.mxu0 0.0
  %460 = vmatpush1.msra.mxu0 0.0
  %461 = vmatprep.subr.mxu0 0.0
  %462 = vmatpush1.msra.mxu0 0.0
  %463 = vmatprep.subr.mxu0 0.0
  %464 = vmatpush1.msra.mxu0 0.0
  %465 = vmatprep.subr.mxu0 0.0
  %466 = vmatpush1.msra.mxu0 0.0
  %467 = vmatprep.subr.mxu0 0.0
  %468 = vmatpush1.msra.mxu0 0.0
  %469 = vmatprep.subr.mxu0 0.0
  %470 = vmatpush1.msra.mxu0 0.0
  %471 = vmatprep.subr.mxu0 %v205
  %472 = vmatpush1.msra.mxu0 %v204
  %473 = vmatprep.subr.mxu0 %v169
  %474 = vmatpush1.msra.mxu0 %v168
  %475 = vmatprep.subr.mxu0 %v133
  %476 = vmatpush1.msra.mxu0 %v132
  %477 = vmatprep.subr.mxu0 %v97
  %478 = vmatpush1.msra.mxu0 %v96
  %479 = vmatprep.subr.mxu0 %v61
  %480 = vmatpush1.msra.mxu0 %v60
  %481 = vmatprep.subr.mxu0 %v25
  %482 = vmatpush1.msra.mxu0 %v24
  %483 = vmatprep.subr.mxu0 0.0
  %484 = vmatpush2.msra.mxu0 0.0
  %485 = vmatprep.subr.mxu0 0.0
  %486 = vmatpush2.msra.mxu0 0.0
  %487 = vmatprep.subr.mxu0 0.0
  %488 = vmatpush2.msra.mxu0 0.0
  %489 = vmatprep.subr.mxu0 0.0
  %490 = vmatpush2.msra.mxu0 0.0
  %491 = vmatprep.subr.mxu0 0.0
  %492 = vmatpush2.msra.mxu0 0.0
  %493 = vmatprep.subr.mxu0 0.0
  %494 = vmatpush2.msra.mxu0 0.0
  %495 = vmatprep.subr.mxu0 0.0
  %496 = vmatpush2.msra.mxu0 0.0
  %497 = vmatprep.subr.mxu0 0.0
  %498 = vmatpush2.msra.mxu0 0.0
  %499 = vmatprep.subr.mxu0 0.0
  %500 = vmatpush2.msra.mxu0 0.0
  %501 = vmatprep.subr.mxu0 0.0
  %502 = vmatpush2.msra.mxu0 0.0
  %503 = vmatprep.subr.mxu0 0.0
  %504 = vmatpush2.msra.mxu0 0.0
  %505 = vmatprep.subr.mxu0 0.0
  %506 = vmatpush2.msra.mxu0 0.0
  %507 = vmatprep.subr.mxu0 0.0
  %508 = vmatpush2.msra.mxu0 0.0
  %509 = vmatprep.subr.mxu0 0.0
  %510 = vmatpush2.msra.mxu0 0.0
  %511 = vmatprep.subr.mxu0 0.0
  %512 = vmatpush2.msra.mxu0 0.0
  %513 = vmatprep.subr.mxu0 0.0
  %514 = vmatpush2.msra.mxu0 0.0
  %515 = vmatprep.mubr.f32.mxu0 0.0
  %516 = vmatmul.mubr.f32.gmra.mxu0 %v236
  %v517 = vpop.f32.mrf.mxu0
  %v518 = vadd.f32 0.0, %v517
  %v519 = vpop.f32.mrf.mxu0
  %v520 = vadd.f32 0.0, %v519
  %521 = vdwg.mxu0
  %522 = vmatprep.subr.mxu0 0.0
  %523 = vmatpush1.msra.mxu0 0.0
  %524 = vmatprep.subr.mxu0 0.0
  %525 = vmatpush1.msra.mxu0 0.0
  %526 = vmatprep.subr.mxu0 0.0
  %527 = vmatpush1.msra.mxu0 0.0
  %528 = vmatprep.subr.mxu0 0.0
  %529 = vmatpush1.msra.mxu0 0.0
  %530 = vmatprep.subr.mxu0 0.0
  %531 = vmatpush1.msra.mxu0 0.0
  %532 = vmatprep.subr.mxu0 0.0
  %533 = vmatpush1.msra.mxu0 0.0
  %534 = vmatprep.subr.mxu0 0.0
  %535 = vmatpush1.msra.mxu0 0.0
  %536 = vmatprep.subr.mxu0 0.0
  %537 = vmatpush1.msra.mxu0 0.0
  %538 = vmatprep.subr.mxu0 0.0
  %539 = vmatpush1.msra.mxu0 0.0
  %540 = vmatprep.subr.mxu0 0.0
  %541 = vmatpush1.msra.mxu0 0.0
  %542 = vmatprep.subr.mxu0 %v207
  %543 = vmatpush1.msra.mxu0 %v206
  %544 = vmatprep.subr.mxu0 %v171
  %545 = vmatpush1.msra.mxu0 %v170
  %546 = vmatprep.subr.mxu0 %v135
  %547 = vmatpush1.msra.mxu0 %v134
  %548 = vmatprep.subr.mxu0 %v99
  %549 = vmatpush1.msra.mxu0 %v98
  %550 = vmatprep.subr.mxu0 %v63
  %551 = vmatpush1.msra.mxu0 %v62
  %552 = vmatprep.subr.mxu0 %v27
  %553 = vmatpush1.msra.mxu0 %v26
  %554 = vmatprep.subr.mxu0 0.0
  %555 = vmatpush2.msra.mxu0 0.0
  %556 = vmatprep.subr.mxu0 0.0
  %557 = vmatpush2.msra.mxu0 0.0
  %558 = vmatprep.subr.mxu0 0.0
  %559 = vmatpush2.msra.mxu0 0.0
  %560 = vmatprep.subr.mxu0 0.0
  %561 = vmatpush2.msra.mxu0 0.0
  %562 = vmatprep.subr.mxu0 0.0
  %563 = vmatpush2.msra.mxu0 0.0
  %564 = vmatprep.subr.mxu0 0.0
  %565 = vmatpush2.msra.mxu0 0.0
  %566 = vmatprep.subr.mxu0 0.0
  %567 = vmatpush2.msra.mxu0 0.0
  %568 = vmatprep.subr.mxu0 0.0
  %569 = vmatpush2.msra.mxu0 0.0
  %570 = vmatprep.subr.mxu0 0.0
  %571 = vmatpush2.msra.mxu0 0.0
  %572 = vmatprep.subr.mxu0 0.0
  %573 = vmatpush2.msra.mxu0 0.0
  %574 = vmatprep.subr.mxu0 0.0
  %575 = vmatpush2.msra.mxu0 0.0
  %576 = vmatprep.subr.mxu0 0.0
  %577 = vmatpush2.msra.mxu0 0.0
  %578 = vmatprep.subr.mxu0 0.0
  %579 = vmatpush2.msra.mxu0 0.0
  %580 = vmatprep.subr.mxu0 0.0
  %581 = vmatpush2.msra.mxu0 0.0
  %582 = vmatprep.subr.mxu0 0.0
  %583 = vmatpush2.msra.mxu0 0.0
  %584 = vmatprep.subr.mxu0 0.0
  %585 = vmatpush2.msra.mxu0 0.0
  %586 = vmatprep.mubr.f32.mxu0 0.0
  %587 = vmatmul.mubr.f32.gmra.mxu0 %v236
  %v588 = vpop.f32.mrf.mxu0
  %v589 = vadd.f32 0.0, %v588
  %v590 = vpop.f32.mrf.mxu0
  %v591 = vadd.f32 0.0, %v590
  %592 = vdwg.mxu0
  %593 = vmatprep.subr.mxu0 0.0
  %594 = vmatpush1.msra.mxu0 0.0
  %595 = vmatprep.subr.mxu0 0.0
  %596 = vmatpush1.msra.mxu0 0.0
  %597 = vmatprep.subr.mxu0 0.0
  %598 = vmatpush1.msra.mxu0 0.0
  %599 = vmatprep.subr.mxu0 0.0
  %600 = vmatpush1.msra.mxu0 0.0
  %601 = vmatprep.subr.mxu0 0.0
  %602 = vmatpush1.msra.mxu0 0.0
  %603 = vmatprep.subr.mxu0 0.0
  %604 = vmatpush1.msra.mxu0 0.0
  %605 = vmatprep.subr.mxu0 0.0
  %606 = vmatpush1.msra.mxu0 0.0
  %607 = vmatprep.subr.mxu0 0.0
  %608 = vmatpush1.msra.mxu0 0.0
  %609 = vmatprep.subr.mxu0 0.0
  %610 = vmatpush1.msra.mxu0 0.0
  %611 = vmatprep.subr.mxu0 0.0
  %612 = vmatpush1.msra.mxu0 0.0
  %613 = vmatprep.subr.mxu0 %v209
  %614 = vmatpush1.msra.mxu0 %v208
  %615 = vmatprep.subr.mxu0 %v173
  %616 = vmatpush1.msra.mxu0 %v172
  %617 = vmatprep.subr.mxu0 %v137
  %618 = vmatpush1.msra.mxu0 %v136
  %619 = vmatprep.subr.mxu0 %v101
  %620 = vmatpush1.msra.mxu0 %v100
  %621 = vmatprep.subr.mxu0 %v65
  %622 = vmatpush1.msra.mxu0 %v64
  %623 = vmatprep.subr.mxu0 %v29
  %624 = vmatpush1.msra.mxu0 %v28
  %625 = vmatprep.subr.mxu0 0.0
  %626 = vmatpush2.msra.mxu0 0.0
  %627 = vmatprep.subr.mxu0 0.0
  %628 = vmatpush2.msra.mxu0 0.0
  %629 = vmatprep.subr.mxu0 0.0
  %630 = vmatpush2.msra.mxu0 0.0
  %631 = vmatprep.subr.mxu0 0.0
  %632 = vmatpush2.msra.mxu0 0.0
  %633 = vmatprep.subr.mxu0 0.0
  %634 = vmatpush2.msra.mxu0 0.0
  %635 = vmatprep.subr.mxu0 0.0
  %636 = vmatpush2.msra.mxu0 0.0
  %637 = vmatprep.subr.mxu0 0.0
  %638 = vmatpush2.msra.mxu0 0.0
  %639 = vmatprep.subr.mxu0 0.0
  %640 = vmatpush2.msra.mxu0 0.0
  %641 = vmatprep.subr.mxu0 0.0
  %642 = vmatpush2.msra.mxu0 0.0
  %643 = vmatprep.subr.mxu0 0.0
  %644 = vmatpush2.msra.mxu0 0.0
  %645 = vmatprep.subr.mxu0 0.0
  %646 = vmatpush2.msra.mxu0 0.0
  %647 = vmatprep.subr.mxu0 0.0
  %648 = vmatpush2.msra.mxu0 0.0
  %649 = vmatprep.subr.mxu0 0.0
  %650 = vmatpush2.msra.mxu0 0.0
  %651 = vmatprep.subr.mxu0 0.0
  %652 = vmatpush2.msra.mxu0 0.0
  %653 = vmatprep.subr.mxu0 0.0
  %654 = vmatpush2.msra.mxu0 0.0
  %655 = vmatprep.subr.mxu0 0.0
  %656 = vmatpush2.msra.mxu0 0.0
  %657 = vmatprep.mubr.f32.mxu0 0.0
  %658 = vmatmul.mubr.f32.gmra.mxu0 %v236
  %v659 = vpop.f32.mrf.mxu0
  %v660 = vadd.f32 0.0, %v659
  %v661 = vpop.f32.mrf.mxu0
  %v662 = vadd.f32 0.0, %v661
  %663 = vdwg.mxu0
  %664 = vmatprep.subr.mxu0 0.0
  %665 = vmatpush1.msra.mxu0 0.0
  %666 = vmatprep.subr.mxu0 0.0
  %667 = vmatpush1.msra.mxu0 0.0
  %668 = vmatprep.subr.mxu0 0.0
  %669 = vmatpush1.msra.mxu0 0.0
  %670 = vmatprep.subr.mxu0 0.0
  %671 = vmatpush1.msra.mxu0 0.0
  %672 = vmatprep.subr.mxu0 0.0
  %673 = vmatpush1.msra.mxu0 0.0
  %674 = vmatprep.subr.mxu0 0.0
  %675 = vmatpush1.msra.mxu0 0.0
  %676 = vmatprep.subr.mxu0 0.0
  %677 = vmatpush1.msra.mxu0 0.0
  %678 = vmatprep.subr.mxu0 0.0
  %679 = vmatpush1.msra.mxu0 0.0
  %680 = vmatprep.subr.mxu0 0.0
  %681 = vmatpush1.msra.mxu0 0.0
  %682 = vmatprep.subr.mxu0 0.0
  %683 = vmatpush1.msra.mxu0 0.0
  %684 = vmatprep.subr.mxu0 %v211
  %685 = vmatpush1.msra.mxu0 %v210
  %686 = vmatprep.subr.mxu0 %v175
  %687 = vmatpush1.msra.mxu0 %v174
  %688 = vmatprep.subr.mxu0 %v139
  %689 = vmatpush1.msra.mxu0 %v138
  %690 = vmatprep.subr.mxu0 %v103
  %691 = vmatpush1.msra.mxu0 %v102
  %692 = vmatprep.subr.mxu0 %v67
  %693 = vmatpush1.msra.mxu0 %v66
  %694 = vmatprep.subr.mxu0 %v31
  %695 = vmatpush1.msra.mxu0 %v30
  %696 = vmatprep.subr.mxu0 0.0
  %697 = vmatpush2.msra.mxu0 0.0
  %698 = vmatprep.subr.mxu0 0.0
  %699 = vmatpush2.msra.mxu0 0.0
  %700 = vmatprep.subr.mxu0 0.0
  %701 = vmatpush2.msra.mxu0 0.0
  %702 = vmatprep.subr.mxu0 0.0
  %703 = vmatpush2.msra.mxu0 0.0
  %704 = vmatprep.subr.mxu0 0.0
  %705 = vmatpush2.msra.mxu0 0.0
  %706 = vmatprep.subr.mxu0 0.0
  %707 = vmatpush2.msra.mxu0 0.0
  %708 = vmatprep.subr.mxu0 0.0
  %709 = vmatpush2.msra.mxu0 0.0
  %710 = vmatprep.subr.mxu0 0.0
  %711 = vmatpush2.msra.mxu0 0.0
  %712 = vmatprep.subr.mxu0 0.0
  %713 = vmatpush2.msra.mxu0 0.0
  %714 = vmatprep.subr.mxu0 0.0
  %715 = vmatpush2.msra.mxu0 0.0
  %716 = vmatprep.subr.mxu0 0.0
  %717 = vmatpush2.msra.mxu0 0.0
  %718 = vmatprep.subr.mxu0 0.0
  %719 = vmatpush2.msra.mxu0 0.0
  %720 = vmatprep.subr.mxu0 0.0
  %721 = vmatpush2.msra.mxu0 0.0
  %722 = vmatprep.subr.mxu0 0.0
  %723 = vmatpush2.msra.mxu0 0.0
  %724 = vmatprep.subr.mxu0 0.0
  %725 = vmatpush2.msra.mxu0 0.0
  %726 = vmatprep.subr.mxu0 0.0
  %727 = vmatpush2.msra.mxu0 0.0
  %728 = vmatprep.mubr.f32.mxu0 0.0
  %729 = vmatmul.mubr.f32.gmra.mxu0 %v236
  %v730 = vpop.f32.mrf.mxu0
  %v731 = vadd.f32 0.0, %v730
  %v732 = vpop.f32.mrf.mxu0
  %v733 = vadd.f32 0.0, %v732
  %734 = vdwg.mxu0
  %735 = vmatprep.subr.mxu0 0.0
  %736 = vmatpush1.msra.mxu0 0.0
  %737 = vmatprep.subr.mxu0 0.0
  %738 = vmatpush1.msra.mxu0 0.0
  %739 = vmatprep.subr.mxu0 0.0
  %740 = vmatpush1.msra.mxu0 0.0
  %741 = vmatprep.subr.mxu0 0.0
  %742 = vmatpush1.msra.mxu0 0.0
  %743 = vmatprep.subr.mxu0 0.0
  %744 = vmatpush1.msra.mxu0 0.0
  %745 = vmatprep.subr.mxu0 0.0
  %746 = vmatpush1.msra.mxu0 0.0
  %747 = vmatprep.subr.mxu0 0.0
  %748 = vmatpush1.msra.mxu0 0.0
  %749 = vmatprep.subr.mxu0 0.0
  %750 = vmatpush1.msra.mxu0 0.0
  %751 = vmatprep.subr.mxu0 0.0
  %752 = vmatpush1.msra.mxu0 0.0
  %753 = vmatprep.subr.mxu0 0.0
  %754 = vmatpush1.msra.mxu0 0.0
  %755 = vmatprep.subr.mxu0 %v213
  %756 = vmatpush1.msra.mxu0 %v212
  %757 = vmatprep.subr.mxu0 %v177
  %758 = vmatpush1.msra.mxu0 %v176
  %759 = vmatprep.subr.mxu0 %v141
  %760 = vmatpush1.msra.mxu0 %v140
  %761 = vmatprep.subr.mxu0 %v105
  %762 = vmatpush1.msra.mxu0 %v104
  %763 = vmatprep.subr.mxu0 %v69
  %764 = vmatpush1.msra.mxu0 %v68
  %765 = vmatprep.subr.mxu0 %v33
  %766 = vmatpush1.msra.mxu0 %v32
  %767 = vmatprep.subr.mxu0 0.0
  %768 = vmatpush2.msra.mxu0 0.0
  %769 = vmatprep.subr.mxu0 0.0
  %770 = vmatpush2.msra.mxu0 0.0
  %771 = vmatprep.subr.mxu0 0.0
  %772 = vmatpush2.msra.mxu0 0.0
  %773 = vmatprep.subr.mxu0 0.0
  %774 = vmatpush2.msra.mxu0 0.0
  %775 = vmatprep.subr.mxu0 0.0
  %776 = vmatpush2.msra.mxu0 0.0
  %777 = vmatprep.subr.mxu0 0.0
  %778 = vmatpush2.msra.mxu0 0.0
  %779 = vmatprep.subr.mxu0 0.0
  %780 = vmatpush2.msra.mxu0 0.0
  %781 = vmatprep.subr.mxu0 0.0
  %782 = vmatpush2.msra.mxu0 0.0
  %783 = vmatprep.subr.mxu0 0.0
  %784 = vmatpush2.msra.mxu0 0.0
  %785 = vmatprep.subr.mxu0 0.0
  %786 = vmatpush2.msra.mxu0 0.0
  %787 = vmatprep.subr.mxu0 0.0
  %788 = vmatpush2.msra.mxu0 0.0
  %789 = vmatprep.subr.mxu0 0.0
  %790 = vmatpush2.msra.mxu0 0.0
  %791 = vmatprep.subr.mxu0 0.0
  %792 = vmatpush2.msra.mxu0 0.0
  %793 = vmatprep.subr.mxu0 0.0
  %794 = vmatpush2.msra.mxu0 0.0
  %795 = vmatprep.subr.mxu0 0.0
  %796 = vmatpush2.msra.mxu0 0.0
  %797 = vmatprep.subr.mxu0 0.0
  %798 = vmatpush2.msra.mxu0 0.0
  %799 = vmatprep.mubr.f32.mxu0 0.0
  %800 = vmatmul.mubr.f32.gmra.mxu0 %v236
  %v801 = vpop.f32.mrf.mxu0
  %v802 = vadd.f32 0.0, %v801
  %v803 = vpop.f32.mrf.mxu0
  %v804 = vadd.f32 0.0, %v803
  %805 = vdwg.mxu0
  %806 = vmatprep.subr.mxu0 0.0
  %807 = vmatpush1.msra.mxu0 0.0
  %808 = vmatprep.subr.mxu0 0.0
  %809 = vmatpush1.msra.mxu0 0.0
  %810 = vmatprep.subr.mxu0 0.0
  %811 = vmatpush1.msra.mxu0 0.0
  %812 = vmatprep.subr.mxu0 0.0
  %813 = vmatpush1.msra.mxu0 0.0
  %814 = vmatprep.subr.mxu0 0.0
  %815 = vmatpush1.msra.mxu0 0.0
  %816 = vmatprep.subr.mxu0 0.0
  %817 = vmatpush1.msra.mxu0 0.0
  %818 = vmatprep.subr.mxu0 0.0
  %819 = vmatpush1.msra.mxu0 0.0
  %820 = vmatprep.subr.mxu0 0.0
  %821 = vmatpush1.msra.mxu0 0.0
  %822 = vmatprep.subr.mxu0 0.0
  %823 = vmatpush1.msra.mxu0 0.0
  %824 = vmatprep.subr.mxu0 0.0
  %825 = vmatpush1.msra.mxu0 0.0
  %826 = vmatprep.subr.mxu0 %v215
  %827 = vmatpush1.msra.mxu0 %v214
  %828 = vmatprep.subr.mxu0 %v179
  %829 = vmatpush1.msra.mxu0 %v178
  %830 = vmatprep.subr.mxu0 %v143
  %831 = vmatpush1.msra.mxu0 %v142
  %832 = vmatprep.subr.mxu0 %v107
  %833 = vmatpush1.msra.mxu0 %v106
  %834 = vmatprep.subr.mxu0 %v71
  %835 = vmatpush1.msra.mxu0 %v70
  %836 = vmatprep.subr.mxu0 %v35
  %837 = vmatpush1.msra.mxu0 %v34
  %838 = vmatprep.subr.mxu0 0.0
  %839 = vmatpush2.msra.mxu0 0.0
  %840 = vmatprep.subr.mxu0 0.0
  %841 = vmatpush2.msra.mxu0 0.0
  %842 = vmatprep.subr.mxu0 0.0
  %843 = vmatpush2.msra.mxu0 0.0
  %844 = vmatprep.subr.mxu0 0.0
  %845 = vmatpush2.msra.mxu0 0.0
  %846 = vmatprep.subr.mxu0 0.0
  %847 = vmatpush2.msra.mxu0 0.0
  %848 = vmatprep.subr.mxu0 0.0
  %849 = vmatpush2.msra.mxu0 0.0
  %850 = vmatprep.subr.mxu0 0.0
  %851 = vmatpush2.msra.mxu0 0.0
  %852 = vmatprep.subr.mxu0 0.0
  %853 = vmatpush2.msra.mxu0 0.0
  %854 = vmatprep.subr.mxu0 0.0
  %855 = vmatpush2.msra.mxu0 0.0
  %856 = vmatprep.subr.mxu0 0.0
  %857 = vmatpush2.msra.mxu0 0.0
  %858 = vmatprep.subr.mxu0 0.0
  %859 = vmatpush2.msra.mxu0 0.0
  %860 = vmatprep.subr.mxu0 0.0
  %861 = vmatpush2.msra.mxu0 0.0
  %862 = vmatprep.subr.mxu0 0.0
  %863 = vmatpush2.msra.mxu0 0.0
  %864 = vmatprep.subr.mxu0 0.0
  %865 = vmatpush2.msra.mxu0 0.0
  %866 = vmatprep.subr.mxu0 0.0
  %867 = vmatpush2.msra.mxu0 0.0
  %868 = vmatprep.subr.mxu0 0.0
  %869 = vmatpush2.msra.mxu0 0.0
  %870 = vmatprep.mubr.f32.mxu0 0.0
  %871 = vmatmul.mubr.f32.gmra.mxu0 %v236
  %v872 = vpop.f32.mrf.mxu0
  %v873 = vadd.f32 0.0, %v872
  %v874 = vpop.f32.mrf.mxu0
  %v875 = vadd.f32 0.0, %v874
  %876 = vdwg.mxu0
  %877 = vmatprep.subr.mxu0 0.0
  %878 = vmatpush1.msra.mxu0 0.0
  %879 = vmatprep.subr.mxu0 0.0
  %880 = vmatpush1.msra.mxu0 0.0
  %881 = vmatprep.subr.mxu0 0.0
  %882 = vmatpush1.msra.mxu0 0.0
  %883 = vmatprep.subr.mxu0 0.0
  %884 = vmatpush1.msra.mxu0 0.0
  %885 = vmatprep.subr.mxu0 0.0
  %886 = vmatpush1.msra.mxu0 0.0
  %887 = vmatprep.subr.mxu0 0.0
  %888 = vmatpush1.msra.mxu0 0.0
  %889 = vmatprep.subr.mxu0 0.0
  %890 = vmatpush1.msra.mxu0 0.0
  %891 = vmatprep.subr.mxu0 0.0
  %892 = vmatpush1.msra.mxu0 0.0
  %893 = vmatprep.subr.mxu0 0.0
  %894 = vmatpush1.msra.mxu0 0.0
  %895 = vmatprep.subr.mxu0 0.0
  %896 = vmatpush1.msra.mxu0 0.0
  %897 = vmatprep.subr.mxu0 %v217
  %898 = vmatpush1.msra.mxu0 %v216
  %899 = vmatprep.subr.mxu0 %v181
  %900 = vmatpush1.msra.mxu0 %v180
  %901 = vmatprep.subr.mxu0 %v145
  %902 = vmatpush1.msra.mxu0 %v144
  %903 = vmatprep.subr.mxu0 %v109
  %904 = vmatpush1.msra.mxu0 %v108
  %905 = vmatprep.subr.mxu0 %v73
  %906 = vmatpush1.msra.mxu0 %v72
  %907 = vmatprep.subr.mxu0 %v37
  %908 = vmatpush1.msra.mxu0 %v36
  %909 = vmatprep.subr.mxu0 0.0
  %910 = vmatpush2.msra.mxu0 0.0
  %911 = vmatprep.subr.mxu0 0.0
  %912 = vmatpush2.msra.mxu0 0.0
  %913 = vmatprep.subr.mxu0 0.0
  %914 = vmatpush2.msra.mxu0 0.0
  %915 = vmatprep.subr.mxu0 0.0
  %916 = vmatpush2.msra.mxu0 0.0
  %917 = vmatprep.subr.mxu0 0.0
  %918 = vmatpush2.msra.mxu0 0.0
  %919 = vmatprep.subr.mxu0 0.0
  %920 = vmatpush2.msra.mxu0 0.0
  %921 = vmatprep.subr.mxu0 0.0
  %922 = vmatpush2.msra.mxu0 0.0
  %923 = vmatprep.subr.mxu0 0.0
  %924 = vmatpush2.msra.mxu0 0.0
  %925 = vmatprep.subr.mxu0 0.0
  %926 = vmatpush2.msra.mxu0 0.0
  %927 = vmatprep.subr.mxu0 0.0
  %928 = vmatpush2.msra.mxu0 0.0
  %929 = vmatprep.subr.mxu0 0.0
  %930 = vmatpush2.msra.mxu0 0.0
  %931 = vmatprep.subr.mxu0 0.0
  %932 = vmatpush2.msra.mxu0 0.0
  %933 = vmatprep.subr.mxu0 0.0
  %934 = vmatpush2.msra.mxu0 0.0
  %935 = vmatprep.subr.mxu0 0.0
  %936 = vmatpush2.msra.mxu0 0.0
  %937 = vmatprep.subr.mxu0 0.0
  %938 = vmatpush2.msra.mxu0 0.0
  %939 = vmatprep.subr.mxu0 0.0
  %940 = vmatpush2.msra.mxu0 0.0
  %941 = vmatprep.mubr.f32.mxu0 0.0
  %942 = vmatmul.mubr.f32.gmra.mxu0 %v236
  %v943 = vpop.f32.mrf.mxu0
  %v944 = vadd.f32 0.0, %v943
  %v945 = vpop.f32.mrf.mxu0
  %v946 = vadd.f32 0.0, %v945
  %947 = vdwg.mxu0
  %948 = vmatprep.subr.mxu0 0.0
  %949 = vmatpush1.msra.mxu0 0.0
  %950 = vmatprep.subr.mxu0 0.0
  %951 = vmatpush1.msra.mxu0 0.0
  %952 = vmatprep.subr.mxu0 0.0
  %953 = vmatpush1.msra.mxu0 0.0
  %954 = vmatprep.subr.mxu0 0.0
  %955 = vmatpush1.msra.mxu0 0.0
  %956 = vmatprep.subr.mxu0 0.0
  %957 = vmatpush1.msra.mxu0 0.0
  %958 = vmatprep.subr.mxu0 0.0
  %959 = vmatpush1.msra.mxu0 0.0
  %960 = vmatprep.subr.mxu0 0.0
  %961 = vmatpush1.msra.mxu0 0.0
  %962 = vmatprep.subr.mxu0 0.0
  %963 = vmatpush1.msra.mxu0 0.0
  %964 = vmatprep.subr.mxu0 0.0
  %965 = vmatpush1.msra.mxu0 0.0
  %966 = vmatprep.subr.mxu0 0.0
  %967 = vmatpush1.msra.mxu0 0.0
  %968 = vmatprep.subr.mxu0 %v219
  %969 = vmatpush1.msra.mxu0 %v218
  %970 = vmatprep.subr.mxu0 %v183
  %971 = vmatpush1.msra.mxu0 %v182
  %972 = vmatprep.subr.mxu0 %v147
  %973 = vmatpush1.msra.mxu0 %v146
  %974 = vmatprep.subr.mxu0 %v111
  %975 = vmatpush1.msra.mxu0 %v110
  %976 = vmatprep.subr.mxu0 %v75
  %977 = vmatpush1.msra.mxu0 %v74
  %978 = vmatprep.subr.mxu0 %v39
  %979 = vmatpush1.msra.mxu0 %v38
  %980 = vmatprep.subr.mxu0 0.0
  %981 = vmatpush2.msra.mxu0 0.0
  %982 = vmatprep.subr.mxu0 0.0
  %983 = vmatpush2.msra.mxu0 0.0
  %984 = vmatprep.subr.mxu0 0.0
  %985 = vmatpush2.msra.mxu0 0.0
  %986 = vmatprep.subr.mxu0 0.0
  %987 = vmatpush2.msra.mxu0 0.0
  %988 = vmatprep.subr.mxu0 0.0
  %989 = vmatpush2.msra.mxu0 0.0
  %990 = vmatprep.subr.mxu0 0.0
  %991 = vmatpush2.msra.mxu0 0.0
  %992 = vmatprep.subr.mxu0 0.0
  %993 = vmatpush2.msra.mxu0 0.0
  %994 = vmatprep.subr.mxu0 0.0
  %995 = vmatpush2.msra.mxu0 0.0
  %996 = vmatprep.subr.mxu0 0.0
  %997 = vmatpush2.msra.mxu0 0.0
  %998 = vmatprep.subr.mxu0 0.0
  %999 = vmatpush2.msra.mxu0 0.0
  %1000 = vmatprep.subr.mxu0 0.0
  %1001 = vmatpush2.msra.mxu0 0.0
  %1002 = vmatprep.subr.mxu0 0.0
  %1003 = vmatpush2.msra.mxu0 0.0
  %1004 = vmatprep.subr.mxu0 0.0
  %1005 = vmatpush2.msra.mxu0 0.0
  %1006 = vmatprep.subr.mxu0 0.0
  %1007 = vmatpush2.msra.mxu0 0.0
  %1008 = vmatprep.subr.mxu0 0.0
  %1009 = vmatpush2.msra.mxu0 0.0
  %1010 = vmatprep.subr.mxu0 0.0
  %1011 = vmatpush2.msra.mxu0 0.0
  %1012 = vmatprep.mubr.f32.mxu0 0.0
  %1013 = vmatmul.mubr.f32.gmra.mxu0 %v236
  %v1014 = vpop.f32.mrf.mxu0
  %v1015 = vadd.f32 0.0, %v1014
  %v1016 = vpop.f32.mrf.mxu0
  %v1017 = vadd.f32 0.0, %v1016
  %1018 = vdwg.mxu0
  %1019 = vmatprep.subr.mxu0 0.0
  %1020 = vmatpush1.msra.mxu0 0.0
  %1021 = vmatprep.subr.mxu0 0.0
  %1022 = vmatpush1.msra.mxu0 0.0
  %1023 = vmatprep.subr.mxu0 0.0
  %1024 = vmatpush1.msra.mxu0 0.0
  %1025 = vmatprep.subr.mxu0 0.0
  %1026 = vmatpush1.msra.mxu0 0.0
  %1027 = vmatprep.subr.mxu0 0.0
  %1028 = vmatpush1.msra.mxu0 0.0
  %1029 = vmatprep.subr.mxu0 0.0
  %1030 = vmatpush1.msra.mxu0 0.0
  %1031 = vmatprep.subr.mxu0 0.0
  %1032 = vmatpush1.msra.mxu0 0.0
  %1033 = vmatprep.subr.mxu0 0.0
  %1034 = vmatpush1.msra.mxu0 0.0
  %1035 = vmatprep.subr.mxu0 0.0
  %1036 = vmatpush1.msra.mxu0 0.0
  %1037 = vmatprep.subr.mxu0 0.0
  %1038 = vmatpush1.msra.mxu0 0.0
  %1039 = vmatprep.subr.mxu0 %v221
  %1040 = vmatpush1.msra.mxu0 %v220
  %1041 = vmatprep.subr.mxu0 %v185
  %1042 = vmatpush1.msra.mxu0 %v184
  %1043 = vmatprep.subr.mxu0 %v149
  %1044 = vmatpush1.msra.mxu0 %v148
  %1045 = vmatprep.subr.mxu0 %v113
  %1046 = vmatpush1.msra.mxu0 %v112
  %1047 = vmatprep.subr.mxu0 %v77
  %1048 = vmatpush1.msra.mxu0 %v76
  %1049 = vmatprep.subr.mxu0 %v41
  %1050 = vmatpush1.msra.mxu0 %v40
  %1051 = vmatprep.subr.mxu0 0.0
  %1052 = vmatpush2.msra.mxu0 0.0
  %1053 = vmatprep.subr.mxu0 0.0
  %1054 = vmatpush2.msra.mxu0 0.0
  %1055 = vmatprep.subr.mxu0 0.0
  %1056 = vmatpush2.msra.mxu0 0.0
  %1057 = vmatprep.subr.mxu0 0.0
  %1058 = vmatpush2.msra.mxu0 0.0
  %1059 = vmatprep.subr.mxu0 0.0
  %1060 = vmatpush2.msra.mxu0 0.0
  %1061 = vmatprep.subr.mxu0 0.0
  %1062 = vmatpush2.msra.mxu0 0.0
  %1063 = vmatprep.subr.mxu0 0.0
  %1064 = vmatpush2.msra.mxu0 0.0
  %1065 = vmatprep.subr.mxu0 0.0
  %1066 = vmatpush2.msra.mxu0 0.0
  %1067 = vmatprep.subr.mxu0 0.0
  %1068 = vmatpush2.msra.mxu0 0.0
  %1069 = vmatprep.subr.mxu0 0.0
  %1070 = vmatpush2.msra.mxu0 0.0
  %1071 = vmatprep.subr.mxu0 0.0
  %1072 = vmatpush2.msra.mxu0 0.0
  %1073 = vmatprep.subr.mxu0 0.0
  %1074 = vmatpush2.msra.mxu0 0.0
  %1075 = vmatprep.subr.mxu0 0.0
  %1076 = vmatpush2.msra.mxu0 0.0
  %1077 = vmatprep.subr.mxu0 0.0
  %1078 = vmatpush2.msra.mxu0 0.0
  %1079 = vmatprep.subr.mxu0 0.0
  %1080 = vmatpush2.msra.mxu0 0.0
  %1081 = vmatprep.subr.mxu0 0.0
  %1082 = vmatpush2.msra.mxu0 0.0
  %1083 = vmatprep.mubr.f32.mxu0 0.0
  %1084 = vmatmul.mubr.f32.gmra.mxu0 %v236
  %v1085 = vpop.f32.mrf.mxu0
  %v1086 = vadd.f32 0.0, %v1085
  %v1087 = vpop.f32.mrf.mxu0
  %v1088 = vadd.f32 0.0, %v1087
  %1089 = vdwg.mxu0
  %1090 = vmatprep.subr.mxu0 0.0
  %1091 = vmatpush1.msra.mxu0 0.0
  %1092 = vmatprep.subr.mxu0 0.0
  %1093 = vmatpush1.msra.mxu0 0.0
  %1094 = vmatprep.subr.mxu0 0.0
  %1095 = vmatpush1.msra.mxu0 0.0
  %1096 = vmatprep.subr.mxu0 0.0
  %1097 = vmatpush1.msra.mxu0 0.0
  %1098 = vmatprep.subr.mxu0 0.0
  %1099 = vmatpush1.msra.mxu0 0.0
  %1100 = vmatprep.subr.mxu0 0.0
  %1101 = vmatpush1.msra.mxu0 0.0
  %1102 = vmatprep.subr.mxu0 0.0
  %1103 = vmatpush1.msra.mxu0 0.0
  %1104 = vmatprep.subr.mxu0 0.0
  %1105 = vmatpush1.msra.mxu0 0.0
  %1106 = vmatprep.subr.mxu0 0.0
  %1107 = vmatpush1.msra.mxu0 0.0
  %1108 = vmatprep.subr.mxu0 0.0
  %1109 = vmatpush1.msra.mxu0 0.0
  %1110 = vmatprep.subr.mxu0 %v223
  %1111 = vmatpush1.msra.mxu0 %v222
  %1112 = vmatprep.subr.mxu0 %v187
  %1113 = vmatpush1.msra.mxu0 %v186
  %1114 = vmatprep.subr.mxu0 %v151
  %1115 = vmatpush1.msra.mxu0 %v150
  %1116 = vmatprep.subr.mxu0 %v115
  %1117 = vmatpush1.msra.mxu0 %v114
  %1118 = vmatprep.subr.mxu0 %v79
  %1119 = vmatpush1.msra.mxu0 %v78
  %1120 = vmatprep.subr.mxu0 %v43
  %1121 = vmatpush1.msra.mxu0 %v42
  %1122 = vmatprep.subr.mxu0 0.0
  %1123 = vmatpush2.msra.mxu0 0.0
  %1124 = vmatprep.subr.mxu0 0.0
  %1125 = vmatpush2.msra.mxu0 0.0
  %1126 = vmatprep.subr.mxu0 0.0
  %1127 = vmatpush2.msra.mxu0 0.0
  %1128 = vmatprep.subr.mxu0 0.0
  %1129 = vmatpush2.msra.mxu0 0.0
  %1130 = vmatprep.subr.mxu0 0.0
  %1131 = vmatpush2.msra.mxu0 0.0
  %1132 = vmatprep.subr.mxu0 0.0
  %1133 = vmatpush2.msra.mxu0 0.0
  %1134 = vmatprep.subr.mxu0 0.0
  %1135 = vmatpush2.msra.mxu0 0.0
  %1136 = vmatprep.subr.mxu0 0.0
  %1137 = vmatpush2.msra.mxu0 0.0
  %1138 = vmatprep.subr.mxu0 0.0
  %1139 = vmatpush2.msra.mxu0 0.0
  %1140 = vmatprep.subr.mxu0 0.0
  %1141 = vmatpush2.msra.mxu0 0.0
  %1142 = vmatprep.subr.mxu0 0.0
  %1143 = vmatpush2.msra.mxu0 0.0
  %1144 = vmatprep.subr.mxu0 0.0
  %1145 = vmatpush2.msra.mxu0 0.0
  %1146 = vmatprep.subr.mxu0 0.0
  %1147 = vmatpush2.msra.mxu0 0.0
  %1148 = vmatprep.subr.mxu0 0.0
  %1149 = vmatpush2.msra.mxu0 0.0
  %1150 = vmatprep.subr.mxu0 0.0
  %1151 = vmatpush2.msra.mxu0 0.0
  %1152 = vmatprep.subr.mxu0 0.0
  %1153 = vmatpush2.msra.mxu0 0.0
  %1154 = vmatprep.mubr.f32.mxu0 0.0
  %1155 = vmatmul.mubr.f32.gmra.mxu0 %v236
  %v1156 = vpop.f32.mrf.mxu0
  %v1157 = vadd.f32 0.0, %v1156
  %v1158 = vpop.f32.mrf.mxu0
  %v1159 = vadd.f32 0.0, %v1158
  %1160 = vdwg.mxu0
  %1161 = vmatprep.subr.mxu0 0.0
  %1162 = vmatpush1.msra.mxu0 0.0
  %1163 = vmatprep.subr.mxu0 0.0
  %1164 = vmatpush1.msra.mxu0 0.0
  %1165 = vmatprep.subr.mxu0 0.0
  %1166 = vmatpush1.msra.mxu0 0.0
  %1167 = vmatprep.subr.mxu0 0.0
  %1168 = vmatpush1.msra.mxu0 0.0
  %1169 = vmatprep.subr.mxu0 0.0
  %1170 = vmatpush1.msra.mxu0 0.0
  %1171 = vmatprep.subr.mxu0 0.0
  %1172 = vmatpush1.msra.mxu0 0.0
  %1173 = vmatprep.subr.mxu0 0.0
  %1174 = vmatpush1.msra.mxu0 0.0
  %1175 = vmatprep.subr.mxu0 0.0
  %1176 = vmatpush1.msra.mxu0 0.0
  %1177 = vmatprep.subr.mxu0 0.0
  %1178 = vmatpush1.msra.mxu0 0.0
  %1179 = vmatprep.subr.mxu0 0.0
  %1180 = vmatpush1.msra.mxu0 0.0
  %1181 = vmatprep.subr.mxu0 %v225
  %1182 = vmatpush1.msra.mxu0 %v224
  %1183 = vmatprep.subr.mxu0 %v189
  %1184 = vmatpush1.msra.mxu0 %v188
  %1185 = vmatprep.subr.mxu0 %v153
  %1186 = vmatpush1.msra.mxu0 %v152
  %1187 = vmatprep.subr.mxu0 %v117
  %1188 = vmatpush1.msra.mxu0 %v116
  %1189 = vmatprep.subr.mxu0 %v81
  %1190 = vmatpush1.msra.mxu0 %v80
  %1191 = vmatprep.subr.mxu0 %v45
  %1192 = vmatpush1.msra.mxu0 %v44
  %1193 = vmatprep.subr.mxu0 0.0
  %1194 = vmatpush2.msra.mxu0 0.0
  %1195 = vmatprep.subr.mxu0 0.0
  %1196 = vmatpush2.msra.mxu0 0.0
  %1197 = vmatprep.subr.mxu0 0.0
  %1198 = vmatpush2.msra.mxu0 0.0
  %1199 = vmatprep.subr.mxu0 0.0
  %1200 = vmatpush2.msra.mxu0 0.0
  %1201 = vmatprep.subr.mxu0 0.0
  %1202 = vmatpush2.msra.mxu0 0.0
  %1203 = vmatprep.subr.mxu0 0.0
  %1204 = vmatpush2.msra.mxu0 0.0
  %1205 = vmatprep.subr.mxu0 0.0
  %1206 = vmatpush2.msra.mxu0 0.0
  %1207 = vmatprep.subr.mxu0 0.0
  %1208 = vmatpush2.msra.mxu0 0.0
  %1209 = vmatprep.subr.mxu0 0.0
  %1210 = vmatpush2.msra.mxu0 0.0
  %1211 = vmatprep.subr.mxu0 0.0
  %1212 = vmatpush2.msra.mxu0 0.0
  %1213 = vmatprep.subr.mxu0 0.0
  %1214 = vmatpush2.msra.mxu0 0.0
  %1215 = vmatprep.subr.mxu0 0.0
  %1216 = vmatpush2.msra.mxu0 0.0
  %1217 = vmatprep.subr.mxu0 0.0
  %1218 = vmatpush2.msra.mxu0 0.0
  %1219 = vmatprep.subr.mxu0 0.0
  %1220 = vmatpush2.msra.mxu0 0.0
  %1221 = vmatprep.subr.mxu0 0.0
  %1222 = vmatpush2.msra.mxu0 0.0
  %1223 = vmatprep.subr.mxu0 0.0
  %1224 = vmatpush2.msra.mxu0 0.0
  %1225 = vmatprep.mubr.f32.mxu0 0.0
  %1226 = vmatmul.mubr.f32.gmra.mxu0 %v236
  %v1227 = vpop.f32.mrf.mxu0
  %v1228 = vadd.f32 0.0, %v1227
  %v1229 = vpop.f32.mrf.mxu0
  %v1230 = vadd.f32 0.0, %v1229
  %1231 = vdwg.mxu0
  %1232 = vmatprep.subr.mxu0 0.0
  %1233 = vmatpush1.msra.mxu0 0.0
  %1234 = vmatprep.subr.mxu0 0.0
  %1235 = vmatpush1.msra.mxu0 0.0
  %1236 = vmatprep.subr.mxu0 0.0
  %1237 = vmatpush1.msra.mxu0 0.0
  %1238 = vmatprep.subr.mxu0 0.0
  %1239 = vmatpush1.msra.mxu0 0.0
  %1240 = vmatprep.subr.mxu0 0.0
  %1241 = vmatpush1.msra.mxu0 0.0
  %1242 = vmatprep.subr.mxu0 0.0
  %1243 = vmatpush1.msra.mxu0 0.0
  %1244 = vmatprep.subr.mxu0 0.0
  %1245 = vmatpush1.msra.mxu0 0.0
  %1246 = vmatprep.subr.mxu0 0.0
  %1247 = vmatpush1.msra.mxu0 0.0
  %1248 = vmatprep.subr.mxu0 0.0
  %1249 = vmatpush1.msra.mxu0 0.0
  %1250 = vmatprep.subr.mxu0 0.0
  %1251 = vmatpush1.msra.mxu0 0.0
  %1252 = vmatprep.subr.mxu0 %v227
  %1253 = vmatpush1.msra.mxu0 %v226
  %1254 = vmatprep.subr.mxu0 %v191
  %1255 = vmatpush1.msra.mxu0 %v190
  %1256 = vmatprep.subr.mxu0 %v155
  %1257 = vmatpush1.msra.mxu0 %v154
  %1258 = vmatprep.subr.mxu0 %v119
  %1259 = vmatpush1.msra.mxu0 %v118
  %1260 = vmatprep.subr.mxu0 %v83
  %1261 = vmatpush1.msra.mxu0 %v82
  %1262 = vmatprep.subr.mxu0 %v47
  %1263 = vmatpush1.msra.mxu0 %v46
  %1264 = vmatprep.subr.mxu0 0.0
  %1265 = vmatpush2.msra.mxu0 0.0
  %1266 = vmatprep.subr.mxu0 0.0
  %1267 = vmatpush2.msra.mxu0 0.0
  %1268 = vmatprep.subr.mxu0 0.0
  %1269 = vmatpush2.msra.mxu0 0.0
  %1270 = vmatprep.subr.mxu0 0.0
  %1271 = vmatpush2.msra.mxu0 0.0
  %1272 = vmatprep.subr.mxu0 0.0
  %1273 = vmatpush2.msra.mxu0 0.0
  %1274 = vmatprep.subr.mxu0 0.0
  %1275 = vmatpush2.msra.mxu0 0.0
  %1276 = vmatprep.subr.mxu0 0.0
  %1277 = vmatpush2.msra.mxu0 0.0
  %1278 = vmatprep.subr.mxu0 0.0
  %1279 = vmatpush2.msra.mxu0 0.0
  %1280 = vmatprep.subr.mxu0 0.0
  %1281 = vmatpush2.msra.mxu0 0.0
  %1282 = vmatprep.subr.mxu0 0.0
  %1283 = vmatpush2.msra.mxu0 0.0
  %1284 = vmatprep.subr.mxu0 0.0
  %1285 = vmatpush2.msra.mxu0 0.0
  %1286 = vmatprep.subr.mxu0 0.0
  %1287 = vmatpush2.msra.mxu0 0.0
  %1288 = vmatprep.subr.mxu0 0.0
  %1289 = vmatpush2.msra.mxu0 0.0
  %1290 = vmatprep.subr.mxu0 0.0
  %1291 = vmatpush2.msra.mxu0 0.0
  %1292 = vmatprep.subr.mxu0 0.0
  %1293 = vmatpush2.msra.mxu0 0.0
  %1294 = vmatprep.subr.mxu0 0.0
  %1295 = vmatpush2.msra.mxu0 0.0
  %1296 = vmatprep.mubr.f32.mxu0 0.0
  %1297 = vmatmul.mubr.f32.gmra.mxu0 %v236
  %v1298 = vpop.f32.mrf.mxu0
  %v1299 = vadd.f32 0.0, %v1298
  %v1300 = vpop.f32.mrf.mxu0
  %v1301 = vadd.f32 0.0, %v1300
  %1302 = vdwg.mxu0
  %1303 = vmatprep.subr.mxu0 0.0
  %1304 = vmatpush1.msra.mxu0 0.0
  %1305 = vmatprep.subr.mxu0 0.0
  %1306 = vmatpush1.msra.mxu0 0.0
  %1307 = vmatprep.subr.mxu0 0.0
  %1308 = vmatpush1.msra.mxu0 0.0
  %1309 = vmatprep.subr.mxu0 0.0
  %1310 = vmatpush1.msra.mxu0 0.0
  %1311 = vmatprep.subr.mxu0 0.0
  %1312 = vmatpush1.msra.mxu0 0.0
  %1313 = vmatprep.subr.mxu0 0.0
  %1314 = vmatpush1.msra.mxu0 0.0
  %1315 = vmatprep.subr.mxu0 0.0
  %1316 = vmatpush1.msra.mxu0 0.0
  %1317 = vmatprep.subr.mxu0 0.0
  %1318 = vmatpush1.msra.mxu0 0.0
  %1319 = vmatprep.subr.mxu0 0.0
  %1320 = vmatpush1.msra.mxu0 0.0
  %1321 = vmatprep.subr.mxu0 0.0
  %1322 = vmatpush1.msra.mxu0 0.0
  %1323 = vmatprep.subr.mxu0 %v229
  %1324 = vmatpush1.msra.mxu0 %v228
  %1325 = vmatprep.subr.mxu0 %v193
  %1326 = vmatpush1.msra.mxu0 %v192
  %1327 = vmatprep.subr.mxu0 %v157
  %1328 = vmatpush1.msra.mxu0 %v156
  %1329 = vmatprep.subr.mxu0 %v121
  %1330 = vmatpush1.msra.mxu0 %v120
  %1331 = vmatprep.subr.mxu0 %v85
  %1332 = vmatpush1.msra.mxu0 %v84
  %1333 = vmatprep.subr.mxu0 %v49
  %1334 = vmatpush1.msra.mxu0 %v48
  %1335 = vmatprep.subr.mxu0 0.0
  %1336 = vmatpush2.msra.mxu0 0.0
  %1337 = vmatprep.subr.mxu0 0.0
  %1338 = vmatpush2.msra.mxu0 0.0
  %1339 = vmatprep.subr.mxu0 0.0
  %1340 = vmatpush2.msra.mxu0 0.0
  %1341 = vmatprep.subr.mxu0 0.0
  %1342 = vmatpush2.msra.mxu0 0.0
  %1343 = vmatprep.subr.mxu0 0.0
  %1344 = vmatpush2.msra.mxu0 0.0
  %1345 = vmatprep.subr.mxu0 0.0
  %1346 = vmatpush2.msra.mxu0 0.0
  %1347 = vmatprep.subr.mxu0 0.0
  %1348 = vmatpush2.msra.mxu0 0.0
  %1349 = vmatprep.subr.mxu0 0.0
  %1350 = vmatpush2.msra.mxu0 0.0
  %1351 = vmatprep.subr.mxu0 0.0
  %1352 = vmatpush2.msra.mxu0 0.0
  %1353 = vmatprep.subr.mxu0 0.0
  %1354 = vmatpush2.msra.mxu0 0.0
  %1355 = vmatprep.subr.mxu0 0.0
  %1356 = vmatpush2.msra.mxu0 0.0
  %1357 = vmatprep.subr.mxu0 0.0
  %1358 = vmatpush2.msra.mxu0 0.0
  %1359 = vmatprep.subr.mxu0 0.0
  %1360 = vmatpush2.msra.mxu0 0.0
  %1361 = vmatprep.subr.mxu0 0.0
  %1362 = vmatpush2.msra.mxu0 0.0
  %1363 = vmatprep.subr.mxu0 0.0
  %1364 = vmatpush2.msra.mxu0 0.0
  %1365 = vmatprep.subr.mxu0 0.0
  %1366 = vmatpush2.msra.mxu0 0.0
  %1367 = vmatprep.mubr.f32.mxu0 0.0
  %1368 = vmatmul.mubr.f32.gmra.mxu0 %v236
  %v1369 = vpop.f32.mrf.mxu0
  %v1370 = vadd.f32 0.0, %v1369
  %v1371 = vpop.f32.mrf.mxu0
  %v1372 = vadd.f32 0.0, %v1371
  %1373 = vdwg.mxu0
  %1374 = vmatprep.subr.mxu0 0.0
  %1375 = vmatpush1.msra.mxu0 0.0
  %1376 = vmatprep.subr.mxu0 0.0
  %1377 = vmatpush1.msra.mxu0 0.0
  %1378 = vmatprep.subr.mxu0 0.0
  %1379 = vmatpush1.msra.mxu0 0.0
  %1380 = vmatprep.subr.mxu0 0.0
  %1381 = vmatpush1.msra.mxu0 0.0
  %1382 = vmatprep.subr.mxu0 0.0
  %1383 = vmatpush1.msra.mxu0 0.0
  %1384 = vmatprep.subr.mxu0 0.0
  %1385 = vmatpush1.msra.mxu0 0.0
  %1386 = vmatprep.subr.mxu0 0.0
  %1387 = vmatpush1.msra.mxu0 0.0
  %1388 = vmatprep.subr.mxu0 0.0
  %1389 = vmatpush1.msra.mxu0 0.0
  %1390 = vmatprep.subr.mxu0 0.0
  %1391 = vmatpush1.msra.mxu0 0.0
  %1392 = vmatprep.subr.mxu0 0.0
  %1393 = vmatpush1.msra.mxu0 0.0
  %1394 = vmatprep.subr.mxu0 %v231
  %1395 = vmatpush1.msra.mxu0 %v230
  %1396 = vmatprep.subr.mxu0 %v195
  %1397 = vmatpush1.msra.mxu0 %v194
  %1398 = vmatprep.subr.mxu0 %v159
  %1399 = vmatpush1.msra.mxu0 %v158
  %1400 = vmatprep.subr.mxu0 %v123
  %1401 = vmatpush1.msra.mxu0 %v122
  %1402 = vmatprep.subr.mxu0 %v87
  %1403 = vmatpush1.msra.mxu0 %v86
  %1404 = vmatprep.subr.mxu0 %v51
  %1405 = vmatpush1.msra.mxu0 %v50
  %1406 = vmatprep.subr.mxu0 0.0
  %1407 = vmatpush2.msra.mxu0 0.0
  %1408 = vmatprep.subr.mxu0 0.0
  %1409 = vmatpush2.msra.mxu0 0.0
  %1410 = vmatprep.subr.mxu0 0.0
  %1411 = vmatpush2.msra.mxu0 0.0
  %1412 = vmatprep.subr.mxu0 0.0
  %1413 = vmatpush2.msra.mxu0 0.0
  %1414 = vmatprep.subr.mxu0 0.0
  %1415 = vmatpush2.msra.mxu0 0.0
  %1416 = vmatprep.subr.mxu0 0.0
  %1417 = vmatpush2.msra.mxu0 0.0
  %1418 = vmatprep.subr.mxu0 0.0
  %1419 = vmatpush2.msra.mxu0 0.0
  %1420 = vmatprep.subr.mxu0 0.0
  %1421 = vmatpush2.msra.mxu0 0.0
  %1422 = vmatprep.subr.mxu0 0.0
  %1423 = vmatpush2.msra.mxu0 0.0
  %1424 = vmatprep.subr.mxu0 0.0
  %1425 = vmatpush2.msra.mxu0 0.0
  %1426 = vmatprep.subr.mxu0 0.0
  %1427 = vmatpush2.msra.mxu0 0.0
  %1428 = vmatprep.subr.mxu0 0.0
  %1429 = vmatpush2.msra.mxu0 0.0
  %1430 = vmatprep.subr.mxu0 0.0
  %1431 = vmatpush2.msra.mxu0 0.0
  %1432 = vmatprep.subr.mxu0 0.0
  %1433 = vmatpush2.msra.mxu0 0.0
  %1434 = vmatprep.subr.mxu0 0.0
  %1435 = vmatpush2.msra.mxu0 0.0
  %1436 = vmatprep.subr.mxu0 0.0
  %1437 = vmatpush2.msra.mxu0 0.0
  %1438 = vmatprep.mubr.f32.mxu0 0.0
  %1439 = vmatmul.mubr.f32.gmra.mxu0 %v236
  %v1440 = vpop.f32.mrf.mxu0
  %v1441 = vadd.f32 0.0, %v1440
  %v1442 = vpop.f32.mrf.mxu0
  %v1443 = vadd.f32 0.0, %v1442
  %1444 = vdwg.mxu0
  %1445 = vmatprep.subr.mxu0 0.0
  %1446 = vmatpush1.msra.mxu0 0.0
  %1447 = vmatprep.subr.mxu0 0.0
  %1448 = vmatpush1.msra.mxu0 0.0
  %1449 = vmatprep.subr.mxu0 0.0
  %1450 = vmatpush1.msra.mxu0 0.0
  %1451 = vmatprep.subr.mxu0 0.0
  %1452 = vmatpush1.msra.mxu0 0.0
  %1453 = vmatprep.subr.mxu0 0.0
  %1454 = vmatpush1.msra.mxu0 0.0
  %1455 = vmatprep.subr.mxu0 0.0
  %1456 = vmatpush1.msra.mxu0 0.0
  %1457 = vmatprep.subr.mxu0 0.0
  %1458 = vmatpush1.msra.mxu0 0.0
  %1459 = vmatprep.subr.mxu0 0.0
  %1460 = vmatpush1.msra.mxu0 0.0
  %1461 = vmatprep.subr.mxu0 0.0
  %1462 = vmatpush1.msra.mxu0 0.0
  %1463 = vmatprep.subr.mxu0 0.0
  %1464 = vmatpush1.msra.mxu0 0.0
  %1465 = vmatprep.subr.mxu0 %v233
  %1466 = vmatpush1.msra.mxu0 %v232
  %1467 = vmatprep.subr.mxu0 %v197
  %1468 = vmatpush1.msra.mxu0 %v196
  %1469 = vmatprep.subr.mxu0 %v161
  %1470 = vmatpush1.msra.mxu0 %v160
  %1471 = vmatprep.subr.mxu0 %v125
  %1472 = vmatpush1.msra.mxu0 %v124
  %1473 = vmatprep.subr.mxu0 %v89
  %1474 = vmatpush1.msra.mxu0 %v88
  %1475 = vmatprep.subr.mxu0 %v53
  %1476 = vmatpush1.msra.mxu0 %v52
  %1477 = vmatprep.subr.mxu0 0.0
  %1478 = vmatpush2.msra.mxu0 0.0
  %1479 = vmatprep.subr.mxu0 0.0
  %1480 = vmatpush2.msra.mxu0 0.0
  %1481 = vmatprep.subr.mxu0 0.0
  %1482 = vmatpush2.msra.mxu0 0.0
  %1483 = vmatprep.subr.mxu0 0.0
  %1484 = vmatpush2.msra.mxu0 0.0
  %1485 = vmatprep.subr.mxu0 0.0
  %1486 = vmatpush2.msra.mxu0 0.0
  %1487 = vmatprep.subr.mxu0 0.0
  %1488 = vmatpush2.msra.mxu0 0.0
  %1489 = vmatprep.subr.mxu0 0.0
  %1490 = vmatpush2.msra.mxu0 0.0
  %1491 = vmatprep.subr.mxu0 0.0
  %1492 = vmatpush2.msra.mxu0 0.0
  %1493 = vmatprep.subr.mxu0 0.0
  %1494 = vmatpush2.msra.mxu0 0.0
  %1495 = vmatprep.subr.mxu0 0.0
  %1496 = vmatpush2.msra.mxu0 0.0
  %1497 = vmatprep.subr.mxu0 0.0
  %1498 = vmatpush2.msra.mxu0 0.0
  %1499 = vmatprep.subr.mxu0 0.0
  %1500 = vmatpush2.msra.mxu0 0.0
  %1501 = vmatprep.subr.mxu0 0.0
  %1502 = vmatpush2.msra.mxu0 0.0
  %1503 = vmatprep.subr.mxu0 0.0
  %1504 = vmatpush2.msra.mxu0 0.0
  %1505 = vmatprep.subr.mxu0 0.0
  %1506 = vmatpush2.msra.mxu0 0.0
  %1507 = vmatprep.subr.mxu0 0.0
  %1508 = vmatpush2.msra.mxu0 0.0
  %1509 = vmatprep.mubr.f32.mxu0 0.0
  %1510 = vmatmul.mubr.f32.gmra.mxu0 %v236
  %v1511 = vpop.f32.mrf.mxu0
  %v1512 = vadd.f32 0.0, %v1511
  %v1513 = vpop.f32.mrf.mxu0
  %v1514 = vadd.f32 0.0, %v1513
  %1515 = vdwg.mxu0
  %v1516 = vadd.f32 %v305, %v307
  %v1517 = vadd.f32 %v1516, %v376
  %v1518 = vadd.f32 %v1517, %v378
  %v1519 = vadd.f32 %v1518, %v447
  %v1520 = vadd.f32 %v1519, %v449
  %v1521 = vadd.f32 %v1520, %v518
  %v1522 = vadd.f32 %v1521, %v520
  %v1523 = vadd.f32 %v1522, %v589
  %v1524 = vadd.f32 %v1523, %v591
  %v1525 = vadd.f32 %v1524, %v660
  %v1526 = vadd.f32 %v1525, %v662
  %v1527 = vadd.f32 %v1526, %v731
  %v1528 = vadd.f32 %v1527, %v733
  %v1529 = vadd.f32 %v1528, %v802
  %v1530 = vadd.f32 %v1529, %v804
  %v1531 = vadd.f32 %v1530, %v873
  %v1532 = vadd.f32 %v1531, %v875
  %v1533 = vadd.f32 %v1532, %v944
  %v1534 = vadd.f32 %v1533, %v946
  %v1535 = vadd.f32 %v1534, %v1015
  %v1536 = vadd.f32 %v1535, %v1017
  %v1537 = vadd.f32 %v1536, %v1086
  %v1538 = vadd.f32 %v1537, %v1088
  %v1539 = vadd.f32 %v1538, %v1157
  %v1540 = vadd.f32 %v1539, %v1159
  %v1541 = vadd.f32 %v1540, %v1228
  %v1542 = vadd.f32 %v1541, %v1230
  %v1543 = vadd.f32 %v1542, %v1299
  %v1544 = vadd.f32 %v1543, %v1301
  %v1545 = vadd.f32 %v1544, %v1370
  %v1546 = vadd.f32 %v1545, %v1372
  %v1547 = vadd.f32 %v1546, %v1441
  %v1548 = vadd.f32 %v1547, %v1443
  %v1549 = vadd.f32 %v1548, %v1512
  %v1550 = vadd.f32 %v1549, %v1514
  %1551 = vadd.xlane.f32.xlu0 %v1550
  %v1552 = vpop.xlane.xlu0 %1551
  %v1553 = vmul.f32 %v305, %v305
  %v1554 = vmul.f32 %v307, %v307
  %v1555 = vmul.f32 %v376, %v376
  %v1556 = vmul.f32 %v378, %v378
  %v1557 = vmul.f32 %v447, %v447
  %v1558 = vmul.f32 %v449, %v449
  %v1559 = vmul.f32 %v518, %v518
  %v1560 = vmul.f32 %v520, %v520
  %v1561 = vmul.f32 %v589, %v589
  %v1562 = vmul.f32 %v591, %v591
  %v1563 = vmul.f32 %v660, %v660
  %v1564 = vmul.f32 %v662, %v662
  %v1565 = vmul.f32 %v731, %v731
  %v1566 = vmul.f32 %v733, %v733
  %v1567 = vmul.f32 %v802, %v802
  %v1568 = vmul.f32 %v804, %v804
  %v1569 = vmul.f32 %v873, %v873
  %v1570 = vmul.f32 %v875, %v875
  %v1571 = vmul.f32 %v944, %v944
  %v1572 = vmul.f32 %v946, %v946
  %v1573 = vmul.f32 %v1015, %v1015
  %v1574 = vmul.f32 %v1017, %v1017
  %v1575 = vmul.f32 %v1086, %v1086
  %v1576 = vmul.f32 %v1088, %v1088
  %v1577 = vmul.f32 %v1157, %v1157
  %v1578 = vmul.f32 %v1159, %v1159
  %v1579 = vmul.f32 %v1228, %v1228
  %v1580 = vmul.f32 %v1230, %v1230
  %v1581 = vmul.f32 %v1299, %v1299
  %v1582 = vmul.f32 %v1301, %v1301
  %v1583 = vmul.f32 %v1370, %v1370
  %v1584 = vmul.f32 %v1372, %v1372
  %v1585 = vmul.f32 %v1441, %v1441
  %v1586 = vmul.f32 %v1443, %v1443
  %v1587 = vmul.f32 %v1512, %v1512
  %v1588 = vmul.f32 %v1514, %v1514
  %v1589 = vadd.f32 %v1553, %v1554
  %v1590 = vadd.f32 %v1589, %v1555
  %v1591 = vadd.f32 %v1590, %v1556
  %v1592 = vadd.f32 %v1591, %v1557
  %v1593 = vadd.f32 %v1592, %v1558
  %v1594 = vadd.f32 %v1593, %v1559
  %v1595 = vadd.f32 %v1594, %v1560
  %v1596 = vadd.f32 %v1595, %v1561
  %v1597 = vadd.f32 %v1596, %v1562
  %v1598 = vadd.f32 %v1597, %v1563
  %v1599 = vadd.f32 %v1598, %v1564
  %v1600 = vadd.f32 %v1599, %v1565
  %v1601 = vadd.f32 %v1600, %v1566
  %v1602 = vadd.f32 %v1601, %v1567
  %v1603 = vadd.f32 %v1602, %v1568
  %v1604 = vadd.f32 %v1603, %v1569
  %v1605 = vadd.f32 %v1604, %v1570
  %v1606 = vadd.f32 %v1605, %v1571
  %v1607 = vadd.f32 %v1606, %v1572
  %v1608 = vadd.f32 %v1607, %v1573
  %v1609 = vadd.f32 %v1608, %v1574
  %v1610 = vadd.f32 %v1609, %v1575
  %v1611 = vadd.f32 %v1610, %v1576
  %v1612 = vadd.f32 %v1611, %v1577
  %v1613 = vadd.f32 %v1612, %v1578
  %v1614 = vadd.f32 %v1613, %v1579
  %v1615 = vadd.f32 %v1614, %v1580
  %v1616 = vadd.f32 %v1615, %v1581
  %v1617 = vadd.f32 %v1616, %v1582
  %v1618 = vadd.f32 %v1617, %v1583
  %v1619 = vadd.f32 %v1618, %v1584
  %v1620 = vadd.f32 %v1619, %v1585
  %v1621 = vadd.f32 %v1620, %v1586
  %v1622 = vadd.f32 %v1621, %v1587
  %v1623 = vadd.f32 %v1622, %v1588
  %1624 = vadd.xlane.f32.xlu0 %v1623
  %v1625 = vpop.xlane.xlu0 %1624
  %v1626 = vmul.f32 %v1552, 0.00021701389
  %v1627 = vmul.f32 %v1625, 0.00021701389
  %v1628 = vmul.f32 %v1626, %v1626
  %v1629 = vsub.f32 %v1627, %v1628
  %v1630 = vmax.f32 %v1629, 0.0
  %v1631 = vld [vmem:[%s2] sm:$0xff]
  %v1632 = vadd.f32 %v1630, 1e-05
  %v1633 = vrsqrt.pop %v1632
  %v1634 = vmul.f32 %v1631, %v1633
  %v1635 = vld [vmem:[%s3] sm:$0xff]
  %v1636 = vmul.f32 %v1626, %v1634
  %v1637 = vsub.f32 %v1635, %v1636
  %1639 = vset.pattern.permute.xlu0 0
  %1640 = vperm.xlu0 %1639, %v1634
  %v1641 = vpop.permute.xlu0 %1640
  %v1643 = vmul.f32 %v305, %v1641
  %v1644 = vmul.f32 %v307, %v1641
  %v1645 = vmul.f32 %v376, %v1641
  %v1646 = vmul.f32 %v378, %v1641
  %v1647 = vmul.f32 %v447, %v1641
  %v1648 = vmul.f32 %v449, %v1641
  %v1649 = vmul.f32 %v518, %v1641
  %v1650 = vmul.f32 %v520, %v1641
  %v1651 = vmul.f32 %v589, %v1641
  %v1652 = vmul.f32 %v591, %v1641
  %v1653 = vmul.f32 %v660, %v1641
  %v1654 = vmul.f32 %v662, %v1641
  %v1655 = vmul.f32 %v731, %v1641
  %v1656 = vmul.f32 %v733, %v1641
  %v1657 = vmul.f32 %v802, %v1641
  %v1658 = vmul.f32 %v804, %v1641
  %v1659 = vmul.f32 %v873, %v1641
  %v1660 = vmul.f32 %v875, %v1641
  %v1661 = vmul.f32 %v944, %v1641
  %v1662 = vmul.f32 %v946, %v1641
  %v1663 = vmul.f32 %v1015, %v1641
  %v1664 = vmul.f32 %v1017, %v1641
  %v1665 = vmul.f32 %v1086, %v1641
  %v1666 = vmul.f32 %v1088, %v1641
  %v1667 = vmul.f32 %v1157, %v1641
  %v1668 = vmul.f32 %v1159, %v1641
  %v1669 = vmul.f32 %v1228, %v1641
  %v1670 = vmul.f32 %v1230, %v1641
  %v1671 = vmul.f32 %v1299, %v1641
  %v1672 = vmul.f32 %v1301, %v1641
  %v1673 = vmul.f32 %v1370, %v1641
  %v1674 = vmul.f32 %v1372, %v1641
  %v1675 = vmul.f32 %v1441, %v1641
  %v1676 = vmul.f32 %v1443, %v1641
  %v1677 = vmul.f32 %v1512, %v1641
  %v1678 = vmul.f32 %v1514, %v1641
  %1680 = vset.pattern.permute.xlu0 0
  %1681 = vperm.xlu0 %1680, %v1637
  %v1682 = vpop.permute.xlu0 %1681
  %v1684 = vadd.f32 %v1643, %v1682
  %v1685 = vadd.f32 %v1644, %v1682
  %v1686 = vadd.f32 %v1645, %v1682
  %v1687 = vadd.f32 %v1646, %v1682
  %v1688 = vadd.f32 %v1647, %v1682
  %v1689 = vadd.f32 %v1648, %v1682
  %v1690 = vadd.f32 %v1649, %v1682
  %v1691 = vadd.f32 %v1650, %v1682
  %v1692 = vadd.f32 %v1651, %v1682
  %v1693 = vadd.f32 %v1652, %v1682
  %v1694 = vadd.f32 %v1653, %v1682
  %v1695 = vadd.f32 %v1654, %v1682
  %v1696 = vadd.f32 %v1655, %v1682
  %v1697 = vadd.f32 %v1656, %v1682
  %v1698 = vadd.f32 %v1657, %v1682
  %v1699 = vadd.f32 %v1658, %v1682
  %v1700 = vadd.f32 %v1659, %v1682
  %v1701 = vadd.f32 %v1660, %v1682
  %v1702 = vadd.f32 %v1661, %v1682
  %v1703 = vadd.f32 %v1662, %v1682
  %v1704 = vadd.f32 %v1663, %v1682
  %v1705 = vadd.f32 %v1664, %v1682
  %v1706 = vadd.f32 %v1665, %v1682
  %v1707 = vadd.f32 %v1666, %v1682
  %v1708 = vadd.f32 %v1667, %v1682
  %v1709 = vadd.f32 %v1668, %v1682
  %v1710 = vadd.f32 %v1669, %v1682
  %v1711 = vadd.f32 %v1670, %v1682
  %v1712 = vadd.f32 %v1671, %v1682
  %v1713 = vadd.f32 %v1672, %v1682
  %v1714 = vadd.f32 %v1673, %v1682
  %v1715 = vadd.f32 %v1674, %v1682
  %v1716 = vadd.f32 %v1675, %v1682
  %v1717 = vadd.f32 %v1676, %v1682
  %v1718 = vadd.f32 %v1677, %v1682
  %v1719 = vadd.f32 %v1678, %v1682
  %vm1720 = vcmp.ge.f32.partialorder %v1684, 0.0
  %vm1721 = vcmp.ge.f32.partialorder %v1685, 0.0
  %vm1722 = vcmp.ge.f32.partialorder %v1686, 0.0
  %vm1723 = vcmp.ge.f32.partialorder %v1687, 0.0
  %vm1724 = vcmp.ge.f32.partialorder %v1688, 0.0
  %vm1725 = vcmp.ge.f32.partialorder %v1689, 0.0
  %vm1726 = vcmp.ge.f32.partialorder %v1690, 0.0
  %vm1727 = vcmp.ge.f32.partialorder %v1691, 0.0
  %vm1728 = vcmp.ge.f32.partialorder %v1692, 0.0
  %vm1729 = vcmp.ge.f32.partialorder %v1693, 0.0
  %vm1730 = vcmp.ge.f32.partialorder %v1694, 0.0
  %vm1731 = vcmp.ge.f32.partialorder %v1695, 0.0
  %vm1732 = vcmp.ge.f32.partialorder %v1696, 0.0
  %vm1733 = vcmp.ge.f32.partialorder %v1697, 0.0
  %vm1734 = vcmp.ge.f32.partialorder %v1698, 0.0
  %vm1735 = vcmp.ge.f32.partialorder %v1699, 0.0
  %vm1736 = vcmp.ge.f32.partialorder %v1700, 0.0
  %vm1737 = vcmp.ge.f32.partialorder %v1701, 0.0
  %vm1738 = vcmp.ge.f32.partialorder %v1702, 0.0
  %vm1739 = vcmp.ge.f32.partialorder %v1703, 0.0
  %vm1740 = vcmp.ge.f32.partialorder %v1704, 0.0
  %vm1741 = vcmp.ge.f32.partialorder %v1705, 0.0
  %vm1742 = vcmp.ge.f32.partialorder %v1706, 0.0
  %vm1743 = vcmp.ge.f32.partialorder %v1707, 0.0
  %vm1744 = vcmp.ge.f32.partialorder %v1708, 0.0
  %vm1745 = vcmp.ge.f32.partialorder %v1709, 0.0
  %vm1746 = vcmp.ge.f32.partialorder %v1710, 0.0
  %vm1747 = vcmp.ge.f32.partialorder %v1711, 0.0
  %vm1748 = vcmp.ge.f32.partialorder %v1712, 0.0
  %vm1749 = vcmp.ge.f32.partialorder %v1713, 0.0
  %vm1750 = vcmp.ge.f32.partialorder %v1714, 0.0
  %vm1751 = vcmp.ge.f32.partialorder %v1715, 0.0
  %vm1752 = vcmp.ge.f32.partialorder %v1716, 0.0
  %vm1753 = vcmp.ge.f32.partialorder %v1717, 0.0
  %vm1754 = vcmp.ge.f32.partialorder %v1718, 0.0
  %vm1755 = vcmp.ge.f32.partialorder %v1719, 0.0
  %v1756 = vmul.f32 %v1684, 0.2
  %v1757 = vmul.f32 %v1685, 0.2
  %v1758 = vmul.f32 %v1686, 0.2
  %v1759 = vmul.f32 %v1687, 0.2
  %v1760 = vmul.f32 %v1688, 0.2
  %v1761 = vmul.f32 %v1689, 0.2
  %v1762 = vmul.f32 %v1690, 0.2
  %v1763 = vmul.f32 %v1691, 0.2
  %v1764 = vmul.f32 %v1692, 0.2
  %v1765 = vmul.f32 %v1693, 0.2
  %v1766 = vmul.f32 %v1694, 0.2
  %v1767 = vmul.f32 %v1695, 0.2
  %v1768 = vmul.f32 %v1696, 0.2
  %v1769 = vmul.f32 %v1697, 0.2
  %v1770 = vmul.f32 %v1698, 0.2
  %v1771 = vmul.f32 %v1699, 0.2
  %v1772 = vmul.f32 %v1700, 0.2
  %v1773 = vmul.f32 %v1701, 0.2
  %v1774 = vmul.f32 %v1702, 0.2
  %v1775 = vmul.f32 %v1703, 0.2
  %v1776 = vmul.f32 %v1704, 0.2
  %v1777 = vmul.f32 %v1705, 0.2
  %v1778 = vmul.f32 %v1706, 0.2
  %v1779 = vmul.f32 %v1707, 0.2
  %v1780 = vmul.f32 %v1708, 0.2
  %v1781 = vmul.f32 %v1709, 0.2
  %v1782 = vmul.f32 %v1710, 0.2
  %v1783 = vmul.f32 %v1711, 0.2
  %v1784 = vmul.f32 %v1712, 0.2
  %v1785 = vmul.f32 %v1713, 0.2
  %v1786 = vmul.f32 %v1714, 0.2
  %v1787 = vmul.f32 %v1715, 0.2
  %v1788 = vmul.f32 %v1716, 0.2
  %v1789 = vmul.f32 %v1717, 0.2
  %v1790 = vmul.f32 %v1718, 0.2
  %v1791 = vmul.f32 %v1719, 0.2
  %v1792 = vsel %vm1720, %v1684, %v1756
  %v1793 = vsel %vm1721, %v1685, %v1757
  %v1794 = vsel %vm1722, %v1686, %v1758
  %v1795 = vsel %vm1723, %v1687, %v1759
  %v1796 = vsel %vm1724, %v1688, %v1760
  %v1797 = vsel %vm1725, %v1689, %v1761
  %v1798 = vsel %vm1726, %v1690, %v1762
  %v1799 = vsel %vm1727, %v1691, %v1763
  %v1800 = vsel %vm1728, %v1692, %v1764
  %v1801 = vsel %vm1729, %v1693, %v1765
  %v1802 = vsel %vm1730, %v1694, %v1766
  %v1803 = vsel %vm1731, %v1695, %v1767
  %v1804 = vsel %vm1732, %v1696, %v1768
  %v1805 = vsel %vm1733, %v1697, %v1769
  %v1806 = vsel %vm1734, %v1698, %v1770
  %v1807 = vsel %vm1735, %v1699, %v1771
  %v1808 = vsel %vm1736, %v1700, %v1772
  %v1809 = vsel %vm1737, %v1701, %v1773
  %v1810 = vsel %vm1738, %v1702, %v1774
  %v1811 = vsel %vm1739, %v1703, %v1775
  %v1812 = vsel %vm1740, %v1704, %v1776
  %v1813 = vsel %vm1741, %v1705, %v1777
  %v1814 = vsel %vm1742, %v1706, %v1778
  %v1815 = vsel %vm1743, %v1707, %v1779
  %v1816 = vsel %vm1744, %v1708, %v1780
  %v1817 = vsel %vm1745, %v1709, %v1781
  %v1818 = vsel %vm1746, %v1710, %v1782
  %v1819 = vsel %vm1747, %v1711, %v1783
  %v1820 = vsel %vm1748, %v1712, %v1784
  %v1821 = vsel %vm1749, %v1713, %v1785
  %v1822 = vsel %vm1750, %v1714, %v1786
  %v1823 = vsel %vm1751, %v1715, %v1787
  %v1824 = vsel %vm1752, %v1716, %v1788
  %v1825 = vsel %vm1753, %v1717, %v1789
  %v1826 = vsel %vm1754, %v1718, %v1790
  %v1827 = vsel %vm1755, %v1719, %v1791
  %1828 = vst [vmem:[%s4] sm:$0xff] %v1792
  %1829 = vst [vmem:[%s4 + $0x8] sm:$0xff] %v1793
  %1830 = vst [vmem:[%s4 + $0x10] sm:$0xff] %v1794
  %1831 = vst [vmem:[%s4 + $0x18] sm:$0xff] %v1795
  %1832 = vst [vmem:[%s4 + $0x20] sm:$0xff] %v1796
  %1833 = vst [vmem:[%s4 + $0x28] sm:$0xff] %v1797
  %1834 = vst [vmem:[%s4 + $0x30] sm:$0xff] %v1798
  %1835 = vst [vmem:[%s4 + $0x38] sm:$0xff] %v1799
  %1836 = vst [vmem:[%s4 + $0x40] sm:$0xff] %v1800
  %1837 = vst [vmem:[%s4 + $0x48] sm:$0xff] %v1801
  %1838 = vst [vmem:[%s4 + $0x50] sm:$0xff] %v1802
  %1839 = vst [vmem:[%s4 + $0x58] sm:$0xff] %v1803
  %1840 = vst [vmem:[%s4 + $0x60] sm:$0xff] %v1804
  %1841 = vst [vmem:[%s4 + $0x68] sm:$0xff] %v1805
  %1842 = vst [vmem:[%s4 + $0x70] sm:$0xff] %v1806
  %1843 = vst [vmem:[%s4 + $0x78] sm:$0xff] %v1807
  %1844 = vst [vmem:[%s4 + $0x80] sm:$0xff] %v1808
  %1845 = vst [vmem:[%s4 + $0x88] sm:$0xff] %v1809
  %1846 = vst [vmem:[%s4 + $0x90] sm:$0xff] %v1810
  %1847 = vst [vmem:[%s4 + $0x98] sm:$0xff] %v1811
  %1848 = vst [vmem:[%s4 + $0xa0] sm:$0xff] %v1812
  %1849 = vst [vmem:[%s4 + $0xa8] sm:$0xff] %v1813
  %1850 = vst [vmem:[%s4 + $0xb0] sm:$0xff] %v1814
  %1851 = vst [vmem:[%s4 + $0xb8] sm:$0xff] %v1815
  %1852 = vst [vmem:[%s4 + $0xc0] sm:$0xff] %v1816
  %1853 = vst [vmem:[%s4 + $0xc8] sm:$0xff] %v1817
  %1854 = vst [vmem:[%s4 + $0xd0] sm:$0xff] %v1818
  %1855 = vst [vmem:[%s4 + $0xd8] sm:$0xff] %v1819
  %1856 = vst [vmem:[%s4 + $0xe0] sm:$0xff] %v1820
  %1857 = vst [vmem:[%s4 + $0xe8] sm:$0xff] %v1821
  %1858 = vst [vmem:[%s4 + $0xf0] sm:$0xff] %v1822
  %1859 = vst [vmem:[%s4 + $0xf8] sm:$0xff] %v1823
  %1860 = vst [vmem:[%s4 + $0x100] sm:$0xff] %v1824
  %1861 = vst [vmem:[%s4 + $0x108] sm:$0xff] %v1825
  %1862 = vst [vmem:[%s4 + $0x110] sm:$0xff] %v1826
  %1863 = vst [vmem:[%s4 + $0x118] sm:$0xff] %v1827
  // Predicated region
  $region18: #{multi_scale_forward.15} parent=0 // pred_check
    _
  $region19: #{multi_scale_forward.15} parent=0 // pred_check_branch
    %1865 = sbr.rel (0) target = $region21
  $region20: #{multi_scale_forward.15} parent=0 // pred_region
    _
  $region21: #{multi_scale_forward.15} parent=0 // pred_fallthru
    _
  // Predicated region
  $region22: #{multi_scale_forward.15} parent=0 // pred_check
    _
  $region23: #{multi_scale_forward.15} parent=0 // pred_check_branch
    %1867 = sbr.rel (0) target = $region25
  $region24: #{multi_scale_forward.15} parent=0 // pred_region
    _
  $region25: #{multi_scale_forward.15} parent=0 // pred_fallthru
    _

// kernel: multi_scale_forward.16
$region0: #{multi_scale_forward.16}
  #allocation0 [shape = 'u32[]', space=smem, size = 0x4, offset = 0x4, fixed_abs, tag = 'smem constant byte address 0x4 - core index']
  #allocation1 [shape = 'u32[144,128]{1,0:T(1,128)}', space=vmem, size = 0x12000, scoped, tag = 'internal scratch']
  %s0 = inlined_call_operand.vmem [shape: f32[16,128], index: 0, kind: input, shape index: {}]
  %s1 = inlined_call_operand.vmem [shape: f32[128,1152], index: 1, kind: input, shape index: {}]
  %s2 = inlined_call_operand.vmem [shape: f32[16,1], index: 2, kind: input, shape index: {}]
  %s3 = inlined_call_operand.vmem [shape: f32[16,1], index: 3, kind: input, shape index: {}]
  %s4 = inlined_call_operand.vmem [shape: f32[16,1152], index: 4, kind: output, shape index: {}]
  %s5 = sld [smem:[#allocation0]]
  $region26: #{multi_scale_forward.16} parent=0
    _
  %s7 = ssub.s32 1, %s5
  %s8 = scalar_select 0, %s7, %s5
  // Predicated region
  $region2: #{multi_scale_forward.16} parent=0 // pred_check
    _
  $region3: #{multi_scale_forward.16} parent=0 // pred_check_branch
    %10 = sbr.rel (0) target = $region5
  $region4: #{multi_scale_forward.16} parent=0 // pred_region
    _
  $region5: #{multi_scale_forward.16} parent=0 // pred_fallthru
    _
  // Predicated region
  $region6: #{multi_scale_forward.16} parent=0 // pred_check
    _
  $region7: #{multi_scale_forward.16} parent=0 // pred_check_branch
    %12 = sbr.rel (0) target = $region9
  $region8: #{multi_scale_forward.16} parent=0 // pred_region
    _
  $region9: #{multi_scale_forward.16} parent=0 // pred_fallthru
    _
  // Predicated region
  $region10: #{multi_scale_forward.16} parent=0 // pred_check
    _
  $region11: #{multi_scale_forward.16} parent=0 // pred_check_branch
    %14 = sbr.rel (0) target = $region13
  $region12: #{multi_scale_forward.16} parent=0 // pred_region
    _
  $region13: #{multi_scale_forward.16} parent=0 // pred_fallthru
    _
  // Predicated region
  $region14: #{multi_scale_forward.16} parent=0 // pred_check
    _
  $region15: #{multi_scale_forward.16} parent=0 // pred_check_branch
    %16 = sbr.rel (0) target = $region17
  $region16: #{multi_scale_forward.16} parent=0 // pred_region
    _
  $region17: #{multi_scale_forward.16} parent=0 // pred_fallthru
    _
  %v17 = vld [vmem:[%s0] sm:$0xff]
  %v18 = vld [vmem:[%s0 + $0x8] sm:$0xff]
  %v19 = vld [vmem:[%s1] sm:$0xff]
  %v20 = vld [vmem:[%s1 + $0x8] sm:$0xff]
  %v21 = vld [vmem:[%s1 + $0x10] sm:$0xff]
  %v22 = vld [vmem:[%s1 + $0x18] sm:$0xff]
  %v23 = vld [vmem:[%s1 + $0x20] sm:$0xff]
  %v24 = vld [vmem:[%s1 + $0x28] sm:$0xff]
  %v25 = vld [vmem:[%s1 + $0x30] sm:$0xff]
  %v26 = vld [vmem:[%s1 + $0x38] sm:$0xff]
  %v27 = vld [vmem:[%s1 + $0x40] sm:$0xff]
  %v28 = vld [vmem:[%s1 + $0x48] sm:$0xff]
  %v29 = vld [vmem:[%s1 + $0x50] sm:$0xff]
  %v30 = vld [vmem:[%s1 + $0x58] sm:$0xff]
  %v31 = vld [vmem:[%s1 + $0x60] sm:$0xff]
  %v32 = vld [vmem:[%s1 + $0x68] sm:$0xff]
  %v33 = vld [vmem:[%s1 + $0x70] sm:$0xff]
  %v34 = vld [vmem:[%s1 + $0x78] sm:$0xff]
  %v35 = vld [vmem:[%s1 + $0x80] sm:$0xff]
  %v36 = vld [vmem:[%s1 + $0x88] sm:$0xff]
  %v37 = vld [vmem:[%s1 + $0x90] sm:$0xff]
  %v38 = vld [vmem:[%s1 + $0x98] sm:$0xff]
  %v39 = vld [vmem:[%s1 + $0xa0] sm:$0xff]
  %v40 = vld [vmem:[%s1 + $0xa8] sm:$0xff]
  %v41 = vld [vmem:[%s1 + $0xb0] sm:$0xff]
  %v42 = vld [vmem:[%s1 + $0xb8] sm:$0xff]
  %v43 = vld [vmem:[%s1 + $0xc0] sm:$0xff]
  %v44 = vld [vmem:[%s1 + $0xc8] sm:$0xff]
  %v45 = vld [vmem:[%s1 + $0xd0] sm:$0xff]
  %v46 = vld [vmem:[%s1 + $0xd8] sm:$0xff]
  %v47 = vld [vmem:[%s1 + $0xe0] sm:$0xff]
  %v48 = vld [vmem:[%s1 + $0xe8] sm:$0xff]
  %v49 = vld [vmem:[%s1 + $0xf0] sm:$0xff]
  %v50 = vld [vmem:[%s1 + $0xf8] sm:$0xff]
  %v51 = vld [vmem:[%s1 + $0x100] sm:$0xff]
  %v52 = vld [vmem:[%s1 + $0x108] sm:$0xff]
  %v53 = vld [vmem:[%s1 + $0x110] sm:$0xff]
  %v54 = vld [vmem:[%s1 + $0x118] sm:$0xff]
  %v55 = vld [vmem:[%s1 + $0x120] sm:$0xff]
  %v56 = vld [vmem:[%s1 + $0x128] sm:$0xff]
  %v57 = vld [vmem:[%s1 + $0x130] sm:$0xff]
  %v58 = vld [vmem:[%s1 + $0x138] sm:$0xff]
  %v59 = vld [vmem:[%s1 + $0x140] sm:$0xff]
  %v60 = vld [vmem:[%s1 + $0x148] sm:$0xff]
  %v61 = vld [vmem:[%s1 + $0x150] sm:$0xff]
  %v62 = vld [vmem:[%s1 + $0x158] sm:$0xff]
  %v63 = vld [vmem:[%s1 + $0x160] sm:$0xff]
  %v64 = vld [vmem:[%s1 + $0x168] sm:$0xff]
  %v65 = vld [vmem:[%s1 + $0x170] sm:$0xff]
  %v66 = vld [vmem:[%s1 + $0x178] sm:$0xff]
  %v67 = vld [vmem:[%s1 + $0x180] sm:$0xff]
  %v68 = vld [vmem:[%s1 + $0x188] sm:$0xff]
  %v69 = vld [vmem:[%s1 + $0x190] sm:$0xff]
  %v70 = vld [vmem:[%s1 + $0x198] sm:$0xff]
  %v71 = vld [vmem:[%s1 + $0x1a0] sm:$0xff]
  %v72 = vld [vmem:[%s1 + $0x1a8] sm:$0xff]
  %v73 = vld [vmem:[%s1 + $0x1b0] sm:$0xff]
  %v74 = vld [vmem:[%s1 + $0x1b8] sm:$0xff]
  %v75 = vld [vmem:[%s1 + $0x1c0] sm:$0xff]
  %v76 = vld [vmem:[%s1 + $0x1c8] sm:$0xff]
  %v77 = vld [vmem:[%s1 + $0x1d0] sm:$0xff]
  %v78 = vld [vmem:[%s1 + $0x1d8] sm:$0xff]
  %v79 = vld [vmem:[%s1 + $0x1e0] sm:$0xff]
  %v80 = vld [vmem:[%s1 + $0x1e8] sm:$0xff]
  %v81 = vld [vmem:[%s1 + $0x1f0] sm:$0xff]
  %v82 = vld [vmem:[%s1 + $0x1f8] sm:$0xff]
  %v83 = vld [vmem:[%s1 + $0x200] sm:$0xff]
  %v84 = vld [vmem:[%s1 + $0x208] sm:$0xff]
  %v85 = vld [vmem:[%s1 + $0x210] sm:$0xff]
  %v86 = vld [vmem:[%s1 + $0x218] sm:$0xff]
  %v87 = vld [vmem:[%s1 + $0x220] sm:$0xff]
  %v88 = vld [vmem:[%s1 + $0x228] sm:$0xff]
  %v89 = vld [vmem:[%s1 + $0x230] sm:$0xff]
  %v90 = vld [vmem:[%s1 + $0x238] sm:$0xff]
  %v91 = vld [vmem:[%s1 + $0x240] sm:$0xff]
  %v92 = vld [vmem:[%s1 + $0x248] sm:$0xff]
  %v93 = vld [vmem:[%s1 + $0x250] sm:$0xff]
  %v94 = vld [vmem:[%s1 + $0x258] sm:$0xff]
  %v95 = vld [vmem:[%s1 + $0x260] sm:$0xff]
  %v96 = vld [vmem:[%s1 + $0x268] sm:$0xff]
  %v97 = vld [vmem:[%s1 + $0x270] sm:$0xff]
  %v98 = vld [vmem:[%s1 + $0x278] sm:$0xff]
  %v99 = vld [vmem:[%s1 + $0x280] sm:$0xff]
  %v100 = vld [vmem:[%s1 + $0x288] sm:$0xff]
  %v101 = vld [vmem:[%s1 + $0x290] sm:$0xff]
  %v102 = vld [vmem:[%s1 + $0x298] sm:$0xff]
  %v103 = vld [vmem:[%s1 + $0x2a0] sm:$0xff]
  %v104 = vld [vmem:[%s1 + $0x2a8] sm:$0xff]
  %v105 = vld [vmem:[%s1 + $0x2b0] sm:$0xff]
  %v106 = vld [vmem:[%s1 + $0x2b8] sm:$0xff]
  %v107 = vld [vmem:[%s1 + $0x2c0] sm:$0xff]
  %v108 = vld [vmem:[%s1 + $0x2c8] sm:$0xff]
  %v109 = vld [vmem:[%s1 + $0x2d0] sm:$0xff]
  %v110 = vld [vmem:[%s1 + $0x2d8] sm:$0xff]
  %v111 = vld [vmem:[%s1 + $0x2e0] sm:$0xff]
  %v112 = vld [vmem:[%s1 + $0x2e8] sm:$0xff]
  %v113 = vld [vmem:[%s1 + $0x2f0] sm:$0xff]
  %v114 = vld [vmem:[%s1 + $0x2f8] sm:$0xff]
  %v115 = vld [vmem:[%s1 + $0x300] sm:$0xff]
  %v116 = vld [vmem:[%s1 + $0x308] sm:$0xff]
  %v117 = vld [vmem:[%s1 + $0x310] sm:$0xff]
  %v118 = vld [vmem:[%s1 + $0x318] sm:$0xff]
  %v119 = vld [vmem:[%s1 + $0x320] sm:$0xff]
  %v120 = vld [vmem:[%s1 + $0x328] sm:$0xff]
  %v121 = vld [vmem:[%s1 + $0x330] sm:$0xff]
  %v122 = vld [vmem:[%s1 + $0x338] sm:$0xff]
  %v123 = vld [vmem:[%s1 + $0x340] sm:$0xff]
  %v124 = vld [vmem:[%s1 + $0x348] sm:$0xff]
  %v125 = vld [vmem:[%s1 + $0x350] sm:$0xff]
  %v126 = vld [vmem:[%s1 + $0x358] sm:$0xff]
  %v127 = vld [vmem:[%s1 + $0x360] sm:$0xff]
  %v128 = vld [vmem:[%s1 + $0x368] sm:$0xff]
  %v129 = vld [vmem:[%s1 + $0x370] sm:$0xff]
  %v130 = vld [vmem:[%s1 + $0x378] sm:$0xff]
  %v131 = vld [vmem:[%s1 + $0x380] sm:$0xff]
  %v132 = vld [vmem:[%s1 + $0x388] sm:$0xff]
  %v133 = vld [vmem:[%s1 + $0x390] sm:$0xff]
  %v134 = vld [vmem:[%s1 + $0x398] sm:$0xff]
  %v135 = vld [vmem:[%s1 + $0x3a0] sm:$0xff]
  %v136 = vld [vmem:[%s1 + $0x3a8] sm:$0xff]
  %v137 = vld [vmem:[%s1 + $0x3b0] sm:$0xff]
  %v138 = vld [vmem:[%s1 + $0x3b8] sm:$0xff]
  %v139 = vld [vmem:[%s1 + $0x3c0] sm:$0xff]
  %v140 = vld [vmem:[%s1 + $0x3c8] sm:$0xff]
  %v141 = vld [vmem:[%s1 + $0x3d0] sm:$0xff]
  %v142 = vld [vmem:[%s1 + $0x3d8] sm:$0xff]
  %v143 = vld [vmem:[%s1 + $0x3e0] sm:$0xff]
  %v144 = vld [vmem:[%s1 + $0x3e8] sm:$0xff]
  %v145 = vld [vmem:[%s1 + $0x3f0] sm:$0xff]
  %v146 = vld [vmem:[%s1 + $0x3f8] sm:$0xff]
  %v147 = vld [vmem:[%s1 + $0x400] sm:$0xff]
  %v148 = vld [vmem:[%s1 + $0x408] sm:$0xff]
  %v149 = vld [vmem:[%s1 + $0x410] sm:$0xff]
  %v150 = vld [vmem:[%s1 + $0x418] sm:$0xff]
  %v151 = vld [vmem:[%s1 + $0x420] sm:$0xff]
  %v152 = vld [vmem:[%s1 + $0x428] sm:$0xff]
  %v153 = vld [vmem:[%s1 + $0x430] sm:$0xff]
  %v154 = vld [vmem:[%s1 + $0x438] sm:$0xff]
  %v155 = vld [vmem:[%s1 + $0x440] sm:$0xff]
  %v156 = vld [vmem:[%s1 + $0x448] sm:$0xff]
  %v157 = vld [vmem:[%s1 + $0x450] sm:$0xff]
  %v158 = vld [vmem:[%s1 + $0x458] sm:$0xff]
  %v159 = vld [vmem:[%s1 + $0x460] sm:$0xff]
  %v160 = vld [vmem:[%s1 + $0x468] sm:$0xff]
  %v161 = vld [vmem:[%s1 + $0x470] sm:$0xff]
  %v162 = vld [vmem:[%s1 + $0x478] sm:$0xff]
  %163 = vmatprep.subr.mxu0 %v155
  %164 = vmatpush1.msra.mxu0 %v154
  %165 = vmatprep.subr.mxu0 %v146
  %166 = vmatpush1.msra.mxu0 %v145
  %167 = vmatprep.subr.mxu0 %v137
  %168 = vmatpush1.msra.mxu0 %v136
  %169 = vmatprep.subr.mxu0 %v128
  %170 = vmatpush1.msra.mxu0 %v127
  %171 = vmatprep.subr.mxu0 %v119
  %172 = vmatpush1.msra.mxu0 %v118
  %173 = vmatprep.subr.mxu0 %v110
  %174 = vmatpush1.msra.mxu0 %v109
  %175 = vmatprep.subr.mxu0 %v101
  %176 = vmatpush1.msra.mxu0 %v100
  %177 = vmatprep.subr.mxu0 %v92
  %178 = vmatpush1.msra.mxu0 %v91
  %179 = vmatprep.subr.mxu0 %v83
  %180 = vmatpush1.msra.mxu0 %v82
  %181 = vmatprep.subr.mxu0 %v74
  %182 = vmatpush1.msra.mxu0 %v73
  %183 = vmatprep.subr.mxu0 %v65
  %184 = vmatpush1.msra.mxu0 %v64
  %185 = vmatprep.subr.mxu0 %v56
  %186 = vmatpush1.msra.mxu0 %v55
  %187 = vmatprep.subr.mxu0 %v47
  %188 = vmatpush1.msra.mxu0 %v46
  %189 = vmatprep.subr.mxu0 %v38
  %190 = vmatpush1.msra.mxu0 %v37
  %191 = vmatprep.subr.mxu0 %v29
  %192 = vmatpush1.msra.mxu0 %v28
  %193 = vmatprep.subr.mxu0 %v20
  %194 = vmatpush1.msra.mxu0 %v19
  %195 = vmatprep.subr.mxu0 0.0
  %196 = vmatpush2.msra.mxu0 0.0
  %197 = vmatprep.subr.mxu0 0.0
  %198 = vmatpush2.msra.mxu0 0.0
  %199 = vmatprep.subr.mxu0 0.0
  %200 = vmatpush2.msra.mxu0 0.0
  %201 = vmatprep.subr.mxu0 0.0
  %202 = vmatpush2.msra.mxu0 0.0
  %203 = vmatprep.subr.mxu0 0.0
  %204 = vmatpush2.msra.mxu0 0.0
  %205 = vmatprep.subr.mxu0 0.0
  %206 = vmatpush2.msra.mxu0 0.0
  %207 = vmatprep.subr.mxu0 0.0
  %208 = vmatpush2.msra.mxu0 0.0
  %209 = vmatprep.subr.mxu0 0.0
  %210 = vmatpush2.msra.mxu0 0.0
  %211 = vmatprep.subr.mxu0 0.0
  %212 = vmatpush2.msra.mxu0 0.0
  %213 = vmatprep.subr.mxu0 0.0
  %214 = vmatpush2.msra.mxu0 0.0
  %215 = vmatprep.subr.mxu0 0.0
  %216 = vmatpush2.msra.mxu0 0.0
  %217 = vmatprep.subr.mxu0 0.0
  %218 = vmatpush2.msra.mxu0 0.0
  %219 = vmatprep.subr.mxu0 0.0
  %220 = vmatpush2.msra.mxu0 0.0
  %221 = vmatprep.subr.mxu0 0.0
  %222 = vmatpush2.msra.mxu0 0.0
  %223 = vmatprep.subr.mxu0 0.0
  %224 = vmatpush2.msra.mxu0 0.0
  %225 = vmatprep.subr.mxu0 0.0
  %226 = vmatpush2.msra.mxu0 0.0
  %227 = vmatprep.mubr.f32.mxu0 0.0
  %228 = vmatmul.mubr.f32.gmra.mxu0 %v17
  %v229 = vpop.f32.mrf.mxu0
  %v230 = vadd.f32 0.0, %v229
  %v231 = vpop.f32.mrf.mxu0
  %v232 = vadd.f32 0.0, %v231
  %233 = vmatprep.mubr.f32.mxu0 0.0
  %234 = vmatmul.mubr.f32.gmra.mxu0 %v18
  %v235 = vpop.f32.mrf.mxu0
  %v236 = vadd.f32 0.0, %v235
  %v237 = vpop.f32.mrf.mxu0
  %v238 = vadd.f32 0.0, %v237
  %239 = vdwg.mxu0
  %240 = vmatprep.subr.mxu0 %v157
  %241 = vmatpush1.msra.mxu0 %v156
  %242 = vmatprep.subr.mxu0 %v148
  %243 = vmatpush1.msra.mxu0 %v147
  %244 = vmatprep.subr.mxu0 %v139
  %245 = vmatpush1.msra.mxu0 %v138
  %246 = vmatprep.subr.mxu0 %v130
  %247 = vmatpush1.msra.mxu0 %v129
  %248 = vmatprep.subr.mxu0 %v121
  %249 = vmatpush1.msra.mxu0 %v120
  %250 = vmatprep.subr.mxu0 %v112
  %251 = vmatpush1.msra.mxu0 %v111
  %252 = vmatprep.subr.mxu0 %v103
  %253 = vmatpush1.msra.mxu0 %v102
  %254 = vmatprep.subr.mxu0 %v94
  %255 = vmatpush1.msra.mxu0 %v93
  %256 = vmatprep.subr.mxu0 %v85
  %257 = vmatpush1.msra.mxu0 %v84
  %258 = vmatprep.subr.mxu0 %v76
  %259 = vmatpush1.msra.mxu0 %v75
  %260 = vmatprep.subr.mxu0 %v67
  %261 = vmatpush1.msra.mxu0 %v66
  %262 = vmatprep.subr.mxu0 %v58
  %263 = vmatpush1.msra.mxu0 %v57
  %264 = vmatprep.subr.mxu0 %v49
  %265 = vmatpush1.msra.mxu0 %v48
  %266 = vmatprep.subr.mxu0 %v40
  %267 = vmatpush1.msra.mxu0 %v39
  %268 = vmatprep.subr.mxu0 %v31
  %269 = vmatpush1.msra.mxu0 %v30
  %270 = vmatprep.subr.mxu0 %v22
  %271 = vmatpush1.msra.mxu0 %v21
  %272 = vmatprep.subr.mxu0 0.0
  %273 = vmatpush2.msra.mxu0 0.0
  %274 = vmatprep.subr.mxu0 0.0
  %275 = vmatpush2.msra.mxu0 0.0
  %276 = vmatprep.subr.mxu0 0.0
  %277 = vmatpush2.msra.mxu0 0.0
  %278 = vmatprep.subr.mxu0 0.0
  %279 = vmatpush2.msra.mxu0 0.0
  %280 = vmatprep.subr.mxu0 0.0
  %281 = vmatpush2.msra.mxu0 0.0
  %282 = vmatprep.subr.mxu0 0.0
  %283 = vmatpush2.msra.mxu0 0.0
  %284 = vmatprep.subr.mxu0 0.0
  %285 = vmatpush2.msra.mxu0 0.0
  %286 = vmatprep.subr.mxu0 0.0
  %287 = vmatpush2.msra.mxu0 0.0
  %288 = vmatprep.subr.mxu0 0.0
  %289 = vmatpush2.msra.mxu0 0.0
  %290 = vmatprep.subr.mxu0 0.0
  %291 = vmatpush2.msra.mxu0 0.0
  %292 = vmatprep.subr.mxu0 0.0
  %293 = vmatpush2.msra.mxu0 0.0
  %294 = vmatprep.subr.mxu0 0.0
  %295 = vmatpush2.msra.mxu0 0.0
  %296 = vmatprep.subr.mxu0 0.0
  %297 = vmatpush2.msra.mxu0 0.0
  %298 = vmatprep.subr.mxu0 0.0
  %299 = vmatpush2.msra.mxu0 0.0
  %300 = vmatprep.subr.mxu0 0.0
  %301 = vmatpush2.msra.mxu0 0.0
  %302 = vmatprep.subr.mxu0 0.0
  %303 = vmatpush2.msra.mxu0 0.0
  %304 = vmatprep.mubr.f32.mxu0 0.0
  %305 = vmatmul.mubr.f32.gmra.mxu0 %v17
  %v306 = vpop.f32.mrf.mxu0
  %v307 = vadd.f32 0.0, %v306
  %v308 = vpop.f32.mrf.mxu0
  %v309 = vadd.f32 0.0, %v308
  %310 = vmatprep.mubr.f32.mxu0 0.0
  %311 = vmatmul.mubr.f32.gmra.mxu0 %v18
  %v312 = vpop.f32.mrf.mxu0
  %v313 = vadd.f32 0.0, %v312
  %v314 = vpop.f32.mrf.mxu0
  %v315 = vadd.f32 0.0, %v314
  %316 = vdwg.mxu0
  %317 = vmatprep.subr.mxu0 %v159
  %318 = vmatpush1.msra.mxu0 %v158
  %319 = vmatprep.subr.mxu0 %v150
  %320 = vmatpush1.msra.mxu0 %v149
  %321 = vmatprep.subr.mxu0 %v141
  %322 = vmatpush1.msra.mxu0 %v140
  %323 = vmatprep.subr.mxu0 %v132
  %324 = vmatpush1.msra.mxu0 %v131
  %325 = vmatprep.subr.mxu0 %v123
  %326 = vmatpush1.msra.mxu0 %v122
  %327 = vmatprep.subr.mxu0 %v114
  %328 = vmatpush1.msra.mxu0 %v113
  %329 = vmatprep.subr.mxu0 %v105
  %330 = vmatpush1.msra.mxu0 %v104
  %331 = vmatprep.subr.mxu0 %v96
  %332 = vmatpush1.msra.mxu0 %v95
  %333 = vmatprep.subr.mxu0 %v87
  %334 = vmatpush1.msra.mxu0 %v86
  %335 = vmatprep.subr.mxu0 %v78
  %336 = vmatpush1.msra.mxu0 %v77
  %337 = vmatprep.subr.mxu0 %v69
  %338 = vmatpush1.msra.mxu0 %v68
  %339 = vmatprep.subr.mxu0 %v60
  %340 = vmatpush1.msra.mxu0 %v59
  %341 = vmatprep.subr.mxu0 %v51
  %342 = vmatpush1.msra.mxu0 %v50
  %343 = vmatprep.subr.mxu0 %v42
  %344 = vmatpush1.msra.mxu0 %v41
  %345 = vmatprep.subr.mxu0 %v33
  %346 = vmatpush1.msra.mxu0 %v32
  %347 = vmatprep.subr.mxu0 %v24
  %348 = vmatpush1.msra.mxu0 %v23
  %349 = vmatprep.subr.mxu0 0.0
  %350 = vmatpush2.msra.mxu0 0.0
  %351 = vmatprep.subr.mxu0 0.0
  %352 = vmatpush2.msra.mxu0 0.0
  %353 = vmatprep.subr.mxu0 0.0
  %354 = vmatpush2.msra.mxu0 0.0
  %355 = vmatprep.subr.mxu0 0.0
  %356 = vmatpush2.msra.mxu0 0.0
  %357 = vmatprep.subr.mxu0 0.0
  %358 = vmatpush2.msra.mxu0 0.0
  %359 = vmatprep.subr.mxu0 0.0
  %360 = vmatpush2.msra.mxu0 0.0
  %361 = vmatprep.subr.mxu0 0.0
  %362 = vmatpush2.msra.mxu0 0.0
  %363 = vmatprep.subr.mxu0 0.0
  %364 = vmatpush2.msra.mxu0 0.0
  %365 = vmatprep.subr.mxu0 0.0
  %366 = vmatpush2.msra.mxu0 0.0
  %367 = vmatprep.subr.mxu0 0.0
  %368 = vmatpush2.msra.mxu0 0.0
  %369 = vmatprep.subr.mxu0 0.0
  %370 = vmatpush2.msra.mxu0 0.0
  %371 = vmatprep.subr.mxu0 0.0
  %372 = vmatpush2.msra.mxu0 0.0
  %373 = vmatprep.subr.mxu0 0.0
  %374 = vmatpush2.msra.mxu0 0.0
  %375 = vmatprep.subr.mxu0 0.0
  %376 = vmatpush2.msra.mxu0 0.0
  %377 = vmatprep.subr.mxu0 0.0
  %378 = vmatpush2.msra.mxu0 0.0
  %379 = vmatprep.subr.mxu0 0.0
  %380 = vmatpush2.msra.mxu0 0.0
  %381 = vmatprep.mubr.f32.mxu0 0.0
  %382 = vmatmul.mubr.f32.gmra.mxu0 %v17
  %v383 = vpop.f32.mrf.mxu0
  %v384 = vadd.f32 0.0, %v383
  %v385 = vpop.f32.mrf.mxu0
  %v386 = vadd.f32 0.0, %v385
  %387 = vmatprep.mubr.f32.mxu0 0.0
  %388 = vmatmul.mubr.f32.gmra.mxu0 %v18
  %v389 = vpop.f32.mrf.mxu0
  %v390 = vadd.f32 0.0, %v389
  %v391 = vpop.f32.mrf.mxu0
  %v392 = vadd.f32 0.0, %v391
  %393 = vdwg.mxu0
  %394 = vmatprep.subr.mxu0 %v161
  %395 = vmatpush1.msra.mxu0 %v160
  %396 = vmatprep.subr.mxu0 %v152
  %397 = vmatpush1.msra.mxu0 %v151
  %398 = vmatprep.subr.mxu0 %v143
  %399 = vmatpush1.msra.mxu0 %v142
  %400 = vmatprep.subr.mxu0 %v134
  %401 = vmatpush1.msra.mxu0 %v133
  %402 = vmatprep.subr.mxu0 %v125
  %403 = vmatpush1.msra.mxu0 %v124
  %404 = vmatprep.subr.mxu0 %v116
  %405 = vmatpush1.msra.mxu0 %v115
  %406 = vmatprep.subr.mxu0 %v107
  %407 = vmatpush1.msra.mxu0 %v106
  %408 = vmatprep.subr.mxu0 %v98
  %409 = vmatpush1.msra.mxu0 %v97
  %410 = vmatprep.subr.mxu0 %v89
  %411 = vmatpush1.msra.mxu0 %v88
  %412 = vmatprep.subr.mxu0 %v80
  %413 = vmatpush1.msra.mxu0 %v79
  %414 = vmatprep.subr.mxu0 %v71
  %415 = vmatpush1.msra.mxu0 %v70
  %416 = vmatprep.subr.mxu0 %v62
  %417 = vmatpush1.msra.mxu0 %v61
  %418 = vmatprep.subr.mxu0 %v53
  %419 = vmatpush1.msra.mxu0 %v52
  %420 = vmatprep.subr.mxu0 %v44
  %421 = vmatpush1.msra.mxu0 %v43
  %422 = vmatprep.subr.mxu0 %v35
  %423 = vmatpush1.msra.mxu0 %v34
  %424 = vmatprep.subr.mxu0 %v26
  %425 = vmatpush1.msra.mxu0 %v25
  %426 = vmatprep.subr.mxu0 0.0
  %427 = vmatpush2.msra.mxu0 0.0
  %428 = vmatprep.subr.mxu0 0.0
  %429 = vmatpush2.msra.mxu0 0.0
  %430 = vmatprep.subr.mxu0 0.0
  %431 = vmatpush2.msra.mxu0 0.0
  %432 = vmatprep.subr.mxu0 0.0
  %433 = vmatpush2.msra.mxu0 0.0
  %434 = vmatprep.subr.mxu0 0.0
  %435 = vmatpush2.msra.mxu0 0.0
  %436 = vmatprep.subr.mxu0 0.0
  %437 = vmatpush2.msra.mxu0 0.0
  %438 = vmatprep.subr.mxu0 0.0
  %439 = vmatpush2.msra.mxu0 0.0
  %440 = vmatprep.subr.mxu0 0.0
  %441 = vmatpush2.msra.mxu0 0.0
  %442 = vmatprep.subr.mxu0 0.0
  %443 = vmatpush2.msra.mxu0 0.0
  %444 = vmatprep.subr.mxu0 0.0
  %445 = vmatpush2.msra.mxu0 0.0
  %446 = vmatprep.subr.mxu0 0.0
  %447 = vmatpush2.msra.mxu0 0.0
  %448 = vmatprep.subr.mxu0 0.0
  %449 = vmatpush2.msra.mxu0 0.0
  %450 = vmatprep.subr.mxu0 0.0
  %451 = vmatpush2.msra.mxu0 0.0
  %452 = vmatprep.subr.mxu0 0.0
  %453 = vmatpush2.msra.mxu0 0.0
  %454 = vmatprep.subr.mxu0 0.0
  %455 = vmatpush2.msra.mxu0 0.0
  %456 = vmatprep.subr.mxu0 0.0
  %457 = vmatpush2.msra.mxu0 0.0
  %458 = vmatprep.mubr.f32.mxu0 0.0
  %459 = vmatmul.mubr.f32.gmra.mxu0 %v17
  %v460 = vpop.f32.mrf.mxu0
  %v461 = vadd.f32 0.0, %v460
  %v462 = vpop.f32.mrf.mxu0
  %v463 = vadd.f32 0.0, %v462
  %464 = vmatprep.mubr.f32.mxu0 0.0
  %465 = vmatmul.mubr.f32.gmra.mxu0 %v18
  %v466 = vpop.f32.mrf.mxu0
  %v467 = vadd.f32 0.0, %v466
  %v468 = vpop.f32.mrf.mxu0
  %v469 = vadd.f32 0.0, %v468
  %470 = vdwg.mxu0
  %471 = vmatprep.subr.mxu0 0.0
  %472 = vmatpush1.msra.mxu0 %v162
  %473 = vmatprep.subr.mxu0 0.0
  %474 = vmatpush1.msra.mxu0 %v153
  %475 = vmatprep.subr.mxu0 0.0
  %476 = vmatpush1.msra.mxu0 %v144
  %477 = vmatprep.subr.mxu0 0.0
  %478 = vmatpush1.msra.mxu0 %v135
  %479 = vmatprep.subr.mxu0 0.0
  %480 = vmatpush1.msra.mxu0 %v126
  %481 = vmatprep.subr.mxu0 0.0
  %482 = vmatpush1.msra.mxu0 %v117
  %483 = vmatprep.subr.mxu0 0.0
  %484 = vmatpush1.msra.mxu0 %v108
  %485 = vmatprep.subr.mxu0 0.0
  %486 = vmatpush1.msra.mxu0 %v99
  %487 = vmatprep.subr.mxu0 0.0
  %488 = vmatpush1.msra.mxu0 %v90
  %489 = vmatprep.subr.mxu0 0.0
  %490 = vmatpush1.msra.mxu0 %v81
  %491 = vmatprep.subr.mxu0 0.0
  %492 = vmatpush1.msra.mxu0 %v72
  %493 = vmatprep.subr.mxu0 0.0
  %494 = vmatpush1.msra.mxu0 %v63
  %495 = vmatprep.subr.mxu0 0.0
  %496 = vmatpush1.msra.mxu0 %v54
  %497 = vmatprep.subr.mxu0 0.0
  %498 = vmatpush1.msra.mxu0 %v45
  %499 = vmatprep.subr.mxu0 0.0
  %500 = vmatpush1.msra.mxu0 %v36
  %501 = vmatprep.subr.mxu0 0.0
  %502 = vmatpush1.msra.mxu0 %v27
  %503 = vmatprep.subr.mxu0 0.0
  %504 = vmatpush2.msra.mxu0 0.0
  %505 = vmatprep.subr.mxu0 0.0
  %506 = vmatpush2.msra.mxu0 0.0
  %507 = vmatprep.subr.mxu0 0.0
  %508 = vmatpush2.msra.mxu0 0.0
  %509 = vmatprep.subr.mxu0 0.0
  %510 = vmatpush2.msra.mxu0 0.0
  %511 = vmatprep.subr.mxu0 0.0
  %512 = vmatpush2.msra.mxu0 0.0
  %513 = vmatprep.subr.mxu0 0.0
  %514 = vmatpush2.msra.mxu0 0.0
  %515 = vmatprep.subr.mxu0 0.0
  %516 = vmatpush2.msra.mxu0 0.0
  %517 = vmatprep.subr.mxu0 0.0
  %518 = vmatpush2.msra.mxu0 0.0
  %519 = vmatprep.subr.mxu0 0.0
  %520 = vmatpush2.msra.mxu0 0.0
  %521 = vmatprep.subr.mxu0 0.0
  %522 = vmatpush2.msra.mxu0 0.0
  %523 = vmatprep.subr.mxu0 0.0
  %524 = vmatpush2.msra.mxu0 0.0
  %525 = vmatprep.subr.mxu0 0.0
  %526 = vmatpush2.msra.mxu0 0.0
  %527 = vmatprep.subr.mxu0 0.0
  %528 = vmatpush2.msra.mxu0 0.0
  %529 = vmatprep.subr.mxu0 0.0
  %530 = vmatpush2.msra.mxu0 0.0
  %531 = vmatprep.subr.mxu0 0.0
  %532 = vmatpush2.msra.mxu0 0.0
  %533 = vmatprep.subr.mxu0 0.0
  %534 = vmatpush2.msra.mxu0 0.0
  %535 = vmatprep.mubr.f32.mxu0 0.0
  %536 = vmatmul.mubr.f32.gmra.mxu0 %v17
  %v537 = vpop.f32.mrf.mxu0
  %v538 = vadd.f32 0.0, %v537
  %v539 = vpop.f32.mrf.mxu0
  %540 = vmatprep.mubr.f32.mxu0 0.0
  %541 = vmatmul.mubr.f32.gmra.mxu0 %v18
  %v542 = vpop.f32.mrf.mxu0
  %v543 = vadd.f32 0.0, %v542
  %v544 = vpop.f32.mrf.mxu0
  %545 = vdwg.mxu0
  %v546 = vadd.f32 %v230, %v232
  %v547 = vadd.f32 %v546, %v307
  %v548 = vadd.f32 %v547, %v309
  %v549 = vadd.f32 %v548, %v384
  %v550 = vadd.f32 %v549, %v386
  %v551 = vadd.f32 %v550, %v461
  %v552 = vadd.f32 %v551, %v463
  %v553 = vadd.f32 %v552, %v538
  %554 = vadd.xlane.f32.xlu0 %v553
  %v555 = vpop.xlane.xlu0 %554
  %v556 = vadd.f32 %v236, %v238
  %v557 = vadd.f32 %v556, %v313
  %v558 = vadd.f32 %v557, %v315
  %v559 = vadd.f32 %v558, %v390
  %v560 = vadd.f32 %v559, %v392
  %v561 = vadd.f32 %v560, %v467
  %v562 = vadd.f32 %v561, %v469
  %v563 = vadd.f32 %v562, %v543
  %564 = vadd.xlane.f32.xlu0 %v563
  %v565 = vpop.xlane.xlu0 %564
  %v566 = vmul.f32 %v230, %v230
  %v567 = vmul.f32 %v232, %v232
  %v568 = vmul.f32 %v307, %v307
  %v569 = vmul.f32 %v309, %v309
  %v570 = vmul.f32 %v384, %v384
  %v571 = vmul.f32 %v386, %v386
  %v572 = vmul.f32 %v461, %v461
  %v573 = vmul.f32 %v463, %v463
  %v574 = vmul.f32 %v538, %v538
  %v575 = vmul.f32 %v236, %v236
  %v576 = vmul.f32 %v238, %v238
  %v577 = vmul.f32 %v313, %v313
  %v578 = vmul.f32 %v315, %v315
  %v579 = vmul.f32 %v390, %v390
  %v580 = vmul.f32 %v392, %v392
  %v581 = vmul.f32 %v467, %v467
  %v582 = vmul.f32 %v469, %v469
  %v583 = vmul.f32 %v543, %v543
  %v584 = vadd.f32 %v566, %v567
  %v585 = vadd.f32 %v584, %v568
  %v586 = vadd.f32 %v585, %v569
  %v587 = vadd.f32 %v586, %v570
  %v588 = vadd.f32 %v587, %v571
  %v589 = vadd.f32 %v588, %v572
  %v590 = vadd.f32 %v589, %v573
  %v591 = vadd.f32 %v590, %v574
  %592 = vadd.xlane.f32.xlu0 %v591
  %v593 = vpop.xlane.xlu0 %592
  %v594 = vadd.f32 %v575, %v576
  %v595 = vadd.f32 %v594, %v577
  %v596 = vadd.f32 %v595, %v578
  %v597 = vadd.f32 %v596, %v579
  %v598 = vadd.f32 %v597, %v580
  %v599 = vadd.f32 %v598, %v581
  %v600 = vadd.f32 %v599, %v582
  %v601 = vadd.f32 %v600, %v583
  %602 = vadd.xlane.f32.xlu0 %v601
  %v603 = vpop.xlane.xlu0 %602
  %v604 = vmul.f32 %v555, 0.00086805556
  %v605 = vmul.f32 %v565, 0.00086805556
  %v606 = vmul.f32 %v593, 0.00086805556
  %v607 = vmul.f32 %v603, 0.00086805556
  %v608 = vmul.f32 %v604, %v604
  %v609 = vmul.f32 %v605, %v605
  %v610 = vsub.f32 %v606, %v608
  %v611 = vsub.f32 %v607, %v609
  %v612 = vmax.f32 %v610, 0.0
  %v613 = vmax.f32 %v611, 0.0
  %v614 = vld [vmem:[%s2] sm:$0xff]
  %v615 = vld [vmem:[%s2 + $0x8] sm:$0xff]
  %v616 = vadd.f32 %v612, 1e-05
  %v617 = vadd.f32 %v613, 1e-05
  %v618 = vrsqrt.pop %v616
  %v619 = vrsqrt.pop %v617
  %v620 = vmul.f32 %v614, %v618
  %v621 = vmul.f32 %v615, %v619
  %v622 = vld [vmem:[%s3] sm:$0xff]
  %v623 = vld [vmem:[%s3 + $0x8] sm:$0xff]
  %v624 = vmul.f32 %v604, %v620
  %v625 = vmul.f32 %v605, %v621
  %v626 = vsub.f32 %v622, %v624
  %v627 = vsub.f32 %v623, %v625
  %629 = vset.pattern.permute.xlu0 0
  %630 = vperm.xlu0 %629, %v620
  %v631 = vpop.permute.xlu0 %630
  %634 = vset.pattern.permute.xlu0 0
  %635 = vperm.xlu0 %634, %v621
  %v636 = vpop.permute.xlu0 %635
  %v638 = vmul.f32 %v230, %v631
  %v639 = vmul.f32 %v232, %v631
  %v640 = vmul.f32 %v307, %v631
  %v641 = vmul.f32 %v309, %v631
  %v642 = vmul.f32 %v384, %v631
  %v643 = vmul.f32 %v386, %v631
  %v644 = vmul.f32 %v461, %v631
  %v645 = vmul.f32 %v463, %v631
  %v646 = vmul.f32 %v538, %v631
  %v647 = vmul.f32 %v236, %v636
  %v648 = vmul.f32 %v238, %v636
  %v649 = vmul.f32 %v313, %v636
  %v650 = vmul.f32 %v315, %v636
  %v651 = vmul.f32 %v390, %v636
  %v652 = vmul.f32 %v392, %v636
  %v653 = vmul.f32 %v467, %v636
  %v654 = vmul.f32 %v469, %v636
  %v655 = vmul.f32 %v543, %v636
  %657 = vset.pattern.permute.xlu0 0
  %658 = vperm.xlu0 %657, %v626
  %v659 = vpop.permute.xlu0 %658
  %662 = vset.pattern.permute.xlu0 0
  %663 = vperm.xlu0 %662, %v627
  %v664 = vpop.permute.xlu0 %663
  %v666 = vadd.f32 %v638, %v659
  %v667 = vadd.f32 %v639, %v659
  %v668 = vadd.f32 %v640, %v659
  %v669 = vadd.f32 %v641, %v659
  %v670 = vadd.f32 %v642, %v659
  %v671 = vadd.f32 %v643, %v659
  %v672 = vadd.f32 %v644, %v659
  %v673 = vadd.f32 %v645, %v659
  %v674 = vadd.f32 %v646, %v659
  %v675 = vadd.f32 %v647, %v664
  %v676 = vadd.f32 %v648, %v664
  %v677 = vadd.f32 %v649, %v664
  %v678 = vadd.f32 %v650, %v664
  %v679 = vadd.f32 %v651, %v664
  %v680 = vadd.f32 %v652, %v664
  %v681 = vadd.f32 %v653, %v664
  %v682 = vadd.f32 %v654, %v664
  %v683 = vadd.f32 %v655, %v664
  %vm684 = vcmp.ge.f32.partialorder %v666, 0.0
  %vm685 = vcmp.ge.f32.partialorder %v667, 0.0
  %vm686 = vcmp.ge.f32.partialorder %v668, 0.0
  %vm687 = vcmp.ge.f32.partialorder %v669, 0.0
  %vm688 = vcmp.ge.f32.partialorder %v670, 0.0
  %vm689 = vcmp.ge.f32.partialorder %v671, 0.0
  %vm690 = vcmp.ge.f32.partialorder %v672, 0.0
  %vm691 = vcmp.ge.f32.partialorder %v673, 0.0
  %vm692 = vcmp.ge.f32.partialorder %v674, 0.0
  %vm693 = vcmp.ge.f32.partialorder %v675, 0.0
  %vm694 = vcmp.ge.f32.partialorder %v676, 0.0
  %vm695 = vcmp.ge.f32.partialorder %v677, 0.0
  %vm696 = vcmp.ge.f32.partialorder %v678, 0.0
  %vm697 = vcmp.ge.f32.partialorder %v679, 0.0
  %vm698 = vcmp.ge.f32.partialorder %v680, 0.0
  %vm699 = vcmp.ge.f32.partialorder %v681, 0.0
  %vm700 = vcmp.ge.f32.partialorder %v682, 0.0
  %vm701 = vcmp.ge.f32.partialorder %v683, 0.0
  %v702 = vmul.f32 %v666, 0.2
  %v703 = vmul.f32 %v667, 0.2
  %v704 = vmul.f32 %v668, 0.2
  %v705 = vmul.f32 %v669, 0.2
  %v706 = vmul.f32 %v670, 0.2
  %v707 = vmul.f32 %v671, 0.2
  %v708 = vmul.f32 %v672, 0.2
  %v709 = vmul.f32 %v673, 0.2
  %v710 = vmul.f32 %v674, 0.2
  %v711 = vmul.f32 %v675, 0.2
  %v712 = vmul.f32 %v676, 0.2
  %v713 = vmul.f32 %v677, 0.2
  %v714 = vmul.f32 %v678, 0.2
  %v715 = vmul.f32 %v679, 0.2
  %v716 = vmul.f32 %v680, 0.2
  %v717 = vmul.f32 %v681, 0.2
  %v718 = vmul.f32 %v682, 0.2
  %v719 = vmul.f32 %v683, 0.2
  %v720 = vsel %vm684, %v666, %v702
  %v721 = vsel %vm685, %v667, %v703
  %v722 = vsel %vm686, %v668, %v704
  %v723 = vsel %vm687, %v669, %v705
  %v724 = vsel %vm688, %v670, %v706
  %v725 = vsel %vm689, %v671, %v707
  %v726 = vsel %vm690, %v672, %v708
  %v727 = vsel %vm691, %v673, %v709
  %v728 = vsel %vm692, %v674, %v710
  %v729 = vsel %vm693, %v675, %v711
  %v730 = vsel %vm694, %v676, %v712
  %v731 = vsel %vm695, %v677, %v713
  %v732 = vsel %vm696, %v678, %v714
  %v733 = vsel %vm697, %v679, %v715
  %v734 = vsel %vm698, %v680, %v716
  %v735 = vsel %vm699, %v681, %v717
  %v736 = vsel %vm700, %v682, %v718
  %v737 = vsel %vm701, %v683, %v719
  %738 = vst [vmem:[%s4] sm:$0xff] %v720
  %739 = vst [vmem:[%s4 + $0x8] sm:$0xff] %v721
  %740 = vst [vmem:[%s4 + $0x10] sm:$0xff] %v722
  %741 = vst [vmem:[%s4 + $0x18] sm:$0xff] %v723
  %742 = vst [vmem:[%s4 + $0x20] sm:$0xff] %v724
  %743 = vst [vmem:[%s4 + $0x28] sm:$0xff] %v725
  %744 = vst [vmem:[%s4 + $0x30] sm:$0xff] %v726
  %745 = vst [vmem:[%s4 + $0x38] sm:$0xff] %v727
  %746 = vst [vmem:[%s4 + $0x40] sm:$0xff] %v728
  %747 = vst [vmem:[%s4 + $0x48] sm:$0xff] %v729
  %748 = vst [vmem:[%s4 + $0x50] sm:$0xff] %v730
  %749 = vst [vmem:[%s4 + $0x58] sm:$0xff] %v731
  %750 = vst [vmem:[%s4 + $0x60] sm:$0xff] %v732
  %751 = vst [vmem:[%s4 + $0x68] sm:$0xff] %v733
  %752 = vst [vmem:[%s4 + $0x70] sm:$0xff] %v734
  %753 = vst [vmem:[%s4 + $0x78] sm:$0xff] %v735
  %754 = vst [vmem:[%s4 + $0x80] sm:$0xff] %v736
  %755 = vst [vmem:[%s4 + $0x88] sm:$0xff] %v737
  // Predicated region
  $region18: #{multi_scale_forward.16} parent=0 // pred_check
    _
  $region19: #{multi_scale_forward.16} parent=0 // pred_check_branch
    %757 = sbr.rel (0) target = $region21
  $region20: #{multi_scale_forward.16} parent=0 // pred_region
    _
  $region21: #{multi_scale_forward.16} parent=0 // pred_fallthru
    _
  // Predicated region
  $region22: #{multi_scale_forward.16} parent=0 // pred_check
    _
  $region23: #{multi_scale_forward.16} parent=0 // pred_check_branch
    %759 = sbr.rel (0) target = $region25
  $region24: #{multi_scale_forward.16} parent=0 // pred_region
    _
  $region25: #{multi_scale_forward.16} parent=0 // pred_fallthru
    _

// kernel: multi_scale_forward.17
$region0: #{multi_scale_forward.17}
  #allocation0 [shape = 'u32[]', space=smem, size = 0x4, offset = 0x4, fixed_abs, tag = 'smem constant byte address 0x4 - core index']
  #allocation1 [shape = 'u32[144,128]{1,0:T(1,128)}', space=vmem, size = 0x12000, scoped, tag = 'internal scratch']
  %s0 = inlined_call_operand.vmem [shape: f32[32,256], index: 0, kind: input, shape index: {}]
  %s1 = inlined_call_operand.vmem [shape: f32[256,384], index: 1, kind: input, shape index: {}]
  %s2 = inlined_call_operand.vmem [shape: f32[32,1], index: 2, kind: input, shape index: {}]
  %s3 = inlined_call_operand.vmem [shape: f32[32,1], index: 3, kind: input, shape index: {}]
  %s4 = inlined_call_operand.vmem [shape: f32[32,384], index: 4, kind: output, shape index: {}]
  %s5 = sld [smem:[#allocation0]]
  $region26: #{multi_scale_forward.17} parent=0
    _
  %s7 = ssub.s32 1, %s5
  %s8 = scalar_select 0, %s7, %s5
  // Predicated region
  $region2: #{multi_scale_forward.17} parent=0 // pred_check
    _
  $region3: #{multi_scale_forward.17} parent=0 // pred_check_branch
    %10 = sbr.rel (0) target = $region5
  $region4: #{multi_scale_forward.17} parent=0 // pred_region
    _
  $region5: #{multi_scale_forward.17} parent=0 // pred_fallthru
    _
  // Predicated region
  $region6: #{multi_scale_forward.17} parent=0 // pred_check
    _
  $region7: #{multi_scale_forward.17} parent=0 // pred_check_branch
    %12 = sbr.rel (0) target = $region9
  $region8: #{multi_scale_forward.17} parent=0 // pred_region
    _
  $region9: #{multi_scale_forward.17} parent=0 // pred_fallthru
    _
  // Predicated region
  $region10: #{multi_scale_forward.17} parent=0 // pred_check
    _
  $region11: #{multi_scale_forward.17} parent=0 // pred_check_branch
    %14 = sbr.rel (0) target = $region13
  $region12: #{multi_scale_forward.17} parent=0 // pred_region
    _
  $region13: #{multi_scale_forward.17} parent=0 // pred_fallthru
    _
  // Predicated region
  $region14: #{multi_scale_forward.17} parent=0 // pred_check
    _
  $region15: #{multi_scale_forward.17} parent=0 // pred_check_branch
    %16 = sbr.rel (0) target = $region17
  $region16: #{multi_scale_forward.17} parent=0 // pred_region
    _
  $region17: #{multi_scale_forward.17} parent=0 // pred_fallthru
    _
  %v17 = vld [vmem:[%s0] sm:$0xff]
  %v18 = vld [vmem:[%s0 + $0x8] sm:$0xff]
  %v19 = vld [vmem:[%s0 + $0x10] sm:$0xff]
  %v20 = vld [vmem:[%s0 + $0x18] sm:$0xff]
  %v21 = vld [vmem:[%s0 + $0x20] sm:$0xff]
  %v22 = vld [vmem:[%s0 + $0x28] sm:$0xff]
  %v23 = vld [vmem:[%s0 + $0x30] sm:$0xff]
  %v24 = vld [vmem:[%s0 + $0x38] sm:$0xff]
  %v25 = vld [vmem:[%s1] sm:$0xff]
  %v26 = vld [vmem:[%s1 + $0x8] sm:$0xff]
  %v27 = vld [vmem:[%s1 + $0x10] sm:$0xff]
  %v28 = vld [vmem:[%s1 + $0x18] sm:$0xff]
  %v29 = vld [vmem:[%s1 + $0x20] sm:$0xff]
  %v30 = vld [vmem:[%s1 + $0x28] sm:$0xff]
  %v31 = vld [vmem:[%s1 + $0x30] sm:$0xff]
  %v32 = vld [vmem:[%s1 + $0x38] sm:$0xff]
  %v33 = vld [vmem:[%s1 + $0x40] sm:$0xff]
  %v34 = vld [vmem:[%s1 + $0x48] sm:$0xff]
  %v35 = vld [vmem:[%s1 + $0x50] sm:$0xff]
  %v36 = vld [vmem:[%s1 + $0x58] sm:$0xff]
  %v37 = vld [vmem:[%s1 + $0x60] sm:$0xff]
  %v38 = vld [vmem:[%s1 + $0x68] sm:$0xff]
  %v39 = vld [vmem:[%s1 + $0x70] sm:$0xff]
  %v40 = vld [vmem:[%s1 + $0x78] sm:$0xff]
  %v41 = vld [vmem:[%s1 + $0x80] sm:$0xff]
  %v42 = vld [vmem:[%s1 + $0x88] sm:$0xff]
  %v43 = vld [vmem:[%s1 + $0x90] sm:$0xff]
  %v44 = vld [vmem:[%s1 + $0x98] sm:$0xff]
  %v45 = vld [vmem:[%s1 + $0xa0] sm:$0xff]
  %v46 = vld [vmem:[%s1 + $0xa8] sm:$0xff]
  %v47 = vld [vmem:[%s1 + $0xb0] sm:$0xff]
  %v48 = vld [vmem:[%s1 + $0xb8] sm:$0xff]
  %v49 = vld [vmem:[%s1 + $0xc0] sm:$0xff]
  %v50 = vld [vmem:[%s1 + $0xc8] sm:$0xff]
  %v51 = vld [vmem:[%s1 + $0xd0] sm:$0xff]
  %v52 = vld [vmem:[%s1 + $0xd8] sm:$0xff]
  %v53 = vld [vmem:[%s1 + $0xe0] sm:$0xff]
  %v54 = vld [vmem:[%s1 + $0xe8] sm:$0xff]
  %v55 = vld [vmem:[%s1 + $0xf0] sm:$0xff]
  %v56 = vld [vmem:[%s1 + $0xf8] sm:$0xff]
  %v57 = vld [vmem:[%s1 + $0x100] sm:$0xff]
  %v58 = vld [vmem:[%s1 + $0x108] sm:$0xff]
  %v59 = vld [vmem:[%s1 + $0x110] sm:$0xff]
  %v60 = vld [vmem:[%s1 + $0x118] sm:$0xff]
  %v61 = vld [vmem:[%s1 + $0x120] sm:$0xff]
  %v62 = vld [vmem:[%s1 + $0x128] sm:$0xff]
  %v63 = vld [vmem:[%s1 + $0x130] sm:$0xff]
  %v64 = vld [vmem:[%s1 + $0x138] sm:$0xff]
  %v65 = vld [vmem:[%s1 + $0x140] sm:$0xff]
  %v66 = vld [vmem:[%s1 + $0x148] sm:$0xff]
  %v67 = vld [vmem:[%s1 + $0x150] sm:$0xff]
  %v68 = vld [vmem:[%s1 + $0x158] sm:$0xff]
  %v69 = vld [vmem:[%s1 + $0x160] sm:$0xff]
  %v70 = vld [vmem:[%s1 + $0x168] sm:$0xff]
  %v71 = vld [vmem:[%s1 + $0x170] sm:$0xff]
  %v72 = vld [vmem:[%s1 + $0x178] sm:$0xff]
  %v73 = vld [vmem:[%s1 + $0x180] sm:$0xff]
  %v74 = vld [vmem:[%s1 + $0x188] sm:$0xff]
  %v75 = vld [vmem:[%s1 + $0x190] sm:$0xff]
  %v76 = vld [vmem:[%s1 + $0x198] sm:$0xff]
  %v77 = vld [vmem:[%s1 + $0x1a0] sm:$0xff]
  %v78 = vld [vmem:[%s1 + $0x1a8] sm:$0xff]
  %v79 = vld [vmem:[%s1 + $0x1b0] sm:$0xff]
  %v80 = vld [vmem:[%s1 + $0x1b8] sm:$0xff]
  %v81 = vld [vmem:[%s1 + $0x1c0] sm:$0xff]
  %v82 = vld [vmem:[%s1 + $0x1c8] sm:$0xff]
  %v83 = vld [vmem:[%s1 + $0x1d0] sm:$0xff]
  %v84 = vld [vmem:[%s1 + $0x1d8] sm:$0xff]
  %v85 = vld [vmem:[%s1 + $0x1e0] sm:$0xff]
  %v86 = vld [vmem:[%s1 + $0x1e8] sm:$0xff]
  %v87 = vld [vmem:[%s1 + $0x1f0] sm:$0xff]
  %v88 = vld [vmem:[%s1 + $0x1f8] sm:$0xff]
  %v89 = vld [vmem:[%s1 + $0x200] sm:$0xff]
  %v90 = vld [vmem:[%s1 + $0x208] sm:$0xff]
  %v91 = vld [vmem:[%s1 + $0x210] sm:$0xff]
  %v92 = vld [vmem:[%s1 + $0x218] sm:$0xff]
  %v93 = vld [vmem:[%s1 + $0x220] sm:$0xff]
  %v94 = vld [vmem:[%s1 + $0x228] sm:$0xff]
  %v95 = vld [vmem:[%s1 + $0x230] sm:$0xff]
  %v96 = vld [vmem:[%s1 + $0x238] sm:$0xff]
  %v97 = vld [vmem:[%s1 + $0x240] sm:$0xff]
  %v98 = vld [vmem:[%s1 + $0x248] sm:$0xff]
  %v99 = vld [vmem:[%s1 + $0x250] sm:$0xff]
  %v100 = vld [vmem:[%s1 + $0x258] sm:$0xff]
  %v101 = vld [vmem:[%s1 + $0x260] sm:$0xff]
  %v102 = vld [vmem:[%s1 + $0x268] sm:$0xff]
  %v103 = vld [vmem:[%s1 + $0x270] sm:$0xff]
  %v104 = vld [vmem:[%s1 + $0x278] sm:$0xff]
  %v105 = vld [vmem:[%s1 + $0x280] sm:$0xff]
  %v106 = vld [vmem:[%s1 + $0x288] sm:$0xff]
  %v107 = vld [vmem:[%s1 + $0x290] sm:$0xff]
  %v108 = vld [vmem:[%s1 + $0x298] sm:$0xff]
  %v109 = vld [vmem:[%s1 + $0x2a0] sm:$0xff]
  %v110 = vld [vmem:[%s1 + $0x2a8] sm:$0xff]
  %v111 = vld [vmem:[%s1 + $0x2b0] sm:$0xff]
  %v112 = vld [vmem:[%s1 + $0x2b8] sm:$0xff]
  %v113 = vld [vmem:[%s1 + $0x2c0] sm:$0xff]
  %v114 = vld [vmem:[%s1 + $0x2c8] sm:$0xff]
  %v115 = vld [vmem:[%s1 + $0x2d0] sm:$0xff]
  %v116 = vld [vmem:[%s1 + $0x2d8] sm:$0xff]
  %v117 = vld [vmem:[%s1 + $0x2e0] sm:$0xff]
  %v118 = vld [vmem:[%s1 + $0x2e8] sm:$0xff]
  %v119 = vld [vmem:[%s1 + $0x2f0] sm:$0xff]
  %v120 = vld [vmem:[%s1 + $0x2f8] sm:$0xff]
  %121 = vmatprep.subr.mxu0 %v71
  %122 = vmatpush1.msra.mxu0 %v70
  %123 = vmatprep.subr.mxu0 %v68
  %124 = vmatpush1.msra.mxu0 %v67
  %125 = vmatprep.subr.mxu0 %v65
  %126 = vmatpush1.msra.mxu0 %v64
  %127 = vmatprep.subr.mxu0 %v62
  %128 = vmatpush1.msra.mxu0 %v61
  %129 = vmatprep.subr.mxu0 %v59
  %130 = vmatpush1.msra.mxu0 %v58
  %131 = vmatprep.subr.mxu0 %v56
  %132 = vmatpush1.msra.mxu0 %v55
  %133 = vmatprep.subr.mxu0 %v53
  %134 = vmatpush1.msra.mxu0 %v52
  %135 = vmatprep.subr.mxu0 %v50
  %136 = vmatpush1.msra.mxu0 %v49
  %137 = vmatprep.subr.mxu0 %v47
  %138 = vmatpush1.msra.mxu0 %v46
  %139 = vmatprep.subr.mxu0 %v44
  %140 = vmatpush1.msra.mxu0 %v43
  %141 = vmatprep.subr.mxu0 %v41
  %142 = vmatpush1.msra.mxu0 %v40
  %143 = vmatprep.subr.mxu0 %v38
  %144 = vmatpush1.msra.mxu0 %v37
  %145 = vmatprep.subr.mxu0 %v35
  %146 = vmatpush1.msra.mxu0 %v34
  %147 = vmatprep.subr.mxu0 %v32
  %148 = vmatpush1.msra.mxu0 %v31
  %149 = vmatprep.subr.mxu0 %v29
  %150 = vmatpush1.msra.mxu0 %v28
  %151 = vmatprep.subr.mxu0 %v26
  %152 = vmatpush1.msra.mxu0 %v25
  %153 = vmatprep.subr.mxu0 %v119
  %154 = vmatpush2.msra.mxu0 %v118
  %155 = vmatprep.subr.mxu0 %v116
  %156 = vmatpush2.msra.mxu0 %v115
  %157 = vmatprep.subr.mxu0 %v113
  %158 = vmatpush2.msra.mxu0 %v112
  %159 = vmatprep.subr.mxu0 %v110
  %160 = vmatpush2.msra.mxu0 %v109
  %161 = vmatprep.subr.mxu0 %v107
  %162 = vmatpush2.msra.mxu0 %v106
  %163 = vmatprep.subr.mxu0 %v104
  %164 = vmatpush2.msra.mxu0 %v103
  %165 = vmatprep.subr.mxu0 %v101
  %166 = vmatpush2.msra.mxu0 %v100
  %167 = vmatprep.subr.mxu0 %v98
  %168 = vmatpush2.msra.mxu0 %v97
  %169 = vmatprep.subr.mxu0 %v95
  %170 = vmatpush2.msra.mxu0 %v94
  %171 = vmatprep.subr.mxu0 %v92
  %172 = vmatpush2.msra.mxu0 %v91
  %173 = vmatprep.subr.mxu0 %v89
  %174 = vmatpush2.msra.mxu0 %v88
  %175 = vmatprep.subr.mxu0 %v86
  %176 = vmatpush2.msra.mxu0 %v85
  %177 = vmatprep.subr.mxu0 %v83
  %178 = vmatpush2.msra.mxu0 %v82
  %179 = vmatprep.subr.mxu0 %v80
  %180 = vmatpush2.msra.mxu0 %v79
  %181 = vmatprep.subr.mxu0 %v77
  %182 = vmatpush2.msra.mxu0 %v76
  %183 = vmatprep.subr.mxu0 %v74
  %184 = vmatpush2.msra.mxu0 %v73
  %185 = vmatprep.mubr.f32.mxu0 %v18
  %186 = vmatmul.mubr.f32.gmra.mxu0 %v17
  %v187 = vpop.f32.mrf.mxu0
  %v188 = vadd.f32 0.0, %v187
  %v189 = vpop.f32.mrf.mxu0
  %v190 = vadd.f32 0.0, %v189
  %191 = vmatprep.mubr.f32.mxu0 %v20
  %192 = vmatmul.mubr.f32.gmra.mxu0 %v19
  %v193 = vpop.f32.mrf.mxu0
  %v194 = vadd.f32 0.0, %v193
  %v195 = vpop.f32.mrf.mxu0
  %v196 = vadd.f32 0.0, %v195
  %197 = vmatprep.mubr.f32.mxu0 %v22
  %198 = vmatmul.mubr.f32.gmra.mxu0 %v21
  %v199 = vpop.f32.mrf.mxu0
  %v200 = vadd.f32 0.0, %v199
  %v201 = vpop.f32.mrf.mxu0
  %v202 = vadd.f32 0.0, %v201
  %203 = vmatprep.mubr.f32.mxu0 %v24
  %204 = vmatmul.mubr.f32.gmra.mxu0 %v23
  %v205 = vpop.f32.mrf.mxu0
  %v206 = vadd.f32 0.0, %v205
  %v207 = vpop.f32.mrf.mxu0
  %v208 = vadd.f32 0.0, %v207
  %209 = vdwg.mxu0
  %210 = vmatprep.subr.mxu0 0.0
  %211 = vmatpush1.msra.mxu0 %v72
  %212 = vmatprep.subr.mxu0 0.0
  %213 = vmatpush1.msra.mxu0 %v69
  %214 = vmatprep.subr.mxu0 0.0
  %215 = vmatpush1.msra.mxu0 %v66
  %216 = vmatprep.subr.mxu0 0.0
  %217 = vmatpush1.msra.mxu0 %v63
  %218 = vmatprep.subr.mxu0 0.0
  %219 = vmatpush1.msra.mxu0 %v60
  %220 = vmatprep.subr.mxu0 0.0
  %221 = vmatpush1.msra.mxu0 %v57
  %222 = vmatprep.subr.mxu0 0.0
  %223 = vmatpush1.msra.mxu0 %v54
  %224 = vmatprep.subr.mxu0 0.0
  %225 = vmatpush1.msra.mxu0 %v51
  %226 = vmatprep.subr.mxu0 0.0
  %227 = vmatpush1.msra.mxu0 %v48
  %228 = vmatprep.subr.mxu0 0.0
  %229 = vmatpush1.msra.mxu0 %v45
  %230 = vmatprep.subr.mxu0 0.0
  %231 = vmatpush1.msra.mxu0 %v42
  %232 = vmatprep.subr.mxu0 0.0
  %233 = vmatpush1.msra.mxu0 %v39
  %234 = vmatprep.subr.mxu0 0.0
  %235 = vmatpush1.msra.mxu0 %v36
  %236 = vmatprep.subr.mxu0 0.0
  %237 = vmatpush1.msra.mxu0 %v33
  %238 = vmatprep.subr.mxu0 0.0
  %239 = vmatpush1.msra.mxu0 %v30
  %240 = vmatprep.subr.mxu0 0.0
  %241 = vmatpush1.msra.mxu0 %v27
  %242 = vmatprep.subr.mxu0 0.0
  %243 = vmatpush2.msra.mxu0 %v120
  %244 = vmatprep.subr.mxu0 0.0
  %245 = vmatpush2.msra.mxu0 %v117
  %246 = vmatprep.subr.mxu0 0.0
  %247 = vmatpush2.msra.mxu0 %v114
  %248 = vmatprep.subr.mxu0 0.0
  %249 = vmatpush2.msra.mxu0 %v111
  %250 = vmatprep.subr.mxu0 0.0
  %251 = vmatpush2.msra.mxu0 %v108
  %252 = vmatprep.subr.mxu0 0.0
  %253 = vmatpush2.msra.mxu0 %v105
  %254 = vmatprep.subr.mxu0 0.0
  %255 = vmatpush2.msra.mxu0 %v102
  %256 = vmatprep.subr.mxu0 0.0
  %257 = vmatpush2.msra.mxu0 %v99
  %258 = vmatprep.subr.mxu0 0.0
  %259 = vmatpush2.msra.mxu0 %v96
  %260 = vmatprep.subr.mxu0 0.0
  %261 = vmatpush2.msra.mxu0 %v93
  %262 = vmatprep.subr.mxu0 0.0
  %263 = vmatpush2.msra.mxu0 %v90
  %264 = vmatprep.subr.mxu0 0.0
  %265 = vmatpush2.msra.mxu0 %v87
  %266 = vmatprep.subr.mxu0 0.0
  %267 = vmatpush2.msra.mxu0 %v84
  %268 = vmatprep.subr.mxu0 0.0
  %269 = vmatpush2.msra.mxu0 %v81
  %270 = vmatprep.subr.mxu0 0.0
  %271 = vmatpush2.msra.mxu0 %v78
  %272 = vmatprep.subr.mxu0 0.0
  %273 = vmatpush2.msra.mxu0 %v75
  %274 = vmatprep.mubr.f32.mxu0 %v18
  %275 = vmatmul.mubr.f32.gmra.mxu0 %v17
  %v276 = vpop.f32.mrf.mxu0
  %v277 = vadd.f32 0.0, %v276
  %v278 = vpop.f32.mrf.mxu0
  %279 = vmatprep.mubr.f32.mxu0 %v20
  %280 = vmatmul.mubr.f32.gmra.mxu0 %v19
  %v281 = vpop.f32.mrf.mxu0
  %v282 = vadd.f32 0.0, %v281
  %v283 = vpop.f32.mrf.mxu0
  %284 = vmatprep.mubr.f32.mxu0 %v22
  %285 = vmatmul.mubr.f32.gmra.mxu0 %v21
  %v286 = vpop.f32.mrf.mxu0
  %v287 = vadd.f32 0.0, %v286
  %v288 = vpop.f32.mrf.mxu0
  %289 = vmatprep.mubr.f32.mxu0 %v24
  %290 = vmatmul.mubr.f32.gmra.mxu0 %v23
  %v291 = vpop.f32.mrf.mxu0
  %v292 = vadd.f32 0.0, %v291
  %v293 = vpop.f32.mrf.mxu0
  %294 = vdwg.mxu0
  %v295 = vadd.f32 %v188, %v190
  %v296 = vadd.f32 %v295, %v277
  %297 = vadd.xlane.f32.xlu0 %v296
  %v298 = vpop.xlane.xlu0 %297
  %v299 = vadd.f32 %v194, %v196
  %v300 = vadd.f32 %v299, %v282
  %301 = vadd.xlane.f32.xlu0 %v300
  %v302 = vpop.xlane.xlu0 %301
  %v303 = vadd.f32 %v200, %v202
  %v304 = vadd.f32 %v303, %v287
  %305 = vadd.xlane.f32.xlu0 %v304
  %v306 = vpop.xlane.xlu0 %305
  %v307 = vadd.f32 %v206, %v208
  %v308 = vadd.f32 %v307, %v292
  %309 = vadd.xlane.f32.xlu0 %v308
  %v310 = vpop.xlane.xlu0 %309
  %v311 = vmul.f32 %v188, %v188
  %v312 = vmul.f32 %v190, %v190
  %v313 = vmul.f32 %v277, %v277
  %v314 = vmul.f32 %v194, %v194
  %v315 = vmul.f32 %v196, %v196
  %v316 = vmul.f32 %v282, %v282
  %v317 = vmul.f32 %v200, %v200
  %v318 = vmul.f32 %v202, %v202
  %v319 = vmul.f32 %v287, %v287
  %v320 = vmul.f32 %v206, %v206
  %v321 = vmul.f32 %v208, %v208
  %v322 = vmul.f32 %v292, %v292
  %v323 = vadd.f32 %v311, %v312
  %v324 = vadd.f32 %v323, %v313
  %325 = vadd.xlane.f32.xlu0 %v324
  %v326 = vpop.xlane.xlu0 %325
  %v327 = vadd.f32 %v314, %v315
  %v328 = vadd.f32 %v327, %v316
  %329 = vadd.xlane.f32.xlu0 %v328
  %v330 = vpop.xlane.xlu0 %329
  %v331 = vadd.f32 %v317, %v318
  %v332 = vadd.f32 %v331, %v319
  %333 = vadd.xlane.f32.xlu0 %v332
  %v334 = vpop.xlane.xlu0 %333
  %v335 = vadd.f32 %v320, %v321
  %v336 = vadd.f32 %v335, %v322
  %337 = vadd.xlane.f32.xlu0 %v336
  %v338 = vpop.xlane.xlu0 %337
  %v339 = vmul.f32 %v298, 0.0034722222
  %v340 = vmul.f32 %v302, 0.0034722222
  %v341 = vmul.f32 %v306, 0.0034722222
  %v342 = vmul.f32 %v310, 0.0034722222
  %v343 = vmul.f32 %v326, 0.0034722222
  %v344 = vmul.f32 %v330, 0.0034722222
  %v345 = vmul.f32 %v334, 0.0034722222
  %v346 = vmul.f32 %v338, 0.0034722222
  %v347 = vmul.f32 %v339, %v339
  %v348 = vmul.f32 %v340, %v340
  %v349 = vmul.f32 %v341, %v341
  %v350 = vmul.f32 %v342, %v342
  %v351 = vsub.f32 %v343, %v347
  %v352 = vsub.f32 %v344, %v348
  %v353 = vsub.f32 %v345, %v349
  %v354 = vsub.f32 %v346, %v350
  %v355 = vmax.f32 %v351, 0.0
  %v356 = vmax.f32 %v352, 0.0
  %v357 = vmax.f32 %v353, 0.0
  %v358 = vmax.f32 %v354, 0.0
  %v359 = vld [vmem:[%s2] sm:$0xff]
  %v360 = vld [vmem:[%s2 + $0x8] sm:$0xff]
  %v361 = vld [vmem:[%s2 + $0x10] sm:$0xff]
  %v362 = vld [vmem:[%s2 + $0x18] sm:$0xff]
  %v363 = vadd.f32 %v355, 1e-05
  %v364 = vadd.f32 %v356, 1e-05
  %v365 = vadd.f32 %v357, 1e-05
  %v366 = vadd.f32 %v358, 1e-05
  %v367 = vrsqrt.pop %v363
  %v368 = vrsqrt.pop %v364
  %v369 = vrsqrt.pop %v365
  %v370 = vrsqrt.pop %v366
  %v371 = vmul.f32 %v359, %v367
  %v372 = vmul.f32 %v360, %v368
  %v373 = vmul.f32 %v361, %v369
  %v374 = vmul.f32 %v362, %v370
  %v375 = vld [vmem:[%s3] sm:$0xff]
  %v376 = vld [vmem:[%s3 + $0x8] sm:$0xff]
  %v377 = vld [vmem:[%s3 + $0x10] sm:$0xff]
  %v378 = vld [vmem:[%s3 + $0x18] sm:$0xff]
  %v379 = vmul.f32 %v339, %v371
  %v380 = vmul.f32 %v340, %v372
  %v381 = vmul.f32 %v341, %v373
  %v382 = vmul.f32 %v342, %v374
  %v383 = vsub.f32 %v375, %v379
  %v384 = vsub.f32 %v376, %v380
  %v385 = vsub.f32 %v377, %v381
  %v386 = vsub.f32 %v378, %v382
  %388 = vset.pattern.permute.xlu0 0
  %389 = vperm.xlu0 %388, %v371
  %v390 = vpop.permute.xlu0 %389
  %393 = vset.pattern.permute.xlu0 0
  %394 = vperm.xlu0 %393, %v372
  %v395 = vpop.permute.xlu0 %394
  %398 = vset.pattern.permute.xlu0 0
  %399 = vperm.xlu0 %398, %v373
  %v400 = vpop.permute.xlu0 %399
  %403 = vset.pattern.permute.xlu0 0
  %404 = vperm.xlu0 %403, %v374
  %v405 = vpop.permute.xlu0 %404
  %v407 = vmul.f32 %v188, %v390
  %v408 = vmul.f32 %v190, %v390
  %v409 = vmul.f32 %v277, %v390
  %v410 = vmul.f32 %v194, %v395
  %v411 = vmul.f32 %v196, %v395
  %v412 = vmul.f32 %v282, %v395
  %v413 = vmul.f32 %v200, %v400
  %v414 = vmul.f32 %v202, %v400
  %v415 = vmul.f32 %v287, %v400
  %v416 = vmul.f32 %v206, %v405
  %v417 = vmul.f32 %v208, %v405
  %v418 = vmul.f32 %v292, %v405
  %420 = vset.pattern.permute.xlu0 0
  %421 = vperm.xlu0 %420, %v383
  %v422 = vpop.permute.xlu0 %421
  %425 = vset.pattern.permute.xlu0 0
  %426 = vperm.xlu0 %425, %v384
  %v427 = vpop.permute.xlu0 %426
  %430 = vset.pattern.permute.xlu0 0
  %431 = vperm.xlu0 %430, %v385
  %v432 = vpop.permute.xlu0 %431
  %435 = vset.pattern.permute.xlu0 0
  %436 = vperm.xlu0 %435, %v386
  %v437 = vpop.permute.xlu0 %436
  %v439 = vadd.f32 %v407, %v422
  %v440 = vadd.f32 %v408, %v422
  %v441 = vadd.f32 %v409, %v422
  %v442 = vadd.f32 %v410, %v427
  %v443 = vadd.f32 %v411, %v427
  %v444 = vadd.f32 %v412, %v427
  %v445 = vadd.f32 %v413, %v432
  %v446 = vadd.f32 %v414, %v432
  %v447 = vadd.f32 %v415, %v432
  %v448 = vadd.f32 %v416, %v437
  %v449 = vadd.f32 %v417, %v437
  %v450 = vadd.f32 %v418, %v437
  %vm451 = vcmp.ge.f32.partialorder %v439, 0.0
  %vm452 = vcmp.ge.f32.partialorder %v440, 0.0
  %vm453 = vcmp.ge.f32.partialorder %v441, 0.0
  %vm454 = vcmp.ge.f32.partialorder %v442, 0.0
  %vm455 = vcmp.ge.f32.partialorder %v443, 0.0
  %vm456 = vcmp.ge.f32.partialorder %v444, 0.0
  %vm457 = vcmp.ge.f32.partialorder %v445, 0.0
  %vm458 = vcmp.ge.f32.partialorder %v446, 0.0
  %vm459 = vcmp.ge.f32.partialorder %v447, 0.0
  %vm460 = vcmp.ge.f32.partialorder %v448, 0.0
  %vm461 = vcmp.ge.f32.partialorder %v449, 0.0
  %vm462 = vcmp.ge.f32.partialorder %v450, 0.0
  %v463 = vmul.f32 %v439, 0.2
  %v464 = vmul.f32 %v440, 0.2
  %v465 = vmul.f32 %v441, 0.2
  %v466 = vmul.f32 %v442, 0.2
  %v467 = vmul.f32 %v443, 0.2
  %v468 = vmul.f32 %v444, 0.2
  %v469 = vmul.f32 %v445, 0.2
  %v470 = vmul.f32 %v446, 0.2
  %v471 = vmul.f32 %v447, 0.2
  %v472 = vmul.f32 %v448, 0.2
  %v473 = vmul.f32 %v449, 0.2
  %v474 = vmul.f32 %v450, 0.2
  %v475 = vsel %vm451, %v439, %v463
  %v476 = vsel %vm452, %v440, %v464
  %v477 = vsel %vm453, %v441, %v465
  %v478 = vsel %vm454, %v442, %v466
  %v479 = vsel %vm455, %v443, %v467
  %v480 = vsel %vm456, %v444, %v468
  %v481 = vsel %vm457, %v445, %v469
  %v482 = vsel %vm458, %v446, %v470
  %v483 = vsel %vm459, %v447, %v471
  %v484 = vsel %vm460, %v448, %v472
  %v485 = vsel %vm461, %v449, %v473
  %v486 = vsel %vm462, %v450, %v474
  %487 = vst [vmem:[%s4] sm:$0xff] %v475
  %488 = vst [vmem:[%s4 + $0x8] sm:$0xff] %v476
  %489 = vst [vmem:[%s4 + $0x10] sm:$0xff] %v477
  %490 = vst [vmem:[%s4 + $0x18] sm:$0xff] %v478
  %491 = vst [vmem:[%s4 + $0x20] sm:$0xff] %v479
  %492 = vst [vmem:[%s4 + $0x28] sm:$0xff] %v480
  %493 = vst [vmem:[%s4 + $0x30] sm:$0xff] %v481
  %494 = vst [vmem:[%s4 + $0x38] sm:$0xff] %v482
  %495 = vst [vmem:[%s4 + $0x40] sm:$0xff] %v483
  %496 = vst [vmem:[%s4 + $0x48] sm:$0xff] %v484
  %497 = vst [vmem:[%s4 + $0x50] sm:$0xff] %v485
  %498 = vst [vmem:[%s4 + $0x58] sm:$0xff] %v486
  // Predicated region
  $region18: #{multi_scale_forward.17} parent=0 // pred_check
    _
  $region19: #{multi_scale_forward.17} parent=0 // pred_check_branch
    %500 = sbr.rel (0) target = $region21
  $region20: #{multi_scale_forward.17} parent=0 // pred_region
    _
  $region21: #{multi_scale_forward.17} parent=0 // pred_fallthru
    _
  // Predicated region
  $region22: #{multi_scale_forward.17} parent=0 // pred_check
    _
  $region23: #{multi_scale_forward.17} parent=0 // pred_check_branch
    %502 = sbr.rel (0) target = $region25
  $region24: #{multi_scale_forward.17} parent=0 // pred_region
    _
  $region25: #{multi_scale_forward.17} parent=0 // pred_fallthru
    _

// kernel: multi_scale_forward.18
$region0: #{multi_scale_forward.18}
  #allocation0 [shape = 'u32[]', space=smem, size = 0x4, offset = 0x4, fixed_abs, tag = 'smem constant byte address 0x4 - core index']
  #allocation1 [shape = 'u32[144,128]{1,0:T(1,128)}', space=vmem, size = 0x12000, scoped, tag = 'internal scratch']
  %s0 = inlined_call_operand.vmem [shape: f32[64,512], index: 0, kind: input, shape index: {}]
  %s1 = inlined_call_operand.vmem [shape: f32[512,256], index: 1, kind: input, shape index: {}]
  %s2 = inlined_call_operand.vmem [shape: f32[64,1], index: 2, kind: input, shape index: {}]
  %s3 = inlined_call_operand.vmem [shape: f32[64,1], index: 3, kind: input, shape index: {}]
  %s4 = inlined_call_operand.vmem [shape: f32[64,256], index: 4, kind: output, shape index: {}]
  %s5 = sld [smem:[#allocation0]]
  $region26: #{multi_scale_forward.18} parent=0
    _
  %s7 = ssub.s32 1, %s5
  %s8 = scalar_select 0, %s7, %s5
  // Predicated region
  $region2: #{multi_scale_forward.18} parent=0 // pred_check
    _
  $region3: #{multi_scale_forward.18} parent=0 // pred_check_branch
    %10 = sbr.rel (0) target = $region5
  $region4: #{multi_scale_forward.18} parent=0 // pred_region
    _
  $region5: #{multi_scale_forward.18} parent=0 // pred_fallthru
    _
  // Predicated region
  $region6: #{multi_scale_forward.18} parent=0 // pred_check
    _
  $region7: #{multi_scale_forward.18} parent=0 // pred_check_branch
    %12 = sbr.rel (0) target = $region9
  $region8: #{multi_scale_forward.18} parent=0 // pred_region
    _
  $region9: #{multi_scale_forward.18} parent=0 // pred_fallthru
    _
  // Predicated region
  $region10: #{multi_scale_forward.18} parent=0 // pred_check
    _
  $region11: #{multi_scale_forward.18} parent=0 // pred_check_branch
    %14 = sbr.rel (0) target = $region13
  $region12: #{multi_scale_forward.18} parent=0 // pred_region
    _
  $region13: #{multi_scale_forward.18} parent=0 // pred_fallthru
    _
  // Predicated region
  $region14: #{multi_scale_forward.18} parent=0 // pred_check
    _
  $region15: #{multi_scale_forward.18} parent=0 // pred_check_branch
    %16 = sbr.rel (0) target = $region17
  $region16: #{multi_scale_forward.18} parent=0 // pred_region
    _
  $region17: #{multi_scale_forward.18} parent=0 // pred_fallthru
    _
  %v17 = vld [vmem:[%s0] sm:$0xff]
  %v18 = vld [vmem:[%s0 + $0x8] sm:$0xff]
  %v19 = vld [vmem:[%s0 + $0x10] sm:$0xff]
  %v20 = vld [vmem:[%s0 + $0x18] sm:$0xff]
  %v21 = vld [vmem:[%s0 + $0x20] sm:$0xff]
  %v22 = vld [vmem:[%s0 + $0x28] sm:$0xff]
  %v23 = vld [vmem:[%s0 + $0x30] sm:$0xff]
  %v24 = vld [vmem:[%s0 + $0x38] sm:$0xff]
  %v25 = vld [vmem:[%s0 + $0x40] sm:$0xff]
  %v26 = vld [vmem:[%s0 + $0x48] sm:$0xff]
  %v27 = vld [vmem:[%s0 + $0x50] sm:$0xff]
  %v28 = vld [vmem:[%s0 + $0x58] sm:$0xff]
  %v29 = vld [vmem:[%s0 + $0x60] sm:$0xff]
  %v30 = vld [vmem:[%s0 + $0x68] sm:$0xff]
  %v31 = vld [vmem:[%s0 + $0x70] sm:$0xff]
  %v32 = vld [vmem:[%s0 + $0x78] sm:$0xff]
  %v33 = vld [vmem:[%s0 + $0x80] sm:$0xff]
  %v34 = vld [vmem:[%s0 + $0x88] sm:$0xff]
  %v35 = vld [vmem:[%s0 + $0x90] sm:$0xff]
  %v36 = vld [vmem:[%s0 + $0x98] sm:$0xff]
  %v37 = vld [vmem:[%s0 + $0xa0] sm:$0xff]
  %v38 = vld [vmem:[%s0 + $0xa8] sm:$0xff]
  %v39 = vld [vmem:[%s0 + $0xb0] sm:$0xff]
  %v40 = vld [vmem:[%s0 + $0xb8] sm:$0xff]
  %v41 = vld [vmem:[%s0 + $0xc0] sm:$0xff]
  %v42 = vld [vmem:[%s0 + $0xc8] sm:$0xff]
  %v43 = vld [vmem:[%s0 + $0xd0] sm:$0xff]
  %v44 = vld [vmem:[%s0 + $0xd8] sm:$0xff]
  %v45 = vld [vmem:[%s0 + $0xe0] sm:$0xff]
  %v46 = vld [vmem:[%s0 + $0xe8] sm:$0xff]
  %v47 = vld [vmem:[%s0 + $0xf0] sm:$0xff]
  %v48 = vld [vmem:[%s0 + $0xf8] sm:$0xff]
  %v49 = vld [vmem:[%s1] sm:$0xff]
  %v50 = vld [vmem:[%s1 + $0x8] sm:$0xff]
  %v51 = vld [vmem:[%s1 + $0x10] sm:$0xff]
  %v52 = vld [vmem:[%s1 + $0x18] sm:$0xff]
  %v53 = vld [vmem:[%s1 + $0x20] sm:$0xff]
  %v54 = vld [vmem:[%s1 + $0x28] sm:$0xff]
  %v55 = vld [vmem:[%s1 + $0x30] sm:$0xff]
  %v56 = vld [vmem:[%s1 + $0x38] sm:$0xff]
  %v57 = vld [vmem:[%s1 + $0x40] sm:$0xff]
  %v58 = vld [vmem:[%s1 + $0x48] sm:$0xff]
  %v59 = vld [vmem:[%s1 + $0x50] sm:$0xff]
  %v60 = vld [vmem:[%s1 + $0x58] sm:$0xff]
  %v61 = vld [vmem:[%s1 + $0x60] sm:$0xff]
  %v62 = vld [vmem:[%s1 + $0x68] sm:$0xff]
  %v63 = vld [vmem:[%s1 + $0x70] sm:$0xff]
  %v64 = vld [vmem:[%s1 + $0x78] sm:$0xff]
  %v65 = vld [vmem:[%s1 + $0x80] sm:$0xff]
  %v66 = vld [vmem:[%s1 + $0x88] sm:$0xff]
  %v67 = vld [vmem:[%s1 + $0x90] sm:$0xff]
  %v68 = vld [vmem:[%s1 + $0x98] sm:$0xff]
  %v69 = vld [vmem:[%s1 + $0xa0] sm:$0xff]
  %v70 = vld [vmem:[%s1 + $0xa8] sm:$0xff]
  %v71 = vld [vmem:[%s1 + $0xb0] sm:$0xff]
  %v72 = vld [vmem:[%s1 + $0xb8] sm:$0xff]
  %v73 = vld [vmem:[%s1 + $0xc0] sm:$0xff]
  %v74 = vld [vmem:[%s1 + $0xc8] sm:$0xff]
  %v75 = vld [vmem:[%s1 + $0xd0] sm:$0xff]
  %v76 = vld [vmem:[%s1 + $0xd8] sm:$0xff]
  %v77 = vld [vmem:[%s1 + $0xe0] sm:$0xff]
  %v78 = vld [vmem:[%s1 + $0xe8] sm:$0xff]
  %v79 = vld [vmem:[%s1 + $0xf0] sm:$0xff]
  %v80 = vld [vmem:[%s1 + $0xf8] sm:$0xff]
  %v81 = vld [vmem:[%s1 + $0x100] sm:$0xff]
  %v82 = vld [vmem:[%s1 + $0x108] sm:$0xff]
  %v83 = vld [vmem:[%s1 + $0x110] sm:$0xff]
  %v84 = vld [vmem:[%s1 + $0x118] sm:$0xff]
  %v85 = vld [vmem:[%s1 + $0x120] sm:$0xff]
  %v86 = vld [vmem:[%s1 + $0x128] sm:$0xff]
  %v87 = vld [vmem:[%s1 + $0x130] sm:$0xff]
  %v88 = vld [vmem:[%s1 + $0x138] sm:$0xff]
  %v89 = vld [vmem:[%s1 + $0x140] sm:$0xff]
  %v90 = vld [vmem:[%s1 + $0x148] sm:$0xff]
  %v91 = vld [vmem:[%s1 + $0x150] sm:$0xff]
  %v92 = vld [vmem:[%s1 + $0x158] sm:$0xff]
  %v93 = vld [vmem:[%s1 + $0x160] sm:$0xff]
  %v94 = vld [vmem:[%s1 + $0x168] sm:$0xff]
  %v95 = vld [vmem:[%s1 + $0x170] sm:$0xff]
  %v96 = vld [vmem:[%s1 + $0x178] sm:$0xff]
  %v97 = vld [vmem:[%s1 + $0x180] sm:$0xff]
  %v98 = vld [vmem:[%s1 + $0x188] sm:$0xff]
  %v99 = vld [vmem:[%s1 + $0x190] sm:$0xff]
  %v100 = vld [vmem:[%s1 + $0x198] sm:$0xff]
  %v101 = vld [vmem:[%s1 + $0x1a0] sm:$0xff]
  %v102 = vld [vmem:[%s1 + $0x1a8] sm:$0xff]
  %v103 = vld [vmem:[%s1 + $0x1b0] sm:$0xff]
  %v104 = vld [vmem:[%s1 + $0x1b8] sm:$0xff]
  %v105 = vld [vmem:[%s1 + $0x1c0] sm:$0xff]
  %v106 = vld [vmem:[%s1 + $0x1c8] sm:$0xff]
  %v107 = vld [vmem:[%s1 + $0x1d0] sm:$0xff]
  %v108 = vld [vmem:[%s1 + $0x1d8] sm:$0xff]
  %v109 = vld [vmem:[%s1 + $0x1e0] sm:$0xff]
  %v110 = vld [vmem:[%s1 + $0x1e8] sm:$0xff]
  %v111 = vld [vmem:[%s1 + $0x1f0] sm:$0xff]
  %v112 = vld [vmem:[%s1 + $0x1f8] sm:$0xff]
  %v113 = vld [vmem:[%s1 + $0x200] sm:$0xff]
  %v114 = vld [vmem:[%s1 + $0x208] sm:$0xff]
  %v115 = vld [vmem:[%s1 + $0x210] sm:$0xff]
  %v116 = vld [vmem:[%s1 + $0x218] sm:$0xff]
  %v117 = vld [vmem:[%s1 + $0x220] sm:$0xff]
  %v118 = vld [vmem:[%s1 + $0x228] sm:$0xff]
  %v119 = vld [vmem:[%s1 + $0x230] sm:$0xff]
  %v120 = vld [vmem:[%s1 + $0x238] sm:$0xff]
  %v121 = vld [vmem:[%s1 + $0x240] sm:$0xff]
  %v122 = vld [vmem:[%s1 + $0x248] sm:$0xff]
  %v123 = vld [vmem:[%s1 + $0x250] sm:$0xff]
  %v124 = vld [vmem:[%s1 + $0x258] sm:$0xff]
  %v125 = vld [vmem:[%s1 + $0x260] sm:$0xff]
  %v126 = vld [vmem:[%s1 + $0x268] sm:$0xff]
  %v127 = vld [vmem:[%s1 + $0x270] sm:$0xff]
  %v128 = vld [vmem:[%s1 + $0x278] sm:$0xff]
  %v129 = vld [vmem:[%s1 + $0x280] sm:$0xff]
  %v130 = vld [vmem:[%s1 + $0x288] sm:$0xff]
  %v131 = vld [vmem:[%s1 + $0x290] sm:$0xff]
  %v132 = vld [vmem:[%s1 + $0x298] sm:$0xff]
  %v133 = vld [vmem:[%s1 + $0x2a0] sm:$0xff]
  %v134 = vld [vmem:[%s1 + $0x2a8] sm:$0xff]
  %v135 = vld [vmem:[%s1 + $0x2b0] sm:$0xff]
  %v136 = vld [vmem:[%s1 + $0x2b8] sm:$0xff]
  %v137 = vld [vmem:[%s1 + $0x2c0] sm:$0xff]
  %v138 = vld [vmem:[%s1 + $0x2c8] sm:$0xff]
  %v139 = vld [vmem:[%s1 + $0x2d0] sm:$0xff]
  %v140 = vld [vmem:[%s1 + $0x2d8] sm:$0xff]
  %v141 = vld [vmem:[%s1 + $0x2e0] sm:$0xff]
  %v142 = vld [vmem:[%s1 + $0x2e8] sm:$0xff]
  %v143 = vld [vmem:[%s1 + $0x2f0] sm:$0xff]
  %v144 = vld [vmem:[%s1 + $0x2f8] sm:$0xff]
  %v145 = vld [vmem:[%s1 + $0x300] sm:$0xff]
  %v146 = vld [vmem:[%s1 + $0x308] sm:$0xff]
  %v147 = vld [vmem:[%s1 + $0x310] sm:$0xff]
  %v148 = vld [vmem:[%s1 + $0x318] sm:$0xff]
  %v149 = vld [vmem:[%s1 + $0x320] sm:$0xff]
  %v150 = vld [vmem:[%s1 + $0x328] sm:$0xff]
  %v151 = vld [vmem:[%s1 + $0x330] sm:$0xff]
  %v152 = vld [vmem:[%s1 + $0x338] sm:$0xff]
  %v153 = vld [vmem:[%s1 + $0x340] sm:$0xff]
  %v154 = vld [vmem:[%s1 + $0x348] sm:$0xff]
  %v155 = vld [vmem:[%s1 + $0x350] sm:$0xff]
  %v156 = vld [vmem:[%s1 + $0x358] sm:$0xff]
  %v157 = vld [vmem:[%s1 + $0x360] sm:$0xff]
  %v158 = vld [vmem:[%s1 + $0x368] sm:$0xff]
  %v159 = vld [vmem:[%s1 + $0x370] sm:$0xff]
  %v160 = vld [vmem:[%s1 + $0x378] sm:$0xff]
  %v161 = vld [vmem:[%s1 + $0x380] sm:$0xff]
  %v162 = vld [vmem:[%s1 + $0x388] sm:$0xff]
  %v163 = vld [vmem:[%s1 + $0x390] sm:$0xff]
  %v164 = vld [vmem:[%s1 + $0x398] sm:$0xff]
  %v165 = vld [vmem:[%s1 + $0x3a0] sm:$0xff]
  %v166 = vld [vmem:[%s1 + $0x3a8] sm:$0xff]
  %v167 = vld [vmem:[%s1 + $0x3b0] sm:$0xff]
  %v168 = vld [vmem:[%s1 + $0x3b8] sm:$0xff]
  %v169 = vld [vmem:[%s1 + $0x3c0] sm:$0xff]
  %v170 = vld [vmem:[%s1 + $0x3c8] sm:$0xff]
  %v171 = vld [vmem:[%s1 + $0x3d0] sm:$0xff]
  %v172 = vld [vmem:[%s1 + $0x3d8] sm:$0xff]
  %v173 = vld [vmem:[%s1 + $0x3e0] sm:$0xff]
  %v174 = vld [vmem:[%s1 + $0x3e8] sm:$0xff]
  %v175 = vld [vmem:[%s1 + $0x3f0] sm:$0xff]
  %v176 = vld [vmem:[%s1 + $0x3f8] sm:$0xff]
  %177 = vmatprep.subr.mxu0 %v80
  %178 = vmatpush1.msra.mxu0 %v79
  %179 = vmatprep.subr.mxu0 %v78
  %180 = vmatpush1.msra.mxu0 %v77
  %181 = vmatprep.subr.mxu0 %v76
  %182 = vmatpush1.msra.mxu0 %v75
  %183 = vmatprep.subr.mxu0 %v74
  %184 = vmatpush1.msra.mxu0 %v73
  %185 = vmatprep.subr.mxu0 %v72
  %186 = vmatpush1.msra.mxu0 %v71
  %187 = vmatprep.subr.mxu0 %v70
  %188 = vmatpush1.msra.mxu0 %v69
  %189 = vmatprep.subr.mxu0 %v68
  %190 = vmatpush1.msra.mxu0 %v67
  %191 = vmatprep.subr.mxu0 %v66
  %192 = vmatpush1.msra.mxu0 %v65
  %193 = vmatprep.subr.mxu0 %v64
  %194 = vmatpush1.msra.mxu0 %v63
  %195 = vmatprep.subr.mxu0 %v62
  %196 = vmatpush1.msra.mxu0 %v61
  %197 = vmatprep.subr.mxu0 %v60
  %198 = vmatpush1.msra.mxu0 %v59
  %199 = vmatprep.subr.mxu0 %v58
  %200 = vmatpush1.msra.mxu0 %v57
  %201 = vmatprep.subr.mxu0 %v56
  %202 = vmatpush1.msra.mxu0 %v55
  %203 = vmatprep.subr.mxu0 %v54
  %204 = vmatpush1.msra.mxu0 %v53
  %205 = vmatprep.subr.mxu0 %v52
  %206 = vmatpush1.msra.mxu0 %v51
  %207 = vmatprep.subr.mxu0 %v50
  %208 = vmatpush1.msra.mxu0 %v49
  %209 = vmatprep.subr.mxu0 %v112
  %210 = vmatpush2.msra.mxu0 %v111
  %211 = vmatprep.subr.mxu0 %v110
  %212 = vmatpush2.msra.mxu0 %v109
  %213 = vmatprep.subr.mxu0 %v108
  %214 = vmatpush2.msra.mxu0 %v107
  %215 = vmatprep.subr.mxu0 %v106
  %216 = vmatpush2.msra.mxu0 %v105
  %217 = vmatprep.subr.mxu0 %v104
  %218 = vmatpush2.msra.mxu0 %v103
  %219 = vmatprep.subr.mxu0 %v102
  %220 = vmatpush2.msra.mxu0 %v101
  %221 = vmatprep.subr.mxu0 %v100
  %222 = vmatpush2.msra.mxu0 %v99
  %223 = vmatprep.subr.mxu0 %v98
  %224 = vmatpush2.msra.mxu0 %v97
  %225 = vmatprep.subr.mxu0 %v96
  %226 = vmatpush2.msra.mxu0 %v95
  %227 = vmatprep.subr.mxu0 %v94
  %228 = vmatpush2.msra.mxu0 %v93
  %229 = vmatprep.subr.mxu0 %v92
  %230 = vmatpush2.msra.mxu0 %v91
  %231 = vmatprep.subr.mxu0 %v90
  %232 = vmatpush2.msra.mxu0 %v89
  %233 = vmatprep.subr.mxu0 %v88
  %234 = vmatpush2.msra.mxu0 %v87
  %235 = vmatprep.subr.mxu0 %v86
  %236 = vmatpush2.msra.mxu0 %v85
  %237 = vmatprep.subr.mxu0 %v84
  %238 = vmatpush2.msra.mxu0 %v83
  %239 = vmatprep.subr.mxu0 %v82
  %240 = vmatpush2.msra.mxu0 %v81
  %241 = vmatprep.mubr.f32.mxu0 %v18
  %242 = vmatmul.mubr.f32.gmra.mxu0 %v17
  %v243 = vpop.f32.mrf.mxu0
  %v244 = vadd.f32 0.0, %v243
  %v245 = vpop.f32.mrf.mxu0
  %v246 = vadd.f32 0.0, %v245
  %247 = vmatprep.mubr.f32.mxu0 %v22
  %248 = vmatmul.mubr.f32.gmra.mxu0 %v21
  %v249 = vpop.f32.mrf.mxu0
  %v250 = vadd.f32 0.0, %v249
  %v251 = vpop.f32.mrf.mxu0
  %v252 = vadd.f32 0.0, %v251
  %253 = vmatprep.mubr.f32.mxu0 %v26
  %254 = vmatmul.mubr.f32.gmra.mxu0 %v25
  %v255 = vpop.f32.mrf.mxu0
  %v256 = vadd.f32 0.0, %v255
  %v257 = vpop.f32.mrf.mxu0
  %v258 = vadd.f32 0.0, %v257
  %259 = vmatprep.mubr.f32.mxu0 %v30
  %260 = vmatmul.mubr.f32.gmra.mxu0 %v29
  %v261 = vpop.f32.mrf.mxu0
  %v262 = vadd.f32 0.0, %v261
  %v263 = vpop.f32.mrf.mxu0
  %v264 = vadd.f32 0.0, %v263
  %265 = vmatprep.mubr.f32.mxu0 %v34
  %266 = vmatmul.mubr.f32.gmra.mxu0 %v33
  %v267 = vpop.f32.mrf.mxu0
  %v268 = vadd.f32 0.0, %v267
  %v269 = vpop.f32.mrf.mxu0
  %v270 = vadd.f32 0.0, %v269
  %271 = vmatprep.mubr.f32.mxu0 %v38
  %272 = vmatmul.mubr.f32.gmra.mxu0 %v37
  %v273 = vpop.f32.mrf.mxu0
  %v274 = vadd.f32 0.0, %v273
  %v275 = vpop.f32.mrf.mxu0
  %v276 = vadd.f32 0.0, %v275
  %277 = vmatprep.mubr.f32.mxu0 %v42
  %278 = vmatmul.mubr.f32.gmra.mxu0 %v41
  %v279 = vpop.f32.mrf.mxu0
  %v280 = vadd.f32 0.0, %v279
  %v281 = vpop.f32.mrf.mxu0
  %v282 = vadd.f32 0.0, %v281
  %283 = vmatprep.mubr.f32.mxu0 %v46
  %284 = vmatmul.mubr.f32.gmra.mxu0 %v45
  %v285 = vpop.f32.mrf.mxu0
  %v286 = vadd.f32 0.0, %v285
  %v287 = vpop.f32.mrf.mxu0
  %v288 = vadd.f32 0.0, %v287
  %289 = vdwg.mxu0
  %290 = vmatprep.subr.mxu0 %v144
  %291 = vmatpush1.msra.mxu0 %v143
  %292 = vmatprep.subr.mxu0 %v142
  %293 = vmatpush1.msra.mxu0 %v141
  %294 = vmatprep.subr.mxu0 %v140
  %295 = vmatpush1.msra.mxu0 %v139
  %296 = vmatprep.subr.mxu0 %v138
  %297 = vmatpush1.msra.mxu0 %v137
  %298 = vmatprep.subr.mxu0 %v136
  %299 = vmatpush1.msra.mxu0 %v135
  %300 = vmatprep.subr.mxu0 %v134
  %301 = vmatpush1.msra.mxu0 %v133
  %302 = vmatprep.subr.mxu0 %v132
  %303 = vmatpush1.msra.mxu0 %v131
  %304 = vmatprep.subr.mxu0 %v130
  %305 = vmatpush1.msra.mxu0 %v129
  %306 = vmatprep.subr.mxu0 %v128
  %307 = vmatpush1.msra.mxu0 %v127
  %308 = vmatprep.subr.mxu0 %v126
  %309 = vmatpush1.msra.mxu0 %v125
  %310 = vmatprep.subr.mxu0 %v124
  %311 = vmatpush1.msra.mxu0 %v123
  %312 = vmatprep.subr.mxu0 %v122
  %313 = vmatpush1.msra.mxu0 %v121
  %314 = vmatprep.subr.mxu0 %v120
  %315 = vmatpush1.msra.mxu0 %v119
  %316 = vmatprep.subr.mxu0 %v118
  %317 = vmatpush1.msra.mxu0 %v117
  %318 = vmatprep.subr.mxu0 %v116
  %319 = vmatpush1.msra.mxu0 %v115
  %320 = vmatprep.subr.mxu0 %v114
  %321 = vmatpush1.msra.mxu0 %v113
  %322 = vmatprep.subr.mxu0 %v176
  %323 = vmatpush2.msra.mxu0 %v175
  %324 = vmatprep.subr.mxu0 %v174
  %325 = vmatpush2.msra.mxu0 %v173
  %326 = vmatprep.subr.mxu0 %v172
  %327 = vmatpush2.msra.mxu0 %v171
  %328 = vmatprep.subr.mxu0 %v170
  %329 = vmatpush2.msra.mxu0 %v169
  %330 = vmatprep.subr.mxu0 %v168
  %331 = vmatpush2.msra.mxu0 %v167
  %332 = vmatprep.subr.mxu0 %v166
  %333 = vmatpush2.msra.mxu0 %v165
  %334 = vmatprep.subr.mxu0 %v164
  %335 = vmatpush2.msra.mxu0 %v163
  %336 = vmatprep.subr.mxu0 %v162
  %337 = vmatpush2.msra.mxu0 %v161
  %338 = vmatprep.subr.mxu0 %v160
  %339 = vmatpush2.msra.mxu0 %v159
  %340 = vmatprep.subr.mxu0 %v158
  %341 = vmatpush2.msra.mxu0 %v157
  %342 = vmatprep.subr.mxu0 %v156
  %343 = vmatpush2.msra.mxu0 %v155
  %344 = vmatprep.subr.mxu0 %v154
  %345 = vmatpush2.msra.mxu0 %v153
  %346 = vmatprep.subr.mxu0 %v152
  %347 = vmatpush2.msra.mxu0 %v151
  %348 = vmatprep.subr.mxu0 %v150
  %349 = vmatpush2.msra.mxu0 %v149
  %350 = vmatprep.subr.mxu0 %v148
  %351 = vmatpush2.msra.mxu0 %v147
  %352 = vmatprep.subr.mxu0 %v146
  %353 = vmatpush2.msra.mxu0 %v145
  %354 = vmatprep.mubr.f32.mxu0 %v20
  %355 = vmatmul.mubr.f32.gmra.mxu0 %v19
  %v356 = vpop.f32.mrf.mxu0
  %v357 = vadd.f32 %v244, %v356
  %v358 = vpop.f32.mrf.mxu0
  %v359 = vadd.f32 %v246, %v358
  %360 = vmatprep.mubr.f32.mxu0 %v24
  %361 = vmatmul.mubr.f32.gmra.mxu0 %v23
  %v362 = vpop.f32.mrf.mxu0
  %v363 = vadd.f32 %v250, %v362
  %v364 = vpop.f32.mrf.mxu0
  %v365 = vadd.f32 %v252, %v364
  %366 = vmatprep.mubr.f32.mxu0 %v28
  %367 = vmatmul.mubr.f32.gmra.mxu0 %v27
  %v368 = vpop.f32.mrf.mxu0
  %v369 = vadd.f32 %v256, %v368
  %v370 = vpop.f32.mrf.mxu0
  %v371 = vadd.f32 %v258, %v370
  %372 = vmatprep.mubr.f32.mxu0 %v32
  %373 = vmatmul.mubr.f32.gmra.mxu0 %v31
  %v374 = vpop.f32.mrf.mxu0
  %v375 = vadd.f32 %v262, %v374
  %v376 = vpop.f32.mrf.mxu0
  %v377 = vadd.f32 %v264, %v376
  %378 = vmatprep.mubr.f32.mxu0 %v36
  %379 = vmatmul.mubr.f32.gmra.mxu0 %v35
  %v380 = vpop.f32.mrf.mxu0
  %v381 = vadd.f32 %v268, %v380
  %v382 = vpop.f32.mrf.mxu0
  %v383 = vadd.f32 %v270, %v382
  %384 = vmatprep.mubr.f32.mxu0 %v40
  %385 = vmatmul.mubr.f32.gmra.mxu0 %v39
  %v386 = vpop.f32.mrf.mxu0
  %v387 = vadd.f32 %v274, %v386
  %v388 = vpop.f32.mrf.mxu0
  %v389 = vadd.f32 %v276, %v388
  %390 = vmatprep.mubr.f32.mxu0 %v44
  %391 = vmatmul.mubr.f32.gmra.mxu0 %v43
  %v392 = vpop.f32.mrf.mxu0
  %v393 = vadd.f32 %v280, %v392
  %v394 = vpop.f32.mrf.mxu0
  %v395 = vadd.f32 %v282, %v394
  %396 = vmatprep.mubr.f32.mxu0 %v48
  %397 = vmatmul.mubr.f32.gmra.mxu0 %v47
  %v398 = vpop.f32.mrf.mxu0
  %v399 = vadd.f32 %v286, %v398
  %v400 = vpop.f32.mrf.mxu0
  %v401 = vadd.f32 %v288, %v400
  %402 = vdwg.mxu0
  %v403 = vadd.f32 %v357, %v359
  %404 = vadd.xlane.f32.xlu0 %v403
  %v405 = vpop.xlane.xlu0 %404
  %v406 = vadd.f32 %v363, %v365
  %407 = vadd.xlane.f32.xlu0 %v406
  %v408 = vpop.xlane.xlu0 %407
  %v409 = vadd.f32 %v369, %v371
  %410 = vadd.xlane.f32.xlu0 %v409
  %v411 = vpop.xlane.xlu0 %410
  %v412 = vadd.f32 %v375, %v377
  %413 = vadd.xlane.f32.xlu0 %v412
  %v414 = vpop.xlane.xlu0 %413
  %v415 = vadd.f32 %v381, %v383
  %416 = vadd.xlane.f32.xlu0 %v415
  %v417 = vpop.xlane.xlu0 %416
  %v418 = vadd.f32 %v387, %v389
  %419 = vadd.xlane.f32.xlu0 %v418
  %v420 = vpop.xlane.xlu0 %419
  %v421 = vadd.f32 %v393, %v395
  %422 = vadd.xlane.f32.xlu0 %v421
  %v423 = vpop.xlane.xlu0 %422
  %v424 = vadd.f32 %v399, %v401
  %425 = vadd.xlane.f32.xlu0 %v424
  %v426 = vpop.xlane.xlu0 %425
  %v427 = vmul.f32 %v357, %v357
  %v428 = vmul.f32 %v359, %v359
  %v429 = vmul.f32 %v363, %v363
  %v430 = vmul.f32 %v365, %v365
  %v431 = vmul.f32 %v369, %v369
  %v432 = vmul.f32 %v371, %v371
  %v433 = vmul.f32 %v375, %v375
  %v434 = vmul.f32 %v377, %v377
  %v435 = vmul.f32 %v381, %v381
  %v436 = vmul.f32 %v383, %v383
  %v437 = vmul.f32 %v387, %v387
  %v438 = vmul.f32 %v389, %v389
  %v439 = vmul.f32 %v393, %v393
  %v440 = vmul.f32 %v395, %v395
  %v441 = vmul.f32 %v399, %v399
  %v442 = vmul.f32 %v401, %v401
  %v443 = vadd.f32 %v427, %v428
  %444 = vadd.xlane.f32.xlu0 %v443
  %v445 = vpop.xlane.xlu0 %444
  %v446 = vadd.f32 %v429, %v430
  %447 = vadd.xlane.f32.xlu0 %v446
  %v448 = vpop.xlane.xlu0 %447
  %v449 = vadd.f32 %v431, %v432
  %450 = vadd.xlane.f32.xlu0 %v449
  %v451 = vpop.xlane.xlu0 %450
  %v452 = vadd.f32 %v433, %v434
  %453 = vadd.xlane.f32.xlu0 %v452
  %v454 = vpop.xlane.xlu0 %453
  %v455 = vadd.f32 %v435, %v436
  %456 = vadd.xlane.f32.xlu0 %v455
  %v457 = vpop.xlane.xlu0 %456
  %v458 = vadd.f32 %v437, %v438
  %459 = vadd.xlane.f32.xlu0 %v458
  %v460 = vpop.xlane.xlu0 %459
  %v461 = vadd.f32 %v439, %v440
  %462 = vadd.xlane.f32.xlu0 %v461
  %v463 = vpop.xlane.xlu0 %462
  %v464 = vadd.f32 %v441, %v442
  %465 = vadd.xlane.f32.xlu0 %v464
  %v466 = vpop.xlane.xlu0 %465
  %v467 = vmul.f32 %v405, 0.004132231
  %v468 = vmul.f32 %v408, 0.004132231
  %v469 = vmul.f32 %v411, 0.004132231
  %v470 = vmul.f32 %v414, 0.004132231
  %v471 = vmul.f32 %v417, 0.004132231
  %v472 = vmul.f32 %v420, 0.004132231
  %v473 = vmul.f32 %v423, 0.004132231
  %v474 = vmul.f32 %v426, 0.004132231
  %v475 = vmul.f32 %v445, 0.004132231
  %v476 = vmul.f32 %v448, 0.004132231
  %v477 = vmul.f32 %v451, 0.004132231
  %v478 = vmul.f32 %v454, 0.004132231
  %v479 = vmul.f32 %v457, 0.004132231
  %v480 = vmul.f32 %v460, 0.004132231
  %v481 = vmul.f32 %v463, 0.004132231
  %v482 = vmul.f32 %v466, 0.004132231
  %v483 = vmul.f32 %v467, %v467
  %v484 = vmul.f32 %v468, %v468
  %v485 = vmul.f32 %v469, %v469
  %v486 = vmul.f32 %v470, %v470
  %v487 = vmul.f32 %v471, %v471
  %v488 = vmul.f32 %v472, %v472
  %v489 = vmul.f32 %v473, %v473
  %v490 = vmul.f32 %v474, %v474
  %v491 = vsub.f32 %v475, %v483
  %v492 = vsub.f32 %v476, %v484
  %v493 = vsub.f32 %v477, %v485
  %v494 = vsub.f32 %v478, %v486
  %v495 = vsub.f32 %v479, %v487
  %v496 = vsub.f32 %v480, %v488
  %v497 = vsub.f32 %v481, %v489
  %v498 = vsub.f32 %v482, %v490
  %v499 = vmax.f32 %v491, 0.0
  %v500 = vmax.f32 %v492, 0.0
  %v501 = vmax.f32 %v493, 0.0
  %v502 = vmax.f32 %v494, 0.0
  %v503 = vmax.f32 %v495, 0.0
  %v504 = vmax.f32 %v496, 0.0
  %v505 = vmax.f32 %v497, 0.0
  %v506 = vmax.f32 %v498, 0.0
  %v507 = vld [vmem:[%s2] sm:$0xff]
  %v508 = vld [vmem:[%s2 + $0x8] sm:$0xff]
  %v509 = vld [vmem:[%s2 + $0x10] sm:$0xff]
  %v510 = vld [vmem:[%s2 + $0x18] sm:$0xff]
  %v511 = vld [vmem:[%s2 + $0x20] sm:$0xff]
  %v512 = vld [vmem:[%s2 + $0x28] sm:$0xff]
  %v513 = vld [vmem:[%s2 + $0x30] sm:$0xff]
  %v514 = vld [vmem:[%s2 + $0x38] sm:$0xff]
  %v515 = vadd.f32 %v499, 1e-05
  %v516 = vadd.f32 %v500, 1e-05
  %v517 = vadd.f32 %v501, 1e-05
  %v518 = vadd.f32 %v502, 1e-05
  %v519 = vadd.f32 %v503, 1e-05
  %v520 = vadd.f32 %v504, 1e-05
  %v521 = vadd.f32 %v505, 1e-05
  %v522 = vadd.f32 %v506, 1e-05
  %v523 = vrsqrt.pop %v515
  %v524 = vrsqrt.pop %v516
  %v525 = vrsqrt.pop %v517
  %v526 = vrsqrt.pop %v518
  %v527 = vrsqrt.pop %v519
  %v528 = vrsqrt.pop %v520
  %v529 = vrsqrt.pop %v521
  %v530 = vrsqrt.pop %v522
  %v531 = vmul.f32 %v507, %v523
  %v532 = vmul.f32 %v508, %v524
  %v533 = vmul.f32 %v509, %v525
  %v534 = vmul.f32 %v510, %v526
  %v535 = vmul.f32 %v511, %v527
  %v536 = vmul.f32 %v512, %v528
  %v537 = vmul.f32 %v513, %v529
  %v538 = vmul.f32 %v514, %v530
  %v539 = vld [vmem:[%s3] sm:$0xff]
  %v540 = vld [vmem:[%s3 + $0x8] sm:$0xff]
  %v541 = vld [vmem:[%s3 + $0x10] sm:$0xff]
  %v542 = vld [vmem:[%s3 + $0x18] sm:$0xff]
  %v543 = vld [vmem:[%s3 + $0x20] sm:$0xff]
  %v544 = vld [vmem:[%s3 + $0x28] sm:$0xff]
  %v545 = vld [vmem:[%s3 + $0x30] sm:$0xff]
  %v546 = vld [vmem:[%s3 + $0x38] sm:$0xff]
  %v547 = vmul.f32 %v467, %v531
  %v548 = vmul.f32 %v468, %v532
  %v549 = vmul.f32 %v469, %v533
  %v550 = vmul.f32 %v470, %v534
  %v551 = vmul.f32 %v471, %v535
  %v552 = vmul.f32 %v472, %v536
  %v553 = vmul.f32 %v473, %v537
  %v554 = vmul.f32 %v474, %v538
  %v555 = vsub.f32 %v539, %v547
  %v556 = vsub.f32 %v540, %v548
  %v557 = vsub.f32 %v541, %v549
  %v558 = vsub.f32 %v542, %v550
  %v559 = vsub.f32 %v543, %v551
  %v560 = vsub.f32 %v544, %v552
  %v561 = vsub.f32 %v545, %v553
  %v562 = vsub.f32 %v546, %v554
  %564 = vset.pattern.permute.xlu0 0
  %565 = vperm.xlu0 %564, %v531
  %v566 = vpop.permute.xlu0 %565
  %569 = vset.pattern.permute.xlu0 0
  %570 = vperm.xlu0 %569, %v532
  %v571 = vpop.permute.xlu0 %570
  %574 = vset.pattern.permute.xlu0 0
  %575 = vperm.xlu0 %574, %v533
  %v576 = vpop.permute.xlu0 %575
  %579 = vset.pattern.permute.xlu0 0
  %580 = vperm.xlu0 %579, %v534
  %v581 = vpop.permute.xlu0 %580
  %584 = vset.pattern.permute.xlu0 0
  %585 = vperm.xlu0 %584, %v535
  %v586 = vpop.permute.xlu0 %585
  %589 = vset.pattern.permute.xlu0 0
  %590 = vperm.xlu0 %589, %v536
  %v591 = vpop.permute.xlu0 %590
  %594 = vset.pattern.permute.xlu0 0
  %595 = vperm.xlu0 %594, %v537
  %v596 = vpop.permute.xlu0 %595
  %599 = vset.pattern.permute.xlu0 0
  %600 = vperm.xlu0 %599, %v538
  %v601 = vpop.permute.xlu0 %600
  %v603 = vmul.f32 %v357, %v566
  %v604 = vmul.f32 %v359, %v566
  %v605 = vmul.f32 %v363, %v571
  %v606 = vmul.f32 %v365, %v571
  %v607 = vmul.f32 %v369, %v576
  %v608 = vmul.f32 %v371, %v576
  %v609 = vmul.f32 %v375, %v581
  %v610 = vmul.f32 %v377, %v581
  %v611 = vmul.f32 %v381, %v586
  %v612 = vmul.f32 %v383, %v586
  %v613 = vmul.f32 %v387, %v591
  %v614 = vmul.f32 %v389, %v591
  %v615 = vmul.f32 %v393, %v596
  %v616 = vmul.f32 %v395, %v596
  %v617 = vmul.f32 %v399, %v601
  %v618 = vmul.f32 %v401, %v601
  %620 = vset.pattern.permute.xlu0 0
  %621 = vperm.xlu0 %620, %v555
  %v622 = vpop.permute.xlu0 %621
  %625 = vset.pattern.permute.xlu0 0
  %626 = vperm.xlu0 %625, %v556
  %v627 = vpop.permute.xlu0 %626
  %630 = vset.pattern.permute.xlu0 0
  %631 = vperm.xlu0 %630, %v557
  %v632 = vpop.permute.xlu0 %631
  %635 = vset.pattern.permute.xlu0 0
  %636 = vperm.xlu0 %635, %v558
  %v637 = vpop.permute.xlu0 %636
  %640 = vset.pattern.permute.xlu0 0
  %641 = vperm.xlu0 %640, %v559
  %v642 = vpop.permute.xlu0 %641
  %645 = vset.pattern.permute.xlu0 0
  %646 = vperm.xlu0 %645, %v560
  %v647 = vpop.permute.xlu0 %646
  %650 = vset.pattern.permute.xlu0 0
  %651 = vperm.xlu0 %650, %v561
  %v652 = vpop.permute.xlu0 %651
  %655 = vset.pattern.permute.xlu0 0
  %656 = vperm.xlu0 %655, %v562
  %v657 = vpop.permute.xlu0 %656
  %v659 = vadd.f32 %v603, %v622
  %v660 = vadd.f32 %v604, %v622
  %v661 = vadd.f32 %v605, %v627
  %v662 = vadd.f32 %v606, %v627
  %v663 = vadd.f32 %v607, %v632
  %v664 = vadd.f32 %v608, %v632
  %v665 = vadd.f32 %v609, %v637
  %v666 = vadd.f32 %v610, %v637
  %v667 = vadd.f32 %v611, %v642
  %v668 = vadd.f32 %v612, %v642
  %v669 = vadd.f32 %v613, %v647
  %v670 = vadd.f32 %v614, %v647
  %v671 = vadd.f32 %v615, %v652
  %v672 = vadd.f32 %v616, %v652
  %v673 = vadd.f32 %v617, %v657
  %v674 = vadd.f32 %v618, %v657
  %vm675 = vcmp.ge.f32.partialorder %v659, 0.0
  %vm676 = vcmp.ge.f32.partialorder %v660, 0.0
  %vm677 = vcmp.ge.f32.partialorder %v661, 0.0
  %vm678 = vcmp.ge.f32.partialorder %v662, 0.0
  %vm679 = vcmp.ge.f32.partialorder %v663, 0.0
  %vm680 = vcmp.ge.f32.partialorder %v664, 0.0
  %vm681 = vcmp.ge.f32.partialorder %v665, 0.0
  %vm682 = vcmp.ge.f32.partialorder %v666, 0.0
  %vm683 = vcmp.ge.f32.partialorder %v667, 0.0
  %vm684 = vcmp.ge.f32.partialorder %v668, 0.0
  %vm685 = vcmp.ge.f32.partialorder %v669, 0.0
  %vm686 = vcmp.ge.f32.partialorder %v670, 0.0
  %vm687 = vcmp.ge.f32.partialorder %v671, 0.0
  %vm688 = vcmp.ge.f32.partialorder %v672, 0.0
  %vm689 = vcmp.ge.f32.partialorder %v673, 0.0
  %vm690 = vcmp.ge.f32.partialorder %v674, 0.0
  %v691 = vmul.f32 %v659, 0.2
  %v692 = vmul.f32 %v660, 0.2
  %v693 = vmul.f32 %v661, 0.2
  %v694 = vmul.f32 %v662, 0.2
  %v695 = vmul.f32 %v663, 0.2
  %v696 = vmul.f32 %v664, 0.2
  %v697 = vmul.f32 %v665, 0.2
  %v698 = vmul.f32 %v666, 0.2
  %v699 = vmul.f32 %v667, 0.2
  %v700 = vmul.f32 %v668, 0.2
  %v701 = vmul.f32 %v669, 0.2
  %v702 = vmul.f32 %v670, 0.2
  %v703 = vmul.f32 %v671, 0.2
  %v704 = vmul.f32 %v672, 0.2
  %v705 = vmul.f32 %v673, 0.2
  %v706 = vmul.f32 %v674, 0.2
  %v707 = vsel %vm675, %v659, %v691
  %v708 = vsel %vm676, %v660, %v692
  %v709 = vsel %vm677, %v661, %v693
  %v710 = vsel %vm678, %v662, %v694
  %v711 = vsel %vm679, %v663, %v695
  %v712 = vsel %vm680, %v664, %v696
  %v713 = vsel %vm681, %v665, %v697
  %v714 = vsel %vm682, %v666, %v698
  %v715 = vsel %vm683, %v667, %v699
  %v716 = vsel %vm684, %v668, %v700
  %v717 = vsel %vm685, %v669, %v701
  %v718 = vsel %vm686, %v670, %v702
  %v719 = vsel %vm687, %v671, %v703
  %v720 = vsel %vm688, %v672, %v704
  %v721 = vsel %vm689, %v673, %v705
  %v722 = vsel %vm690, %v674, %v706
  %723 = vst [vmem:[%s4] sm:$0xff] %v707
  %724 = vst [vmem:[%s4 + $0x8] sm:$0xff] %v708
  %725 = vst [vmem:[%s4 + $0x10] sm:$0xff] %v709
  %726 = vst [vmem:[%s4 + $0x18] sm:$0xff] %v710
  %727 = vst [vmem:[%s4 + $0x20] sm:$0xff] %v711
  %728 = vst [vmem:[%s4 + $0x28] sm:$0xff] %v712
  %729 = vst [vmem:[%s4 + $0x30] sm:$0xff] %v713
  %730 = vst [vmem:[%s4 + $0x38] sm:$0xff] %v714
  %731 = vst [vmem:[%s4 + $0x40] sm:$0xff] %v715
  %732 = vst [vmem:[%s4 + $0x48] sm:$0xff] %v716
  %733 = vst [vmem:[%s4 + $0x50] sm:$0xff] %v717
  %734 = vst [vmem:[%s4 + $0x58] sm:$0xff] %v718
  %735 = vst [vmem:[%s4 + $0x60] sm:$0xff] %v719
  %736 = vst [vmem:[%s4 + $0x68] sm:$0xff] %v720
  %737 = vst [vmem:[%s4 + $0x70] sm:$0xff] %v721
  %738 = vst [vmem:[%s4 + $0x78] sm:$0xff] %v722
  // Predicated region
  $region18: #{multi_scale_forward.18} parent=0 // pred_check
    _
  $region19: #{multi_scale_forward.18} parent=0 // pred_check_branch
    %740 = sbr.rel (0) target = $region21
  $region20: #{multi_scale_forward.18} parent=0 // pred_region
    _
  $region21: #{multi_scale_forward.18} parent=0 // pred_fallthru
    _
  // Predicated region
  $region22: #{multi_scale_forward.18} parent=0 // pred_check
    _
  $region23: #{multi_scale_forward.18} parent=0 // pred_check_branch
    %742 = sbr.rel (0) target = $region25
  $region24: #{multi_scale_forward.18} parent=0 // pred_region
    _
  $region25: #{multi_scale_forward.18} parent=0 // pred_fallthru
    _

// kernel: multi_scale_forward.19
$region0: #{multi_scale_forward.19}
  #allocation0 [shape = 'u32[]', space=smem, size = 0x4, offset = 0x4, fixed_abs, tag = 'smem constant byte address 0x4 - core index']
  #allocation1 [shape = 'u32[144,128]{1,0:T(1,128)}', space=vmem, size = 0x12000, scoped, tag = 'internal scratch']
  %s0 = inlined_call_operand.vmem [shape: f32[8,1024], index: 0, kind: input, shape index: {}]
  %s1 = inlined_call_operand.vmem [shape: f32[1024,256], index: 1, kind: input, shape index: {}]
  %s2 = inlined_call_operand.vmem [shape: f32[8,1], index: 2, kind: input, shape index: {}]
  %s3 = inlined_call_operand.vmem [shape: f32[8,256], index: 3, kind: output, shape index: {}]
  %s4 = sld [smem:[#allocation0]]
  $region22: #{multi_scale_forward.19} parent=0
    _
  %s6 = ssub.s32 1, %s4
  %s7 = scalar_select 0, %s6, %s4
  // Predicated region
  $region2: #{multi_scale_forward.19} parent=0 // pred_check
    _
  $region3: #{multi_scale_forward.19} parent=0 // pred_check_branch
    %9 = sbr.rel (0) target = $region5
  $region4: #{multi_scale_forward.19} parent=0 // pred_region
    _
  $region5: #{multi_scale_forward.19} parent=0 // pred_fallthru
    _
  // Predicated region
  $region6: #{multi_scale_forward.19} parent=0 // pred_check
    _
  $region7: #{multi_scale_forward.19} parent=0 // pred_check_branch
    %11 = sbr.rel (0) target = $region9
  $region8: #{multi_scale_forward.19} parent=0 // pred_region
    _
  $region9: #{multi_scale_forward.19} parent=0 // pred_fallthru
    _
  // Predicated region
  $region10: #{multi_scale_forward.19} parent=0 // pred_check
    _
  $region11: #{multi_scale_forward.19} parent=0 // pred_check_branch
    %13 = sbr.rel (0) target = $region13
  $region12: #{multi_scale_forward.19} parent=0 // pred_region
    _
  $region13: #{multi_scale_forward.19} parent=0 // pred_fallthru
    _
  %v14 = vld [vmem:[%s0] sm:$0xff]
  %v15 = vld [vmem:[%s0 + $0x8] sm:$0xff]
  %v16 = vld [vmem:[%s0 + $0x10] sm:$0xff]
  %v17 = vld [vmem:[%s0 + $0x18] sm:$0xff]
  %v18 = vld [vmem:[%s0 + $0x20] sm:$0xff]
  %v19 = vld [vmem:[%s0 + $0x28] sm:$0xff]
  %v20 = vld [vmem:[%s0 + $0x30] sm:$0xff]
  %v21 = vld [vmem:[%s0 + $0x38] sm:$0xff]
  %v22 = vld [vmem:[%s1] sm:$0xff]
  %v23 = vld [vmem:[%s1 + $0x8] sm:$0xff]
  %v24 = vld [vmem:[%s1 + $0x10] sm:$0xff]
  %v25 = vld [vmem:[%s1 + $0x18] sm:$0xff]
  %v26 = vld [vmem:[%s1 + $0x20] sm:$0xff]
  %v27 = vld [vmem:[%s1 + $0x28] sm:$0xff]
  %v28 = vld [vmem:[%s1 + $0x30] sm:$0xff]
  %v29 = vld [vmem:[%s1 + $0x38] sm:$0xff]
  %v30 = vld [vmem:[%s1 + $0x40] sm:$0xff]
  %v31 = vld [vmem:[%s1 + $0x48] sm:$0xff]
  %v32 = vld [vmem:[%s1 + $0x50] sm:$0xff]
  %v33 = vld [vmem:[%s1 + $0x58] sm:$0xff]
  %v34 = vld [vmem:[%s1 + $0x60] sm:$0xff]
  %v35 = vld [vmem:[%s1 + $0x68] sm:$0xff]
  %v36 = vld [vmem:[%s1 + $0x70] sm:$0xff]
  %v37 = vld [vmem:[%s1 + $0x78] sm:$0xff]
  %v38 = vld [vmem:[%s1 + $0x80] sm:$0xff]
  %v39 = vld [vmem:[%s1 + $0x88] sm:$0xff]
  %v40 = vld [vmem:[%s1 + $0x90] sm:$0xff]
  %v41 = vld [vmem:[%s1 + $0x98] sm:$0xff]
  %v42 = vld [vmem:[%s1 + $0xa0] sm:$0xff]
  %v43 = vld [vmem:[%s1 + $0xa8] sm:$0xff]
  %v44 = vld [vmem:[%s1 + $0xb0] sm:$0xff]
  %v45 = vld [vmem:[%s1 + $0xb8] sm:$0xff]
  %v46 = vld [vmem:[%s1 + $0xc0] sm:$0xff]
  %v47 = vld [vmem:[%s1 + $0xc8] sm:$0xff]
  %v48 = vld [vmem:[%s1 + $0xd0] sm:$0xff]
  %v49 = vld [vmem:[%s1 + $0xd8] sm:$0xff]
  %v50 = vld [vmem:[%s1 + $0xe0] sm:$0xff]
  %v51 = vld [vmem:[%s1 + $0xe8] sm:$0xff]
  %v52 = vld [vmem:[%s1 + $0xf0] sm:$0xff]
  %v53 = vld [vmem:[%s1 + $0xf8] sm:$0xff]
  %v54 = vld [vmem:[%s1 + $0x100] sm:$0xff]
  %v55 = vld [vmem:[%s1 + $0x108] sm:$0xff]
  %v56 = vld [vmem:[%s1 + $0x110] sm:$0xff]
  %v57 = vld [vmem:[%s1 + $0x118] sm:$0xff]
  %v58 = vld [vmem:[%s1 + $0x120] sm:$0xff]
  %v59 = vld [vmem:[%s1 + $0x128] sm:$0xff]
  %v60 = vld [vmem:[%s1 + $0x130] sm:$0xff]
  %v61 = vld [vmem:[%s1 + $0x138] sm:$0xff]
  %v62 = vld [vmem:[%s1 + $0x140] sm:$0xff]
  %v63 = vld [vmem:[%s1 + $0x148] sm:$0xff]
  %v64 = vld [vmem:[%s1 + $0x150] sm:$0xff]
  %v65 = vld [vmem:[%s1 + $0x158] sm:$0xff]
  %v66 = vld [vmem:[%s1 + $0x160] sm:$0xff]
  %v67 = vld [vmem:[%s1 + $0x168] sm:$0xff]
  %v68 = vld [vmem:[%s1 + $0x170] sm:$0xff]
  %v69 = vld [vmem:[%s1 + $0x178] sm:$0xff]
  %v70 = vld [vmem:[%s1 + $0x180] sm:$0xff]
  %v71 = vld [vmem:[%s1 + $0x188] sm:$0xff]
  %v72 = vld [vmem:[%s1 + $0x190] sm:$0xff]
  %v73 = vld [vmem:[%s1 + $0x198] sm:$0xff]
  %v74 = vld [vmem:[%s1 + $0x1a0] sm:$0xff]
  %v75 = vld [vmem:[%s1 + $0x1a8] sm:$0xff]
  %v76 = vld [vmem:[%s1 + $0x1b0] sm:$0xff]
  %v77 = vld [vmem:[%s1 + $0x1b8] sm:$0xff]
  %v78 = vld [vmem:[%s1 + $0x1c0] sm:$0xff]
  %v79 = vld [vmem:[%s1 + $0x1c8] sm:$0xff]
  %v80 = vld [vmem:[%s1 + $0x1d0] sm:$0xff]
  %v81 = vld [vmem:[%s1 + $0x1d8] sm:$0xff]
  %v82 = vld [vmem:[%s1 + $0x1e0] sm:$0xff]
  %v83 = vld [vmem:[%s1 + $0x1e8] sm:$0xff]
  %v84 = vld [vmem:[%s1 + $0x1f0] sm:$0xff]
  %v85 = vld [vmem:[%s1 + $0x1f8] sm:$0xff]
  %v86 = vld [vmem:[%s1 + $0x200] sm:$0xff]
  %v87 = vld [vmem:[%s1 + $0x208] sm:$0xff]
  %v88 = vld [vmem:[%s1 + $0x210] sm:$0xff]
  %v89 = vld [vmem:[%s1 + $0x218] sm:$0xff]
  %v90 = vld [vmem:[%s1 + $0x220] sm:$0xff]
  %v91 = vld [vmem:[%s1 + $0x228] sm:$0xff]
  %v92 = vld [vmem:[%s1 + $0x230] sm:$0xff]
  %v93 = vld [vmem:[%s1 + $0x238] sm:$0xff]
  %v94 = vld [vmem:[%s1 + $0x240] sm:$0xff]
  %v95 = vld [vmem:[%s1 + $0x248] sm:$0xff]
  %v96 = vld [vmem:[%s1 + $0x250] sm:$0xff]
  %v97 = vld [vmem:[%s1 + $0x258] sm:$0xff]
  %v98 = vld [vmem:[%s1 + $0x260] sm:$0xff]
  %v99 = vld [vmem:[%s1 + $0x268] sm:$0xff]
  %v100 = vld [vmem:[%s1 + $0x270] sm:$0xff]
  %v101 = vld [vmem:[%s1 + $0x278] sm:$0xff]
  %v102 = vld [vmem:[%s1 + $0x280] sm:$0xff]
  %v103 = vld [vmem:[%s1 + $0x288] sm:$0xff]
  %v104 = vld [vmem:[%s1 + $0x290] sm:$0xff]
  %v105 = vld [vmem:[%s1 + $0x298] sm:$0xff]
  %v106 = vld [vmem:[%s1 + $0x2a0] sm:$0xff]
  %v107 = vld [vmem:[%s1 + $0x2a8] sm:$0xff]
  %v108 = vld [vmem:[%s1 + $0x2b0] sm:$0xff]
  %v109 = vld [vmem:[%s1 + $0x2b8] sm:$0xff]
  %v110 = vld [vmem:[%s1 + $0x2c0] sm:$0xff]
  %v111 = vld [vmem:[%s1 + $0x2c8] sm:$0xff]
  %v112 = vld [vmem:[%s1 + $0x2d0] sm:$0xff]
  %v113 = vld [vmem:[%s1 + $0x2d8] sm:$0xff]
  %v114 = vld [vmem:[%s1 + $0x2e0] sm:$0xff]
  %v115 = vld [vmem:[%s1 + $0x2e8] sm:$0xff]
  %v116 = vld [vmem:[%s1 + $0x2f0] sm:$0xff]
  %v117 = vld [vmem:[%s1 + $0x2f8] sm:$0xff]
  %v118 = vld [vmem:[%s1 + $0x300] sm:$0xff]
  %v119 = vld [vmem:[%s1 + $0x308] sm:$0xff]
  %v120 = vld [vmem:[%s1 + $0x310] sm:$0xff]
  %v121 = vld [vmem:[%s1 + $0x318] sm:$0xff]
  %v122 = vld [vmem:[%s1 + $0x320] sm:$0xff]
  %v123 = vld [vmem:[%s1 + $0x328] sm:$0xff]
  %v124 = vld [vmem:[%s1 + $0x330] sm:$0xff]
  %v125 = vld [vmem:[%s1 + $0x338] sm:$0xff]
  %v126 = vld [vmem:[%s1 + $0x340] sm:$0xff]
  %v127 = vld [vmem:[%s1 + $0x348] sm:$0xff]
  %v128 = vld [vmem:[%s1 + $0x350] sm:$0xff]
  %v129 = vld [vmem:[%s1 + $0x358] sm:$0xff]
  %v130 = vld [vmem:[%s1 + $0x360] sm:$0xff]
  %v131 = vld [vmem:[%s1 + $0x368] sm:$0xff]
  %v132 = vld [vmem:[%s1 + $0x370] sm:$0xff]
  %v133 = vld [vmem:[%s1 + $0x378] sm:$0xff]
  %v134 = vld [vmem:[%s1 + $0x380] sm:$0xff]
  %v135 = vld [vmem:[%s1 + $0x388] sm:$0xff]
  %v136 = vld [vmem:[%s1 + $0x390] sm:$0xff]
  %v137 = vld [vmem:[%s1 + $0x398] sm:$0xff]
  %v138 = vld [vmem:[%s1 + $0x3a0] sm:$0xff]
  %v139 = vld [vmem:[%s1 + $0x3a8] sm:$0xff]
  %v140 = vld [vmem:[%s1 + $0x3b0] sm:$0xff]
  %v141 = vld [vmem:[%s1 + $0x3b8] sm:$0xff]
  %v142 = vld [vmem:[%s1 + $0x3c0] sm:$0xff]
  %v143 = vld [vmem:[%s1 + $0x3c8] sm:$0xff]
  %v144 = vld [vmem:[%s1 + $0x3d0] sm:$0xff]
  %v145 = vld [vmem:[%s1 + $0x3d8] sm:$0xff]
  %v146 = vld [vmem:[%s1 + $0x3e0] sm:$0xff]
  %v147 = vld [vmem:[%s1 + $0x3e8] sm:$0xff]
  %v148 = vld [vmem:[%s1 + $0x3f0] sm:$0xff]
  %v149 = vld [vmem:[%s1 + $0x3f8] sm:$0xff]
  %v150 = vld [vmem:[%s1 + $0x400] sm:$0xff]
  %v151 = vld [vmem:[%s1 + $0x408] sm:$0xff]
  %v152 = vld [vmem:[%s1 + $0x410] sm:$0xff]
  %v153 = vld [vmem:[%s1 + $0x418] sm:$0xff]
  %v154 = vld [vmem:[%s1 + $0x420] sm:$0xff]
  %v155 = vld [vmem:[%s1 + $0x428] sm:$0xff]
  %v156 = vld [vmem:[%s1 + $0x430] sm:$0xff]
  %v157 = vld [vmem:[%s1 + $0x438] sm:$0xff]
  %v158 = vld [vmem:[%s1 + $0x440] sm:$0xff]
  %v159 = vld [vmem:[%s1 + $0x448] sm:$0xff]
  %v160 = vld [vmem:[%s1 + $0x450] sm:$0xff]
  %v161 = vld [vmem:[%s1 + $0x458] sm:$0xff]
  %v162 = vld [vmem:[%s1 + $0x460] sm:$0xff]
  %v163 = vld [vmem:[%s1 + $0x468] sm:$0xff]
  %v164 = vld [vmem:[%s1 + $0x470] sm:$0xff]
  %v165 = vld [vmem:[%s1 + $0x478] sm:$0xff]
  %v166 = vld [vmem:[%s1 + $0x480] sm:$0xff]
  %v167 = vld [vmem:[%s1 + $0x488] sm:$0xff]
  %v168 = vld [vmem:[%s1 + $0x490] sm:$0xff]
  %v169 = vld [vmem:[%s1 + $0x498] sm:$0xff]
  %v170 = vld [vmem:[%s1 + $0x4a0] sm:$0xff]
  %v171 = vld [vmem:[%s1 + $0x4a8] sm:$0xff]
  %v172 = vld [vmem:[%s1 + $0x4b0] sm:$0xff]
  %v173 = vld [vmem:[%s1 + $0x4b8] sm:$0xff]
  %v174 = vld [vmem:[%s1 + $0x4c0] sm:$0xff]
  %v175 = vld [vmem:[%s1 + $0x4c8] sm:$0xff]
  %v176 = vld [vmem:[%s1 + $0x4d0] sm:$0xff]
  %v177 = vld [vmem:[%s1 + $0x4d8] sm:$0xff]
  %v178 = vld [vmem:[%s1 + $0x4e0] sm:$0xff]
  %v179 = vld [vmem:[%s1 + $0x4e8] sm:$0xff]
  %v180 = vld [vmem:[%s1 + $0x4f0] sm:$0xff]
  %v181 = vld [vmem:[%s1 + $0x4f8] sm:$0xff]
  %v182 = vld [vmem:[%s1 + $0x500] sm:$0xff]
  %v183 = vld [vmem:[%s1 + $0x508] sm:$0xff]
  %v184 = vld [vmem:[%s1 + $0x510] sm:$0xff]
  %v185 = vld [vmem:[%s1 + $0x518] sm:$0xff]
  %v186 = vld [vmem:[%s1 + $0x520] sm:$0xff]
  %v187 = vld [vmem:[%s1 + $0x528] sm:$0xff]
  %v188 = vld [vmem:[%s1 + $0x530] sm:$0xff]
  %v189 = vld [vmem:[%s1 + $0x538] sm:$0xff]
  %v190 = vld [vmem:[%s1 + $0x540] sm:$0xff]
  %v191 = vld [vmem:[%s1 + $0x548] sm:$0xff]
  %v192 = vld [vmem:[%s1 + $0x550] sm:$0xff]
  %v193 = vld [vmem:[%s1 + $0x558] sm:$0xff]
  %v194 = vld [vmem:[%s1 + $0x560] sm:$0xff]
  %v195 = vld [vmem:[%s1 + $0x568] sm:$0xff]
  %v196 = vld [vmem:[%s1 + $0x570] sm:$0xff]
  %v197 = vld [vmem:[%s1 + $0x578] sm:$0xff]
  %v198 = vld [vmem:[%s1 + $0x580] sm:$0xff]
  %v199 = vld [vmem:[%s1 + $0x588] sm:$0xff]
  %v200 = vld [vmem:[%s1 + $0x590] sm:$0xff]
  %v201 = vld [vmem:[%s1 + $0x598] sm:$0xff]
  %v202 = vld [vmem:[%s1 + $0x5a0] sm:$0xff]
  %v203 = vld [vmem:[%s1 + $0x5a8] sm:$0xff]
  %v204 = vld [vmem:[%s1 + $0x5b0] sm:$0xff]
  %v205 = vld [vmem:[%s1 + $0x5b8] sm:$0xff]
  %v206 = vld [vmem:[%s1 + $0x5c0] sm:$0xff]
  %v207 = vld [vmem:[%s1 + $0x5c8] sm:$0xff]
  %v208 = vld [vmem:[%s1 + $0x5d0] sm:$0xff]
  %v209 = vld [vmem:[%s1 + $0x5d8] sm:$0xff]
  %v210 = vld [vmem:[%s1 + $0x5e0] sm:$0xff]
  %v211 = vld [vmem:[%s1 + $0x5e8] sm:$0xff]
  %v212 = vld [vmem:[%s1 + $0x5f0] sm:$0xff]
  %v213 = vld [vmem:[%s1 + $0x5f8] sm:$0xff]
  %v214 = vld [vmem:[%s1 + $0x600] sm:$0xff]
  %v215 = vld [vmem:[%s1 + $0x608] sm:$0xff]
  %v216 = vld [vmem:[%s1 + $0x610] sm:$0xff]
  %v217 = vld [vmem:[%s1 + $0x618] sm:$0xff]
  %v218 = vld [vmem:[%s1 + $0x620] sm:$0xff]
  %v219 = vld [vmem:[%s1 + $0x628] sm:$0xff]
  %v220 = vld [vmem:[%s1 + $0x630] sm:$0xff]
  %v221 = vld [vmem:[%s1 + $0x638] sm:$0xff]
  %v222 = vld [vmem:[%s1 + $0x640] sm:$0xff]
  %v223 = vld [vmem:[%s1 + $0x648] sm:$0xff]
  %v224 = vld [vmem:[%s1 + $0x650] sm:$0xff]
  %v225 = vld [vmem:[%s1 + $0x658] sm:$0xff]
  %v226 = vld [vmem:[%s1 + $0x660] sm:$0xff]
  %v227 = vld [vmem:[%s1 + $0x668] sm:$0xff]
  %v228 = vld [vmem:[%s1 + $0x670] sm:$0xff]
  %v229 = vld [vmem:[%s1 + $0x678] sm:$0xff]
  %v230 = vld [vmem:[%s1 + $0x680] sm:$0xff]
  %v231 = vld [vmem:[%s1 + $0x688] sm:$0xff]
  %v232 = vld [vmem:[%s1 + $0x690] sm:$0xff]
  %v233 = vld [vmem:[%s1 + $0x698] sm:$0xff]
  %v234 = vld [vmem:[%s1 + $0x6a0] sm:$0xff]
  %v235 = vld [vmem:[%s1 + $0x6a8] sm:$0xff]
  %v236 = vld [vmem:[%s1 + $0x6b0] sm:$0xff]
  %v237 = vld [vmem:[%s1 + $0x6b8] sm:$0xff]
  %v238 = vld [vmem:[%s1 + $0x6c0] sm:$0xff]
  %v239 = vld [vmem:[%s1 + $0x6c8] sm:$0xff]
  %v240 = vld [vmem:[%s1 + $0x6d0] sm:$0xff]
  %v241 = vld [vmem:[%s1 + $0x6d8] sm:$0xff]
  %v242 = vld [vmem:[%s1 + $0x6e0] sm:$0xff]
  %v243 = vld [vmem:[%s1 + $0x6e8] sm:$0xff]
  %v244 = vld [vmem:[%s1 + $0x6f0] sm:$0xff]
  %v245 = vld [vmem:[%s1 + $0x6f8] sm:$0xff]
  %v246 = vld [vmem:[%s1 + $0x700] sm:$0xff]
  %v247 = vld [vmem:[%s1 + $0x708] sm:$0xff]
  %v248 = vld [vmem:[%s1 + $0x710] sm:$0xff]
  %v249 = vld [vmem:[%s1 + $0x718] sm:$0xff]
  %v250 = vld [vmem:[%s1 + $0x720] sm:$0xff]
  %v251 = vld [vmem:[%s1 + $0x728] sm:$0xff]
  %v252 = vld [vmem:[%s1 + $0x730] sm:$0xff]
  %v253 = vld [vmem:[%s1 + $0x738] sm:$0xff]
  %v254 = vld [vmem:[%s1 + $0x740] sm:$0xff]
  %v255 = vld [vmem:[%s1 + $0x748] sm:$0xff]
  %v256 = vld [vmem:[%s1 + $0x750] sm:$0xff]
  %v257 = vld [vmem:[%s1 + $0x758] sm:$0xff]
  %v258 = vld [vmem:[%s1 + $0x760] sm:$0xff]
  %v259 = vld [vmem:[%s1 + $0x768] sm:$0xff]
  %v260 = vld [vmem:[%s1 + $0x770] sm:$0xff]
  %v261 = vld [vmem:[%s1 + $0x778] sm:$0xff]
  %v262 = vld [vmem:[%s1 + $0x780] sm:$0xff]
  %v263 = vld [vmem:[%s1 + $0x788] sm:$0xff]
  %v264 = vld [vmem:[%s1 + $0x790] sm:$0xff]
  %v265 = vld [vmem:[%s1 + $0x798] sm:$0xff]
  %v266 = vld [vmem:[%s1 + $0x7a0] sm:$0xff]
  %v267 = vld [vmem:[%s1 + $0x7a8] sm:$0xff]
  %v268 = vld [vmem:[%s1 + $0x7b0] sm:$0xff]
  %v269 = vld [vmem:[%s1 + $0x7b8] sm:$0xff]
  %v270 = vld [vmem:[%s1 + $0x7c0] sm:$0xff]
  %v271 = vld [vmem:[%s1 + $0x7c8] sm:$0xff]
  %v272 = vld [vmem:[%s1 + $0x7d0] sm:$0xff]
  %v273 = vld [vmem:[%s1 + $0x7d8] sm:$0xff]
  %v274 = vld [vmem:[%s1 + $0x7e0] sm:$0xff]
  %v275 = vld [vmem:[%s1 + $0x7e8] sm:$0xff]
  %v276 = vld [vmem:[%s1 + $0x7f0] sm:$0xff]
  %v277 = vld [vmem:[%s1 + $0x7f8] sm:$0xff]
  %v278 = vld [vmem:[%s2] sm:$0xff]
  %280 = vset.pattern.permute.xlu0 0
  %281 = vperm.xlu0 %280, %v278
  %v282 = vpop.permute.xlu0 %281
  %284 = vmatprep.subr.mxu0 %v53
  %285 = vmatpush1.msra.mxu0 %v52
  %286 = vmatprep.subr.mxu0 %v51
  %287 = vmatpush1.msra.mxu0 %v50
  %288 = vmatprep.subr.mxu0 %v49
  %289 = vmatpush1.msra.mxu0 %v48
  %290 = vmatprep.subr.mxu0 %v47
  %291 = vmatpush1.msra.mxu0 %v46
  %292 = vmatprep.subr.mxu0 %v45
  %293 = vmatpush1.msra.mxu0 %v44
  %294 = vmatprep.subr.mxu0 %v43
  %295 = vmatpush1.msra.mxu0 %v42
  %296 = vmatprep.subr.mxu0 %v41
  %297 = vmatpush1.msra.mxu0 %v40
  %298 = vmatprep.subr.mxu0 %v39
  %299 = vmatpush1.msra.mxu0 %v38
  %300 = vmatprep.subr.mxu0 %v37
  %301 = vmatpush1.msra.mxu0 %v36
  %302 = vmatprep.subr.mxu0 %v35
  %303 = vmatpush1.msra.mxu0 %v34
  %304 = vmatprep.subr.mxu0 %v33
  %305 = vmatpush1.msra.mxu0 %v32
  %306 = vmatprep.subr.mxu0 %v31
  %307 = vmatpush1.msra.mxu0 %v30
  %308 = vmatprep.subr.mxu0 %v29
  %309 = vmatpush1.msra.mxu0 %v28
  %310 = vmatprep.subr.mxu0 %v27
  %311 = vmatpush1.msra.mxu0 %v26
  %312 = vmatprep.subr.mxu0 %v25
  %313 = vmatpush1.msra.mxu0 %v24
  %314 = vmatprep.subr.mxu0 %v23
  %315 = vmatpush1.msra.mxu0 %v22
  %316 = vmatprep.subr.mxu0 %v85
  %317 = vmatpush2.msra.mxu0 %v84
  %318 = vmatprep.subr.mxu0 %v83
  %319 = vmatpush2.msra.mxu0 %v82
  %320 = vmatprep.subr.mxu0 %v81
  %321 = vmatpush2.msra.mxu0 %v80
  %322 = vmatprep.subr.mxu0 %v79
  %323 = vmatpush2.msra.mxu0 %v78
  %324 = vmatprep.subr.mxu0 %v77
  %325 = vmatpush2.msra.mxu0 %v76
  %326 = vmatprep.subr.mxu0 %v75
  %327 = vmatpush2.msra.mxu0 %v74
  %328 = vmatprep.subr.mxu0 %v73
  %329 = vmatpush2.msra.mxu0 %v72
  %330 = vmatprep.subr.mxu0 %v71
  %331 = vmatpush2.msra.mxu0 %v70
  %332 = vmatprep.subr.mxu0 %v69
  %333 = vmatpush2.msra.mxu0 %v68
  %334 = vmatprep.subr.mxu0 %v67
  %335 = vmatpush2.msra.mxu0 %v66
  %336 = vmatprep.subr.mxu0 %v65
  %337 = vmatpush2.msra.mxu0 %v64
  %338 = vmatprep.subr.mxu0 %v63
  %339 = vmatpush2.msra.mxu0 %v62
  %340 = vmatprep.subr.mxu0 %v61
  %341 = vmatpush2.msra.mxu0 %v60
  %342 = vmatprep.subr.mxu0 %v59
  %343 = vmatpush2.msra.mxu0 %v58
  %344 = vmatprep.subr.mxu0 %v57
  %345 = vmatpush2.msra.mxu0 %v56
  %346 = vmatprep.subr.mxu0 %v55
  %347 = vmatpush2.msra.mxu0 %v54
  %348 = vmatprep.mubr.f32.mxu0 %v15
  %349 = vmatmul.mubr.f32.gmra.mxu0 %v14
  %v350 = vpop.f32.mrf.mxu0
  %v351 = vadd.f32 %v282, %v350
  %v352 = vpop.f32.mrf.mxu0
  %v353 = vadd.f32 %v282, %v352
  %354 = vdwg.mxu0
  %355 = vmatprep.subr.mxu0 %v117
  %356 = vmatpush1.msra.mxu0 %v116
  %357 = vmatprep.subr.mxu0 %v115
  %358 = vmatpush1.msra.mxu0 %v114
  %359 = vmatprep.subr.mxu0 %v113
  %360 = vmatpush1.msra.mxu0 %v112
  %361 = vmatprep.subr.mxu0 %v111
  %362 = vmatpush1.msra.mxu0 %v110
  %363 = vmatprep.subr.mxu0 %v109
  %364 = vmatpush1.msra.mxu0 %v108
  %365 = vmatprep.subr.mxu0 %v107
  %366 = vmatpush1.msra.mxu0 %v106
  %367 = vmatprep.subr.mxu0 %v105
  %368 = vmatpush1.msra.mxu0 %v104
  %369 = vmatprep.subr.mxu0 %v103
  %370 = vmatpush1.msra.mxu0 %v102
  %371 = vmatprep.subr.mxu0 %v101
  %372 = vmatpush1.msra.mxu0 %v100
  %373 = vmatprep.subr.mxu0 %v99
  %374 = vmatpush1.msra.mxu0 %v98
  %375 = vmatprep.subr.mxu0 %v97
  %376 = vmatpush1.msra.mxu0 %v96
  %377 = vmatprep.subr.mxu0 %v95
  %378 = vmatpush1.msra.mxu0 %v94
  %379 = vmatprep.subr.mxu0 %v93
  %380 = vmatpush1.msra.mxu0 %v92
  %381 = vmatprep.subr.mxu0 %v91
  %382 = vmatpush1.msra.mxu0 %v90
  %383 = vmatprep.subr.mxu0 %v89
  %384 = vmatpush1.msra.mxu0 %v88
  %385 = vmatprep.subr.mxu0 %v87
  %386 = vmatpush1.msra.mxu0 %v86
  %387 = vmatprep.subr.mxu0 %v149
  %388 = vmatpush2.msra.mxu0 %v148
  %389 = vmatprep.subr.mxu0 %v147
  %390 = vmatpush2.msra.mxu0 %v146
  %391 = vmatprep.subr.mxu0 %v145
  %392 = vmatpush2.msra.mxu0 %v144
  %393 = vmatprep.subr.mxu0 %v143
  %394 = vmatpush2.msra.mxu0 %v142
  %395 = vmatprep.subr.mxu0 %v141
  %396 = vmatpush2.msra.mxu0 %v140
  %397 = vmatprep.subr.mxu0 %v139
  %398 = vmatpush2.msra.mxu0 %v138
  %399 = vmatprep.subr.mxu0 %v137
  %400 = vmatpush2.msra.mxu0 %v136
  %401 = vmatprep.subr.mxu0 %v135
  %402 = vmatpush2.msra.mxu0 %v134
  %403 = vmatprep.subr.mxu0 %v133
  %404 = vmatpush2.msra.mxu0 %v132
  %405 = vmatprep.subr.mxu0 %v131
  %406 = vmatpush2.msra.mxu0 %v130
  %407 = vmatprep.subr.mxu0 %v129
  %408 = vmatpush2.msra.mxu0 %v128
  %409 = vmatprep.subr.mxu0 %v127
  %410 = vmatpush2.msra.mxu0 %v126
  %411 = vmatprep.subr.mxu0 %v125
  %412 = vmatpush2.msra.mxu0 %v124
  %413 = vmatprep.subr.mxu0 %v123
  %414 = vmatpush2.msra.mxu0 %v122
  %415 = vmatprep.subr.mxu0 %v121
  %416 = vmatpush2.msra.mxu0 %v120
  %417 = vmatprep.subr.mxu0 %v119
  %418 = vmatpush2.msra.mxu0 %v118
  %419 = vmatprep.mubr.f32.mxu0 %v17
  %420 = vmatmul.mubr.f32.gmra.mxu0 %v16
  %v421 = vpop.f32.mrf.mxu0
  %v422 = vadd.f32 %v351, %v421
  %v423 = vpop.f32.mrf.mxu0
  %v424 = vadd.f32 %v353, %v423
  %425 = vdwg.mxu0
  %426 = vmatprep.subr.mxu0 %v181
  %427 = vmatpush1.msra.mxu0 %v180
  %428 = vmatprep.subr.mxu0 %v179
  %429 = vmatpush1.msra.mxu0 %v178
  %430 = vmatprep.subr.mxu0 %v177
  %431 = vmatpush1.msra.mxu0 %v176
  %432 = vmatprep.subr.mxu0 %v175
  %433 = vmatpush1.msra.mxu0 %v174
  %434 = vmatprep.subr.mxu0 %v173
  %435 = vmatpush1.msra.mxu0 %v172
  %436 = vmatprep.subr.mxu0 %v171
  %437 = vmatpush1.msra.mxu0 %v170
  %438 = vmatprep.subr.mxu0 %v169
  %439 = vmatpush1.msra.mxu0 %v168
  %440 = vmatprep.subr.mxu0 %v167
  %441 = vmatpush1.msra.mxu0 %v166
  %442 = vmatprep.subr.mxu0 %v165
  %443 = vmatpush1.msra.mxu0 %v164
  %444 = vmatprep.subr.mxu0 %v163
  %445 = vmatpush1.msra.mxu0 %v162
  %446 = vmatprep.subr.mxu0 %v161
  %447 = vmatpush1.msra.mxu0 %v160
  %448 = vmatprep.subr.mxu0 %v159
  %449 = vmatpush1.msra.mxu0 %v158
  %450 = vmatprep.subr.mxu0 %v157
  %451 = vmatpush1.msra.mxu0 %v156
  %452 = vmatprep.subr.mxu0 %v155
  %453 = vmatpush1.msra.mxu0 %v154
  %454 = vmatprep.subr.mxu0 %v153
  %455 = vmatpush1.msra.mxu0 %v152
  %456 = vmatprep.subr.mxu0 %v151
  %457 = vmatpush1.msra.mxu0 %v150
  %458 = vmatprep.subr.mxu0 %v213
  %459 = vmatpush2.msra.mxu0 %v212
  %460 = vmatprep.subr.mxu0 %v211
  %461 = vmatpush2.msra.mxu0 %v210
  %462 = vmatprep.subr.mxu0 %v209
  %463 = vmatpush2.msra.mxu0 %v208
  %464 = vmatprep.subr.mxu0 %v207
  %465 = vmatpush2.msra.mxu0 %v206
  %466 = vmatprep.subr.mxu0 %v205
  %467 = vmatpush2.msra.mxu0 %v204
  %468 = vmatprep.subr.mxu0 %v203
  %469 = vmatpush2.msra.mxu0 %v202
  %470 = vmatprep.subr.mxu0 %v201
  %471 = vmatpush2.msra.mxu0 %v200
  %472 = vmatprep.subr.mxu0 %v199
  %473 = vmatpush2.msra.mxu0 %v198
  %474 = vmatprep.subr.mxu0 %v197
  %475 = vmatpush2.msra.mxu0 %v196
  %476 = vmatprep.subr.mxu0 %v195
  %477 = vmatpush2.msra.mxu0 %v194
  %478 = vmatprep.subr.mxu0 %v193
  %479 = vmatpush2.msra.mxu0 %v192
  %480 = vmatprep.subr.mxu0 %v191
  %481 = vmatpush2.msra.mxu0 %v190
  %482 = vmatprep.subr.mxu0 %v189
  %483 = vmatpush2.msra.mxu0 %v188
  %484 = vmatprep.subr.mxu0 %v187
  %485 = vmatpush2.msra.mxu0 %v186
  %486 = vmatprep.subr.mxu0 %v185
  %487 = vmatpush2.msra.mxu0 %v184
  %488 = vmatprep.subr.mxu0 %v183
  %489 = vmatpush2.msra.mxu0 %v182
  %490 = vmatprep.mubr.f32.mxu0 %v19
  %491 = vmatmul.mubr.f32.gmra.mxu0 %v18
  %v492 = vpop.f32.mrf.mxu0
  %v493 = vadd.f32 %v422, %v492
  %v494 = vpop.f32.mrf.mxu0
  %v495 = vadd.f32 %v424, %v494
  %496 = vdwg.mxu0
  %497 = vmatprep.subr.mxu0 %v245
  %498 = vmatpush1.msra.mxu0 %v244
  %499 = vmatprep.subr.mxu0 %v243
  %500 = vmatpush1.msra.mxu0 %v242
  %501 = vmatprep.subr.mxu0 %v241
  %502 = vmatpush1.msra.mxu0 %v240
  %503 = vmatprep.subr.mxu0 %v239
  %504 = vmatpush1.msra.mxu0 %v238
  %505 = vmatprep.subr.mxu0 %v237
  %506 = vmatpush1.msra.mxu0 %v236
  %507 = vmatprep.subr.mxu0 %v235
  %508 = vmatpush1.msra.mxu0 %v234
  %509 = vmatprep.subr.mxu0 %v233
  %510 = vmatpush1.msra.mxu0 %v232
  %511 = vmatprep.subr.mxu0 %v231
  %512 = vmatpush1.msra.mxu0 %v230
  %513 = vmatprep.subr.mxu0 %v229
  %514 = vmatpush1.msra.mxu0 %v228
  %515 = vmatprep.subr.mxu0 %v227
  %516 = vmatpush1.msra.mxu0 %v226
  %517 = vmatprep.subr.mxu0 %v225
  %518 = vmatpush1.msra.mxu0 %v224
  %519 = vmatprep.subr.mxu0 %v223
  %520 = vmatpush1.msra.mxu0 %v222
  %521 = vmatprep.subr.mxu0 %v221
  %522 = vmatpush1.msra.mxu0 %v220
  %523 = vmatprep.subr.mxu0 %v219
  %524 = vmatpush1.msra.mxu0 %v218
  %525 = vmatprep.subr.mxu0 %v217
  %526 = vmatpush1.msra.mxu0 %v216
  %527 = vmatprep.subr.mxu0 %v215
  %528 = vmatpush1.msra.mxu0 %v214
  %529 = vmatprep.subr.mxu0 %v277
  %530 = vmatpush2.msra.mxu0 %v276
  %531 = vmatprep.subr.mxu0 %v275
  %532 = vmatpush2.msra.mxu0 %v274
  %533 = vmatprep.subr.mxu0 %v273
  %534 = vmatpush2.msra.mxu0 %v272
  %535 = vmatprep.subr.mxu0 %v271
  %536 = vmatpush2.msra.mxu0 %v270
  %537 = vmatprep.subr.mxu0 %v269
  %538 = vmatpush2.msra.mxu0 %v268
  %539 = vmatprep.subr.mxu0 %v267
  %540 = vmatpush2.msra.mxu0 %v266
  %541 = vmatprep.subr.mxu0 %v265
  %542 = vmatpush2.msra.mxu0 %v264
  %543 = vmatprep.subr.mxu0 %v263
  %544 = vmatpush2.msra.mxu0 %v262
  %545 = vmatprep.subr.mxu0 %v261
  %546 = vmatpush2.msra.mxu0 %v260
  %547 = vmatprep.subr.mxu0 %v259
  %548 = vmatpush2.msra.mxu0 %v258
  %549 = vmatprep.subr.mxu0 %v257
  %550 = vmatpush2.msra.mxu0 %v256
  %551 = vmatprep.subr.mxu0 %v255
  %552 = vmatpush2.msra.mxu0 %v254
  %553 = vmatprep.subr.mxu0 %v253
  %554 = vmatpush2.msra.mxu0 %v252
  %555 = vmatprep.subr.mxu0 %v251
  %556 = vmatpush2.msra.mxu0 %v250
  %557 = vmatprep.subr.mxu0 %v249
  %558 = vmatpush2.msra.mxu0 %v248
  %559 = vmatprep.subr.mxu0 %v247
  %560 = vmatpush2.msra.mxu0 %v246
  %561 = vmatprep.mubr.f32.mxu0 %v21
  %562 = vmatmul.mubr.f32.gmra.mxu0 %v20
  %v563 = vpop.f32.mrf.mxu0
  %v564 = vadd.f32 %v493, %v563
  %v565 = vpop.f32.mrf.mxu0
  %v566 = vadd.f32 %v495, %v565
  %567 = vdwg.mxu0
  %568 = vst [vmem:[%s3] sm:$0xff] %v564
  %569 = vst [vmem:[%s3 + $0x8] sm:$0xff] %v566
  // Predicated region
  $region14: #{multi_scale_forward.19} parent=0 // pred_check
    _
  $region15: #{multi_scale_forward.19} parent=0 // pred_check_branch
    %571 = sbr.rel (0) target = $region17
  $region16: #{multi_scale_forward.19} parent=0 // pred_region
    _
  $region17: #{multi_scale_forward.19} parent=0 // pred_fallthru
    _
  // Predicated region
  $region18: #{multi_scale_forward.19} parent=0 // pred_check
    _
  $region19: #{multi_scale_forward.19} parent=0 // pred_check_branch
    %573 = sbr.rel (0) target = $region21
  $region20: #{multi_scale_forward.19} parent=0 // pred_region
    _
  $region21: #{multi_scale_forward.19} parent=0 // pred_fallthru
    _

</llo_original>
